<compile_context>
chip_gen: v6e
topology: v6e:2x2x1
jax: 0.10.0
libtpu: 0.0.40
codegen_flags: <defaults>
</compile_context>

<pallas_src>
import functools

import jax
import jax.numpy as jnp
import numpy as np
from jax.experimental import pallas as pl
from jax.experimental.pallas import tpu as pltpu

EPS = 1e-3  # BatchNorm eps from the PyTorch module


def _conv1_kernel(x_ref, w1_ref, y1_ref):
    # 1x1 conv == per-row-tile matmul on the MXU (bf16 operands, f32 acc).
    y1_ref[...] = jnp.dot(
        x_ref[...], w1_ref[...], preferred_element_type=jnp.float32
    ).astype(y1_ref.dtype)


def _bn_relu_conv2_bn_kernel(y1_ref, masks_ref, w2_ref, g1_ref, b1_ref,
                             g2_ref, b2_ref, o_ref, *, W, inv_nhw):
    n = y1_ref.shape[0]                               # padded NHW

    # ---- batchnorm2d12 (batch stats folded into a per-channel affine) + ReLU
    # Zero-pad rows of y1 are exactly 0, so they contribute nothing to the
    # sums; inv_nhw divides by the *real* NHW.
    y1 = y1_ref[...].astype(jnp.float32)              # (n, 32)
    m1 = jnp.sum(y1, axis=0, keepdims=True) * inv_nhw
    q1 = jnp.sum(y1 * y1, axis=0, keepdims=True) * inv_nhw
    scale1 = g1_ref[...] * jax.lax.rsqrt(q1 - m1 * m1 + EPS)
    shift1 = b1_ref[...] - m1 * scale1
    act = jnp.maximum(y1 * scale1 + shift1, 0.0)      # f32 (n, 32)

    # ---- conv2d13 (3x3, pad 1): ONE K=9*32 im2col matmul ----------------
    # Each tap = circular row shift (pltpu.roll, XLU) * precombined {0,1}
    # mask.  Wrapped / cross-image / pad rows are all zeroed by the mask
    # (valid for 3x3 / pad-1 / stride-1, |off| <= W+1).
    taps = []
    t = 0
    for dh in (-1, 0, 1):
        for dw in (-1, 0, 1):
            off = dh * W + dw                         # flat-NHW row shift
            v = act if off == 0 else pltpu.roll(act, shift=(-off) % n, axis=0)
            taps.append((v * masks_ref[:, t:t + 1]).astype(jnp.bfloat16))
            t += 1
    col = jnp.concatenate(taps, axis=1)               # (n, 288) bf16
    y2 = jnp.dot(col, w2_ref[...], preferred_element_type=jnp.float32)  # (n, 128)

    # ---- batchnorm2d13 (pad rows of y2 are exactly 0 -> sums unaffected) --
    m2 = jnp.sum(y2, axis=0, keepdims=True) * inv_nhw
    q2 = jnp.sum(y2 * y2, axis=0, keepdims=True) * inv_nhw
    scale2 = g2_ref[...] * jax.lax.rsqrt(q2 - m2 * m2 + EPS)
    shift2 = b2_ref[...] - m2 * scale2
    o_ref[...] = (y2 * scale2 + shift2).astype(o_ref.dtype)


def gnet_block_forward(x_nchw, w1_oihw, w2_oihw, g1, b1, g2, b2,
                       *, tile_rows=256):
    """Pallas implementation of M.forward. Input NCHW, output NCHW."""
    N, Cin, H, W = x_nchw.shape
    Cmid = w1_oihw.shape[0]
    Cout = w2_oihw.shape[0]
    CPAD = 128                                        # lane-dense output channels
    nhw = N * H * W
    n_tiles = pl.cdiv(nhw, tile_rows)
    nhw_pad = n_tiles * tile_rows

    # Input: NCHW -> flat channels-last bf16 slab, zero-padded to whole tiles.
    x2d = jnp.transpose(x_nchw, (0, 2, 3, 1)).reshape(nhw, Cin).astype(jnp.bfloat16)
    x2d = jnp.pad(x2d, ((0, nhw_pad - nhw), (0, 0)))

    # Precombined {0,1} border/validity masks, one column per 3x3 tap
    # (same tap order as the in-kernel loop).
    r = jnp.arange(nhw_pad, dtype=jnp.int32)
    hh = (r // W) % H
    ww = r % W
    valid = r < nhw
    cols = []
    for dh in (-1, 0, 1):
        for dw in (-1, 0, 1):
            m = valid
            if dh == -1:
                m = m & (hh >= 1)
            if dh == 1:
                m = m & (hh <= H - 2)
            if dw == -1:
                m = m & (ww >= 1)
            if dw == 1:
                m = m & (ww <= W - 2)
            cols.append(m)
    masks = jnp.stack(cols, axis=1).astype(jnp.float32)      # (nhw_pad, 9)

    # 1x1 weights: OIHW -> (Cin, Cmid) bf16.
    w1 = jnp.transpose(w1_oihw[:, :, 0, 0], (1, 0)).astype(jnp.bfloat16)
    # 3x3 weights: OIHW -> HWIO -> (9*Cmid, Cout), zero-pad Cout -> CPAD, bf16.
    w2 = jnp.transpose(w2_oihw, (2, 3, 1, 0)).reshape(9 * Cmid, Cout)
    w2 = jnp.pad(w2, ((0, 0), (0, CPAD - Cout))).astype(jnp.bfloat16)

    g1r = g1.reshape(1, Cmid).astype(jnp.float32)
    b1r = b1.reshape(1, Cmid).astype(jnp.float32)
    g2r = jnp.pad(g2, (0, CPAD - Cout)).reshape(1, CPAD).astype(jnp.float32)
    b2r = jnp.pad(b2, (0, CPAD - Cout)).reshape(1, CPAD).astype(jnp.float32)

    # ---- pass 1: 1x1 conv, gridded over NHW row tiles ("parallel") --------
    vmem1 = int(tile_rows * 2048 + (2 << 20))          # tiles + weights + headroom
    y1 = pl.pallas_call(
        _conv1_kernel,
        out_shape=jax.ShapeDtypeStruct((nhw_pad, Cmid), jnp.bfloat16),
        grid_spec=pltpu.PrefetchScalarGridSpec(
            num_scalar_prefetch=0,
            grid=(n_tiles,),
            in_specs=[pl.BlockSpec((tile_rows, Cin), lambda i: (i, 0)),
                      pl.BlockSpec((Cin, Cmid), lambda i: (0, 0))],
            out_specs=pl.BlockSpec((tile_rows, Cmid), lambda i: (i, 0))),
        compiler_params=pltpu.CompilerParams(
            dimension_semantics=("parallel",),
            vmem_limit_bytes=vmem1),
        cost_estimate=pl.CostEstimate(
            flops=2 * nhw_pad * Cin * Cmid, transcendentals=0,
            bytes_accessed=nhw_pad * Cin * 2 + Cin * Cmid * 2 + nhw_pad * Cmid * 2),
    )(x2d, w1)

    # ---- pass 2: BN1 + ReLU + im2col 3x3 conv + BN2 (single fused kernel) --
    # Derived VMEM budget (~6 KiB live per padded row, generous) + headroom.
    vmem2 = int(min(nhw_pad * 6144 + (4 << 20), 48 << 20))
    vmem = pl.BlockSpec(memory_space=pltpu.MemorySpace.VMEM)
    y2 = pl.pallas_call(
        functools.partial(_bn_relu_conv2_bn_kernel, W=W, inv_nhw=1.0 / nhw),
        out_shape=jax.ShapeDtypeStruct((nhw_pad, CPAD), jnp.float32),
        in_specs=[vmem] * 7,
        out_specs=vmem,
        compiler_params=pltpu.CompilerParams(vmem_limit_bytes=vmem2),
        cost_estimate=pl.CostEstimate(
            flops=2 * nhw_pad * (9 * Cmid) * CPAD, transcendentals=0,
            bytes_accessed=(nhw_pad * (Cmid * 2 + 9 * 4)
                            + 9 * Cmid * CPAD * 2 + nhw_pad * CPAD * 4)),
    )(y1, masks, w2, g1r, b1r, g2r, b2r)

    # (NHW_pad, CPAD) -> NCHW, drop row and channel padding.
    out = y2[:nhw, :Cout].reshape(N, H, W, Cout)
    return jnp.transpose(out, (0, 3, 1, 2))


def ref_forward(x, w1, w2, g1, b1, g2, b2):
    """Pure-JAX reference (NCHW, matches PyTorch training-mode forward)."""
    y = jax.lax.conv_general_dilated(
        x, w1, (1, 1), 'VALID', dimension_numbers=('NCHW', 'OIHW', 'NCHW'))
    m = jnp.mean(y, axis=(0, 2, 3), keepdims=True)
    v = jnp.mean((y - m) ** 2, axis=(0, 2, 3), keepdims=True)
    y = (y - m) * jax.lax.rsqrt(v + EPS) * g1.reshape(1, -1, 1, 1) \
        + b1.reshape(1, -1, 1, 1)
    y = jnp.maximum(y, 0.0)
    y = jax.lax.conv_general_dilated(
        y, w2, (1, 1), ((1, 1), (1, 1)),
        dimension_numbers=('NCHW', 'OIHW', 'NCHW'))
    m = jnp.mean(y, axis=(0, 2, 3), keepdims=True)
    v = jnp.mean((y - m) ** 2, axis=(0, 2, 3), keepdims=True)
    y = (y - m) * jax.lax.rsqrt(v + EPS) * g2.reshape(1, -1, 1, 1) \
        + b2.reshape(1, -1, 1, 1)
    return y


if __name__ == "__main__":
    # Channels fixed by the module weights (256 -> 32 -> 96); small batch/spatial
    # (batch 2 exercises the cross-image boundary masking of the flat-NHW taps).
    N, Cin, H, W = 2, 256, 14, 14
    Cmid, Cout = 32, 96

    key = jax.random.PRNGKey(0)
    kx, kw1, kw2, kg1, kb1, kg2, kb2 = jax.random.split(key, 7)

    x = jax.random.normal(kx, (N, Cin, H, W), dtype=jnp.float32)
    w1 = 0.05 * jax.random.normal(kw1, (Cmid, Cin, 1, 1), dtype=jnp.float32)
    w2 = 0.05 * jax.random.normal(kw2, (Cout, Cmid, 3, 3), dtype=jnp.float32)
    g1 = 1.0 + 0.1 * jax.random.normal(kg1, (Cmid,), dtype=jnp.float32)
    b1 = 0.1 * jax.random.normal(kb1, (Cmid,), dtype=jnp.float32)
    g2 = 1.0 + 0.1 * jax.random.normal(kg2, (Cout,), dtype=jnp.float32)
    b2 = 0.1 * jax.random.normal(kb2, (Cout,), dtype=jnp.float32)

    fwd = jax.jit(gnet_block_forward)
    out = jax.block_until_ready(fwd(x, w1, w2, g1, b1, g2, b2))
    ref = jax.block_until_ready(ref_forward(x, w1, w2, g1, b1, g2, b2))

    assert out.shape == (N, Cout, H, W), out.shape
    max_err = float(np.max(np.abs(np.asarray(out) - np.asarray(ref))))
    assert np.allclose(np.asarray(out), np.asarray(ref), atol=5e-2, rtol=5e-2), max_err

    print("KERNEL_OK")
</pallas_src>

<mosaic_0001>
module attributes {stable_mosaic.version = 11 : i64} {
  func.func @_conv1_kernel(%arg0: i32, %arg1: memref<256x256xbf16, #tpu.memory_space<vmem>>, %arg2: memref<256x32xbf16, #tpu.memory_space<vmem>>, %arg3: memref<256x32xbf16, #tpu.memory_space<vmem>>) attributes {dimension_semantics = [#tpu.dimension_semantics<parallel>], iteration_bounds = array<i64: 2>, scalar_prefetch = 0 : i64, scratch_operands = 0 : i64, tpu.core_type = #tpu.core_type<tc>, window_params = [{transform_indices = @transform_0, window_bounds = array<i64: 256, 256>}, {pipeline_mode = #tpu.pipeline_mode<synchronous>, transform_indices = @transform_1, window_bounds = array<i64: 256, 32>}, {transform_indices = @transform_2, window_bounds = array<i64: 256, 32>}]} {
    %c0 = arith.constant 0 : index
    %c0_0 = arith.constant 0 : index
    %0 = vector.load %arg1[%c0, %c0_0] : memref<256x256xbf16, #tpu.memory_space<vmem>>, vector<256x256xbf16>
    %c0_1 = arith.constant 0 : index
    %c0_2 = arith.constant 0 : index
    %1 = vector.load %arg2[%c0_1, %c0_2] : memref<256x32xbf16, #tpu.memory_space<vmem>>, vector<256x32xbf16>
    %cst = arith.constant dense<0.000000e+00> : vector<256x32xf32>
    %2 = tpu.matmul %0, %1, %cst {dimension_numbers = #tpu.dot_dimension_numbers<[1], [0], [0], [1], [0, 0, 1, 1], [], []>} : vector<256x256xbf16>, vector<256x32xbf16>, vector<256x32xf32> -> vector<256x32xf32>
    %3 = arith.truncf %2 : vector<256x32xf32> to vector<256x32xbf16>
    %c0_3 = arith.constant 0 : index
    %c0_4 = arith.constant 0 : index
    %4 = vector.load %arg3[%c0_3, %c0_4] : memref<256x32xbf16, #tpu.memory_space<vmem>>, vector<256x32xbf16>
    tpu.vector_store %arg3[%c0_3, %c0_4], %3 {strides = array<i32>} : memref<256x32xbf16, #tpu.memory_space<vmem>>, vector<256x32xbf16>,
    return
  }
  func.func @transform_0(%arg0: i32) -> (i32, i32) {
    %c0_i32 = arith.constant 0 : i32
    %c0_i32_0 = arith.constant 0 : i32
    return %arg0, %c0_i32 : i32, i32
  }
  func.func @transform_1(%arg0: i32) -> (i32, i32) {
    %c0_i32 = arith.constant 0 : i32
    %c0_i32_0 = arith.constant 0 : i32
    %c0_i32_1 = arith.constant 0 : i32
    return %c0_i32, %c0_i32_0 : i32, i32
  }
  func.func @transform_2(%arg0: i32) -> (i32, i32) {
    %c0_i32 = arith.constant 0 : i32
    %c0_i32_0 = arith.constant 0 : i32
    return %arg0, %c0_i32 : i32, i32
  }
}

module attributes {stable_mosaic.version = 11 : i64} {
  func.func @_bn_relu_conv2_bn_kernel(%arg0: memref<512x32xbf16, #tpu.memory_space<vmem>>, %arg1: memref<512x9xf32, #tpu.memory_space<vmem>>, %arg2: memref<288x128xbf16, #tpu.memory_space<vmem>>, %arg3: memref<1x32xf32, #tpu.memory_space<vmem>>, %arg4: memref<1x32xf32, #tpu.memory_space<vmem>>, %arg5: memref<1x128xf32, #tpu.memory_space<vmem>>, %arg6: memref<1x128xf32, #tpu.memory_space<vmem>>, %arg7: memref<512x128xf32, #tpu.memory_space<vmem>>) attributes {dimension_semantics = [], scalar_prefetch = 0 : i64, scratch_operands = 0 : i64, tpu.core_type = #tpu.core_type<tc>} {
    %c0 = arith.constant 0 : index
    %c0_0 = arith.constant 0 : index
    %0 = vector.load %arg0[%c0, %c0_0] : memref<512x32xbf16, #tpu.memory_space<vmem>>, vector<512x32xbf16>
    %1 = arith.extf %0 : vector<512x32xbf16> to vector<512x32xf32>
    %cst = arith.constant dense<0.000000e+00> : vector<32xf32>
    %2 = vector.multi_reduction <add>, %1, %cst [0] : vector<512x32xf32> to vector<32xf32>
    %3 = vector.shape_cast %2 : vector<32xf32> to vector<1x32xf32>
    %cst_1 = arith.constant 0.00255102036 : f32
    %4 = vector.broadcast %cst_1 : f32 to vector<1x32xf32>
    %5 = arith.mulf %3, %4 : vector<1x32xf32>
    %6 = arith.mulf %1, %1 : vector<512x32xf32>
    %cst_2 = arith.constant dense<0.000000e+00> : vector<32xf32>
    %7 = vector.multi_reduction <add>, %6, %cst_2 [0] : vector<512x32xf32> to vector<32xf32>
    %8 = vector.shape_cast %7 : vector<32xf32> to vector<1x32xf32>
    %cst_3 = arith.constant 0.00255102036 : f32
    %9 = vector.broadcast %cst_3 : f32 to vector<1x32xf32>
    %10 = arith.mulf %8, %9 : vector<1x32xf32>
    %c0_4 = arith.constant 0 : index
    %c0_5 = arith.constant 0 : index
    %11 = vector.load %arg3[%c0_4, %c0_5] : memref<1x32xf32, #tpu.memory_space<vmem>>, vector<1x32xf32>
    %12 = arith.mulf %5, %5 : vector<1x32xf32>
    %13 = arith.subf %10, %12 : vector<1x32xf32>
    %cst_6 = arith.constant 1.000000e-03 : f32
    %14 = vector.broadcast %cst_6 : f32 to vector<1x32xf32>
    %15 = arith.addf %13, %14 : vector<1x32xf32>
    %16 = math.rsqrt %15 : vector<1x32xf32>
    %17 = arith.mulf %11, %16 : vector<1x32xf32>
    %c0_7 = arith.constant 0 : index
    %c0_8 = arith.constant 0 : index
    %18 = vector.load %arg4[%c0_7, %c0_8] : memref<1x32xf32, #tpu.memory_space<vmem>>, vector<1x32xf32>
    %19 = arith.mulf %5, %17 : vector<1x32xf32>
    %20 = arith.subf %18, %19 : vector<1x32xf32>
    %21 = vector.broadcast %17 : vector<1x32xf32> to vector<512x32xf32>
    %22 = arith.mulf %1, %21 : vector<512x32xf32>
    %23 = vector.broadcast %20 : vector<1x32xf32> to vector<512x32xf32>
    %24 = arith.addf %22, %23 : vector<512x32xf32>
    %cst_9 = arith.constant 0.000000e+00 : f32
    %25 = vector.broadcast %cst_9 : f32 to vector<512x32xf32>
    %26 = arith.maximumf %24, %25 : vector<512x32xf32>
    %c15_i32 = arith.constant 15 : i32
    %27 = tpu.dynamic_rotate %26 by %c15_i32 dim 0 : vector<512x32xf32>, i32 -> vector<512x32xf32>
    %c0_10 = arith.constant 0 : index
    %c0_11 = arith.constant 0 : index
    %28 = vector.load %arg1[%c0_10, %c0_11] : memref<512x9xf32, #tpu.memory_space<vmem>>, vector<512x1xf32>
    %29 = vector.broadcast %28 : vector<512x1xf32> to vector<512x32xf32>
    %30 = arith.mulf %27, %29 : vector<512x32xf32>
    %31 = arith.truncf %30 : vector<512x32xf32> to vector<512x32xbf16>
    %c14_i32 = arith.constant 14 : i32
    %32 = tpu.dynamic_rotate %26 by %c14_i32 dim 0 : vector<512x32xf32>, i32 -> vector<512x32xf32>
    %c0_12 = arith.constant 0 : index
    %c1 = arith.constant 1 : index
    %33 = vector.load %arg1[%c0_12, %c1] : memref<512x9xf32, #tpu.memory_space<vmem>>, vector<512x1xf32>
    %34 = vector.broadcast %33 : vector<512x1xf32> to vector<512x32xf32>
    %35 = arith.mulf %32, %34 : vector<512x32xf32>
    %36 = arith.truncf %35 : vector<512x32xf32> to vector<512x32xbf16>
    %c13_i32 = arith.constant 13 : i32
    %37 = tpu.dynamic_rotate %26 by %c13_i32 dim 0 : vector<512x32xf32>, i32 -> vector<512x32xf32>
    %c0_13 = arith.constant 0 : index
    %c2 = arith.constant 2 : index
    %38 = vector.load %arg1[%c0_13, %c2] : memref<512x9xf32, #tpu.memory_space<vmem>>, vector<512x1xf32>
    %39 = vector.broadcast %38 : vector<512x1xf32> to vector<512x32xf32>
    %40 = arith.mulf %37, %39 : vector<512x32xf32>
    %41 = arith.truncf %40 : vector<512x32xf32> to vector<512x32xbf16>
    %c1_i32 = arith.constant 1 : i32
    %42 = tpu.dynamic_rotate %26 by %c1_i32 dim 0 : vector<512x32xf32>, i32 -> vector<512x32xf32>
    %c0_14 = arith.constant 0 : index
    %c3 = arith.constant 3 : index
    %43 = vector.load %arg1[%c0_14, %c3] : memref<512x9xf32, #tpu.memory_space<vmem>>, vector<512x1xf32>
    %44 = vector.broadcast %43 : vector<512x1xf32> to vector<512x32xf32>
    %45 = arith.mulf %42, %44 : vector<512x32xf32>
    %46 = arith.truncf %45 : vector<512x32xf32> to vector<512x32xbf16>
    %c0_15 = arith.constant 0 : index
    %c4 = arith.constant 4 : index
    %47 = vector.load %arg1[%c0_15, %c4] : memref<512x9xf32, #tpu.memory_space<vmem>>, vector<512x1xf32>
    %48 = vector.broadcast %47 : vector<512x1xf32> to vector<512x32xf32>
    %49 = arith.mulf %26, %48 : vector<512x32xf32>
    %50 = arith.truncf %49 : vector<512x32xf32> to vector<512x32xbf16>
    %c511_i32 = arith.constant 511 : i32
    %51 = tpu.dynamic_rotate %26 by %c511_i32 dim 0 : vector<512x32xf32>, i32 -> vector<512x32xf32>
    %c0_16 = arith.constant 0 : index
    %c5 = arith.constant 5 : index
    %52 = vector.load %arg1[%c0_16, %c5] : memref<512x9xf32, #tpu.memory_space<vmem>>, vector<512x1xf32>
    %53 = vector.broadcast %52 : vector<512x1xf32> to vector<512x32xf32>
    %54 = arith.mulf %51, %53 : vector<512x32xf32>
    %55 = arith.truncf %54 : vector<512x32xf32> to vector<512x32xbf16>
    %c499_i32 = arith.constant 499 : i32
    %56 = tpu.dynamic_rotate %26 by %c499_i32 dim 0 : vector<512x32xf32>, i32 -> vector<512x32xf32>
    %c0_17 = arith.constant 0 : index
    %c6 = arith.constant 6 : index
    %57 = vector.load %arg1[%c0_17, %c6] : memref<512x9xf32, #tpu.memory_space<vmem>>, vector<512x1xf32>
    %58 = vector.broadcast %57 : vector<512x1xf32> to vector<512x32xf32>
    %59 = arith.mulf %56, %58 : vector<512x32xf32>
    %60 = arith.truncf %59 : vector<512x32xf32> to vector<512x32xbf16>
    %c498_i32 = arith.constant 498 : i32
    %61 = tpu.dynamic_rotate %26 by %c498_i32 dim 0 : vector<512x32xf32>, i32 -> vector<512x32xf32>
    %c0_18 = arith.constant 0 : index
    %c7 = arith.constant 7 : index
    %62 = vector.load %arg1[%c0_18, %c7] : memref<512x9xf32, #tpu.memory_space<vmem>>, vector<512x1xf32>
    %63 = vector.broadcast %62 : vector<512x1xf32> to vector<512x32xf32>
    %64 = arith.mulf %61, %63 : vector<512x32xf32>
    %65 = arith.truncf %64 : vector<512x32xf32> to vector<512x32xbf16>
    %c497_i32 = arith.constant 497 : i32
    %66 = tpu.dynamic_rotate %26 by %c497_i32 dim 0 : vector<512x32xf32>, i32 -> vector<512x32xf32>
    %c0_19 = arith.constant 0 : index
    %c8 = arith.constant 8 : index
    %67 = vector.load %arg1[%c0_19, %c8] : memref<512x9xf32, #tpu.memory_space<vmem>>, vector<512x1xf32>
    %68 = vector.broadcast %67 : vector<512x1xf32> to vector<512x32xf32>
    %69 = arith.mulf %66, %68 : vector<512x32xf32>
    %70 = arith.truncf %69 : vector<512x32xf32> to vector<512x32xbf16>
    %71 = tpu.concatenate %31, %36, %41, %46, %50, %55, %60, %65, %70 in 1 : vector<512x32xbf16>, vector<512x32xbf16>, vector<512x32xbf16>, vector<512x32xbf16>, vector<512x32xbf16>, vector<512x32xbf16>, vector<512x32xbf16>, vector<512x32xbf16>, vector<512x32xbf16> -> vector<512x288xbf16>
    %c0_20 = arith.constant 0 : index
    %c0_21 = arith.constant 0 : index
    %72 = vector.load %arg2[%c0_20, %c0_21] : memref<288x128xbf16, #tpu.memory_space<vmem>>, vector<288x128xbf16>
    %cst_22 = arith.constant dense<0.000000e+00> : vector<512x128xf32>
    %73 = tpu.matmul %71, %72, %cst_22 {dimension_numbers = #tpu.dot_dimension_numbers<[1], [0], [0], [1], [0, 0, 1, 1], [], []>} : vector<512x288xbf16>, vector<288x128xbf16>, vector<512x128xf32> -> vector<512x128xf32>
    %cst_23 = arith.constant dense<0.000000e+00> : vector<128xf32>
    %74 = vector.multi_reduction <add>, %73, %cst_23 [0] : vector<512x128xf32> to vector<128xf32>
    %75 = vector.shape_cast %74 : vector<128xf32> to vector<1x128xf32>
    %cst_24 = arith.constant 0.00255102036 : f32
    %76 = vector.broadcast %cst_24 : f32 to vector<1x128xf32>
    %77 = arith.mulf %75, %76 : vector<1x128xf32>
    %78 = arith.mulf %73, %73 : vector<512x128xf32>
    %cst_25 = arith.constant dense<0.000000e+00> : vector<128xf32>
    %79 = vector.multi_reduction <add>, %78, %cst_25 [0] : vector<512x128xf32> to vector<128xf32>
    %80 = vector.shape_cast %79 : vector<128xf32> to vector<1x128xf32>
    %cst_26 = arith.constant 0.00255102036 : f32
    %81 = vector.broadcast %cst_26 : f32 to vector<1x128xf32>
    %82 = arith.mulf %80, %81 : vector<1x128xf32>
    %c0_27 = arith.constant 0 : index
    %c0_28 = arith.constant 0 : index
    %83 = vector.load %arg5[%c0_27, %c0_28] : memref<1x128xf32, #tpu.memory_space<vmem>>, vector<1x128xf32>
    %84 = arith.mulf %77, %77 : vector<1x128xf32>
    %85 = arith.subf %82, %84 : vector<1x128xf32>
    %cst_29 = arith.constant 1.000000e-03 : f32
    %86 = vector.broadcast %cst_29 : f32 to vector<1x128xf32>
    %87 = arith.addf %85, %86 : vector<1x128xf32>
    %88 = math.rsqrt %87 : vector<1x128xf32>
    %89 = arith.mulf %83, %88 : vector<1x128xf32>
    %c0_30 = arith.constant 0 : index
    %c0_31 = arith.constant 0 : index
    %90 = vector.load %arg6[%c0_30, %c0_31] : memref<1x128xf32, #tpu.memory_space<vmem>>, vector<1x128xf32>
    %91 = arith.mulf %77, %89 : vector<1x128xf32>
    %92 = arith.subf %90, %91 : vector<1x128xf32>
    %93 = vector.broadcast %89 : vector<1x128xf32> to vector<512x128xf32>
    %94 = arith.mulf %73, %93 : vector<512x128xf32>
    %95 = vector.broadcast %92 : vector<1x128xf32> to vector<512x128xf32>
    %96 = arith.addf %94, %95 : vector<512x128xf32>
    %c0_32 = arith.constant 0 : index
    %c0_33 = arith.constant 0 : index
    %97 = vector.load %arg7[%c0_32, %c0_33] : memref<512x128xf32, #tpu.memory_space<vmem>>, vector<512x128xf32>
    tpu.vector_store %arg7[%c0_32, %c0_33], %96 {strides = array<i32>} : memref<512x128xf32, #tpu.memory_space<vmem>>, vector<512x128xf32>,
    return
  }
}

</mosaic_0001>

<llo_original>
// kernel: gnet_block_forward.2
$region0: #{gnet_block_forward.2}
  #allocation0 [shape = 'u32[]', space=smem, size = 0x4, offset = 0x4, fixed_abs, tag = 'smem constant byte address 0x4 - core index']
  #allocation1 [shape = 'u32[144,128]{1,0:T(1,128)}', space=vmem, size = 0x12000, scoped, tag = 'internal scratch']
  %s0 = inlined_call_operand.vmem [shape: bf16[512,256], index: 0, kind: input, shape index: {}]
  %s1 = inlined_call_operand.vmem [shape: bf16[256,32], index: 1, kind: input, shape index: {}]
  %s2 = inlined_call_operand.vmem [shape: bf16[512,32], index: 2, kind: output, shape index: {}]
  %s3 = sld [smem:[#allocation0]]
  $region41: #{gnet_block_forward.2} parent=0
    _
  %s5 = ssub.s32 1, %s3
  %s6 = scalar_select 0, %s5, %s3
  loop: start=0, step=1, limit=4
  $region2: #{gnet_block_forward.2} parent=0 // loop_pre_header
    _
  $region3: #{gnet_block_forward.2} parent=0 // loop_header
    %s8 = sphi 0, %s12
    %p9 = scmp.ge.s32.totalorder %s8, 4
    %s18 = sphi 0, %s20
    %s21 = sphi 0, %s18
    %s22 = sphi 0, %s21
    %s38 = sphi 0, %s22
    %s42 = sphi 0, %s42
    %s44 = sphi 0, %s42
    %s45 = sphi 0, %s44
    %s59 = sphi 0, %s45
    %s65 = sphi 0, %s67
    %s68 = sphi 0, %s65
    %s69 = sphi 0, %s68
    %s85 = sphi 0, %s69
  $region4: #{gnet_block_forward.2} parent=0 // loop_header_branch
    %11 = sbr.rel (%p9) target = $region8
  $region5: #{gnet_block_forward.2} parent=0 // loop_body
    %s13 = ssub.s32 %s8, 1
    %s14 = ssub.s32 %s8, 2
    %s15 = sadd.s32 %s8, 1
    %s16 = ssub.s32 %s8, %s15
    %p17 = scmp.eq.s32.totalorder %s16, 0
    %s19 = sadd.s32 %s18, 1
    %s20 = scalar_select %p17, %s18, %s19
    %p23 = pneg %p17
    %p24 = scmp.eq.s32.totalorder %s8, 1
    %p25 = por %p23, %p24
    %p26 = scmp.ne.s32.totalorder %s18, %s21
    %p27 = scmp.eq.s32.totalorder %s8, 0
    %p28 = por %p26, %p27
    %p29 = scmp.ne.s32.totalorder %s18, %s21
    %p30 = scmp.eq.s32.totalorder %s13, 1
    %p31 = por %p29, %p30
    %p32 = scmp.ne.s32.totalorder %s21, %s22
    %p33 = scmp.eq.s32.totalorder %s13, 0
    %p34 = por %p32, %p33
    %p35 = scmp.ne.s32.totalorder %s21, %s22
    %p36 = scmp.eq.s32.totalorder %s14, 1
    %p37 = por %p35, %p36
    %p39 = scmp.ne.s32.totalorder %s22, %s38
    %p40 = scmp.eq.s32.totalorder %s14, 0
    %p41 = por %p39, %p40
    %s43 = sadd.s32 %s42, 1
    %p46 = scmp.eq.s32.totalorder %s8, 1
    %p47 = scmp.ne.s32.totalorder %s42, %s44
    %p48 = scmp.eq.s32.totalorder %s8, 0
    %p49 = por %p47, %p48
    %p50 = scmp.ne.s32.totalorder %s42, %s44
    %p51 = scmp.eq.s32.totalorder %s13, 1
    %p52 = por %p50, %p51
    %p53 = scmp.ne.s32.totalorder %s44, %s45
    %p54 = scmp.eq.s32.totalorder %s13, 0
    %p55 = por %p53, %p54
    %p56 = scmp.ne.s32.totalorder %s44, %s45
    %p57 = scmp.eq.s32.totalorder %s14, 1
    %p58 = por %p56, %p57
    %p60 = scmp.ne.s32.totalorder %s45, %s59
    %p61 = scmp.eq.s32.totalorder %s14, 0
    %p62 = por %p60, %p61
    %s63 = ssub.s32 %s8, %s15
    %p64 = scmp.eq.s32.totalorder %s63, 0
    %s66 = sadd.s32 %s65, 1
    %s67 = scalar_select %p64, %s65, %s66
    %p70 = pneg %p64
    %p71 = scmp.eq.s32.totalorder %s8, 1
    %p72 = por %p70, %p71
    %p73 = scmp.ne.s32.totalorder %s65, %s68
    %p74 = scmp.eq.s32.totalorder %s8, 0
    %p75 = por %p73, %p74
    %p76 = scmp.ne.s32.totalorder %s65, %s68
    %p77 = scmp.eq.s32.totalorder %s13, 1
    %p78 = por %p76, %p77
    %p79 = scmp.ne.s32.totalorder %s68, %s69
    %p80 = scmp.eq.s32.totalorder %s13, 0
    %p81 = por %p79, %p80
    %p82 = scmp.ne.s32.totalorder %s68, %s69
    %p83 = scmp.eq.s32.totalorder %s14, 1
    %p84 = por %p82, %p83
    %p86 = scmp.ne.s32.totalorder %s69, %s85
    %p87 = scmp.eq.s32.totalorder %s14, 0
    %p88 = por %p86, %p87
    %p89 = scmp.le.s32.totalorder 1, %s8
    %p90 = scmp.lt.s32.totalorder %s8, 3
    %p91 = pnand %p89, %p90
    %p92 = pneg %p91
    // Predicated region
    $region9: #{gnet_block_forward.2} parent=5 // pred_check
      _
    $region10: #{gnet_block_forward.2} parent=5 // pred_check_branch
      %94 = sbr.rel (%p91) target = $region12
    $region11: #{gnet_block_forward.2} parent=5 // pred_region
      %s95 = ssub.s32 %s8, 1
      // Predicated region
      $region13: #{gnet_block_forward.2} parent=11 // pred_check
        %p96 = pneg %p55
      $region14: #{gnet_block_forward.2} parent=11 // pred_check_branch
        %98 = sbr.rel (%p96) target = $region16
      $region15: #{gnet_block_forward.2} parent=11 // pred_region
        _
      $region16: #{gnet_block_forward.2} parent=11 // pred_fallthru
        _
    $region12: #{gnet_block_forward.2} parent=5 // pred_fallthru
      _
    %p99 = scmp.lt.s32.totalorder %s8, 2
    // Predicated region
    $region17: #{gnet_block_forward.2} parent=5 // pred_check
      %p100 = pneg %p99
    $region18: #{gnet_block_forward.2} parent=5 // pred_check_branch
      %102 = sbr.rel (%p100) target = $region20
    $region19: #{gnet_block_forward.2} parent=5 // pred_region
      // Predicated region
      $region21: #{gnet_block_forward.2} parent=19 // pred_check
        %p103 = pneg %p28
      $region22: #{gnet_block_forward.2} parent=19 // pred_check_branch
        %105 = sbr.rel (%p103) target = $region24
      $region23: #{gnet_block_forward.2} parent=19 // pred_region
        %s106 = smul.u32 32, %s8
        %p107 = scmp.lt.s32.totalorder %s106, 63
        %s108 = scalar_select %p107, %s106, 63
        %s109 = smul.addr %s108, 2
        %s110 = smul.addr %s109, 4
        %s111 = scalar_lea.vmem %s0, %s110
        %s112 = smul.u32 32, %s8
      $region24: #{gnet_block_forward.2} parent=19 // pred_fallthru
        _
    $region20: #{gnet_block_forward.2} parent=5 // pred_fallthru
      _
    %p113 = scmp.le.s32.totalorder 1, %s8
    %p114 = scmp.lt.s32.totalorder %s8, 3
    %p115 = pnand %p113, %p114
    %p116 = pneg %p115
    // Predicated region
    $region25: #{gnet_block_forward.2} parent=5 // pred_check
      _
    $region26: #{gnet_block_forward.2} parent=5 // pred_check_branch
      %118 = sbr.rel (%p115) target = $region28
    $region27: #{gnet_block_forward.2} parent=5 // pred_region
      %s119 = ssub.s32 %s8, 1
      %s120 = smul.u32 32, %s13
      %p121 = scmp.lt.s32.totalorder %s120, 63
      %s122 = scalar_select %p121, %s120, 63
      %s123 = smul.addr %s122, 2
      %s124 = smul.addr %s123, 4
      %s125 = scalar_lea.vmem %s0, %s124
      %p126 = pneg %p34
      %p127 = pneg %p31
      %p128 = pneg %p55
      %p129 = pneg %p52
      %p130 = pneg %p81
      %p131 = pneg %p78
      %s132 = smul.u32 32, %s13
      %p133 = scmp.lt.s32.totalorder %s132, 63
      %s134 = scalar_select %p133, %s132, 63
      %s135 = smul.addr %s134, 4
      %s136 = scalar_lea.vmem %s2, %s135
      %s137 = smul.u32 32, %s13
      %p138 = scmp.lt.s32.totalorder %s137, 63
      %s139 = scalar_select %p138, %s137, 63
      %s140 = smul.addr %s139, 2
      %s141 = smul.addr %s140, 4
      %s142 = scalar_lea.vmem %s0, %s141
      %s143 = smul.u32 32, %s13
      %s144 = smul.u32 32, %s13
      %p145 = scmp.lt.s32.totalorder %s144, 63
      %s146 = scalar_select %p145, %s144, 63
      %s147 = smul.addr %s146, 4
      %s148 = scalar_lea.vmem %s2, %s147
      %s149 = smul.u32 32, %s13
      %v151 = vld [vmem:[%s142] sm:$0xff]
      %v152 = vld [vmem:[%s142 + $0x8] sm:$0xff]
      %v153 = vld [vmem:[%s142 + $0x10] sm:$0xff]
      %v154 = vld [vmem:[%s142 + $0x18] sm:$0xff]
      %v155 = vld [vmem:[%s142 + $0x20] sm:$0xff]
      %v156 = vld [vmem:[%s142 + $0x28] sm:$0xff]
      %v157 = vld [vmem:[%s142 + $0x30] sm:$0xff]
      %v158 = vld [vmem:[%s142 + $0x38] sm:$0xff]
      %v159 = vld [vmem:[%s142 + $0x40] sm:$0xff]
      %v160 = vld [vmem:[%s142 + $0x48] sm:$0xff]
      %v161 = vld [vmem:[%s142 + $0x50] sm:$0xff]
      %v162 = vld [vmem:[%s142 + $0x58] sm:$0xff]
      %v163 = vld [vmem:[%s142 + $0x60] sm:$0xff]
      %v164 = vld [vmem:[%s142 + $0x68] sm:$0xff]
      %v165 = vld [vmem:[%s142 + $0x70] sm:$0xff]
      %v166 = vld [vmem:[%s142 + $0x78] sm:$0xff]
      %v167 = vld [vmem:[%s142 + $0x80] sm:$0xff]
      %v168 = vld [vmem:[%s142 + $0x88] sm:$0xff]
      %v169 = vld [vmem:[%s142 + $0x90] sm:$0xff]
      %v170 = vld [vmem:[%s142 + $0x98] sm:$0xff]
      %v171 = vld [vmem:[%s142 + $0xa0] sm:$0xff]
      %v172 = vld [vmem:[%s142 + $0xa8] sm:$0xff]
      %v173 = vld [vmem:[%s142 + $0xb0] sm:$0xff]
      %v174 = vld [vmem:[%s142 + $0xb8] sm:$0xff]
      %v175 = vld [vmem:[%s142 + $0xc0] sm:$0xff]
      %v176 = vld [vmem:[%s142 + $0xc8] sm:$0xff]
      %v177 = vld [vmem:[%s142 + $0xd0] sm:$0xff]
      %v178 = vld [vmem:[%s142 + $0xd8] sm:$0xff]
      %v179 = vld [vmem:[%s142 + $0xe0] sm:$0xff]
      %v180 = vld [vmem:[%s142 + $0xe8] sm:$0xff]
      %v181 = vld [vmem:[%s142 + $0xf0] sm:$0xff]
      %v182 = vld [vmem:[%s142 + $0xf8] sm:$0xff]
      %v183 = vld [vmem:[%s1] sm:$0xf]
      %v184 = vld [vmem:[%s1 + $0x4] sm:$0xf]
      %v185 = vld [vmem:[%s1 + $0x8] sm:$0xf]
      %v186 = vld [vmem:[%s1 + $0xc] sm:$0xf]
      %v187 = vld [vmem:[%s1 + $0x10] sm:$0xf]
      %v188 = vld [vmem:[%s1 + $0x14] sm:$0xf]
      %v189 = vld [vmem:[%s1 + $0x18] sm:$0xf]
      %v190 = vld [vmem:[%s1 + $0x1c] sm:$0xf]
      %v191 = vld [vmem:[%s1 + $0x20] sm:$0xf]
      %v192 = vld [vmem:[%s1 + $0x24] sm:$0xf]
      %v193 = vld [vmem:[%s1 + $0x28] sm:$0xf]
      %v194 = vld [vmem:[%s1 + $0x2c] sm:$0xf]
      %v195 = vld [vmem:[%s1 + $0x30] sm:$0xf]
      %v196 = vld [vmem:[%s1 + $0x34] sm:$0xf]
      %v197 = vld [vmem:[%s1 + $0x38] sm:$0xf]
      %v198 = vld [vmem:[%s1 + $0x3c] sm:$0xf]
      %v199 = vld [vmem:[%s1 + $0x40] sm:$0xf]
      %v200 = vld [vmem:[%s1 + $0x44] sm:$0xf]
      %v201 = vld [vmem:[%s1 + $0x48] sm:$0xf]
      %v202 = vld [vmem:[%s1 + $0x4c] sm:$0xf]
      %v203 = vld [vmem:[%s1 + $0x50] sm:$0xf]
      %v204 = vld [vmem:[%s1 + $0x54] sm:$0xf]
      %v205 = vld [vmem:[%s1 + $0x58] sm:$0xf]
      %v206 = vld [vmem:[%s1 + $0x5c] sm:$0xf]
      %v207 = vld [vmem:[%s1 + $0x60] sm:$0xf]
      %v208 = vld [vmem:[%s1 + $0x64] sm:$0xf]
      %v209 = vld [vmem:[%s1 + $0x68] sm:$0xf]
      %v210 = vld [vmem:[%s1 + $0x6c] sm:$0xf]
      %v211 = vld [vmem:[%s1 + $0x70] sm:$0xf]
      %v212 = vld [vmem:[%s1 + $0x74] sm:$0xf]
      %v213 = vld [vmem:[%s1 + $0x78] sm:$0xf]
      %v214 = vld [vmem:[%s1 + $0x7c] sm:$0xf]
      %v247 = vunpack.c.l.b16 %v151
      %v248 = vunpack.c.h.b16 %v151
      %v249 = vunpack.c.l.b16 %v152
      %v250 = vunpack.c.h.b16 %v152
      %v251 = vunpack.c.l.b16 %v153
      %v252 = vunpack.c.h.b16 %v153
      %v253 = vunpack.c.l.b16 %v154
      %v254 = vunpack.c.h.b16 %v154
      %v255 = vunpack.c.l.b16 %v155
      %v256 = vunpack.c.h.b16 %v155
      %v257 = vunpack.c.l.b16 %v156
      %v258 = vunpack.c.h.b16 %v156
      %v259 = vunpack.c.l.b16 %v157
      %v260 = vunpack.c.h.b16 %v157
      %v261 = vunpack.c.l.b16 %v158
      %v262 = vunpack.c.h.b16 %v158
      %v263 = vunpack.c.l.b16 %v159
      %v264 = vunpack.c.h.b16 %v159
      %v265 = vunpack.c.l.b16 %v160
      %v266 = vunpack.c.h.b16 %v160
      %v267 = vunpack.c.l.b16 %v161
      %v268 = vunpack.c.h.b16 %v161
      %v269 = vunpack.c.l.b16 %v162
      %v270 = vunpack.c.h.b16 %v162
      %v271 = vunpack.c.l.b16 %v163
      %v272 = vunpack.c.h.b16 %v163
      %v273 = vunpack.c.l.b16 %v164
      %v274 = vunpack.c.h.b16 %v164
      %v275 = vunpack.c.l.b16 %v165
      %v276 = vunpack.c.h.b16 %v165
      %v277 = vunpack.c.l.b16 %v166
      %v278 = vunpack.c.h.b16 %v166
      %v279 = vunpack.c.l.b16 %v167
      %v280 = vunpack.c.h.b16 %v167
      %v281 = vunpack.c.l.b16 %v168
      %v282 = vunpack.c.h.b16 %v168
      %v283 = vunpack.c.l.b16 %v169
      %v284 = vunpack.c.h.b16 %v169
      %v285 = vunpack.c.l.b16 %v170
      %v286 = vunpack.c.h.b16 %v170
      %v287 = vunpack.c.l.b16 %v171
      %v288 = vunpack.c.h.b16 %v171
      %v289 = vunpack.c.l.b16 %v172
      %v290 = vunpack.c.h.b16 %v172
      %v291 = vunpack.c.l.b16 %v173
      %v292 = vunpack.c.h.b16 %v173
      %v293 = vunpack.c.l.b16 %v174
      %v294 = vunpack.c.h.b16 %v174
      %v295 = vunpack.c.l.b16 %v175
      %v296 = vunpack.c.h.b16 %v175
      %v297 = vunpack.c.l.b16 %v176
      %v298 = vunpack.c.h.b16 %v176
      %v299 = vunpack.c.l.b16 %v177
      %v300 = vunpack.c.h.b16 %v177
      %v301 = vunpack.c.l.b16 %v178
      %v302 = vunpack.c.h.b16 %v178
      %v303 = vunpack.c.l.b16 %v179
      %v304 = vunpack.c.h.b16 %v179
      %v305 = vunpack.c.l.b16 %v180
      %v306 = vunpack.c.h.b16 %v180
      %v307 = vunpack.c.l.b16 %v181
      %v308 = vunpack.c.h.b16 %v181
      %v309 = vunpack.c.l.b16 %v182
      %v310 = vunpack.c.h.b16 %v182
      %v311 = vpack.c.b16 %v249, %v247
      %v312 = vpack.c.b16 %v250, %v248
      %v313 = vpack.c.b16 %v253, %v251
      %v314 = vpack.c.b16 %v254, %v252
      %v315 = vpack.c.b16 %v257, %v255
      %v316 = vpack.c.b16 %v258, %v256
      %v317 = vpack.c.b16 %v261, %v259
      %v318 = vpack.c.b16 %v262, %v260
      %v319 = vpack.c.b16 %v265, %v263
      %v320 = vpack.c.b16 %v266, %v264
      %v321 = vpack.c.b16 %v269, %v267
      %v322 = vpack.c.b16 %v270, %v268
      %v323 = vpack.c.b16 %v273, %v271
      %v324 = vpack.c.b16 %v274, %v272
      %v325 = vpack.c.b16 %v277, %v275
      %v326 = vpack.c.b16 %v278, %v276
      %v327 = vpack.c.b16 %v281, %v279
      %v328 = vpack.c.b16 %v282, %v280
      %v329 = vpack.c.b16 %v285, %v283
      %v330 = vpack.c.b16 %v286, %v284
      %v331 = vpack.c.b16 %v289, %v287
      %v332 = vpack.c.b16 %v290, %v288
      %v333 = vpack.c.b16 %v293, %v291
      %v334 = vpack.c.b16 %v294, %v292
      %v335 = vpack.c.b16 %v297, %v295
      %v336 = vpack.c.b16 %v298, %v296
      %v337 = vpack.c.b16 %v301, %v299
      %v338 = vpack.c.b16 %v302, %v300
      %v339 = vpack.c.b16 %v305, %v303
      %v340 = vpack.c.b16 %v306, %v304
      %v341 = vpack.c.b16 %v309, %v307
      %v342 = vpack.c.b16 %v310, %v308
      %v407 = vunpack.c.l.b16 %v183
      %v408 = vunpack.c.l.b16 %v184
      %v409 = vunpack.c.l.b16 %v185
      %v410 = vunpack.c.l.b16 %v186
      %v411 = vunpack.c.l.b16 %v187
      %v412 = vunpack.c.l.b16 %v188
      %v413 = vunpack.c.l.b16 %v189
      %v414 = vunpack.c.l.b16 %v190
      %v415 = vunpack.c.l.b16 %v191
      %v416 = vunpack.c.l.b16 %v192
      %v417 = vunpack.c.l.b16 %v193
      %v418 = vunpack.c.l.b16 %v194
      %v419 = vunpack.c.l.b16 %v195
      %v420 = vunpack.c.l.b16 %v196
      %v421 = vunpack.c.l.b16 %v197
      %v422 = vunpack.c.l.b16 %v198
      %v423 = vunpack.c.l.b16 %v199
      %v424 = vunpack.c.l.b16 %v200
      %v425 = vunpack.c.l.b16 %v201
      %v426 = vunpack.c.l.b16 %v202
      %v427 = vunpack.c.l.b16 %v203
      %v428 = vunpack.c.l.b16 %v204
      %v429 = vunpack.c.l.b16 %v205
      %v430 = vunpack.c.l.b16 %v206
      %v431 = vunpack.c.l.b16 %v207
      %v432 = vunpack.c.l.b16 %v208
      %v433 = vunpack.c.l.b16 %v209
      %v434 = vunpack.c.l.b16 %v210
      %v435 = vunpack.c.l.b16 %v211
      %v436 = vunpack.c.l.b16 %v212
      %v437 = vunpack.c.l.b16 %v213
      %v438 = vunpack.c.l.b16 %v214
      %v439 = vpack.c.b16 %v408, %v407
      %v440 = vpack.c.b16 %v410, %v409
      %v441 = vpack.c.b16 %v412, %v411
      %v442 = vpack.c.b16 %v414, %v413
      %v443 = vpack.c.b16 %v416, %v415
      %v444 = vpack.c.b16 %v418, %v417
      %v445 = vpack.c.b16 %v420, %v419
      %v446 = vpack.c.b16 %v422, %v421
      %v447 = vpack.c.b16 %v424, %v423
      %v448 = vpack.c.b16 %v426, %v425
      %v449 = vpack.c.b16 %v428, %v427
      %v450 = vpack.c.b16 %v430, %v429
      %v451 = vpack.c.b16 %v432, %v431
      %v452 = vpack.c.b16 %v434, %v433
      %v453 = vpack.c.b16 %v436, %v435
      %v454 = vpack.c.b16 %v438, %v437
      %471 = vmatprep.subr.bf16.mxu0 0
      %472 = vmatpush1.bf16.msra.mxu0 %v446
      %473 = vmatprep.subr.bf16.mxu0 0
      %474 = vmatpush1.bf16.msra.mxu0 %v445
      %475 = vmatprep.subr.bf16.mxu0 0
      %476 = vmatpush1.bf16.msra.mxu0 %v444
      %477 = vmatprep.subr.bf16.mxu0 0
      %478 = vmatpush1.bf16.msra.mxu0 %v443
      %479 = vmatprep.subr.bf16.mxu0 0
      %480 = vmatpush1.bf16.msra.mxu0 %v442
      %481 = vmatprep.subr.bf16.mxu0 0
      %482 = vmatpush1.bf16.msra.mxu0 %v441
      %483 = vmatprep.subr.bf16.mxu0 0
      %484 = vmatpush1.bf16.msra.mxu0 %v440
      %485 = vmatprep.subr.bf16.mxu0 0
      %486 = vmatpush1.bf16.msra.mxu0 %v439
      %487 = vmatprep.subr.bf16.mxu0 0
      %488 = vmatpush2.bf16.msra.mxu0 %v454
      %489 = vmatprep.subr.bf16.mxu0 0
      %490 = vmatpush2.bf16.msra.mxu0 %v453
      %491 = vmatprep.subr.bf16.mxu0 0
      %492 = vmatpush2.bf16.msra.mxu0 %v452
      %493 = vmatprep.subr.bf16.mxu0 0
      %494 = vmatpush2.bf16.msra.mxu0 %v451
      %495 = vmatprep.subr.bf16.mxu0 0
      %496 = vmatpush2.bf16.msra.mxu0 %v450
      %497 = vmatprep.subr.bf16.mxu0 0
      %498 = vmatpush2.bf16.msra.mxu0 %v449
      %499 = vmatprep.subr.bf16.mxu0 0
      %500 = vmatpush2.bf16.msra.mxu0 %v448
      %501 = vmatprep.subr.bf16.mxu0 0
      %502 = vmatpush2.bf16.msra.mxu0 %v447
      %503 = vmatprep.mubr.bf16.mxu0 %v312
      %504 = vmatmul.mubr.bf16.gmra.mxu0 %v311
      %v505 = vpop.f32.mrf.mxu0
      %v506 = vadd.f32 0.0, %v505
      %v507 = vpop.f32.mrf.mxu0
      %v508 = vpop.f32.mrf.mxu0
      %v509 = vadd.f32 0.0, %v508
      %v510 = vpop.f32.mrf.mxu0
      %511 = vmatprep.mubr.bf16.mxu0 %v314
      %512 = vmatmul.mubr.bf16.gmra.mxu0 %v313
      %v513 = vpop.f32.mrf.mxu0
      %v514 = vadd.f32 0.0, %v513
      %v515 = vpop.f32.mrf.mxu0
      %v516 = vpop.f32.mrf.mxu0
      %v517 = vadd.f32 0.0, %v516
      %v518 = vpop.f32.mrf.mxu0
      %519 = vmatprep.mubr.bf16.mxu0 %v316
      %520 = vmatmul.mubr.bf16.gmra.mxu0 %v315
      %v521 = vpop.f32.mrf.mxu0
      %v522 = vadd.f32 0.0, %v521
      %v523 = vpop.f32.mrf.mxu0
      %v524 = vpop.f32.mrf.mxu0
      %v525 = vadd.f32 0.0, %v524
      %v526 = vpop.f32.mrf.mxu0
      %527 = vmatprep.mubr.bf16.mxu0 %v318
      %528 = vmatmul.mubr.bf16.gmra.mxu0 %v317
      %v529 = vpop.f32.mrf.mxu0
      %v530 = vadd.f32 0.0, %v529
      %v531 = vpop.f32.mrf.mxu0
      %v532 = vpop.f32.mrf.mxu0
      %v533 = vadd.f32 0.0, %v532
      %v534 = vpop.f32.mrf.mxu0
      %535 = vmatprep.mubr.bf16.mxu0 %v320
      %536 = vmatmul.mubr.bf16.gmra.mxu0 %v319
      %v537 = vpop.f32.mrf.mxu0
      %v538 = vadd.f32 0.0, %v537
      %v539 = vpop.f32.mrf.mxu0
      %v540 = vpop.f32.mrf.mxu0
      %v541 = vadd.f32 0.0, %v540
      %v542 = vpop.f32.mrf.mxu0
      %543 = vmatprep.mubr.bf16.mxu0 %v322
      %544 = vmatmul.mubr.bf16.gmra.mxu0 %v321
      %v545 = vpop.f32.mrf.mxu0
      %v546 = vadd.f32 0.0, %v545
      %v547 = vpop.f32.mrf.mxu0
      %v548 = vpop.f32.mrf.mxu0
      %v549 = vadd.f32 0.0, %v548
      %v550 = vpop.f32.mrf.mxu0
      %551 = vmatprep.mubr.bf16.mxu0 %v324
      %552 = vmatmul.mubr.bf16.gmra.mxu0 %v323
      %v553 = vpop.f32.mrf.mxu0
      %v554 = vadd.f32 0.0, %v553
      %v555 = vpop.f32.mrf.mxu0
      %v556 = vpop.f32.mrf.mxu0
      %v557 = vadd.f32 0.0, %v556
      %v558 = vpop.f32.mrf.mxu0
      %559 = vmatprep.mubr.bf16.mxu0 %v326
      %560 = vmatmul.mubr.bf16.gmra.mxu0 %v325
      %v561 = vpop.f32.mrf.mxu0
      %v562 = vadd.f32 0.0, %v561
      %v563 = vpop.f32.mrf.mxu0
      %v564 = vpop.f32.mrf.mxu0
      %v565 = vadd.f32 0.0, %v564
      %v566 = vpop.f32.mrf.mxu0
      %567 = vmatprep.mubr.bf16.mxu0 %v328
      %568 = vmatmul.mubr.bf16.gmra.mxu0 %v327
      %v569 = vpop.f32.mrf.mxu0
      %v570 = vadd.f32 0.0, %v569
      %v571 = vpop.f32.mrf.mxu0
      %v572 = vpop.f32.mrf.mxu0
      %v573 = vadd.f32 0.0, %v572
      %v574 = vpop.f32.mrf.mxu0
      %575 = vmatprep.mubr.bf16.mxu0 %v330
      %576 = vmatmul.mubr.bf16.gmra.mxu0 %v329
      %v577 = vpop.f32.mrf.mxu0
      %v578 = vadd.f32 0.0, %v577
      %v579 = vpop.f32.mrf.mxu0
      %v580 = vpop.f32.mrf.mxu0
      %v581 = vadd.f32 0.0, %v580
      %v582 = vpop.f32.mrf.mxu0
      %583 = vmatprep.mubr.bf16.mxu0 %v332
      %584 = vmatmul.mubr.bf16.gmra.mxu0 %v331
      %v585 = vpop.f32.mrf.mxu0
      %v586 = vadd.f32 0.0, %v585
      %v587 = vpop.f32.mrf.mxu0
      %v588 = vpop.f32.mrf.mxu0
      %v589 = vadd.f32 0.0, %v588
      %v590 = vpop.f32.mrf.mxu0
      %591 = vmatprep.mubr.bf16.mxu0 %v334
      %592 = vmatmul.mubr.bf16.gmra.mxu0 %v333
      %v593 = vpop.f32.mrf.mxu0
      %v594 = vadd.f32 0.0, %v593
      %v595 = vpop.f32.mrf.mxu0
      %v596 = vpop.f32.mrf.mxu0
      %v597 = vadd.f32 0.0, %v596
      %v598 = vpop.f32.mrf.mxu0
      %599 = vmatprep.mubr.bf16.mxu0 %v336
      %600 = vmatmul.mubr.bf16.gmra.mxu0 %v335
      %v601 = vpop.f32.mrf.mxu0
      %v602 = vadd.f32 0.0, %v601
      %v603 = vpop.f32.mrf.mxu0
      %v604 = vpop.f32.mrf.mxu0
      %v605 = vadd.f32 0.0, %v604
      %v606 = vpop.f32.mrf.mxu0
      %607 = vmatprep.mubr.bf16.mxu0 %v338
      %608 = vmatmul.mubr.bf16.gmra.mxu0 %v337
      %v609 = vpop.f32.mrf.mxu0
      %v610 = vadd.f32 0.0, %v609
      %v611 = vpop.f32.mrf.mxu0
      %v612 = vpop.f32.mrf.mxu0
      %v613 = vadd.f32 0.0, %v612
      %v614 = vpop.f32.mrf.mxu0
      %615 = vmatprep.mubr.bf16.mxu0 %v340
      %616 = vmatmul.mubr.bf16.gmra.mxu0 %v339
      %v617 = vpop.f32.mrf.mxu0
      %v618 = vadd.f32 0.0, %v617
      %v619 = vpop.f32.mrf.mxu0
      %v620 = vpop.f32.mrf.mxu0
      %v621 = vadd.f32 0.0, %v620
      %v622 = vpop.f32.mrf.mxu0
      %623 = vmatprep.mubr.bf16.mxu0 %v342
      %624 = vmatmul.mubr.bf16.gmra.mxu0 %v341
      %v625 = vpop.f32.mrf.mxu0
      %v626 = vadd.f32 0.0, %v625
      %v627 = vpop.f32.mrf.mxu0
      %v628 = vpop.f32.mrf.mxu0
      %v629 = vadd.f32 0.0, %v628
      %v630 = vpop.f32.mrf.mxu0
      %631 = vdwg.mxu0
      %v632 = vpack.c.bf16 %v509, %v506
      %v633 = vpack.c.bf16 %v517, %v514
      %v634 = vpack.c.bf16 %v525, %v522
      %v635 = vpack.c.bf16 %v533, %v530
      %v636 = vpack.c.bf16 %v541, %v538
      %v637 = vpack.c.bf16 %v549, %v546
      %v638 = vpack.c.bf16 %v557, %v554
      %v639 = vpack.c.bf16 %v565, %v562
      %v640 = vpack.c.bf16 %v573, %v570
      %v641 = vpack.c.bf16 %v581, %v578
      %v642 = vpack.c.bf16 %v589, %v586
      %v643 = vpack.c.bf16 %v597, %v594
      %v644 = vpack.c.bf16 %v605, %v602
      %v645 = vpack.c.bf16 %v613, %v610
      %v646 = vpack.c.bf16 %v621, %v618
      %v647 = vpack.c.bf16 %v629, %v626
      %v664 = vunpack.c.l.b16 %v632
      %v665 = vunpack.c.h.b16 %v632
      %v666 = vunpack.c.l.b16 %v633
      %v667 = vunpack.c.h.b16 %v633
      %v668 = vunpack.c.l.b16 %v634
      %v669 = vunpack.c.h.b16 %v634
      %v670 = vunpack.c.l.b16 %v635
      %v671 = vunpack.c.h.b16 %v635
      %v672 = vunpack.c.l.b16 %v636
      %v673 = vunpack.c.h.b16 %v636
      %v674 = vunpack.c.l.b16 %v637
      %v675 = vunpack.c.h.b16 %v637
      %v676 = vunpack.c.l.b16 %v638
      %v677 = vunpack.c.h.b16 %v638
      %v678 = vunpack.c.l.b16 %v639
      %v679 = vunpack.c.h.b16 %v639
      %v680 = vunpack.c.l.b16 %v640
      %v681 = vunpack.c.h.b16 %v640
      %v682 = vunpack.c.l.b16 %v641
      %v683 = vunpack.c.h.b16 %v641
      %v684 = vunpack.c.l.b16 %v642
      %v685 = vunpack.c.h.b16 %v642
      %v686 = vunpack.c.l.b16 %v643
      %v687 = vunpack.c.h.b16 %v643
      %v688 = vunpack.c.l.b16 %v644
      %v689 = vunpack.c.h.b16 %v644
      %v690 = vunpack.c.l.b16 %v645
      %v691 = vunpack.c.h.b16 %v645
      %v692 = vunpack.c.l.b16 %v646
      %v693 = vunpack.c.h.b16 %v646
      %v694 = vunpack.c.l.b16 %v647
      %v695 = vunpack.c.h.b16 %v647
      %v696 = vpack.c.b16 %v664, %v664
      %v697 = vpack.c.b16 %v665, %v665
      %v698 = vpack.c.b16 %v666, %v666
      %v699 = vpack.c.b16 %v667, %v667
      %v700 = vpack.c.b16 %v668, %v668
      %v701 = vpack.c.b16 %v669, %v669
      %v702 = vpack.c.b16 %v670, %v670
      %v703 = vpack.c.b16 %v671, %v671
      %v704 = vpack.c.b16 %v672, %v672
      %v705 = vpack.c.b16 %v673, %v673
      %v706 = vpack.c.b16 %v674, %v674
      %v707 = vpack.c.b16 %v675, %v675
      %v708 = vpack.c.b16 %v676, %v676
      %v709 = vpack.c.b16 %v677, %v677
      %v710 = vpack.c.b16 %v678, %v678
      %v711 = vpack.c.b16 %v679, %v679
      %v712 = vpack.c.b16 %v680, %v680
      %v713 = vpack.c.b16 %v681, %v681
      %v714 = vpack.c.b16 %v682, %v682
      %v715 = vpack.c.b16 %v683, %v683
      %v716 = vpack.c.b16 %v684, %v684
      %v717 = vpack.c.b16 %v685, %v685
      %v718 = vpack.c.b16 %v686, %v686
      %v719 = vpack.c.b16 %v687, %v687
      %v720 = vpack.c.b16 %v688, %v688
      %v721 = vpack.c.b16 %v689, %v689
      %v722 = vpack.c.b16 %v690, %v690
      %v723 = vpack.c.b16 %v691, %v691
      %v724 = vpack.c.b16 %v692, %v692
      %v725 = vpack.c.b16 %v693, %v693
      %v726 = vpack.c.b16 %v694, %v694
      %v727 = vpack.c.b16 %v695, %v695
      %vm760 = vcmask 257024
      %761 = vst.msk [vmem:[%s148] sm:$0xf] %vm760, %v696
      %762 = vst.msk [vmem:[%s148 + $0x4] sm:$0xf] %vm760, %v697
      %763 = vst.msk [vmem:[%s148 + $0x8] sm:$0xf] %vm760, %v698
      %764 = vst.msk [vmem:[%s148 + $0xc] sm:$0xf] %vm760, %v699
      %765 = vst.msk [vmem:[%s148 + $0x10] sm:$0xf] %vm760, %v700
      %766 = vst.msk [vmem:[%s148 + $0x14] sm:$0xf] %vm760, %v701
      %767 = vst.msk [vmem:[%s148 + $0x18] sm:$0xf] %vm760, %v702
      %768 = vst.msk [vmem:[%s148 + $0x1c] sm:$0xf] %vm760, %v703
      %769 = vst.msk [vmem:[%s148 + $0x20] sm:$0xf] %vm760, %v704
      %770 = vst.msk [vmem:[%s148 + $0x24] sm:$0xf] %vm760, %v705
      %771 = vst.msk [vmem:[%s148 + $0x28] sm:$0xf] %vm760, %v706
      %772 = vst.msk [vmem:[%s148 + $0x2c] sm:$0xf] %vm760, %v707
      %773 = vst.msk [vmem:[%s148 + $0x30] sm:$0xf] %vm760, %v708
      %774 = vst.msk [vmem:[%s148 + $0x34] sm:$0xf] %vm760, %v709
      %775 = vst.msk [vmem:[%s148 + $0x38] sm:$0xf] %vm760, %v710
      %776 = vst.msk [vmem:[%s148 + $0x3c] sm:$0xf] %vm760, %v711
      %777 = vst.msk [vmem:[%s148 + $0x40] sm:$0xf] %vm760, %v712
      %778 = vst.msk [vmem:[%s148 + $0x44] sm:$0xf] %vm760, %v713
      %779 = vst.msk [vmem:[%s148 + $0x48] sm:$0xf] %vm760, %v714
      %780 = vst.msk [vmem:[%s148 + $0x4c] sm:$0xf] %vm760, %v715
      %781 = vst.msk [vmem:[%s148 + $0x50] sm:$0xf] %vm760, %v716
      %782 = vst.msk [vmem:[%s148 + $0x54] sm:$0xf] %vm760, %v717
      %783 = vst.msk [vmem:[%s148 + $0x58] sm:$0xf] %vm760, %v718
      %784 = vst.msk [vmem:[%s148 + $0x5c] sm:$0xf] %vm760, %v719
      %785 = vst.msk [vmem:[%s148 + $0x60] sm:$0xf] %vm760, %v720
      %786 = vst.msk [vmem:[%s148 + $0x64] sm:$0xf] %vm760, %v721
      %787 = vst.msk [vmem:[%s148 + $0x68] sm:$0xf] %vm760, %v722
      %788 = vst.msk [vmem:[%s148 + $0x6c] sm:$0xf] %vm760, %v723
      %789 = vst.msk [vmem:[%s148 + $0x70] sm:$0xf] %vm760, %v724
      %790 = vst.msk [vmem:[%s148 + $0x74] sm:$0xf] %vm760, %v725
      %791 = vst.msk [vmem:[%s148 + $0x78] sm:$0xf] %vm760, %v726
      %792 = vst.msk [vmem:[%s148 + $0x7c] sm:$0xf] %vm760, %v727
      %s793 = smul.u32 32, %s13
      %p794 = scmp.lt.s32.totalorder %s793, 63
      %s795 = scalar_select %p794, %s793, 63
      %s796 = smul.addr %s795, 4
      %s797 = scalar_lea.vmem %s2, %s796
      // Predicated region
      $region29: #{gnet_block_forward.2} parent=27 // pred_check
        %p798 = pneg %p78
      $region30: #{gnet_block_forward.2} parent=27 // pred_check_branch
        %800 = sbr.rel (%p798) target = $region32
      $region31: #{gnet_block_forward.2} parent=27 // pred_region
        %s801 = smul.u32 32, %s13
      $region32: #{gnet_block_forward.2} parent=27 // pred_fallthru
        _
    $region28: #{gnet_block_forward.2} parent=5 // pred_fallthru
      _
    %p802 = scmp.le.s32.totalorder 2, %s8
    // Predicated region
    $region33: #{gnet_block_forward.2} parent=5 // pred_check
      %p803 = pneg %p802
    $region34: #{gnet_block_forward.2} parent=5 // pred_check_branch
      %805 = sbr.rel (%p803) target = $region36
    $region35: #{gnet_block_forward.2} parent=5 // pred_region
      %s806 = ssub.s32 %s8, 2
      // Predicated region
      $region37: #{gnet_block_forward.2} parent=35 // pred_check
        %p807 = pneg %p84
      $region38: #{gnet_block_forward.2} parent=35 // pred_check_branch
        %809 = sbr.rel (%p807) target = $region40
      $region39: #{gnet_block_forward.2} parent=35 // pred_region
        %s810 = smul.u32 32, %s14
        %p811 = scmp.lt.s32.totalorder %s810, 63
        %s812 = scalar_select %p811, %s810, 63
        %s813 = smul.addr %s812, 4
        %s814 = scalar_lea.vmem %s2, %s813
      $region40: #{gnet_block_forward.2} parent=35 // pred_fallthru
        _
    $region36: #{gnet_block_forward.2} parent=5 // pred_fallthru
      _
  $region6: #{gnet_block_forward.2} parent=0 // loop_footer
    %s12 = sadd.s32 1, %s8
  $region7: #{gnet_block_forward.2} parent=0 // loop_footer_branch
    %7 = sbr.rel target = $region3
  $region8: #{gnet_block_forward.2} parent=0 // loop_exit
    _

// kernel: gnet_block_forward.3
$region0: #{gnet_block_forward.3}
  #allocation0 [shape = 'u32[]', space=smem, size = 0x4, offset = 0x4, fixed_abs, tag = 'smem constant byte address 0x4 - core index']
  #allocation1 [shape = 'u32[144,128]{1,0:T(1,128)}', space=vmem, size = 0x12000, scoped, tag = 'internal scratch']
  %s0 = inlined_call_operand.vmem [shape: bf16[512,32], index: 0, kind: input, shape index: {}]
  %s1 = inlined_call_operand.vmem [shape: f32[512,9], index: 1, kind: input, shape index: {}]
  %s2 = inlined_call_operand.vmem [shape: bf16[288,128], index: 2, kind: input, shape index: {}]
  %s3 = inlined_call_operand.vmem [shape: f32[1,32], index: 3, kind: input, shape index: {}]
  %s4 = inlined_call_operand.vmem [shape: f32[1,32], index: 4, kind: input, shape index: {}]
  %s5 = inlined_call_operand.vmem [shape: f32[1,128], index: 5, kind: input, shape index: {}]
  %s6 = inlined_call_operand.vmem [shape: f32[1,128], index: 6, kind: input, shape index: {}]
  %s7 = inlined_call_operand.vmem [shape: f32[512,128], index: 7, kind: output, shape index: {}]
  %s8 = sld [smem:[#allocation0]]
  $region38: #{gnet_block_forward.3} parent=0
    _
  %s10 = ssub.s32 1, %s8
  %s11 = scalar_select 0, %s10, %s8
  // Predicated region
  $region2: #{gnet_block_forward.3} parent=0 // pred_check
    _
  $region3: #{gnet_block_forward.3} parent=0 // pred_check_branch
    %13 = sbr.rel (0) target = $region5
  $region4: #{gnet_block_forward.3} parent=0 // pred_region
    _
  $region5: #{gnet_block_forward.3} parent=0 // pred_fallthru
    _
  // Predicated region
  $region6: #{gnet_block_forward.3} parent=0 // pred_check
    _
  $region7: #{gnet_block_forward.3} parent=0 // pred_check_branch
    %15 = sbr.rel (0) target = $region9
  $region8: #{gnet_block_forward.3} parent=0 // pred_region
    _
  $region9: #{gnet_block_forward.3} parent=0 // pred_fallthru
    _
  // Predicated region
  $region10: #{gnet_block_forward.3} parent=0 // pred_check
    _
  $region11: #{gnet_block_forward.3} parent=0 // pred_check_branch
    %17 = sbr.rel (0) target = $region13
  $region12: #{gnet_block_forward.3} parent=0 // pred_region
    _
  $region13: #{gnet_block_forward.3} parent=0 // pred_fallthru
    _
  // Predicated region
  $region14: #{gnet_block_forward.3} parent=0 // pred_check
    _
  $region15: #{gnet_block_forward.3} parent=0 // pred_check_branch
    %19 = sbr.rel (0) target = $region17
  $region16: #{gnet_block_forward.3} parent=0 // pred_region
    _
  $region17: #{gnet_block_forward.3} parent=0 // pred_fallthru
    _
  // Predicated region
  $region18: #{gnet_block_forward.3} parent=0 // pred_check
    _
  $region19: #{gnet_block_forward.3} parent=0 // pred_check_branch
    %21 = sbr.rel (0) target = $region21
  $region20: #{gnet_block_forward.3} parent=0 // pred_region
    _
  $region21: #{gnet_block_forward.3} parent=0 // pred_fallthru
    _
  // Predicated region
  $region22: #{gnet_block_forward.3} parent=0 // pred_check
    _
  $region23: #{gnet_block_forward.3} parent=0 // pred_check_branch
    %23 = sbr.rel (0) target = $region25
  $region24: #{gnet_block_forward.3} parent=0 // pred_region
    _
  $region25: #{gnet_block_forward.3} parent=0 // pred_fallthru
    _
  // Predicated region
  $region26: #{gnet_block_forward.3} parent=0 // pred_check
    _
  $region27: #{gnet_block_forward.3} parent=0 // pred_check_branch
    %25 = sbr.rel (0) target = $region29
  $region28: #{gnet_block_forward.3} parent=0 // pred_region
    _
  $region29: #{gnet_block_forward.3} parent=0 // pred_fallthru
    _
  %v27 = vld [vmem:[%s0] sm:$0xf]
  %v28 = vld [vmem:[%s0 + $0x4] sm:$0xf]
  %v29 = vld [vmem:[%s0 + $0x8] sm:$0xf]
  %v30 = vld [vmem:[%s0 + $0xc] sm:$0xf]
  %v31 = vld [vmem:[%s0 + $0x10] sm:$0xf]
  %v32 = vld [vmem:[%s0 + $0x14] sm:$0xf]
  %v33 = vld [vmem:[%s0 + $0x18] sm:$0xf]
  %v34 = vld [vmem:[%s0 + $0x1c] sm:$0xf]
  %v35 = vld [vmem:[%s0 + $0x20] sm:$0xf]
  %v36 = vld [vmem:[%s0 + $0x24] sm:$0xf]
  %v37 = vld [vmem:[%s0 + $0x28] sm:$0xf]
  %v38 = vld [vmem:[%s0 + $0x2c] sm:$0xf]
  %v39 = vld [vmem:[%s0 + $0x30] sm:$0xf]
  %v40 = vld [vmem:[%s0 + $0x34] sm:$0xf]
  %v41 = vld [vmem:[%s0 + $0x38] sm:$0xf]
  %v42 = vld [vmem:[%s0 + $0x3c] sm:$0xf]
  %v43 = vld [vmem:[%s0 + $0x40] sm:$0xf]
  %v44 = vld [vmem:[%s0 + $0x44] sm:$0xf]
  %v45 = vld [vmem:[%s0 + $0x48] sm:$0xf]
  %v46 = vld [vmem:[%s0 + $0x4c] sm:$0xf]
  %v47 = vld [vmem:[%s0 + $0x50] sm:$0xf]
  %v48 = vld [vmem:[%s0 + $0x54] sm:$0xf]
  %v49 = vld [vmem:[%s0 + $0x58] sm:$0xf]
  %v50 = vld [vmem:[%s0 + $0x5c] sm:$0xf]
  %v51 = vld [vmem:[%s0 + $0x60] sm:$0xf]
  %v52 = vld [vmem:[%s0 + $0x64] sm:$0xf]
  %v53 = vld [vmem:[%s0 + $0x68] sm:$0xf]
  %v54 = vld [vmem:[%s0 + $0x6c] sm:$0xf]
  %v55 = vld [vmem:[%s0 + $0x70] sm:$0xf]
  %v56 = vld [vmem:[%s0 + $0x74] sm:$0xf]
  %v57 = vld [vmem:[%s0 + $0x78] sm:$0xf]
  %v58 = vld [vmem:[%s0 + $0x7c] sm:$0xf]
  %v59 = vld [vmem:[%s0 + $0x80] sm:$0xf]
  %v60 = vld [vmem:[%s0 + $0x84] sm:$0xf]
  %v61 = vld [vmem:[%s0 + $0x88] sm:$0xf]
  %v62 = vld [vmem:[%s0 + $0x8c] sm:$0xf]
  %v63 = vld [vmem:[%s0 + $0x90] sm:$0xf]
  %v64 = vld [vmem:[%s0 + $0x94] sm:$0xf]
  %v65 = vld [vmem:[%s0 + $0x98] sm:$0xf]
  %v66 = vld [vmem:[%s0 + $0x9c] sm:$0xf]
  %v67 = vld [vmem:[%s0 + $0xa0] sm:$0xf]
  %v68 = vld [vmem:[%s0 + $0xa4] sm:$0xf]
  %v69 = vld [vmem:[%s0 + $0xa8] sm:$0xf]
  %v70 = vld [vmem:[%s0 + $0xac] sm:$0xf]
  %v71 = vld [vmem:[%s0 + $0xb0] sm:$0xf]
  %v72 = vld [vmem:[%s0 + $0xb4] sm:$0xf]
  %v73 = vld [vmem:[%s0 + $0xb8] sm:$0xf]
  %v74 = vld [vmem:[%s0 + $0xbc] sm:$0xf]
  %v75 = vld [vmem:[%s0 + $0xc0] sm:$0xf]
  %v76 = vld [vmem:[%s0 + $0xc4] sm:$0xf]
  %v77 = vld [vmem:[%s0 + $0xc8] sm:$0xf]
  %v78 = vld [vmem:[%s0 + $0xcc] sm:$0xf]
  %v79 = vld [vmem:[%s0 + $0xd0] sm:$0xf]
  %v80 = vld [vmem:[%s0 + $0xd4] sm:$0xf]
  %v81 = vld [vmem:[%s0 + $0xd8] sm:$0xf]
  %v82 = vld [vmem:[%s0 + $0xdc] sm:$0xf]
  %v83 = vld [vmem:[%s0 + $0xe0] sm:$0xf]
  %v84 = vld [vmem:[%s0 + $0xe4] sm:$0xf]
  %v85 = vld [vmem:[%s0 + $0xe8] sm:$0xf]
  %v86 = vld [vmem:[%s0 + $0xec] sm:$0xf]
  %v87 = vld [vmem:[%s0 + $0xf0] sm:$0xf]
  %v88 = vld [vmem:[%s0 + $0xf4] sm:$0xf]
  %v89 = vld [vmem:[%s0 + $0xf8] sm:$0xf]
  %v90 = vld [vmem:[%s0 + $0xfc] sm:$0xf]
  %v91 = vunpack.c.l.bf16 %v27
  %v92 = vunpack.c.l.bf16 %v28
  %v93 = vunpack.c.l.bf16 %v29
  %v94 = vunpack.c.l.bf16 %v30
  %v95 = vunpack.c.l.bf16 %v31
  %v96 = vunpack.c.l.bf16 %v32
  %v97 = vunpack.c.l.bf16 %v33
  %v98 = vunpack.c.l.bf16 %v34
  %v99 = vunpack.c.l.bf16 %v35
  %v100 = vunpack.c.l.bf16 %v36
  %v101 = vunpack.c.l.bf16 %v37
  %v102 = vunpack.c.l.bf16 %v38
  %v103 = vunpack.c.l.bf16 %v39
  %v104 = vunpack.c.l.bf16 %v40
  %v105 = vunpack.c.l.bf16 %v41
  %v106 = vunpack.c.l.bf16 %v42
  %v107 = vunpack.c.l.bf16 %v43
  %v108 = vunpack.c.l.bf16 %v44
  %v109 = vunpack.c.l.bf16 %v45
  %v110 = vunpack.c.l.bf16 %v46
  %v111 = vunpack.c.l.bf16 %v47
  %v112 = vunpack.c.l.bf16 %v48
  %v113 = vunpack.c.l.bf16 %v49
  %v114 = vunpack.c.l.bf16 %v50
  %v115 = vunpack.c.l.bf16 %v51
  %v116 = vunpack.c.l.bf16 %v52
  %v117 = vunpack.c.l.bf16 %v53
  %v118 = vunpack.c.l.bf16 %v54
  %v119 = vunpack.c.l.bf16 %v55
  %v120 = vunpack.c.l.bf16 %v56
  %v121 = vunpack.c.l.bf16 %v57
  %v122 = vunpack.c.l.bf16 %v58
  %v123 = vunpack.c.l.bf16 %v59
  %v124 = vunpack.c.l.bf16 %v60
  %v125 = vunpack.c.l.bf16 %v61
  %v126 = vunpack.c.l.bf16 %v62
  %v127 = vunpack.c.l.bf16 %v63
  %v128 = vunpack.c.l.bf16 %v64
  %v129 = vunpack.c.l.bf16 %v65
  %v130 = vunpack.c.l.bf16 %v66
  %v131 = vunpack.c.l.bf16 %v67
  %v132 = vunpack.c.l.bf16 %v68
  %v133 = vunpack.c.l.bf16 %v69
  %v134 = vunpack.c.l.bf16 %v70
  %v135 = vunpack.c.l.bf16 %v71
  %v136 = vunpack.c.l.bf16 %v72
  %v137 = vunpack.c.l.bf16 %v73
  %v138 = vunpack.c.l.bf16 %v74
  %v139 = vunpack.c.l.bf16 %v75
  %v140 = vunpack.c.l.bf16 %v76
  %v141 = vunpack.c.l.bf16 %v77
  %v142 = vunpack.c.l.bf16 %v78
  %v143 = vunpack.c.l.bf16 %v79
  %v144 = vunpack.c.l.bf16 %v80
  %v145 = vunpack.c.l.bf16 %v81
  %v146 = vunpack.c.l.bf16 %v82
  %v147 = vunpack.c.l.bf16 %v83
  %v148 = vunpack.c.l.bf16 %v84
  %v149 = vunpack.c.l.bf16 %v85
  %v150 = vunpack.c.l.bf16 %v86
  %v151 = vunpack.c.l.bf16 %v87
  %v152 = vunpack.c.l.bf16 %v88
  %v153 = vunpack.c.l.bf16 %v89
  %v154 = vunpack.c.l.bf16 %v90
  %vm155 = vcmask 261120
  %v156 = vsel %vm155, %v91, 0.0
  %v157 = vsel %vm155, %v92, 0.0
  %v158 = vadd.f32 %v156, %v157
  %v159 = vsel %vm155, %v93, 0.0
  %v160 = vadd.f32 %v158, %v159
  %v161 = vsel %vm155, %v94, 0.0
  %v162 = vadd.f32 %v160, %v161
  %v163 = vsel %vm155, %v95, 0.0
  %v164 = vadd.f32 %v162, %v163
  %v165 = vsel %vm155, %v96, 0.0
  %v166 = vadd.f32 %v164, %v165
  %v167 = vsel %vm155, %v97, 0.0
  %v168 = vadd.f32 %v166, %v167
  %v169 = vsel %vm155, %v98, 0.0
  %v170 = vadd.f32 %v168, %v169
  %v171 = vsel %vm155, %v99, 0.0
  %v172 = vadd.f32 %v170, %v171
  %v173 = vsel %vm155, %v100, 0.0
  %v174 = vadd.f32 %v172, %v173
  %v175 = vsel %vm155, %v101, 0.0
  %v176 = vadd.f32 %v174, %v175
  %v177 = vsel %vm155, %v102, 0.0
  %v178 = vadd.f32 %v176, %v177
  %v179 = vsel %vm155, %v103, 0.0
  %v180 = vadd.f32 %v178, %v179
  %v181 = vsel %vm155, %v104, 0.0
  %v182 = vadd.f32 %v180, %v181
  %v183 = vsel %vm155, %v105, 0.0
  %v184 = vadd.f32 %v182, %v183
  %v185 = vsel %vm155, %v106, 0.0
  %v186 = vadd.f32 %v184, %v185
  %v187 = vsel %vm155, %v107, 0.0
  %v188 = vadd.f32 %v186, %v187
  %v189 = vsel %vm155, %v108, 0.0
  %v190 = vadd.f32 %v188, %v189
  %v191 = vsel %vm155, %v109, 0.0
  %v192 = vadd.f32 %v190, %v191
  %v193 = vsel %vm155, %v110, 0.0
  %v194 = vadd.f32 %v192, %v193
  %v195 = vsel %vm155, %v111, 0.0
  %v196 = vadd.f32 %v194, %v195
  %v197 = vsel %vm155, %v112, 0.0
  %v198 = vadd.f32 %v196, %v197
  %v199 = vsel %vm155, %v113, 0.0
  %v200 = vadd.f32 %v198, %v199
  %v201 = vsel %vm155, %v114, 0.0
  %v202 = vadd.f32 %v200, %v201
  %v203 = vsel %vm155, %v115, 0.0
  %v204 = vadd.f32 %v202, %v203
  %v205 = vsel %vm155, %v116, 0.0
  %v206 = vadd.f32 %v204, %v205
  %v207 = vsel %vm155, %v117, 0.0
  %v208 = vadd.f32 %v206, %v207
  %v209 = vsel %vm155, %v118, 0.0
  %v210 = vadd.f32 %v208, %v209
  %v211 = vsel %vm155, %v119, 0.0
  %v212 = vadd.f32 %v210, %v211
  %v213 = vsel %vm155, %v120, 0.0
  %v214 = vadd.f32 %v212, %v213
  %v215 = vsel %vm155, %v121, 0.0
  %v216 = vadd.f32 %v214, %v215
  %v217 = vsel %vm155, %v122, 0.0
  %v218 = vadd.f32 %v216, %v217
  %v219 = vsel %vm155, %v123, 0.0
  %v220 = vadd.f32 %v218, %v219
  %v221 = vsel %vm155, %v124, 0.0
  %v222 = vadd.f32 %v220, %v221
  %v223 = vsel %vm155, %v125, 0.0
  %v224 = vadd.f32 %v222, %v223
  %v225 = vsel %vm155, %v126, 0.0
  %v226 = vadd.f32 %v224, %v225
  %v227 = vsel %vm155, %v127, 0.0
  %v228 = vadd.f32 %v226, %v227
  %v229 = vsel %vm155, %v128, 0.0
  %v230 = vadd.f32 %v228, %v229
  %v231 = vsel %vm155, %v129, 0.0
  %v232 = vadd.f32 %v230, %v231
  %v233 = vsel %vm155, %v130, 0.0
  %v234 = vadd.f32 %v232, %v233
  %v235 = vsel %vm155, %v131, 0.0
  %v236 = vadd.f32 %v234, %v235
  %v237 = vsel %vm155, %v132, 0.0
  %v238 = vadd.f32 %v236, %v237
  %v239 = vsel %vm155, %v133, 0.0
  %v240 = vadd.f32 %v238, %v239
  %v241 = vsel %vm155, %v134, 0.0
  %v242 = vadd.f32 %v240, %v241
  %v243 = vsel %vm155, %v135, 0.0
  %v244 = vadd.f32 %v242, %v243
  %v245 = vsel %vm155, %v136, 0.0
  %v246 = vadd.f32 %v244, %v245
  %v247 = vsel %vm155, %v137, 0.0
  %v248 = vadd.f32 %v246, %v247
  %v249 = vsel %vm155, %v138, 0.0
  %v250 = vadd.f32 %v248, %v249
  %v251 = vsel %vm155, %v139, 0.0
  %v252 = vadd.f32 %v250, %v251
  %v253 = vsel %vm155, %v140, 0.0
  %v254 = vadd.f32 %v252, %v253
  %v255 = vsel %vm155, %v141, 0.0
  %v256 = vadd.f32 %v254, %v255
  %v257 = vsel %vm155, %v142, 0.0
  %v258 = vadd.f32 %v256, %v257
  %v259 = vsel %vm155, %v143, 0.0
  %v260 = vadd.f32 %v258, %v259
  %v261 = vsel %vm155, %v144, 0.0
  %v262 = vadd.f32 %v260, %v261
  %v263 = vsel %vm155, %v145, 0.0
  %v264 = vadd.f32 %v262, %v263
  %v265 = vsel %vm155, %v146, 0.0
  %v266 = vadd.f32 %v264, %v265
  %v267 = vsel %vm155, %v147, 0.0
  %v268 = vadd.f32 %v266, %v267
  %v269 = vsel %vm155, %v148, 0.0
  %v270 = vadd.f32 %v268, %v269
  %v271 = vsel %vm155, %v149, 0.0
  %v272 = vadd.f32 %v270, %v271
  %v273 = vsel %vm155, %v150, 0.0
  %v274 = vadd.f32 %v272, %v273
  %v275 = vsel %vm155, %v151, 0.0
  %v276 = vadd.f32 %v274, %v275
  %v277 = vsel %vm155, %v152, 0.0
  %v278 = vadd.f32 %v276, %v277
  %v279 = vsel %vm155, %v153, 0.0
  %v280 = vadd.f32 %v278, %v279
  %v281 = vsel %vm155, %v154, 0.0
  %v282 = vadd.f32 %v280, %v281
  %v283 = vrot.slane %v282, 4
  %v284 = vadd.f32 %v282, %v283
  %v285 = vrot.slane %v284, 2
  %v286 = vadd.f32 %v284, %v285
  %v287 = vrot.slane %v286, 1
  %v288 = vadd.f32 %v286, %v287
  %v289 = vmul.f32 %v288, 0.0025510204
  %v290 = vmul.f32 %v91, %v91
  %v291 = vmul.f32 %v92, %v92
  %v292 = vmul.f32 %v93, %v93
  %v293 = vmul.f32 %v94, %v94
  %v294 = vmul.f32 %v95, %v95
  %v295 = vmul.f32 %v96, %v96
  %v296 = vmul.f32 %v97, %v97
  %v297 = vmul.f32 %v98, %v98
  %v298 = vmul.f32 %v99, %v99
  %v299 = vmul.f32 %v100, %v100
  %v300 = vmul.f32 %v101, %v101
  %v301 = vmul.f32 %v102, %v102
  %v302 = vmul.f32 %v103, %v103
  %v303 = vmul.f32 %v104, %v104
  %v304 = vmul.f32 %v105, %v105
  %v305 = vmul.f32 %v106, %v106
  %v306 = vmul.f32 %v107, %v107
  %v307 = vmul.f32 %v108, %v108
  %v308 = vmul.f32 %v109, %v109
  %v309 = vmul.f32 %v110, %v110
  %v310 = vmul.f32 %v111, %v111
  %v311 = vmul.f32 %v112, %v112
  %v312 = vmul.f32 %v113, %v113
  %v313 = vmul.f32 %v114, %v114
  %v314 = vmul.f32 %v115, %v115
  %v315 = vmul.f32 %v116, %v116
  %v316 = vmul.f32 %v117, %v117
  %v317 = vmul.f32 %v118, %v118
  %v318 = vmul.f32 %v119, %v119
  %v319 = vmul.f32 %v120, %v120
  %v320 = vmul.f32 %v121, %v121
  %v321 = vmul.f32 %v122, %v122
  %v322 = vmul.f32 %v123, %v123
  %v323 = vmul.f32 %v124, %v124
  %v324 = vmul.f32 %v125, %v125
  %v325 = vmul.f32 %v126, %v126
  %v326 = vmul.f32 %v127, %v127
  %v327 = vmul.f32 %v128, %v128
  %v328 = vmul.f32 %v129, %v129
  %v329 = vmul.f32 %v130, %v130
  %v330 = vmul.f32 %v131, %v131
  %v331 = vmul.f32 %v132, %v132
  %v332 = vmul.f32 %v133, %v133
  %v333 = vmul.f32 %v134, %v134
  %v334 = vmul.f32 %v135, %v135
  %v335 = vmul.f32 %v136, %v136
  %v336 = vmul.f32 %v137, %v137
  %v337 = vmul.f32 %v138, %v138
  %v338 = vmul.f32 %v139, %v139
  %v339 = vmul.f32 %v140, %v140
  %v340 = vmul.f32 %v141, %v141
  %v341 = vmul.f32 %v142, %v142
  %v342 = vmul.f32 %v143, %v143
  %v343 = vmul.f32 %v144, %v144
  %v344 = vmul.f32 %v145, %v145
  %v345 = vmul.f32 %v146, %v146
  %v346 = vmul.f32 %v147, %v147
  %v347 = vmul.f32 %v148, %v148
  %v348 = vmul.f32 %v149, %v149
  %v349 = vmul.f32 %v150, %v150
  %v350 = vmul.f32 %v151, %v151
  %v351 = vmul.f32 %v152, %v152
  %v352 = vmul.f32 %v153, %v153
  %v353 = vmul.f32 %v154, %v154
  %v354 = vsel %vm155, %v290, 0.0
  %v355 = vsel %vm155, %v291, 0.0
  %v356 = vadd.f32 %v354, %v355
  %v357 = vsel %vm155, %v292, 0.0
  %v358 = vadd.f32 %v356, %v357
  %v359 = vsel %vm155, %v293, 0.0
  %v360 = vadd.f32 %v358, %v359
  %v361 = vsel %vm155, %v294, 0.0
  %v362 = vadd.f32 %v360, %v361
  %v363 = vsel %vm155, %v295, 0.0
  %v364 = vadd.f32 %v362, %v363
  %v365 = vsel %vm155, %v296, 0.0
  %v366 = vadd.f32 %v364, %v365
  %v367 = vsel %vm155, %v297, 0.0
  %v368 = vadd.f32 %v366, %v367
  %v369 = vsel %vm155, %v298, 0.0
  %v370 = vadd.f32 %v368, %v369
  %v371 = vsel %vm155, %v299, 0.0
  %v372 = vadd.f32 %v370, %v371
  %v373 = vsel %vm155, %v300, 0.0
  %v374 = vadd.f32 %v372, %v373
  %v375 = vsel %vm155, %v301, 0.0
  %v376 = vadd.f32 %v374, %v375
  %v377 = vsel %vm155, %v302, 0.0
  %v378 = vadd.f32 %v376, %v377
  %v379 = vsel %vm155, %v303, 0.0
  %v380 = vadd.f32 %v378, %v379
  %v381 = vsel %vm155, %v304, 0.0
  %v382 = vadd.f32 %v380, %v381
  %v383 = vsel %vm155, %v305, 0.0
  %v384 = vadd.f32 %v382, %v383
  %v385 = vsel %vm155, %v306, 0.0
  %v386 = vadd.f32 %v384, %v385
  %v387 = vsel %vm155, %v307, 0.0
  %v388 = vadd.f32 %v386, %v387
  %v389 = vsel %vm155, %v308, 0.0
  %v390 = vadd.f32 %v388, %v389
  %v391 = vsel %vm155, %v309, 0.0
  %v392 = vadd.f32 %v390, %v391
  %v393 = vsel %vm155, %v310, 0.0
  %v394 = vadd.f32 %v392, %v393
  %v395 = vsel %vm155, %v311, 0.0
  %v396 = vadd.f32 %v394, %v395
  %v397 = vsel %vm155, %v312, 0.0
  %v398 = vadd.f32 %v396, %v397
  %v399 = vsel %vm155, %v313, 0.0
  %v400 = vadd.f32 %v398, %v399
  %v401 = vsel %vm155, %v314, 0.0
  %v402 = vadd.f32 %v400, %v401
  %v403 = vsel %vm155, %v315, 0.0
  %v404 = vadd.f32 %v402, %v403
  %v405 = vsel %vm155, %v316, 0.0
  %v406 = vadd.f32 %v404, %v405
  %v407 = vsel %vm155, %v317, 0.0
  %v408 = vadd.f32 %v406, %v407
  %v409 = vsel %vm155, %v318, 0.0
  %v410 = vadd.f32 %v408, %v409
  %v411 = vsel %vm155, %v319, 0.0
  %v412 = vadd.f32 %v410, %v411
  %v413 = vsel %vm155, %v320, 0.0
  %v414 = vadd.f32 %v412, %v413
  %v415 = vsel %vm155, %v321, 0.0
  %v416 = vadd.f32 %v414, %v415
  %v417 = vsel %vm155, %v322, 0.0
  %v418 = vadd.f32 %v416, %v417
  %v419 = vsel %vm155, %v323, 0.0
  %v420 = vadd.f32 %v418, %v419
  %v421 = vsel %vm155, %v324, 0.0
  %v422 = vadd.f32 %v420, %v421
  %v423 = vsel %vm155, %v325, 0.0
  %v424 = vadd.f32 %v422, %v423
  %v425 = vsel %vm155, %v326, 0.0
  %v426 = vadd.f32 %v424, %v425
  %v427 = vsel %vm155, %v327, 0.0
  %v428 = vadd.f32 %v426, %v427
  %v429 = vsel %vm155, %v328, 0.0
  %v430 = vadd.f32 %v428, %v429
  %v431 = vsel %vm155, %v329, 0.0
  %v432 = vadd.f32 %v430, %v431
  %v433 = vsel %vm155, %v330, 0.0
  %v434 = vadd.f32 %v432, %v433
  %v435 = vsel %vm155, %v331, 0.0
  %v436 = vadd.f32 %v434, %v435
  %v437 = vsel %vm155, %v332, 0.0
  %v438 = vadd.f32 %v436, %v437
  %v439 = vsel %vm155, %v333, 0.0
  %v440 = vadd.f32 %v438, %v439
  %v441 = vsel %vm155, %v334, 0.0
  %v442 = vadd.f32 %v440, %v441
  %v443 = vsel %vm155, %v335, 0.0
  %v444 = vadd.f32 %v442, %v443
  %v445 = vsel %vm155, %v336, 0.0
  %v446 = vadd.f32 %v444, %v445
  %v447 = vsel %vm155, %v337, 0.0
  %v448 = vadd.f32 %v446, %v447
  %v449 = vsel %vm155, %v338, 0.0
  %v450 = vadd.f32 %v448, %v449
  %v451 = vsel %vm155, %v339, 0.0
  %v452 = vadd.f32 %v450, %v451
  %v453 = vsel %vm155, %v340, 0.0
  %v454 = vadd.f32 %v452, %v453
  %v455 = vsel %vm155, %v341, 0.0
  %v456 = vadd.f32 %v454, %v455
  %v457 = vsel %vm155, %v342, 0.0
  %v458 = vadd.f32 %v456, %v457
  %v459 = vsel %vm155, %v343, 0.0
  %v460 = vadd.f32 %v458, %v459
  %v461 = vsel %vm155, %v344, 0.0
  %v462 = vadd.f32 %v460, %v461
  %v463 = vsel %vm155, %v345, 0.0
  %v464 = vadd.f32 %v462, %v463
  %v465 = vsel %vm155, %v346, 0.0
  %v466 = vadd.f32 %v464, %v465
  %v467 = vsel %vm155, %v347, 0.0
  %v468 = vadd.f32 %v466, %v467
  %v469 = vsel %vm155, %v348, 0.0
  %v470 = vadd.f32 %v468, %v469
  %v471 = vsel %vm155, %v349, 0.0
  %v472 = vadd.f32 %v470, %v471
  %v473 = vsel %vm155, %v350, 0.0
  %v474 = vadd.f32 %v472, %v473
  %v475 = vsel %vm155, %v351, 0.0
  %v476 = vadd.f32 %v474, %v475
  %v477 = vsel %vm155, %v352, 0.0
  %v478 = vadd.f32 %v476, %v477
  %v479 = vsel %vm155, %v353, 0.0
  %v480 = vadd.f32 %v478, %v479
  %v481 = vrot.slane %v480, 4
  %v482 = vadd.f32 %v480, %v481
  %v483 = vrot.slane %v482, 2
  %v484 = vadd.f32 %v482, %v483
  %v485 = vrot.slane %v484, 1
  %v486 = vadd.f32 %v484, %v485
  %v487 = vmul.f32 %v486, 0.0025510204
  %v488 = vld [vmem:[%s3] sm:$0x1]
  %v489 = vmul.f32 %v289, %v289
  %v490 = vsub.f32 %v487, %v489
  %v491 = vadd.f32 %v490, 0.001
  %v492 = vrsqrt.pop %v491
  %v493 = vmul.f32 %v488, %v492
  %v494 = vld [vmem:[%s4] sm:$0x1]
  %v495 = vmul.f32 %v289, %v493
  %v496 = vsub.f32 %v494, %v495
  %v498 = vlaneseq
  %v499 = vshrl.u32 %v498, 7
  %v500 = vsub.s32 0, %v499
  %v501 = vrot.slane %v493, %v500
  %v503 = vmul.f32 %v91, %v501
  %v504 = vmul.f32 %v92, %v501
  %v505 = vmul.f32 %v93, %v501
  %v506 = vmul.f32 %v94, %v501
  %v507 = vmul.f32 %v95, %v501
  %v508 = vmul.f32 %v96, %v501
  %v509 = vmul.f32 %v97, %v501
  %v510 = vmul.f32 %v98, %v501
  %v511 = vmul.f32 %v99, %v501
  %v512 = vmul.f32 %v100, %v501
  %v513 = vmul.f32 %v101, %v501
  %v514 = vmul.f32 %v102, %v501
  %v515 = vmul.f32 %v103, %v501
  %v516 = vmul.f32 %v104, %v501
  %v517 = vmul.f32 %v105, %v501
  %v518 = vmul.f32 %v106, %v501
  %v519 = vmul.f32 %v107, %v501
  %v520 = vmul.f32 %v108, %v501
  %v521 = vmul.f32 %v109, %v501
  %v522 = vmul.f32 %v110, %v501
  %v523 = vmul.f32 %v111, %v501
  %v524 = vmul.f32 %v112, %v501
  %v525 = vmul.f32 %v113, %v501
  %v526 = vmul.f32 %v114, %v501
  %v527 = vmul.f32 %v115, %v501
  %v528 = vmul.f32 %v116, %v501
  %v529 = vmul.f32 %v117, %v501
  %v530 = vmul.f32 %v118, %v501
  %v531 = vmul.f32 %v119, %v501
  %v532 = vmul.f32 %v120, %v501
  %v533 = vmul.f32 %v121, %v501
  %v534 = vmul.f32 %v122, %v501
  %v535 = vmul.f32 %v123, %v501
  %v536 = vmul.f32 %v124, %v501
  %v537 = vmul.f32 %v125, %v501
  %v538 = vmul.f32 %v126, %v501
  %v539 = vmul.f32 %v127, %v501
  %v540 = vmul.f32 %v128, %v501
  %v541 = vmul.f32 %v129, %v501
  %v542 = vmul.f32 %v130, %v501
  %v543 = vmul.f32 %v131, %v501
  %v544 = vmul.f32 %v132, %v501
  %v545 = vmul.f32 %v133, %v501
  %v546 = vmul.f32 %v134, %v501
  %v547 = vmul.f32 %v135, %v501
  %v548 = vmul.f32 %v136, %v501
  %v549 = vmul.f32 %v137, %v501
  %v550 = vmul.f32 %v138, %v501
  %v551 = vmul.f32 %v139, %v501
  %v552 = vmul.f32 %v140, %v501
  %v553 = vmul.f32 %v141, %v501
  %v554 = vmul.f32 %v142, %v501
  %v555 = vmul.f32 %v143, %v501
  %v556 = vmul.f32 %v144, %v501
  %v557 = vmul.f32 %v145, %v501
  %v558 = vmul.f32 %v146, %v501
  %v559 = vmul.f32 %v147, %v501
  %v560 = vmul.f32 %v148, %v501
  %v561 = vmul.f32 %v149, %v501
  %v562 = vmul.f32 %v150, %v501
  %v563 = vmul.f32 %v151, %v501
  %v564 = vmul.f32 %v152, %v501
  %v565 = vmul.f32 %v153, %v501
  %v566 = vmul.f32 %v154, %v501
  %v568 = vlaneseq
  %v569 = vshrl.u32 %v568, 7
  %v570 = vsub.s32 0, %v569
  %v571 = vrot.slane %v496, %v570
  %v573 = vadd.f32 %v503, %v571
  %v574 = vadd.f32 %v504, %v571
  %v575 = vadd.f32 %v505, %v571
  %v576 = vadd.f32 %v506, %v571
  %v577 = vadd.f32 %v507, %v571
  %v578 = vadd.f32 %v508, %v571
  %v579 = vadd.f32 %v509, %v571
  %v580 = vadd.f32 %v510, %v571
  %v581 = vadd.f32 %v511, %v571
  %v582 = vadd.f32 %v512, %v571
  %v583 = vadd.f32 %v513, %v571
  %v584 = vadd.f32 %v514, %v571
  %v585 = vadd.f32 %v515, %v571
  %v586 = vadd.f32 %v516, %v571
  %v587 = vadd.f32 %v517, %v571
  %v588 = vadd.f32 %v518, %v571
  %v589 = vadd.f32 %v519, %v571
  %v590 = vadd.f32 %v520, %v571
  %v591 = vadd.f32 %v521, %v571
  %v592 = vadd.f32 %v522, %v571
  %v593 = vadd.f32 %v523, %v571
  %v594 = vadd.f32 %v524, %v571
  %v595 = vadd.f32 %v525, %v571
  %v596 = vadd.f32 %v526, %v571
  %v597 = vadd.f32 %v527, %v571
  %v598 = vadd.f32 %v528, %v571
  %v599 = vadd.f32 %v529, %v571
  %v600 = vadd.f32 %v530, %v571
  %v601 = vadd.f32 %v531, %v571
  %v602 = vadd.f32 %v532, %v571
  %v603 = vadd.f32 %v533, %v571
  %v604 = vadd.f32 %v534, %v571
  %v605 = vadd.f32 %v535, %v571
  %v606 = vadd.f32 %v536, %v571
  %v607 = vadd.f32 %v537, %v571
  %v608 = vadd.f32 %v538, %v571
  %v609 = vadd.f32 %v539, %v571
  %v610 = vadd.f32 %v540, %v571
  %v611 = vadd.f32 %v541, %v571
  %v612 = vadd.f32 %v542, %v571
  %v613 = vadd.f32 %v543, %v571
  %v614 = vadd.f32 %v544, %v571
  %v615 = vadd.f32 %v545, %v571
  %v616 = vadd.f32 %v546, %v571
  %v617 = vadd.f32 %v547, %v571
  %v618 = vadd.f32 %v548, %v571
  %v619 = vadd.f32 %v549, %v571
  %v620 = vadd.f32 %v550, %v571
  %v621 = vadd.f32 %v551, %v571
  %v622 = vadd.f32 %v552, %v571
  %v623 = vadd.f32 %v553, %v571
  %v624 = vadd.f32 %v554, %v571
  %v625 = vadd.f32 %v555, %v571
  %v626 = vadd.f32 %v556, %v571
  %v627 = vadd.f32 %v557, %v571
  %v628 = vadd.f32 %v558, %v571
  %v629 = vadd.f32 %v559, %v571
  %v630 = vadd.f32 %v560, %v571
  %v631 = vadd.f32 %v561, %v571
  %v632 = vadd.f32 %v562, %v571
  %v633 = vadd.f32 %v563, %v571
  %v634 = vadd.f32 %v564, %v571
  %v635 = vadd.f32 %v565, %v571
  %v636 = vadd.f32 %v566, %v571
  %v637 = vmax.f32 %v573, 0.0
  %v638 = vmax.f32 %v574, 0.0
  %v639 = vmax.f32 %v575, 0.0
  %v640 = vmax.f32 %v576, 0.0
  %v641 = vmax.f32 %v577, 0.0
  %v642 = vmax.f32 %v578, 0.0
  %v643 = vmax.f32 %v579, 0.0
  %v644 = vmax.f32 %v580, 0.0
  %v645 = vmax.f32 %v581, 0.0
  %v646 = vmax.f32 %v582, 0.0
  %v647 = vmax.f32 %v583, 0.0
  %v648 = vmax.f32 %v584, 0.0
  %v649 = vmax.f32 %v585, 0.0
  %v650 = vmax.f32 %v586, 0.0
  %v651 = vmax.f32 %v587, 0.0
  %v652 = vmax.f32 %v588, 0.0
  %v653 = vmax.f32 %v589, 0.0
  %v654 = vmax.f32 %v590, 0.0
  %v655 = vmax.f32 %v591, 0.0
  %v656 = vmax.f32 %v592, 0.0
  %v657 = vmax.f32 %v593, 0.0
  %v658 = vmax.f32 %v594, 0.0
  %v659 = vmax.f32 %v595, 0.0
  %v660 = vmax.f32 %v596, 0.0
  %v661 = vmax.f32 %v597, 0.0
  %v662 = vmax.f32 %v598, 0.0
  %v663 = vmax.f32 %v599, 0.0
  %v664 = vmax.f32 %v600, 0.0
  %v665 = vmax.f32 %v601, 0.0
  %v666 = vmax.f32 %v602, 0.0
  %v667 = vmax.f32 %v603, 0.0
  %v668 = vmax.f32 %v604, 0.0
  %v669 = vmax.f32 %v605, 0.0
  %v670 = vmax.f32 %v606, 0.0
  %v671 = vmax.f32 %v607, 0.0
  %v672 = vmax.f32 %v608, 0.0
  %v673 = vmax.f32 %v609, 0.0
  %v674 = vmax.f32 %v610, 0.0
  %v675 = vmax.f32 %v611, 0.0
  %v676 = vmax.f32 %v612, 0.0
  %v677 = vmax.f32 %v613, 0.0
  %v678 = vmax.f32 %v614, 0.0
  %v679 = vmax.f32 %v615, 0.0
  %v680 = vmax.f32 %v616, 0.0
  %v681 = vmax.f32 %v617, 0.0
  %v682 = vmax.f32 %v618, 0.0
  %v683 = vmax.f32 %v619, 0.0
  %v684 = vmax.f32 %v620, 0.0
  %v685 = vmax.f32 %v621, 0.0
  %v686 = vmax.f32 %v622, 0.0
  %v687 = vmax.f32 %v623, 0.0
  %v688 = vmax.f32 %v624, 0.0
  %v689 = vmax.f32 %v625, 0.0
  %v690 = vmax.f32 %v626, 0.0
  %v691 = vmax.f32 %v627, 0.0
  %v692 = vmax.f32 %v628, 0.0
  %v693 = vmax.f32 %v629, 0.0
  %v694 = vmax.f32 %v630, 0.0
  %v695 = vmax.f32 %v631, 0.0
  %v696 = vmax.f32 %v632, 0.0
  %v697 = vmax.f32 %v633, 0.0
  %v698 = vmax.f32 %v634, 0.0
  %v699 = vmax.f32 %v635, 0.0
  %v700 = vmax.f32 %v636, 0.0
  %v701 = vrot.slane %v637, 1
  %v702 = vrot.slane %v638, 1
  %v703 = vrot.slane %v639, 1
  %v704 = vrot.slane %v640, 1
  %v705 = vrot.slane %v641, 1
  %v706 = vrot.slane %v642, 1
  %v707 = vrot.slane %v643, 1
  %v708 = vrot.slane %v644, 1
  %v709 = vrot.slane %v645, 1
  %v710 = vrot.slane %v646, 1
  %v711 = vrot.slane %v647, 1
  %v712 = vrot.slane %v648, 1
  %v713 = vrot.slane %v649, 1
  %v714 = vrot.slane %v650, 1
  %v715 = vrot.slane %v651, 1
  %v716 = vrot.slane %v652, 1
  %v717 = vrot.slane %v653, 1
  %v718 = vrot.slane %v654, 1
  %v719 = vrot.slane %v655, 1
  %v720 = vrot.slane %v656, 1
  %v721 = vrot.slane %v657, 1
  %v722 = vrot.slane %v658, 1
  %v723 = vrot.slane %v659, 1
  %v724 = vrot.slane %v660, 1
  %v725 = vrot.slane %v661, 1
  %v726 = vrot.slane %v662, 1
  %v727 = vrot.slane %v663, 1
  %v728 = vrot.slane %v664, 1
  %v729 = vrot.slane %v665, 1
  %v730 = vrot.slane %v666, 1
  %v731 = vrot.slane %v667, 1
  %v732 = vrot.slane %v668, 1
  %v733 = vrot.slane %v669, 1
  %v734 = vrot.slane %v670, 1
  %v735 = vrot.slane %v671, 1
  %v736 = vrot.slane %v672, 1
  %v737 = vrot.slane %v673, 1
  %v738 = vrot.slane %v674, 1
  %v739 = vrot.slane %v675, 1
  %v740 = vrot.slane %v676, 1
  %v741 = vrot.slane %v677, 1
  %v742 = vrot.slane %v678, 1
  %v743 = vrot.slane %v679, 1
  %v744 = vrot.slane %v680, 1
  %v745 = vrot.slane %v681, 1
  %v746 = vrot.slane %v682, 1
  %v747 = vrot.slane %v683, 1
  %v748 = vrot.slane %v684, 1
  %v749 = vrot.slane %v685, 1
  %v750 = vrot.slane %v686, 1
  %v751 = vrot.slane %v687, 1
  %v752 = vrot.slane %v688, 1
  %v753 = vrot.slane %v689, 1
  %v754 = vrot.slane %v690, 1
  %v755 = vrot.slane %v691, 1
  %v756 = vrot.slane %v692, 1
  %v757 = vrot.slane %v693, 1
  %v758 = vrot.slane %v694, 1
  %v759 = vrot.slane %v695, 1
  %v760 = vrot.slane %v696, 1
  %v761 = vrot.slane %v697, 1
  %v762 = vrot.slane %v698, 1
  %v763 = vrot.slane %v699, 1
  %v764 = vrot.slane %v700, 1
  %v765 = vlaneseq
  %v766 = vshrl.u32 %v765, 7
  %vm767 = vcmp.lt.s32.totalorder %v766, 7
  %v768 = vsel %vm767, %v763, %v764
  %v769 = vsel %vm767, %v762, %v763
  %v770 = vsel %vm767, %v761, %v762
  %v771 = vsel %vm767, %v760, %v761
  %v772 = vsel %vm767, %v759, %v760
  %v773 = vsel %vm767, %v758, %v759
  %v774 = vsel %vm767, %v757, %v758
  %v775 = vsel %vm767, %v756, %v757
  %v776 = vsel %vm767, %v755, %v756
  %v777 = vsel %vm767, %v754, %v755
  %v778 = vsel %vm767, %v753, %v754
  %v779 = vsel %vm767, %v752, %v753
  %v780 = vsel %vm767, %v751, %v752
  %v781 = vsel %vm767, %v750, %v751
  %v782 = vsel %vm767, %v749, %v750
  %v783 = vsel %vm767, %v748, %v749
  %v784 = vsel %vm767, %v747, %v748
  %v785 = vsel %vm767, %v746, %v747
  %v786 = vsel %vm767, %v745, %v746
  %v787 = vsel %vm767, %v744, %v745
  %v788 = vsel %vm767, %v743, %v744
  %v789 = vsel %vm767, %v742, %v743
  %v790 = vsel %vm767, %v741, %v742
  %v791 = vsel %vm767, %v740, %v741
  %v792 = vsel %vm767, %v739, %v740
  %v793 = vsel %vm767, %v738, %v739
  %v794 = vsel %vm767, %v737, %v738
  %v795 = vsel %vm767, %v736, %v737
  %v796 = vsel %vm767, %v735, %v736
  %v797 = vsel %vm767, %v734, %v735
  %v798 = vsel %vm767, %v733, %v734
  %v799 = vsel %vm767, %v732, %v733
  %v800 = vsel %vm767, %v731, %v732
  %v801 = vsel %vm767, %v730, %v731
  %v802 = vsel %vm767, %v729, %v730
  %v803 = vsel %vm767, %v728, %v729
  %v804 = vsel %vm767, %v727, %v728
  %v805 = vsel %vm767, %v726, %v727
  %v806 = vsel %vm767, %v725, %v726
  %v807 = vsel %vm767, %v724, %v725
  %v808 = vsel %vm767, %v723, %v724
  %v809 = vsel %vm767, %v722, %v723
  %v810 = vsel %vm767, %v721, %v722
  %v811 = vsel %vm767, %v720, %v721
  %v812 = vsel %vm767, %v719, %v720
  %v813 = vsel %vm767, %v718, %v719
  %v814 = vsel %vm767, %v717, %v718
  %v815 = vsel %vm767, %v716, %v717
  %v816 = vsel %vm767, %v715, %v716
  %v817 = vsel %vm767, %v714, %v715
  %v818 = vsel %vm767, %v713, %v714
  %v819 = vsel %vm767, %v712, %v713
  %v820 = vsel %vm767, %v711, %v712
  %v821 = vsel %vm767, %v710, %v711
  %v822 = vsel %vm767, %v709, %v710
  %v823 = vsel %vm767, %v708, %v709
  %v824 = vsel %vm767, %v707, %v708
  %v825 = vsel %vm767, %v706, %v707
  %v826 = vsel %vm767, %v705, %v706
  %v827 = vsel %vm767, %v704, %v705
  %v828 = vsel %vm767, %v703, %v704
  %v829 = vsel %vm767, %v702, %v703
  %v830 = vsel %vm767, %v701, %v702
  %v831 = vsel %vm767, %v764, %v701
  %v832 = vld [vmem:[%s1] sm:$0xff]
  %v833 = vld [vmem:[%s1 + $0x8] sm:$0xff]
  %v834 = vld [vmem:[%s1 + $0x10] sm:$0xff]
  %v835 = vld [vmem:[%s1 + $0x18] sm:$0xff]
  %v836 = vld [vmem:[%s1 + $0x20] sm:$0xff]
  %v837 = vld [vmem:[%s1 + $0x28] sm:$0xff]
  %v838 = vld [vmem:[%s1 + $0x30] sm:$0xff]
  %v839 = vld [vmem:[%s1 + $0x38] sm:$0xff]
  %v840 = vld [vmem:[%s1 + $0x40] sm:$0xff]
  %v841 = vld [vmem:[%s1 + $0x48] sm:$0xff]
  %v842 = vld [vmem:[%s1 + $0x50] sm:$0xff]
  %v843 = vld [vmem:[%s1 + $0x58] sm:$0xff]
  %v844 = vld [vmem:[%s1 + $0x60] sm:$0xff]
  %v845 = vld [vmem:[%s1 + $0x68] sm:$0xff]
  %v846 = vld [vmem:[%s1 + $0x70] sm:$0xff]
  %v847 = vld [vmem:[%s1 + $0x78] sm:$0xff]
  %v848 = vld [vmem:[%s1 + $0x80] sm:$0xff]
  %v849 = vld [vmem:[%s1 + $0x88] sm:$0xff]
  %v850 = vld [vmem:[%s1 + $0x90] sm:$0xff]
  %v851 = vld [vmem:[%s1 + $0x98] sm:$0xff]
  %v852 = vld [vmem:[%s1 + $0xa0] sm:$0xff]
  %v853 = vld [vmem:[%s1 + $0xa8] sm:$0xff]
  %v854 = vld [vmem:[%s1 + $0xb0] sm:$0xff]
  %v855 = vld [vmem:[%s1 + $0xb8] sm:$0xff]
  %v856 = vld [vmem:[%s1 + $0xc0] sm:$0xff]
  %v857 = vld [vmem:[%s1 + $0xc8] sm:$0xff]
  %v858 = vld [vmem:[%s1 + $0xd0] sm:$0xff]
  %v859 = vld [vmem:[%s1 + $0xd8] sm:$0xff]
  %v860 = vld [vmem:[%s1 + $0xe0] sm:$0xff]
  %v861 = vld [vmem:[%s1 + $0xe8] sm:$0xff]
  %v862 = vld [vmem:[%s1 + $0xf0] sm:$0xff]
  %v863 = vld [vmem:[%s1 + $0xf8] sm:$0xff]
  %v864 = vld [vmem:[%s1 + $0x100] sm:$0xff]
  %v865 = vld [vmem:[%s1 + $0x108] sm:$0xff]
  %v866 = vld [vmem:[%s1 + $0x110] sm:$0xff]
  %v867 = vld [vmem:[%s1 + $0x118] sm:$0xff]
  %v868 = vld [vmem:[%s1 + $0x120] sm:$0xff]
  %v869 = vld [vmem:[%s1 + $0x128] sm:$0xff]
  %v870 = vld [vmem:[%s1 + $0x130] sm:$0xff]
  %v871 = vld [vmem:[%s1 + $0x138] sm:$0xff]
  %v872 = vld [vmem:[%s1 + $0x140] sm:$0xff]
  %v873 = vld [vmem:[%s1 + $0x148] sm:$0xff]
  %v874 = vld [vmem:[%s1 + $0x150] sm:$0xff]
  %v875 = vld [vmem:[%s1 + $0x158] sm:$0xff]
  %v876 = vld [vmem:[%s1 + $0x160] sm:$0xff]
  %v877 = vld [vmem:[%s1 + $0x168] sm:$0xff]
  %v878 = vld [vmem:[%s1 + $0x170] sm:$0xff]
  %v879 = vld [vmem:[%s1 + $0x178] sm:$0xff]
  %v880 = vld [vmem:[%s1 + $0x180] sm:$0xff]
  %v881 = vld [vmem:[%s1 + $0x188] sm:$0xff]
  %v882 = vld [vmem:[%s1 + $0x190] sm:$0xff]
  %v883 = vld [vmem:[%s1 + $0x198] sm:$0xff]
  %v884 = vld [vmem:[%s1 + $0x1a0] sm:$0xff]
  %v885 = vld [vmem:[%s1 + $0x1a8] sm:$0xff]
  %v886 = vld [vmem:[%s1 + $0x1b0] sm:$0xff]
  %v887 = vld [vmem:[%s1 + $0x1b8] sm:$0xff]
  %v888 = vld [vmem:[%s1 + $0x1c0] sm:$0xff]
  %v889 = vld [vmem:[%s1 + $0x1c8] sm:$0xff]
  %v890 = vld [vmem:[%s1 + $0x1d0] sm:$0xff]
  %v891 = vld [vmem:[%s1 + $0x1d8] sm:$0xff]
  %v892 = vld [vmem:[%s1 + $0x1e0] sm:$0xff]
  %v893 = vld [vmem:[%s1 + $0x1e8] sm:$0xff]
  %v894 = vld [vmem:[%s1 + $0x1f0] sm:$0xff]
  %v895 = vld [vmem:[%s1 + $0x1f8] sm:$0xff]
  %897 = vset.pattern.permute.xlu0 0
  %898 = vperm.xlu0 %897, %v832
  %v899 = vpop.permute.xlu0 %898
  %902 = vset.pattern.permute.xlu0 0
  %903 = vperm.xlu0 %902, %v833
  %v904 = vpop.permute.xlu0 %903
  %907 = vset.pattern.permute.xlu0 0
  %908 = vperm.xlu0 %907, %v834
  %v909 = vpop.permute.xlu0 %908
  %912 = vset.pattern.permute.xlu0 0
  %913 = vperm.xlu0 %912, %v835
  %v914 = vpop.permute.xlu0 %913
  %917 = vset.pattern.permute.xlu0 0
  %918 = vperm.xlu0 %917, %v836
  %v919 = vpop.permute.xlu0 %918
  %922 = vset.pattern.permute.xlu0 0
  %923 = vperm.xlu0 %922, %v837
  %v924 = vpop.permute.xlu0 %923
  %927 = vset.pattern.permute.xlu0 0
  %928 = vperm.xlu0 %927, %v838
  %v929 = vpop.permute.xlu0 %928
  %932 = vset.pattern.permute.xlu0 0
  %933 = vperm.xlu0 %932, %v839
  %v934 = vpop.permute.xlu0 %933
  %937 = vset.pattern.permute.xlu0 0
  %938 = vperm.xlu0 %937, %v840
  %v939 = vpop.permute.xlu0 %938
  %942 = vset.pattern.permute.xlu0 0
  %943 = vperm.xlu0 %942, %v841
  %v944 = vpop.permute.xlu0 %943
  %947 = vset.pattern.permute.xlu0 0
  %948 = vperm.xlu0 %947, %v842
  %v949 = vpop.permute.xlu0 %948
  %952 = vset.pattern.permute.xlu0 0
  %953 = vperm.xlu0 %952, %v843
  %v954 = vpop.permute.xlu0 %953
  %957 = vset.pattern.permute.xlu0 0
  %958 = vperm.xlu0 %957, %v844
  %v959 = vpop.permute.xlu0 %958
  %962 = vset.pattern.permute.xlu0 0
  %963 = vperm.xlu0 %962, %v845
  %v964 = vpop.permute.xlu0 %963
  %967 = vset.pattern.permute.xlu0 0
  %968 = vperm.xlu0 %967, %v846
  %v969 = vpop.permute.xlu0 %968
  %972 = vset.pattern.permute.xlu0 0
  %973 = vperm.xlu0 %972, %v847
  %v974 = vpop.permute.xlu0 %973
  %977 = vset.pattern.permute.xlu0 0
  %978 = vperm.xlu0 %977, %v848
  %v979 = vpop.permute.xlu0 %978
  %982 = vset.pattern.permute.xlu0 0
  %983 = vperm.xlu0 %982, %v849
  %v984 = vpop.permute.xlu0 %983
  %987 = vset.pattern.permute.xlu0 0
  %988 = vperm.xlu0 %987, %v850
  %v989 = vpop.permute.xlu0 %988
  %992 = vset.pattern.permute.xlu0 0
  %993 = vperm.xlu0 %992, %v851
  %v994 = vpop.permute.xlu0 %993
  %997 = vset.pattern.permute.xlu0 0
  %998 = vperm.xlu0 %997, %v852
  %v999 = vpop.permute.xlu0 %998
  %1002 = vset.pattern.permute.xlu0 0
  %1003 = vperm.xlu0 %1002, %v853
  %v1004 = vpop.permute.xlu0 %1003
  %1007 = vset.pattern.permute.xlu0 0
  %1008 = vperm.xlu0 %1007, %v854
  %v1009 = vpop.permute.xlu0 %1008
  %1012 = vset.pattern.permute.xlu0 0
  %1013 = vperm.xlu0 %1012, %v855
  %v1014 = vpop.permute.xlu0 %1013
  %1017 = vset.pattern.permute.xlu0 0
  %1018 = vperm.xlu0 %1017, %v856
  %v1019 = vpop.permute.xlu0 %1018
  %1022 = vset.pattern.permute.xlu0 0
  %1023 = vperm.xlu0 %1022, %v857
  %v1024 = vpop.permute.xlu0 %1023
  %1027 = vset.pattern.permute.xlu0 0
  %1028 = vperm.xlu0 %1027, %v858
  %v1029 = vpop.permute.xlu0 %1028
  %1032 = vset.pattern.permute.xlu0 0
  %1033 = vperm.xlu0 %1032, %v859
  %v1034 = vpop.permute.xlu0 %1033
  %1037 = vset.pattern.permute.xlu0 0
  %1038 = vperm.xlu0 %1037, %v860
  %v1039 = vpop.permute.xlu0 %1038
  %1042 = vset.pattern.permute.xlu0 0
  %1043 = vperm.xlu0 %1042, %v861
  %v1044 = vpop.permute.xlu0 %1043
  %1047 = vset.pattern.permute.xlu0 0
  %1048 = vperm.xlu0 %1047, %v862
  %v1049 = vpop.permute.xlu0 %1048
  %1052 = vset.pattern.permute.xlu0 0
  %1053 = vperm.xlu0 %1052, %v863
  %v1054 = vpop.permute.xlu0 %1053
  %1057 = vset.pattern.permute.xlu0 0
  %1058 = vperm.xlu0 %1057, %v864
  %v1059 = vpop.permute.xlu0 %1058
  %1062 = vset.pattern.permute.xlu0 0
  %1063 = vperm.xlu0 %1062, %v865
  %v1064 = vpop.permute.xlu0 %1063
  %1067 = vset.pattern.permute.xlu0 0
  %1068 = vperm.xlu0 %1067, %v866
  %v1069 = vpop.permute.xlu0 %1068
  %1072 = vset.pattern.permute.xlu0 0
  %1073 = vperm.xlu0 %1072, %v867
  %v1074 = vpop.permute.xlu0 %1073
  %1077 = vset.pattern.permute.xlu0 0
  %1078 = vperm.xlu0 %1077, %v868
  %v1079 = vpop.permute.xlu0 %1078
  %1082 = vset.pattern.permute.xlu0 0
  %1083 = vperm.xlu0 %1082, %v869
  %v1084 = vpop.permute.xlu0 %1083
  %1087 = vset.pattern.permute.xlu0 0
  %1088 = vperm.xlu0 %1087, %v870
  %v1089 = vpop.permute.xlu0 %1088
  %1092 = vset.pattern.permute.xlu0 0
  %1093 = vperm.xlu0 %1092, %v871
  %v1094 = vpop.permute.xlu0 %1093
  %1097 = vset.pattern.permute.xlu0 0
  %1098 = vperm.xlu0 %1097, %v872
  %v1099 = vpop.permute.xlu0 %1098
  %1102 = vset.pattern.permute.xlu0 0
  %1103 = vperm.xlu0 %1102, %v873
  %v1104 = vpop.permute.xlu0 %1103
  %1107 = vset.pattern.permute.xlu0 0
  %1108 = vperm.xlu0 %1107, %v874
  %v1109 = vpop.permute.xlu0 %1108
  %1112 = vset.pattern.permute.xlu0 0
  %1113 = vperm.xlu0 %1112, %v875
  %v1114 = vpop.permute.xlu0 %1113
  %1117 = vset.pattern.permute.xlu0 0
  %1118 = vperm.xlu0 %1117, %v876
  %v1119 = vpop.permute.xlu0 %1118
  %1122 = vset.pattern.permute.xlu0 0
  %1123 = vperm.xlu0 %1122, %v877
  %v1124 = vpop.permute.xlu0 %1123
  %1127 = vset.pattern.permute.xlu0 0
  %1128 = vperm.xlu0 %1127, %v878
  %v1129 = vpop.permute.xlu0 %1128
  %1132 = vset.pattern.permute.xlu0 0
  %1133 = vperm.xlu0 %1132, %v879
  %v1134 = vpop.permute.xlu0 %1133
  %1137 = vset.pattern.permute.xlu0 0
  %1138 = vperm.xlu0 %1137, %v880
  %v1139 = vpop.permute.xlu0 %1138
  %1142 = vset.pattern.permute.xlu0 0
  %1143 = vperm.xlu0 %1142, %v881
  %v1144 = vpop.permute.xlu0 %1143
  %1147 = vset.pattern.permute.xlu0 0
  %1148 = vperm.xlu0 %1147, %v882
  %v1149 = vpop.permute.xlu0 %1148
  %1152 = vset.pattern.permute.xlu0 0
  %1153 = vperm.xlu0 %1152, %v883
  %v1154 = vpop.permute.xlu0 %1153
  %1157 = vset.pattern.permute.xlu0 0
  %1158 = vperm.xlu0 %1157, %v884
  %v1159 = vpop.permute.xlu0 %1158
  %1162 = vset.pattern.permute.xlu0 0
  %1163 = vperm.xlu0 %1162, %v885
  %v1164 = vpop.permute.xlu0 %1163
  %1167 = vset.pattern.permute.xlu0 0
  %1168 = vperm.xlu0 %1167, %v886
  %v1169 = vpop.permute.xlu0 %1168
  %1172 = vset.pattern.permute.xlu0 0
  %1173 = vperm.xlu0 %1172, %v887
  %v1174 = vpop.permute.xlu0 %1173
  %1177 = vset.pattern.permute.xlu0 0
  %1178 = vperm.xlu0 %1177, %v888
  %v1179 = vpop.permute.xlu0 %1178
  %1182 = vset.pattern.permute.xlu0 0
  %1183 = vperm.xlu0 %1182, %v889
  %v1184 = vpop.permute.xlu0 %1183
  %1187 = vset.pattern.permute.xlu0 0
  %1188 = vperm.xlu0 %1187, %v890
  %v1189 = vpop.permute.xlu0 %1188
  %1192 = vset.pattern.permute.xlu0 0
  %1193 = vperm.xlu0 %1192, %v891
  %v1194 = vpop.permute.xlu0 %1193
  %1197 = vset.pattern.permute.xlu0 0
  %1198 = vperm.xlu0 %1197, %v892
  %v1199 = vpop.permute.xlu0 %1198
  %1202 = vset.pattern.permute.xlu0 0
  %1203 = vperm.xlu0 %1202, %v893
  %v1204 = vpop.permute.xlu0 %1203
  %1207 = vset.pattern.permute.xlu0 0
  %1208 = vperm.xlu0 %1207, %v894
  %v1209 = vpop.permute.xlu0 %1208
  %1212 = vset.pattern.permute.xlu0 0
  %1213 = vperm.xlu0 %1212, %v895
  %v1214 = vpop.permute.xlu0 %1213
  %v1216 = vmul.f32 %v768, %v899
  %v1217 = vmul.f32 %v831, %v904
  %v1218 = vmul.f32 %v830, %v909
  %v1219 = vmul.f32 %v829, %v914
  %v1220 = vmul.f32 %v828, %v919
  %v1221 = vmul.f32 %v827, %v924
  %v1222 = vmul.f32 %v826, %v929
  %v1223 = vmul.f32 %v825, %v934
  %v1224 = vmul.f32 %v824, %v939
  %v1225 = vmul.f32 %v823, %v944
  %v1226 = vmul.f32 %v822, %v949
  %v1227 = vmul.f32 %v821, %v954
  %v1228 = vmul.f32 %v820, %v959
  %v1229 = vmul.f32 %v819, %v964
  %v1230 = vmul.f32 %v818, %v969
  %v1231 = vmul.f32 %v817, %v974
  %v1232 = vmul.f32 %v816, %v979
  %v1233 = vmul.f32 %v815, %v984
  %v1234 = vmul.f32 %v814, %v989
  %v1235 = vmul.f32 %v813, %v994
  %v1236 = vmul.f32 %v812, %v999
  %v1237 = vmul.f32 %v811, %v1004
  %v1238 = vmul.f32 %v810, %v1009
  %v1239 = vmul.f32 %v809, %v1014
  %v1240 = vmul.f32 %v808, %v1019
  %v1241 = vmul.f32 %v807, %v1024
  %v1242 = vmul.f32 %v806, %v1029
  %v1243 = vmul.f32 %v805, %v1034
  %v1244 = vmul.f32 %v804, %v1039
  %v1245 = vmul.f32 %v803, %v1044
  %v1246 = vmul.f32 %v802, %v1049
  %v1247 = vmul.f32 %v801, %v1054
  %v1248 = vmul.f32 %v800, %v1059
  %v1249 = vmul.f32 %v799, %v1064
  %v1250 = vmul.f32 %v798, %v1069
  %v1251 = vmul.f32 %v797, %v1074
  %v1252 = vmul.f32 %v796, %v1079
  %v1253 = vmul.f32 %v795, %v1084
  %v1254 = vmul.f32 %v794, %v1089
  %v1255 = vmul.f32 %v793, %v1094
  %v1256 = vmul.f32 %v792, %v1099
  %v1257 = vmul.f32 %v791, %v1104
  %v1258 = vmul.f32 %v790, %v1109
  %v1259 = vmul.f32 %v789, %v1114
  %v1260 = vmul.f32 %v788, %v1119
  %v1261 = vmul.f32 %v787, %v1124
  %v1262 = vmul.f32 %v786, %v1129
  %v1263 = vmul.f32 %v785, %v1134
  %v1264 = vmul.f32 %v784, %v1139
  %v1265 = vmul.f32 %v783, %v1144
  %v1266 = vmul.f32 %v782, %v1149
  %v1267 = vmul.f32 %v781, %v1154
  %v1268 = vmul.f32 %v780, %v1159
  %v1269 = vmul.f32 %v779, %v1164
  %v1270 = vmul.f32 %v778, %v1169
  %v1271 = vmul.f32 %v777, %v1174
  %v1272 = vmul.f32 %v776, %v1179
  %v1273 = vmul.f32 %v775, %v1184
  %v1274 = vmul.f32 %v774, %v1189
  %v1275 = vmul.f32 %v773, %v1194
  %v1276 = vmul.f32 %v772, %v1199
  %v1277 = vmul.f32 %v771, %v1204
  %v1278 = vmul.f32 %v770, %v1209
  %v1279 = vmul.f32 %v769, %v1214
  %v1280 = vpack.c.bf16 %v1217, %v1216
  %v1281 = vpack.c.bf16 %v1219, %v1218
  %v1282 = vpack.c.bf16 %v1221, %v1220
  %v1283 = vpack.c.bf16 %v1223, %v1222
  %v1284 = vpack.c.bf16 %v1225, %v1224
  %v1285 = vpack.c.bf16 %v1227, %v1226
  %v1286 = vpack.c.bf16 %v1229, %v1228
  %v1287 = vpack.c.bf16 %v1231, %v1230
  %v1288 = vpack.c.bf16 %v1233, %v1232
  %v1289 = vpack.c.bf16 %v1235, %v1234
  %v1290 = vpack.c.bf16 %v1237, %v1236
  %v1291 = vpack.c.bf16 %v1239, %v1238
  %v1292 = vpack.c.bf16 %v1241, %v1240
  %v1293 = vpack.c.bf16 %v1243, %v1242
  %v1294 = vpack.c.bf16 %v1245, %v1244
  %v1295 = vpack.c.bf16 %v1247, %v1246
  %v1296 = vpack.c.bf16 %v1249, %v1248
  %v1297 = vpack.c.bf16 %v1251, %v1250
  %v1298 = vpack.c.bf16 %v1253, %v1252
  %v1299 = vpack.c.bf16 %v1255, %v1254
  %v1300 = vpack.c.bf16 %v1257, %v1256
  %v1301 = vpack.c.bf16 %v1259, %v1258
  %v1302 = vpack.c.bf16 %v1261, %v1260
  %v1303 = vpack.c.bf16 %v1263, %v1262
  %v1304 = vpack.c.bf16 %v1265, %v1264
  %v1305 = vpack.c.bf16 %v1267, %v1266
  %v1306 = vpack.c.bf16 %v1269, %v1268
  %v1307 = vpack.c.bf16 %v1271, %v1270
  %v1308 = vpack.c.bf16 %v1273, %v1272
  %v1309 = vpack.c.bf16 %v1275, %v1274
  %v1310 = vpack.c.bf16 %v1277, %v1276
  %v1311 = vpack.c.bf16 %v1279, %v1278
  %v1312 = vrot.slane %v637, 2
  %v1313 = vrot.slane %v638, 2
  %v1314 = vrot.slane %v639, 2
  %v1315 = vrot.slane %v640, 2
  %v1316 = vrot.slane %v641, 2
  %v1317 = vrot.slane %v642, 2
  %v1318 = vrot.slane %v643, 2
  %v1319 = vrot.slane %v644, 2
  %v1320 = vrot.slane %v645, 2
  %v1321 = vrot.slane %v646, 2
  %v1322 = vrot.slane %v647, 2
  %v1323 = vrot.slane %v648, 2
  %v1324 = vrot.slane %v649, 2
  %v1325 = vrot.slane %v650, 2
  %v1326 = vrot.slane %v651, 2
  %v1327 = vrot.slane %v652, 2
  %v1328 = vrot.slane %v653, 2
  %v1329 = vrot.slane %v654, 2
  %v1330 = vrot.slane %v655, 2
  %v1331 = vrot.slane %v656, 2
  %v1332 = vrot.slane %v657, 2
  %v1333 = vrot.slane %v658, 2
  %v1334 = vrot.slane %v659, 2
  %v1335 = vrot.slane %v660, 2
  %v1336 = vrot.slane %v661, 2
  %v1337 = vrot.slane %v662, 2
  %v1338 = vrot.slane %v663, 2
  %v1339 = vrot.slane %v664, 2
  %v1340 = vrot.slane %v665, 2
  %v1341 = vrot.slane %v666, 2
  %v1342 = vrot.slane %v667, 2
  %v1343 = vrot.slane %v668, 2
  %v1344 = vrot.slane %v669, 2
  %v1345 = vrot.slane %v670, 2
  %v1346 = vrot.slane %v671, 2
  %v1347 = vrot.slane %v672, 2
  %v1348 = vrot.slane %v673, 2
  %v1349 = vrot.slane %v674, 2
  %v1350 = vrot.slane %v675, 2
  %v1351 = vrot.slane %v676, 2
  %v1352 = vrot.slane %v677, 2
  %v1353 = vrot.slane %v678, 2
  %v1354 = vrot.slane %v679, 2
  %v1355 = vrot.slane %v680, 2
  %v1356 = vrot.slane %v681, 2
  %v1357 = vrot.slane %v682, 2
  %v1358 = vrot.slane %v683, 2
  %v1359 = vrot.slane %v684, 2
  %v1360 = vrot.slane %v685, 2
  %v1361 = vrot.slane %v686, 2
  %v1362 = vrot.slane %v687, 2
  %v1363 = vrot.slane %v688, 2
  %v1364 = vrot.slane %v689, 2
  %v1365 = vrot.slane %v690, 2
  %v1366 = vrot.slane %v691, 2
  %v1367 = vrot.slane %v692, 2
  %v1368 = vrot.slane %v693, 2
  %v1369 = vrot.slane %v694, 2
  %v1370 = vrot.slane %v695, 2
  %v1371 = vrot.slane %v696, 2
  %v1372 = vrot.slane %v697, 2
  %v1373 = vrot.slane %v698, 2
  %v1374 = vrot.slane %v699, 2
  %v1375 = vrot.slane %v700, 2
  %vm1376 = vcmp.lt.s32.totalorder %v766, 6
  %v1377 = vsel %vm1376, %v1374, %v1375
  %v1378 = vsel %vm1376, %v1373, %v1374
  %v1379 = vsel %vm1376, %v1372, %v1373
  %v1380 = vsel %vm1376, %v1371, %v1372
  %v1381 = vsel %vm1376, %v1370, %v1371
  %v1382 = vsel %vm1376, %v1369, %v1370
  %v1383 = vsel %vm1376, %v1368, %v1369
  %v1384 = vsel %vm1376, %v1367, %v1368
  %v1385 = vsel %vm1376, %v1366, %v1367
  %v1386 = vsel %vm1376, %v1365, %v1366
  %v1387 = vsel %vm1376, %v1364, %v1365
  %v1388 = vsel %vm1376, %v1363, %v1364
  %v1389 = vsel %vm1376, %v1362, %v1363
  %v1390 = vsel %vm1376, %v1361, %v1362
  %v1391 = vsel %vm1376, %v1360, %v1361
  %v1392 = vsel %vm1376, %v1359, %v1360
  %v1393 = vsel %vm1376, %v1358, %v1359
  %v1394 = vsel %vm1376, %v1357, %v1358
  %v1395 = vsel %vm1376, %v1356, %v1357
  %v1396 = vsel %vm1376, %v1355, %v1356
  %v1397 = vsel %vm1376, %v1354, %v1355
  %v1398 = vsel %vm1376, %v1353, %v1354
  %v1399 = vsel %vm1376, %v1352, %v1353
  %v1400 = vsel %vm1376, %v1351, %v1352
  %v1401 = vsel %vm1376, %v1350, %v1351
  %v1402 = vsel %vm1376, %v1349, %v1350
  %v1403 = vsel %vm1376, %v1348, %v1349
  %v1404 = vsel %vm1376, %v1347, %v1348
  %v1405 = vsel %vm1376, %v1346, %v1347
  %v1406 = vsel %vm1376, %v1345, %v1346
  %v1407 = vsel %vm1376, %v1344, %v1345
  %v1408 = vsel %vm1376, %v1343, %v1344
  %v1409 = vsel %vm1376, %v1342, %v1343
  %v1410 = vsel %vm1376, %v1341, %v1342
  %v1411 = vsel %vm1376, %v1340, %v1341
  %v1412 = vsel %vm1376, %v1339, %v1340
  %v1413 = vsel %vm1376, %v1338, %v1339
  %v1414 = vsel %vm1376, %v1337, %v1338
  %v1415 = vsel %vm1376, %v1336, %v1337
  %v1416 = vsel %vm1376, %v1335, %v1336
  %v1417 = vsel %vm1376, %v1334, %v1335
  %v1418 = vsel %vm1376, %v1333, %v1334
  %v1419 = vsel %vm1376, %v1332, %v1333
  %v1420 = vsel %vm1376, %v1331, %v1332
  %v1421 = vsel %vm1376, %v1330, %v1331
  %v1422 = vsel %vm1376, %v1329, %v1330
  %v1423 = vsel %vm1376, %v1328, %v1329
  %v1424 = vsel %vm1376, %v1327, %v1328
  %v1425 = vsel %vm1376, %v1326, %v1327
  %v1426 = vsel %vm1376, %v1325, %v1326
  %v1427 = vsel %vm1376, %v1324, %v1325
  %v1428 = vsel %vm1376, %v1323, %v1324
  %v1429 = vsel %vm1376, %v1322, %v1323
  %v1430 = vsel %vm1376, %v1321, %v1322
  %v1431 = vsel %vm1376, %v1320, %v1321
  %v1432 = vsel %vm1376, %v1319, %v1320
  %v1433 = vsel %vm1376, %v1318, %v1319
  %v1434 = vsel %vm1376, %v1317, %v1318
  %v1435 = vsel %vm1376, %v1316, %v1317
  %v1436 = vsel %vm1376, %v1315, %v1316
  %v1437 = vsel %vm1376, %v1314, %v1315
  %v1438 = vsel %vm1376, %v1313, %v1314
  %v1439 = vsel %vm1376, %v1312, %v1313
  %v1440 = vsel %vm1376, %v1375, %v1312
  %1441 = vset.pattern.permute.xlu0 1
  %1442 = vperm.xlu0 %1441, %v832
  %v1443 = vpop.permute.xlu0 %1442
  %1445 = vset.pattern.permute.xlu0 1
  %1446 = vperm.xlu0 %1445, %v833
  %v1447 = vpop.permute.xlu0 %1446
  %1449 = vset.pattern.permute.xlu0 1
  %1450 = vperm.xlu0 %1449, %v834
  %v1451 = vpop.permute.xlu0 %1450
  %1453 = vset.pattern.permute.xlu0 1
  %1454 = vperm.xlu0 %1453, %v835
  %v1455 = vpop.permute.xlu0 %1454
  %1457 = vset.pattern.permute.xlu0 1
  %1458 = vperm.xlu0 %1457, %v836
  %v1459 = vpop.permute.xlu0 %1458
  %1461 = vset.pattern.permute.xlu0 1
  %1462 = vperm.xlu0 %1461, %v837
  %v1463 = vpop.permute.xlu0 %1462
  %1465 = vset.pattern.permute.xlu0 1
  %1466 = vperm.xlu0 %1465, %v838
  %v1467 = vpop.permute.xlu0 %1466
  %1469 = vset.pattern.permute.xlu0 1
  %1470 = vperm.xlu0 %1469, %v839
  %v1471 = vpop.permute.xlu0 %1470
  %1473 = vset.pattern.permute.xlu0 1
  %1474 = vperm.xlu0 %1473, %v840
  %v1475 = vpop.permute.xlu0 %1474
  %1477 = vset.pattern.permute.xlu0 1
  %1478 = vperm.xlu0 %1477, %v841
  %v1479 = vpop.permute.xlu0 %1478
  %1481 = vset.pattern.permute.xlu0 1
  %1482 = vperm.xlu0 %1481, %v842
  %v1483 = vpop.permute.xlu0 %1482
  %1485 = vset.pattern.permute.xlu0 1
  %1486 = vperm.xlu0 %1485, %v843
  %v1487 = vpop.permute.xlu0 %1486
  %1489 = vset.pattern.permute.xlu0 1
  %1490 = vperm.xlu0 %1489, %v844
  %v1491 = vpop.permute.xlu0 %1490
  %1493 = vset.pattern.permute.xlu0 1
  %1494 = vperm.xlu0 %1493, %v845
  %v1495 = vpop.permute.xlu0 %1494
  %1497 = vset.pattern.permute.xlu0 1
  %1498 = vperm.xlu0 %1497, %v846
  %v1499 = vpop.permute.xlu0 %1498
  %1501 = vset.pattern.permute.xlu0 1
  %1502 = vperm.xlu0 %1501, %v847
  %v1503 = vpop.permute.xlu0 %1502
  %1505 = vset.pattern.permute.xlu0 1
  %1506 = vperm.xlu0 %1505, %v848
  %v1507 = vpop.permute.xlu0 %1506
  %1509 = vset.pattern.permute.xlu0 1
  %1510 = vperm.xlu0 %1509, %v849
  %v1511 = vpop.permute.xlu0 %1510
  %1513 = vset.pattern.permute.xlu0 1
  %1514 = vperm.xlu0 %1513, %v850
  %v1515 = vpop.permute.xlu0 %1514
  %1517 = vset.pattern.permute.xlu0 1
  %1518 = vperm.xlu0 %1517, %v851
  %v1519 = vpop.permute.xlu0 %1518
  %1521 = vset.pattern.permute.xlu0 1
  %1522 = vperm.xlu0 %1521, %v852
  %v1523 = vpop.permute.xlu0 %1522
  %1525 = vset.pattern.permute.xlu0 1
  %1526 = vperm.xlu0 %1525, %v853
  %v1527 = vpop.permute.xlu0 %1526
  %1529 = vset.pattern.permute.xlu0 1
  %1530 = vperm.xlu0 %1529, %v854
  %v1531 = vpop.permute.xlu0 %1530
  %1533 = vset.pattern.permute.xlu0 1
  %1534 = vperm.xlu0 %1533, %v855
  %v1535 = vpop.permute.xlu0 %1534
  %1537 = vset.pattern.permute.xlu0 1
  %1538 = vperm.xlu0 %1537, %v856
  %v1539 = vpop.permute.xlu0 %1538
  %1541 = vset.pattern.permute.xlu0 1
  %1542 = vperm.xlu0 %1541, %v857
  %v1543 = vpop.permute.xlu0 %1542
  %1545 = vset.pattern.permute.xlu0 1
  %1546 = vperm.xlu0 %1545, %v858
  %v1547 = vpop.permute.xlu0 %1546
  %1549 = vset.pattern.permute.xlu0 1
  %1550 = vperm.xlu0 %1549, %v859
  %v1551 = vpop.permute.xlu0 %1550
  %1553 = vset.pattern.permute.xlu0 1
  %1554 = vperm.xlu0 %1553, %v860
  %v1555 = vpop.permute.xlu0 %1554
  %1557 = vset.pattern.permute.xlu0 1
  %1558 = vperm.xlu0 %1557, %v861
  %v1559 = vpop.permute.xlu0 %1558
  %1561 = vset.pattern.permute.xlu0 1
  %1562 = vperm.xlu0 %1561, %v862
  %v1563 = vpop.permute.xlu0 %1562
  %1565 = vset.pattern.permute.xlu0 1
  %1566 = vperm.xlu0 %1565, %v863
  %v1567 = vpop.permute.xlu0 %1566
  %1569 = vset.pattern.permute.xlu0 1
  %1570 = vperm.xlu0 %1569, %v864
  %v1571 = vpop.permute.xlu0 %1570
  %1573 = vset.pattern.permute.xlu0 1
  %1574 = vperm.xlu0 %1573, %v865
  %v1575 = vpop.permute.xlu0 %1574
  %1577 = vset.pattern.permute.xlu0 1
  %1578 = vperm.xlu0 %1577, %v866
  %v1579 = vpop.permute.xlu0 %1578
  %1581 = vset.pattern.permute.xlu0 1
  %1582 = vperm.xlu0 %1581, %v867
  %v1583 = vpop.permute.xlu0 %1582
  %1585 = vset.pattern.permute.xlu0 1
  %1586 = vperm.xlu0 %1585, %v868
  %v1587 = vpop.permute.xlu0 %1586
  %1589 = vset.pattern.permute.xlu0 1
  %1590 = vperm.xlu0 %1589, %v869
  %v1591 = vpop.permute.xlu0 %1590
  %1593 = vset.pattern.permute.xlu0 1
  %1594 = vperm.xlu0 %1593, %v870
  %v1595 = vpop.permute.xlu0 %1594
  %1597 = vset.pattern.permute.xlu0 1
  %1598 = vperm.xlu0 %1597, %v871
  %v1599 = vpop.permute.xlu0 %1598
  %1601 = vset.pattern.permute.xlu0 1
  %1602 = vperm.xlu0 %1601, %v872
  %v1603 = vpop.permute.xlu0 %1602
  %1605 = vset.pattern.permute.xlu0 1
  %1606 = vperm.xlu0 %1605, %v873
  %v1607 = vpop.permute.xlu0 %1606
  %1609 = vset.pattern.permute.xlu0 1
  %1610 = vperm.xlu0 %1609, %v874
  %v1611 = vpop.permute.xlu0 %1610
  %1613 = vset.pattern.permute.xlu0 1
  %1614 = vperm.xlu0 %1613, %v875
  %v1615 = vpop.permute.xlu0 %1614
  %1617 = vset.pattern.permute.xlu0 1
  %1618 = vperm.xlu0 %1617, %v876
  %v1619 = vpop.permute.xlu0 %1618
  %1621 = vset.pattern.permute.xlu0 1
  %1622 = vperm.xlu0 %1621, %v877
  %v1623 = vpop.permute.xlu0 %1622
  %1625 = vset.pattern.permute.xlu0 1
  %1626 = vperm.xlu0 %1625, %v878
  %v1627 = vpop.permute.xlu0 %1626
  %1629 = vset.pattern.permute.xlu0 1
  %1630 = vperm.xlu0 %1629, %v879
  %v1631 = vpop.permute.xlu0 %1630
  %1633 = vset.pattern.permute.xlu0 1
  %1634 = vperm.xlu0 %1633, %v880
  %v1635 = vpop.permute.xlu0 %1634
  %1637 = vset.pattern.permute.xlu0 1
  %1638 = vperm.xlu0 %1637, %v881
  %v1639 = vpop.permute.xlu0 %1638
  %1641 = vset.pattern.permute.xlu0 1
  %1642 = vperm.xlu0 %1641, %v882
  %v1643 = vpop.permute.xlu0 %1642
  %1645 = vset.pattern.permute.xlu0 1
  %1646 = vperm.xlu0 %1645, %v883
  %v1647 = vpop.permute.xlu0 %1646
  %1649 = vset.pattern.permute.xlu0 1
  %1650 = vperm.xlu0 %1649, %v884
  %v1651 = vpop.permute.xlu0 %1650
  %1653 = vset.pattern.permute.xlu0 1
  %1654 = vperm.xlu0 %1653, %v885
  %v1655 = vpop.permute.xlu0 %1654
  %1657 = vset.pattern.permute.xlu0 1
  %1658 = vperm.xlu0 %1657, %v886
  %v1659 = vpop.permute.xlu0 %1658
  %1661 = vset.pattern.permute.xlu0 1
  %1662 = vperm.xlu0 %1661, %v887
  %v1663 = vpop.permute.xlu0 %1662
  %1665 = vset.pattern.permute.xlu0 1
  %1666 = vperm.xlu0 %1665, %v888
  %v1667 = vpop.permute.xlu0 %1666
  %1669 = vset.pattern.permute.xlu0 1
  %1670 = vperm.xlu0 %1669, %v889
  %v1671 = vpop.permute.xlu0 %1670
  %1673 = vset.pattern.permute.xlu0 1
  %1674 = vperm.xlu0 %1673, %v890
  %v1675 = vpop.permute.xlu0 %1674
  %1677 = vset.pattern.permute.xlu0 1
  %1678 = vperm.xlu0 %1677, %v891
  %v1679 = vpop.permute.xlu0 %1678
  %1681 = vset.pattern.permute.xlu0 1
  %1682 = vperm.xlu0 %1681, %v892
  %v1683 = vpop.permute.xlu0 %1682
  %1685 = vset.pattern.permute.xlu0 1
  %1686 = vperm.xlu0 %1685, %v893
  %v1687 = vpop.permute.xlu0 %1686
  %1689 = vset.pattern.permute.xlu0 1
  %1690 = vperm.xlu0 %1689, %v894
  %v1691 = vpop.permute.xlu0 %1690
  %1693 = vset.pattern.permute.xlu0 1
  %1694 = vperm.xlu0 %1693, %v895
  %v1695 = vpop.permute.xlu0 %1694
  %v1697 = vmul.f32 %v1377, %v1443
  %v1698 = vmul.f32 %v1440, %v1447
  %v1699 = vmul.f32 %v1439, %v1451
  %v1700 = vmul.f32 %v1438, %v1455
  %v1701 = vmul.f32 %v1437, %v1459
  %v1702 = vmul.f32 %v1436, %v1463
  %v1703 = vmul.f32 %v1435, %v1467
  %v1704 = vmul.f32 %v1434, %v1471
  %v1705 = vmul.f32 %v1433, %v1475
  %v1706 = vmul.f32 %v1432, %v1479
  %v1707 = vmul.f32 %v1431, %v1483
  %v1708 = vmul.f32 %v1430, %v1487
  %v1709 = vmul.f32 %v1429, %v1491
  %v1710 = vmul.f32 %v1428, %v1495
  %v1711 = vmul.f32 %v1427, %v1499
  %v1712 = vmul.f32 %v1426, %v1503
  %v1713 = vmul.f32 %v1425, %v1507
  %v1714 = vmul.f32 %v1424, %v1511
  %v1715 = vmul.f32 %v1423, %v1515
  %v1716 = vmul.f32 %v1422, %v1519
  %v1717 = vmul.f32 %v1421, %v1523
  %v1718 = vmul.f32 %v1420, %v1527
  %v1719 = vmul.f32 %v1419, %v1531
  %v1720 = vmul.f32 %v1418, %v1535
  %v1721 = vmul.f32 %v1417, %v1539
  %v1722 = vmul.f32 %v1416, %v1543
  %v1723 = vmul.f32 %v1415, %v1547
  %v1724 = vmul.f32 %v1414, %v1551
  %v1725 = vmul.f32 %v1413, %v1555
  %v1726 = vmul.f32 %v1412, %v1559
  %v1727 = vmul.f32 %v1411, %v1563
  %v1728 = vmul.f32 %v1410, %v1567
  %v1729 = vmul.f32 %v1409, %v1571
  %v1730 = vmul.f32 %v1408, %v1575
  %v1731 = vmul.f32 %v1407, %v1579
  %v1732 = vmul.f32 %v1406, %v1583
  %v1733 = vmul.f32 %v1405, %v1587
  %v1734 = vmul.f32 %v1404, %v1591
  %v1735 = vmul.f32 %v1403, %v1595
  %v1736 = vmul.f32 %v1402, %v1599
  %v1737 = vmul.f32 %v1401, %v1603
  %v1738 = vmul.f32 %v1400, %v1607
  %v1739 = vmul.f32 %v1399, %v1611
  %v1740 = vmul.f32 %v1398, %v1615
  %v1741 = vmul.f32 %v1397, %v1619
  %v1742 = vmul.f32 %v1396, %v1623
  %v1743 = vmul.f32 %v1395, %v1627
  %v1744 = vmul.f32 %v1394, %v1631
  %v1745 = vmul.f32 %v1393, %v1635
  %v1746 = vmul.f32 %v1392, %v1639
  %v1747 = vmul.f32 %v1391, %v1643
  %v1748 = vmul.f32 %v1390, %v1647
  %v1749 = vmul.f32 %v1389, %v1651
  %v1750 = vmul.f32 %v1388, %v1655
  %v1751 = vmul.f32 %v1387, %v1659
  %v1752 = vmul.f32 %v1386, %v1663
  %v1753 = vmul.f32 %v1385, %v1667
  %v1754 = vmul.f32 %v1384, %v1671
  %v1755 = vmul.f32 %v1383, %v1675
  %v1756 = vmul.f32 %v1382, %v1679
  %v1757 = vmul.f32 %v1381, %v1683
  %v1758 = vmul.f32 %v1380, %v1687
  %v1759 = vmul.f32 %v1379, %v1691
  %v1760 = vmul.f32 %v1378, %v1695
  %v1761 = vpack.c.bf16 %v1698, %v1697
  %v1762 = vpack.c.bf16 %v1700, %v1699
  %v1763 = vpack.c.bf16 %v1702, %v1701
  %v1764 = vpack.c.bf16 %v1704, %v1703
  %v1765 = vpack.c.bf16 %v1706, %v1705
  %v1766 = vpack.c.bf16 %v1708, %v1707
  %v1767 = vpack.c.bf16 %v1710, %v1709
  %v1768 = vpack.c.bf16 %v1712, %v1711
  %v1769 = vpack.c.bf16 %v1714, %v1713
  %v1770 = vpack.c.bf16 %v1716, %v1715
  %v1771 = vpack.c.bf16 %v1718, %v1717
  %v1772 = vpack.c.bf16 %v1720, %v1719
  %v1773 = vpack.c.bf16 %v1722, %v1721
  %v1774 = vpack.c.bf16 %v1724, %v1723
  %v1775 = vpack.c.bf16 %v1726, %v1725
  %v1776 = vpack.c.bf16 %v1728, %v1727
  %v1777 = vpack.c.bf16 %v1730, %v1729
  %v1778 = vpack.c.bf16 %v1732, %v1731
  %v1779 = vpack.c.bf16 %v1734, %v1733
  %v1780 = vpack.c.bf16 %v1736, %v1735
  %v1781 = vpack.c.bf16 %v1738, %v1737
  %v1782 = vpack.c.bf16 %v1740, %v1739
  %v1783 = vpack.c.bf16 %v1742, %v1741
  %v1784 = vpack.c.bf16 %v1744, %v1743
  %v1785 = vpack.c.bf16 %v1746, %v1745
  %v1786 = vpack.c.bf16 %v1748, %v1747
  %v1787 = vpack.c.bf16 %v1750, %v1749
  %v1788 = vpack.c.bf16 %v1752, %v1751
  %v1789 = vpack.c.bf16 %v1754, %v1753
  %v1790 = vpack.c.bf16 %v1756, %v1755
  %v1791 = vpack.c.bf16 %v1758, %v1757
  %v1792 = vpack.c.bf16 %v1760, %v1759
  %v1793 = vrot.slane %v637, 3
  %v1794 = vrot.slane %v638, 3
  %v1795 = vrot.slane %v639, 3
  %v1796 = vrot.slane %v640, 3
  %v1797 = vrot.slane %v641, 3
  %v1798 = vrot.slane %v642, 3
  %v1799 = vrot.slane %v643, 3
  %v1800 = vrot.slane %v644, 3
  %v1801 = vrot.slane %v645, 3
  %v1802 = vrot.slane %v646, 3
  %v1803 = vrot.slane %v647, 3
  %v1804 = vrot.slane %v648, 3
  %v1805 = vrot.slane %v649, 3
  %v1806 = vrot.slane %v650, 3
  %v1807 = vrot.slane %v651, 3
  %v1808 = vrot.slane %v652, 3
  %v1809 = vrot.slane %v653, 3
  %v1810 = vrot.slane %v654, 3
  %v1811 = vrot.slane %v655, 3
  %v1812 = vrot.slane %v656, 3
  %v1813 = vrot.slane %v657, 3
  %v1814 = vrot.slane %v658, 3
  %v1815 = vrot.slane %v659, 3
  %v1816 = vrot.slane %v660, 3
  %v1817 = vrot.slane %v661, 3
  %v1818 = vrot.slane %v662, 3
  %v1819 = vrot.slane %v663, 3
  %v1820 = vrot.slane %v664, 3
  %v1821 = vrot.slane %v665, 3
  %v1822 = vrot.slane %v666, 3
  %v1823 = vrot.slane %v667, 3
  %v1824 = vrot.slane %v668, 3
  %v1825 = vrot.slane %v669, 3
  %v1826 = vrot.slane %v670, 3
  %v1827 = vrot.slane %v671, 3
  %v1828 = vrot.slane %v672, 3
  %v1829 = vrot.slane %v673, 3
  %v1830 = vrot.slane %v674, 3
  %v1831 = vrot.slane %v675, 3
  %v1832 = vrot.slane %v676, 3
  %v1833 = vrot.slane %v677, 3
  %v1834 = vrot.slane %v678, 3
  %v1835 = vrot.slane %v679, 3
  %v1836 = vrot.slane %v680, 3
  %v1837 = vrot.slane %v681, 3
  %v1838 = vrot.slane %v682, 3
  %v1839 = vrot.slane %v683, 3
  %v1840 = vrot.slane %v684, 3
  %v1841 = vrot.slane %v685, 3
  %v1842 = vrot.slane %v686, 3
  %v1843 = vrot.slane %v687, 3
  %v1844 = vrot.slane %v688, 3
  %v1845 = vrot.slane %v689, 3
  %v1846 = vrot.slane %v690, 3
  %v1847 = vrot.slane %v691, 3
  %v1848 = vrot.slane %v692, 3
  %v1849 = vrot.slane %v693, 3
  %v1850 = vrot.slane %v694, 3
  %v1851 = vrot.slane %v695, 3
  %v1852 = vrot.slane %v696, 3
  %v1853 = vrot.slane %v697, 3
  %v1854 = vrot.slane %v698, 3
  %v1855 = vrot.slane %v699, 3
  %v1856 = vrot.slane %v700, 3
  %vm1857 = vcmp.lt.s32.totalorder %v766, 5
  %v1858 = vsel %vm1857, %v1855, %v1856
  %v1859 = vsel %vm1857, %v1854, %v1855
  %v1860 = vsel %vm1857, %v1853, %v1854
  %v1861 = vsel %vm1857, %v1852, %v1853
  %v1862 = vsel %vm1857, %v1851, %v1852
  %v1863 = vsel %vm1857, %v1850, %v1851
  %v1864 = vsel %vm1857, %v1849, %v1850
  %v1865 = vsel %vm1857, %v1848, %v1849
  %v1866 = vsel %vm1857, %v1847, %v1848
  %v1867 = vsel %vm1857, %v1846, %v1847
  %v1868 = vsel %vm1857, %v1845, %v1846
  %v1869 = vsel %vm1857, %v1844, %v1845
  %v1870 = vsel %vm1857, %v1843, %v1844
  %v1871 = vsel %vm1857, %v1842, %v1843
  %v1872 = vsel %vm1857, %v1841, %v1842
  %v1873 = vsel %vm1857, %v1840, %v1841
  %v1874 = vsel %vm1857, %v1839, %v1840
  %v1875 = vsel %vm1857, %v1838, %v1839
  %v1876 = vsel %vm1857, %v1837, %v1838
  %v1877 = vsel %vm1857, %v1836, %v1837
  %v1878 = vsel %vm1857, %v1835, %v1836
  %v1879 = vsel %vm1857, %v1834, %v1835
  %v1880 = vsel %vm1857, %v1833, %v1834
  %v1881 = vsel %vm1857, %v1832, %v1833
  %v1882 = vsel %vm1857, %v1831, %v1832
  %v1883 = vsel %vm1857, %v1830, %v1831
  %v1884 = vsel %vm1857, %v1829, %v1830
  %v1885 = vsel %vm1857, %v1828, %v1829
  %v1886 = vsel %vm1857, %v1827, %v1828
  %v1887 = vsel %vm1857, %v1826, %v1827
  %v1888 = vsel %vm1857, %v1825, %v1826
  %v1889 = vsel %vm1857, %v1824, %v1825
  %v1890 = vsel %vm1857, %v1823, %v1824
  %v1891 = vsel %vm1857, %v1822, %v1823
  %v1892 = vsel %vm1857, %v1821, %v1822
  %v1893 = vsel %vm1857, %v1820, %v1821
  %v1894 = vsel %vm1857, %v1819, %v1820
  %v1895 = vsel %vm1857, %v1818, %v1819
  %v1896 = vsel %vm1857, %v1817, %v1818
  %v1897 = vsel %vm1857, %v1816, %v1817
  %v1898 = vsel %vm1857, %v1815, %v1816
  %v1899 = vsel %vm1857, %v1814, %v1815
  %v1900 = vsel %vm1857, %v1813, %v1814
  %v1901 = vsel %vm1857, %v1812, %v1813
  %v1902 = vsel %vm1857, %v1811, %v1812
  %v1903 = vsel %vm1857, %v1810, %v1811
  %v1904 = vsel %vm1857, %v1809, %v1810
  %v1905 = vsel %vm1857, %v1808, %v1809
  %v1906 = vsel %vm1857, %v1807, %v1808
  %v1907 = vsel %vm1857, %v1806, %v1807
  %v1908 = vsel %vm1857, %v1805, %v1806
  %v1909 = vsel %vm1857, %v1804, %v1805
  %v1910 = vsel %vm1857, %v1803, %v1804
  %v1911 = vsel %vm1857, %v1802, %v1803
  %v1912 = vsel %vm1857, %v1801, %v1802
  %v1913 = vsel %vm1857, %v1800, %v1801
  %v1914 = vsel %vm1857, %v1799, %v1800
  %v1915 = vsel %vm1857, %v1798, %v1799
  %v1916 = vsel %vm1857, %v1797, %v1798
  %v1917 = vsel %vm1857, %v1796, %v1797
  %v1918 = vsel %vm1857, %v1795, %v1796
  %v1919 = vsel %vm1857, %v1794, %v1795
  %v1920 = vsel %vm1857, %v1793, %v1794
  %v1921 = vsel %vm1857, %v1856, %v1793
  %1922 = vset.pattern.permute.xlu0 2
  %1923 = vperm.xlu0 %1922, %v832
  %v1924 = vpop.permute.xlu0 %1923
  %1926 = vset.pattern.permute.xlu0 2
  %1927 = vperm.xlu0 %1926, %v833
  %v1928 = vpop.permute.xlu0 %1927
  %1930 = vset.pattern.permute.xlu0 2
  %1931 = vperm.xlu0 %1930, %v834
  %v1932 = vpop.permute.xlu0 %1931
  %1934 = vset.pattern.permute.xlu0 2
  %1935 = vperm.xlu0 %1934, %v835
  %v1936 = vpop.permute.xlu0 %1935
  %1938 = vset.pattern.permute.xlu0 2
  %1939 = vperm.xlu0 %1938, %v836
  %v1940 = vpop.permute.xlu0 %1939
  %1942 = vset.pattern.permute.xlu0 2
  %1943 = vperm.xlu0 %1942, %v837
  %v1944 = vpop.permute.xlu0 %1943
  %1946 = vset.pattern.permute.xlu0 2
  %1947 = vperm.xlu0 %1946, %v838
  %v1948 = vpop.permute.xlu0 %1947
  %1950 = vset.pattern.permute.xlu0 2
  %1951 = vperm.xlu0 %1950, %v839
  %v1952 = vpop.permute.xlu0 %1951
  %1954 = vset.pattern.permute.xlu0 2
  %1955 = vperm.xlu0 %1954, %v840
  %v1956 = vpop.permute.xlu0 %1955
  %1958 = vset.pattern.permute.xlu0 2
  %1959 = vperm.xlu0 %1958, %v841
  %v1960 = vpop.permute.xlu0 %1959
  %1962 = vset.pattern.permute.xlu0 2
  %1963 = vperm.xlu0 %1962, %v842
  %v1964 = vpop.permute.xlu0 %1963
  %1966 = vset.pattern.permute.xlu0 2
  %1967 = vperm.xlu0 %1966, %v843
  %v1968 = vpop.permute.xlu0 %1967
  %1970 = vset.pattern.permute.xlu0 2
  %1971 = vperm.xlu0 %1970, %v844
  %v1972 = vpop.permute.xlu0 %1971
  %1974 = vset.pattern.permute.xlu0 2
  %1975 = vperm.xlu0 %1974, %v845
  %v1976 = vpop.permute.xlu0 %1975
  %1978 = vset.pattern.permute.xlu0 2
  %1979 = vperm.xlu0 %1978, %v846
  %v1980 = vpop.permute.xlu0 %1979
  %1982 = vset.pattern.permute.xlu0 2
  %1983 = vperm.xlu0 %1982, %v847
  %v1984 = vpop.permute.xlu0 %1983
  %1986 = vset.pattern.permute.xlu0 2
  %1987 = vperm.xlu0 %1986, %v848
  %v1988 = vpop.permute.xlu0 %1987
  %1990 = vset.pattern.permute.xlu0 2
  %1991 = vperm.xlu0 %1990, %v849
  %v1992 = vpop.permute.xlu0 %1991
  %1994 = vset.pattern.permute.xlu0 2
  %1995 = vperm.xlu0 %1994, %v850
  %v1996 = vpop.permute.xlu0 %1995
  %1998 = vset.pattern.permute.xlu0 2
  %1999 = vperm.xlu0 %1998, %v851
  %v2000 = vpop.permute.xlu0 %1999
  %2002 = vset.pattern.permute.xlu0 2
  %2003 = vperm.xlu0 %2002, %v852
  %v2004 = vpop.permute.xlu0 %2003
  %2006 = vset.pattern.permute.xlu0 2
  %2007 = vperm.xlu0 %2006, %v853
  %v2008 = vpop.permute.xlu0 %2007
  %2010 = vset.pattern.permute.xlu0 2
  %2011 = vperm.xlu0 %2010, %v854
  %v2012 = vpop.permute.xlu0 %2011
  %2014 = vset.pattern.permute.xlu0 2
  %2015 = vperm.xlu0 %2014, %v855
  %v2016 = vpop.permute.xlu0 %2015
  %2018 = vset.pattern.permute.xlu0 2
  %2019 = vperm.xlu0 %2018, %v856
  %v2020 = vpop.permute.xlu0 %2019
  %2022 = vset.pattern.permute.xlu0 2
  %2023 = vperm.xlu0 %2022, %v857
  %v2024 = vpop.permute.xlu0 %2023
  %2026 = vset.pattern.permute.xlu0 2
  %2027 = vperm.xlu0 %2026, %v858
  %v2028 = vpop.permute.xlu0 %2027
  %2030 = vset.pattern.permute.xlu0 2
  %2031 = vperm.xlu0 %2030, %v859
  %v2032 = vpop.permute.xlu0 %2031
  %2034 = vset.pattern.permute.xlu0 2
  %2035 = vperm.xlu0 %2034, %v860
  %v2036 = vpop.permute.xlu0 %2035
  %2038 = vset.pattern.permute.xlu0 2
  %2039 = vperm.xlu0 %2038, %v861
  %v2040 = vpop.permute.xlu0 %2039
  %2042 = vset.pattern.permute.xlu0 2
  %2043 = vperm.xlu0 %2042, %v862
  %v2044 = vpop.permute.xlu0 %2043
  %2046 = vset.pattern.permute.xlu0 2
  %2047 = vperm.xlu0 %2046, %v863
  %v2048 = vpop.permute.xlu0 %2047
  %2050 = vset.pattern.permute.xlu0 2
  %2051 = vperm.xlu0 %2050, %v864
  %v2052 = vpop.permute.xlu0 %2051
  %2054 = vset.pattern.permute.xlu0 2
  %2055 = vperm.xlu0 %2054, %v865
  %v2056 = vpop.permute.xlu0 %2055
  %2058 = vset.pattern.permute.xlu0 2
  %2059 = vperm.xlu0 %2058, %v866
  %v2060 = vpop.permute.xlu0 %2059
  %2062 = vset.pattern.permute.xlu0 2
  %2063 = vperm.xlu0 %2062, %v867
  %v2064 = vpop.permute.xlu0 %2063
  %2066 = vset.pattern.permute.xlu0 2
  %2067 = vperm.xlu0 %2066, %v868
  %v2068 = vpop.permute.xlu0 %2067
  %2070 = vset.pattern.permute.xlu0 2
  %2071 = vperm.xlu0 %2070, %v869
  %v2072 = vpop.permute.xlu0 %2071
  %2074 = vset.pattern.permute.xlu0 2
  %2075 = vperm.xlu0 %2074, %v870
  %v2076 = vpop.permute.xlu0 %2075
  %2078 = vset.pattern.permute.xlu0 2
  %2079 = vperm.xlu0 %2078, %v871
  %v2080 = vpop.permute.xlu0 %2079
  %2082 = vset.pattern.permute.xlu0 2
  %2083 = vperm.xlu0 %2082, %v872
  %v2084 = vpop.permute.xlu0 %2083
  %2086 = vset.pattern.permute.xlu0 2
  %2087 = vperm.xlu0 %2086, %v873
  %v2088 = vpop.permute.xlu0 %2087
  %2090 = vset.pattern.permute.xlu0 2
  %2091 = vperm.xlu0 %2090, %v874
  %v2092 = vpop.permute.xlu0 %2091
  %2094 = vset.pattern.permute.xlu0 2
  %2095 = vperm.xlu0 %2094, %v875
  %v2096 = vpop.permute.xlu0 %2095
  %2098 = vset.pattern.permute.xlu0 2
  %2099 = vperm.xlu0 %2098, %v876
  %v2100 = vpop.permute.xlu0 %2099
  %2102 = vset.pattern.permute.xlu0 2
  %2103 = vperm.xlu0 %2102, %v877
  %v2104 = vpop.permute.xlu0 %2103
  %2106 = vset.pattern.permute.xlu0 2
  %2107 = vperm.xlu0 %2106, %v878
  %v2108 = vpop.permute.xlu0 %2107
  %2110 = vset.pattern.permute.xlu0 2
  %2111 = vperm.xlu0 %2110, %v879
  %v2112 = vpop.permute.xlu0 %2111
  %2114 = vset.pattern.permute.xlu0 2
  %2115 = vperm.xlu0 %2114, %v880
  %v2116 = vpop.permute.xlu0 %2115
  %2118 = vset.pattern.permute.xlu0 2
  %2119 = vperm.xlu0 %2118, %v881
  %v2120 = vpop.permute.xlu0 %2119
  %2122 = vset.pattern.permute.xlu0 2
  %2123 = vperm.xlu0 %2122, %v882
  %v2124 = vpop.permute.xlu0 %2123
  %2126 = vset.pattern.permute.xlu0 2
  %2127 = vperm.xlu0 %2126, %v883
  %v2128 = vpop.permute.xlu0 %2127
  %2130 = vset.pattern.permute.xlu0 2
  %2131 = vperm.xlu0 %2130, %v884
  %v2132 = vpop.permute.xlu0 %2131
  %2134 = vset.pattern.permute.xlu0 2
  %2135 = vperm.xlu0 %2134, %v885
  %v2136 = vpop.permute.xlu0 %2135
  %2138 = vset.pattern.permute.xlu0 2
  %2139 = vperm.xlu0 %2138, %v886
  %v2140 = vpop.permute.xlu0 %2139
  %2142 = vset.pattern.permute.xlu0 2
  %2143 = vperm.xlu0 %2142, %v887
  %v2144 = vpop.permute.xlu0 %2143
  %2146 = vset.pattern.permute.xlu0 2
  %2147 = vperm.xlu0 %2146, %v888
  %v2148 = vpop.permute.xlu0 %2147
  %2150 = vset.pattern.permute.xlu0 2
  %2151 = vperm.xlu0 %2150, %v889
  %v2152 = vpop.permute.xlu0 %2151
  %2154 = vset.pattern.permute.xlu0 2
  %2155 = vperm.xlu0 %2154, %v890
  %v2156 = vpop.permute.xlu0 %2155
  %2158 = vset.pattern.permute.xlu0 2
  %2159 = vperm.xlu0 %2158, %v891
  %v2160 = vpop.permute.xlu0 %2159
  %2162 = vset.pattern.permute.xlu0 2
  %2163 = vperm.xlu0 %2162, %v892
  %v2164 = vpop.permute.xlu0 %2163
  %2166 = vset.pattern.permute.xlu0 2
  %2167 = vperm.xlu0 %2166, %v893
  %v2168 = vpop.permute.xlu0 %2167
  %2170 = vset.pattern.permute.xlu0 2
  %2171 = vperm.xlu0 %2170, %v894
  %v2172 = vpop.permute.xlu0 %2171
  %2174 = vset.pattern.permute.xlu0 2
  %2175 = vperm.xlu0 %2174, %v895
  %v2176 = vpop.permute.xlu0 %2175
  %v2178 = vmul.f32 %v1858, %v1924
  %v2179 = vmul.f32 %v1921, %v1928
  %v2180 = vmul.f32 %v1920, %v1932
  %v2181 = vmul.f32 %v1919, %v1936
  %v2182 = vmul.f32 %v1918, %v1940
  %v2183 = vmul.f32 %v1917, %v1944
  %v2184 = vmul.f32 %v1916, %v1948
  %v2185 = vmul.f32 %v1915, %v1952
  %v2186 = vmul.f32 %v1914, %v1956
  %v2187 = vmul.f32 %v1913, %v1960
  %v2188 = vmul.f32 %v1912, %v1964
  %v2189 = vmul.f32 %v1911, %v1968
  %v2190 = vmul.f32 %v1910, %v1972
  %v2191 = vmul.f32 %v1909, %v1976
  %v2192 = vmul.f32 %v1908, %v1980
  %v2193 = vmul.f32 %v1907, %v1984
  %v2194 = vmul.f32 %v1906, %v1988
  %v2195 = vmul.f32 %v1905, %v1992
  %v2196 = vmul.f32 %v1904, %v1996
  %v2197 = vmul.f32 %v1903, %v2000
  %v2198 = vmul.f32 %v1902, %v2004
  %v2199 = vmul.f32 %v1901, %v2008
  %v2200 = vmul.f32 %v1900, %v2012
  %v2201 = vmul.f32 %v1899, %v2016
  %v2202 = vmul.f32 %v1898, %v2020
  %v2203 = vmul.f32 %v1897, %v2024
  %v2204 = vmul.f32 %v1896, %v2028
  %v2205 = vmul.f32 %v1895, %v2032
  %v2206 = vmul.f32 %v1894, %v2036
  %v2207 = vmul.f32 %v1893, %v2040
  %v2208 = vmul.f32 %v1892, %v2044
  %v2209 = vmul.f32 %v1891, %v2048
  %v2210 = vmul.f32 %v1890, %v2052
  %v2211 = vmul.f32 %v1889, %v2056
  %v2212 = vmul.f32 %v1888, %v2060
  %v2213 = vmul.f32 %v1887, %v2064
  %v2214 = vmul.f32 %v1886, %v2068
  %v2215 = vmul.f32 %v1885, %v2072
  %v2216 = vmul.f32 %v1884, %v2076
  %v2217 = vmul.f32 %v1883, %v2080
  %v2218 = vmul.f32 %v1882, %v2084
  %v2219 = vmul.f32 %v1881, %v2088
  %v2220 = vmul.f32 %v1880, %v2092
  %v2221 = vmul.f32 %v1879, %v2096
  %v2222 = vmul.f32 %v1878, %v2100
  %v2223 = vmul.f32 %v1877, %v2104
  %v2224 = vmul.f32 %v1876, %v2108
  %v2225 = vmul.f32 %v1875, %v2112
  %v2226 = vmul.f32 %v1874, %v2116
  %v2227 = vmul.f32 %v1873, %v2120
  %v2228 = vmul.f32 %v1872, %v2124
  %v2229 = vmul.f32 %v1871, %v2128
  %v2230 = vmul.f32 %v1870, %v2132
  %v2231 = vmul.f32 %v1869, %v2136
  %v2232 = vmul.f32 %v1868, %v2140
  %v2233 = vmul.f32 %v1867, %v2144
  %v2234 = vmul.f32 %v1866, %v2148
  %v2235 = vmul.f32 %v1865, %v2152
  %v2236 = vmul.f32 %v1864, %v2156
  %v2237 = vmul.f32 %v1863, %v2160
  %v2238 = vmul.f32 %v1862, %v2164
  %v2239 = vmul.f32 %v1861, %v2168
  %v2240 = vmul.f32 %v1860, %v2172
  %v2241 = vmul.f32 %v1859, %v2176
  %v2242 = vpack.c.bf16 %v2179, %v2178
  %v2243 = vpack.c.bf16 %v2181, %v2180
  %v2244 = vpack.c.bf16 %v2183, %v2182
  %v2245 = vpack.c.bf16 %v2185, %v2184
  %v2246 = vpack.c.bf16 %v2187, %v2186
  %v2247 = vpack.c.bf16 %v2189, %v2188
  %v2248 = vpack.c.bf16 %v2191, %v2190
  %v2249 = vpack.c.bf16 %v2193, %v2192
  %v2250 = vpack.c.bf16 %v2195, %v2194
  %v2251 = vpack.c.bf16 %v2197, %v2196
  %v2252 = vpack.c.bf16 %v2199, %v2198
  %v2253 = vpack.c.bf16 %v2201, %v2200
  %v2254 = vpack.c.bf16 %v2203, %v2202
  %v2255 = vpack.c.bf16 %v2205, %v2204
  %v2256 = vpack.c.bf16 %v2207, %v2206
  %v2257 = vpack.c.bf16 %v2209, %v2208
  %v2258 = vpack.c.bf16 %v2211, %v2210
  %v2259 = vpack.c.bf16 %v2213, %v2212
  %v2260 = vpack.c.bf16 %v2215, %v2214
  %v2261 = vpack.c.bf16 %v2217, %v2216
  %v2262 = vpack.c.bf16 %v2219, %v2218
  %v2263 = vpack.c.bf16 %v2221, %v2220
  %v2264 = vpack.c.bf16 %v2223, %v2222
  %v2265 = vpack.c.bf16 %v2225, %v2224
  %v2266 = vpack.c.bf16 %v2227, %v2226
  %v2267 = vpack.c.bf16 %v2229, %v2228
  %v2268 = vpack.c.bf16 %v2231, %v2230
  %v2269 = vpack.c.bf16 %v2233, %v2232
  %v2270 = vpack.c.bf16 %v2235, %v2234
  %v2271 = vpack.c.bf16 %v2237, %v2236
  %v2272 = vpack.c.bf16 %v2239, %v2238
  %v2273 = vpack.c.bf16 %v2241, %v2240
  %v2274 = vrot.slane %v637, 7
  %v2275 = vrot.slane %v638, 7
  %v2276 = vrot.slane %v639, 7
  %v2277 = vrot.slane %v640, 7
  %v2278 = vrot.slane %v641, 7
  %v2279 = vrot.slane %v642, 7
  %v2280 = vrot.slane %v643, 7
  %v2281 = vrot.slane %v644, 7
  %v2282 = vrot.slane %v645, 7
  %v2283 = vrot.slane %v646, 7
  %v2284 = vrot.slane %v647, 7
  %v2285 = vrot.slane %v648, 7
  %v2286 = vrot.slane %v649, 7
  %v2287 = vrot.slane %v650, 7
  %v2288 = vrot.slane %v651, 7
  %v2289 = vrot.slane %v652, 7
  %v2290 = vrot.slane %v653, 7
  %v2291 = vrot.slane %v654, 7
  %v2292 = vrot.slane %v655, 7
  %v2293 = vrot.slane %v656, 7
  %v2294 = vrot.slane %v657, 7
  %v2295 = vrot.slane %v658, 7
  %v2296 = vrot.slane %v659, 7
  %v2297 = vrot.slane %v660, 7
  %v2298 = vrot.slane %v661, 7
  %v2299 = vrot.slane %v662, 7
  %v2300 = vrot.slane %v663, 7
  %v2301 = vrot.slane %v664, 7
  %v2302 = vrot.slane %v665, 7
  %v2303 = vrot.slane %v666, 7
  %v2304 = vrot.slane %v667, 7
  %v2305 = vrot.slane %v668, 7
  %v2306 = vrot.slane %v669, 7
  %v2307 = vrot.slane %v670, 7
  %v2308 = vrot.slane %v671, 7
  %v2309 = vrot.slane %v672, 7
  %v2310 = vrot.slane %v673, 7
  %v2311 = vrot.slane %v674, 7
  %v2312 = vrot.slane %v675, 7
  %v2313 = vrot.slane %v676, 7
  %v2314 = vrot.slane %v677, 7
  %v2315 = vrot.slane %v678, 7
  %v2316 = vrot.slane %v679, 7
  %v2317 = vrot.slane %v680, 7
  %v2318 = vrot.slane %v681, 7
  %v2319 = vrot.slane %v682, 7
  %v2320 = vrot.slane %v683, 7
  %v2321 = vrot.slane %v684, 7
  %v2322 = vrot.slane %v685, 7
  %v2323 = vrot.slane %v686, 7
  %v2324 = vrot.slane %v687, 7
  %v2325 = vrot.slane %v688, 7
  %v2326 = vrot.slane %v689, 7
  %v2327 = vrot.slane %v690, 7
  %v2328 = vrot.slane %v691, 7
  %v2329 = vrot.slane %v692, 7
  %v2330 = vrot.slane %v693, 7
  %v2331 = vrot.slane %v694, 7
  %v2332 = vrot.slane %v695, 7
  %v2333 = vrot.slane %v696, 7
  %v2334 = vrot.slane %v697, 7
  %v2335 = vrot.slane %v698, 7
  %v2336 = vrot.slane %v699, 7
  %v2337 = vrot.slane %v700, 7
  %vm2338 = vcmp.lt.s32.totalorder %v766, 1
  %v2339 = vsel %vm2338, %v2336, %v2337
  %v2340 = vsel %vm2338, %v2335, %v2336
  %v2341 = vsel %vm2338, %v2334, %v2335
  %v2342 = vsel %vm2338, %v2333, %v2334
  %v2343 = vsel %vm2338, %v2332, %v2333
  %v2344 = vsel %vm2338, %v2331, %v2332
  %v2345 = vsel %vm2338, %v2330, %v2331
  %v2346 = vsel %vm2338, %v2329, %v2330
  %v2347 = vsel %vm2338, %v2328, %v2329
  %v2348 = vsel %vm2338, %v2327, %v2328
  %v2349 = vsel %vm2338, %v2326, %v2327
  %v2350 = vsel %vm2338, %v2325, %v2326
  %v2351 = vsel %vm2338, %v2324, %v2325
  %v2352 = vsel %vm2338, %v2323, %v2324
  %v2353 = vsel %vm2338, %v2322, %v2323
  %v2354 = vsel %vm2338, %v2321, %v2322
  %v2355 = vsel %vm2338, %v2320, %v2321
  %v2356 = vsel %vm2338, %v2319, %v2320
  %v2357 = vsel %vm2338, %v2318, %v2319
  %v2358 = vsel %vm2338, %v2317, %v2318
  %v2359 = vsel %vm2338, %v2316, %v2317
  %v2360 = vsel %vm2338, %v2315, %v2316
  %v2361 = vsel %vm2338, %v2314, %v2315
  %v2362 = vsel %vm2338, %v2313, %v2314
  %v2363 = vsel %vm2338, %v2312, %v2313
  %v2364 = vsel %vm2338, %v2311, %v2312
  %v2365 = vsel %vm2338, %v2310, %v2311
  %v2366 = vsel %vm2338, %v2309, %v2310
  %v2367 = vsel %vm2338, %v2308, %v2309
  %v2368 = vsel %vm2338, %v2307, %v2308
  %v2369 = vsel %vm2338, %v2306, %v2307
  %v2370 = vsel %vm2338, %v2305, %v2306
  %v2371 = vsel %vm2338, %v2304, %v2305
  %v2372 = vsel %vm2338, %v2303, %v2304
  %v2373 = vsel %vm2338, %v2302, %v2303
  %v2374 = vsel %vm2338, %v2301, %v2302
  %v2375 = vsel %vm2338, %v2300, %v2301
  %v2376 = vsel %vm2338, %v2299, %v2300
  %v2377 = vsel %vm2338, %v2298, %v2299
  %v2378 = vsel %vm2338, %v2297, %v2298
  %v2379 = vsel %vm2338, %v2296, %v2297
  %v2380 = vsel %vm2338, %v2295, %v2296
  %v2381 = vsel %vm2338, %v2294, %v2295
  %v2382 = vsel %vm2338, %v2293, %v2294
  %v2383 = vsel %vm2338, %v2292, %v2293
  %v2384 = vsel %vm2338, %v2291, %v2292
  %v2385 = vsel %vm2338, %v2290, %v2291
  %v2386 = vsel %vm2338, %v2289, %v2290
  %v2387 = vsel %vm2338, %v2288, %v2289
  %v2388 = vsel %vm2338, %v2287, %v2288
  %v2389 = vsel %vm2338, %v2286, %v2287
  %v2390 = vsel %vm2338, %v2285, %v2286
  %v2391 = vsel %vm2338, %v2284, %v2285
  %v2392 = vsel %vm2338, %v2283, %v2284
  %v2393 = vsel %vm2338, %v2282, %v2283
  %v2394 = vsel %vm2338, %v2281, %v2282
  %v2395 = vsel %vm2338, %v2280, %v2281
  %v2396 = vsel %vm2338, %v2279, %v2280
  %v2397 = vsel %vm2338, %v2278, %v2279
  %v2398 = vsel %vm2338, %v2277, %v2278
  %v2399 = vsel %vm2338, %v2276, %v2277
  %v2400 = vsel %vm2338, %v2275, %v2276
  %v2401 = vsel %vm2338, %v2274, %v2275
  %v2402 = vsel %vm2338, %v2337, %v2274
  %2403 = vset.pattern.permute.xlu0 3
  %2404 = vperm.xlu0 %2403, %v832
  %v2405 = vpop.permute.xlu0 %2404
  %2407 = vset.pattern.permute.xlu0 3
  %2408 = vperm.xlu0 %2407, %v833
  %v2409 = vpop.permute.xlu0 %2408
  %2411 = vset.pattern.permute.xlu0 3
  %2412 = vperm.xlu0 %2411, %v834
  %v2413 = vpop.permute.xlu0 %2412
  %2415 = vset.pattern.permute.xlu0 3
  %2416 = vperm.xlu0 %2415, %v835
  %v2417 = vpop.permute.xlu0 %2416
  %2419 = vset.pattern.permute.xlu0 3
  %2420 = vperm.xlu0 %2419, %v836
  %v2421 = vpop.permute.xlu0 %2420
  %2423 = vset.pattern.permute.xlu0 3
  %2424 = vperm.xlu0 %2423, %v837
  %v2425 = vpop.permute.xlu0 %2424
  %2427 = vset.pattern.permute.xlu0 3
  %2428 = vperm.xlu0 %2427, %v838
  %v2429 = vpop.permute.xlu0 %2428
  %2431 = vset.pattern.permute.xlu0 3
  %2432 = vperm.xlu0 %2431, %v839
  %v2433 = vpop.permute.xlu0 %2432
  %2435 = vset.pattern.permute.xlu0 3
  %2436 = vperm.xlu0 %2435, %v840
  %v2437 = vpop.permute.xlu0 %2436
  %2439 = vset.pattern.permute.xlu0 3
  %2440 = vperm.xlu0 %2439, %v841
  %v2441 = vpop.permute.xlu0 %2440
  %2443 = vset.pattern.permute.xlu0 3
  %2444 = vperm.xlu0 %2443, %v842
  %v2445 = vpop.permute.xlu0 %2444
  %2447 = vset.pattern.permute.xlu0 3
  %2448 = vperm.xlu0 %2447, %v843
  %v2449 = vpop.permute.xlu0 %2448
  %2451 = vset.pattern.permute.xlu0 3
  %2452 = vperm.xlu0 %2451, %v844
  %v2453 = vpop.permute.xlu0 %2452
  %2455 = vset.pattern.permute.xlu0 3
  %2456 = vperm.xlu0 %2455, %v845
  %v2457 = vpop.permute.xlu0 %2456
  %2459 = vset.pattern.permute.xlu0 3
  %2460 = vperm.xlu0 %2459, %v846
  %v2461 = vpop.permute.xlu0 %2460
  %2463 = vset.pattern.permute.xlu0 3
  %2464 = vperm.xlu0 %2463, %v847
  %v2465 = vpop.permute.xlu0 %2464
  %2467 = vset.pattern.permute.xlu0 3
  %2468 = vperm.xlu0 %2467, %v848
  %v2469 = vpop.permute.xlu0 %2468
  %2471 = vset.pattern.permute.xlu0 3
  %2472 = vperm.xlu0 %2471, %v849
  %v2473 = vpop.permute.xlu0 %2472
  %2475 = vset.pattern.permute.xlu0 3
  %2476 = vperm.xlu0 %2475, %v850
  %v2477 = vpop.permute.xlu0 %2476
  %2479 = vset.pattern.permute.xlu0 3
  %2480 = vperm.xlu0 %2479, %v851
  %v2481 = vpop.permute.xlu0 %2480
  %2483 = vset.pattern.permute.xlu0 3
  %2484 = vperm.xlu0 %2483, %v852
  %v2485 = vpop.permute.xlu0 %2484
  %2487 = vset.pattern.permute.xlu0 3
  %2488 = vperm.xlu0 %2487, %v853
  %v2489 = vpop.permute.xlu0 %2488
  %2491 = vset.pattern.permute.xlu0 3
  %2492 = vperm.xlu0 %2491, %v854
  %v2493 = vpop.permute.xlu0 %2492
  %2495 = vset.pattern.permute.xlu0 3
  %2496 = vperm.xlu0 %2495, %v855
  %v2497 = vpop.permute.xlu0 %2496
  %2499 = vset.pattern.permute.xlu0 3
  %2500 = vperm.xlu0 %2499, %v856
  %v2501 = vpop.permute.xlu0 %2500
  %2503 = vset.pattern.permute.xlu0 3
  %2504 = vperm.xlu0 %2503, %v857
  %v2505 = vpop.permute.xlu0 %2504
  %2507 = vset.pattern.permute.xlu0 3
  %2508 = vperm.xlu0 %2507, %v858
  %v2509 = vpop.permute.xlu0 %2508
  %2511 = vset.pattern.permute.xlu0 3
  %2512 = vperm.xlu0 %2511, %v859
  %v2513 = vpop.permute.xlu0 %2512
  %2515 = vset.pattern.permute.xlu0 3
  %2516 = vperm.xlu0 %2515, %v860
  %v2517 = vpop.permute.xlu0 %2516
  %2519 = vset.pattern.permute.xlu0 3
  %2520 = vperm.xlu0 %2519, %v861
  %v2521 = vpop.permute.xlu0 %2520
  %2523 = vset.pattern.permute.xlu0 3
  %2524 = vperm.xlu0 %2523, %v862
  %v2525 = vpop.permute.xlu0 %2524
  %2527 = vset.pattern.permute.xlu0 3
  %2528 = vperm.xlu0 %2527, %v863
  %v2529 = vpop.permute.xlu0 %2528
  %2531 = vset.pattern.permute.xlu0 3
  %2532 = vperm.xlu0 %2531, %v864
  %v2533 = vpop.permute.xlu0 %2532
  %2535 = vset.pattern.permute.xlu0 3
  %2536 = vperm.xlu0 %2535, %v865
  %v2537 = vpop.permute.xlu0 %2536
  %2539 = vset.pattern.permute.xlu0 3
  %2540 = vperm.xlu0 %2539, %v866
  %v2541 = vpop.permute.xlu0 %2540
  %2543 = vset.pattern.permute.xlu0 3
  %2544 = vperm.xlu0 %2543, %v867
  %v2545 = vpop.permute.xlu0 %2544
  %2547 = vset.pattern.permute.xlu0 3
  %2548 = vperm.xlu0 %2547, %v868
  %v2549 = vpop.permute.xlu0 %2548
  %2551 = vset.pattern.permute.xlu0 3
  %2552 = vperm.xlu0 %2551, %v869
  %v2553 = vpop.permute.xlu0 %2552
  %2555 = vset.pattern.permute.xlu0 3
  %2556 = vperm.xlu0 %2555, %v870
  %v2557 = vpop.permute.xlu0 %2556
  %2559 = vset.pattern.permute.xlu0 3
  %2560 = vperm.xlu0 %2559, %v871
  %v2561 = vpop.permute.xlu0 %2560
  %2563 = vset.pattern.permute.xlu0 3
  %2564 = vperm.xlu0 %2563, %v872
  %v2565 = vpop.permute.xlu0 %2564
  %2567 = vset.pattern.permute.xlu0 3
  %2568 = vperm.xlu0 %2567, %v873
  %v2569 = vpop.permute.xlu0 %2568
  %2571 = vset.pattern.permute.xlu0 3
  %2572 = vperm.xlu0 %2571, %v874
  %v2573 = vpop.permute.xlu0 %2572
  %2575 = vset.pattern.permute.xlu0 3
  %2576 = vperm.xlu0 %2575, %v875
  %v2577 = vpop.permute.xlu0 %2576
  %2579 = vset.pattern.permute.xlu0 3
  %2580 = vperm.xlu0 %2579, %v876
  %v2581 = vpop.permute.xlu0 %2580
  %2583 = vset.pattern.permute.xlu0 3
  %2584 = vperm.xlu0 %2583, %v877
  %v2585 = vpop.permute.xlu0 %2584
  %2587 = vset.pattern.permute.xlu0 3
  %2588 = vperm.xlu0 %2587, %v878
  %v2589 = vpop.permute.xlu0 %2588
  %2591 = vset.pattern.permute.xlu0 3
  %2592 = vperm.xlu0 %2591, %v879
  %v2593 = vpop.permute.xlu0 %2592
  %2595 = vset.pattern.permute.xlu0 3
  %2596 = vperm.xlu0 %2595, %v880
  %v2597 = vpop.permute.xlu0 %2596
  %2599 = vset.pattern.permute.xlu0 3
  %2600 = vperm.xlu0 %2599, %v881
  %v2601 = vpop.permute.xlu0 %2600
  %2603 = vset.pattern.permute.xlu0 3
  %2604 = vperm.xlu0 %2603, %v882
  %v2605 = vpop.permute.xlu0 %2604
  %2607 = vset.pattern.permute.xlu0 3
  %2608 = vperm.xlu0 %2607, %v883
  %v2609 = vpop.permute.xlu0 %2608
  %2611 = vset.pattern.permute.xlu0 3
  %2612 = vperm.xlu0 %2611, %v884
  %v2613 = vpop.permute.xlu0 %2612
  %2615 = vset.pattern.permute.xlu0 3
  %2616 = vperm.xlu0 %2615, %v885
  %v2617 = vpop.permute.xlu0 %2616
  %2619 = vset.pattern.permute.xlu0 3
  %2620 = vperm.xlu0 %2619, %v886
  %v2621 = vpop.permute.xlu0 %2620
  %2623 = vset.pattern.permute.xlu0 3
  %2624 = vperm.xlu0 %2623, %v887
  %v2625 = vpop.permute.xlu0 %2624
  %2627 = vset.pattern.permute.xlu0 3
  %2628 = vperm.xlu0 %2627, %v888
  %v2629 = vpop.permute.xlu0 %2628
  %2631 = vset.pattern.permute.xlu0 3
  %2632 = vperm.xlu0 %2631, %v889
  %v2633 = vpop.permute.xlu0 %2632
  %2635 = vset.pattern.permute.xlu0 3
  %2636 = vperm.xlu0 %2635, %v890
  %v2637 = vpop.permute.xlu0 %2636
  %2639 = vset.pattern.permute.xlu0 3
  %2640 = vperm.xlu0 %2639, %v891
  %v2641 = vpop.permute.xlu0 %2640
  %2643 = vset.pattern.permute.xlu0 3
  %2644 = vperm.xlu0 %2643, %v892
  %v2645 = vpop.permute.xlu0 %2644
  %2647 = vset.pattern.permute.xlu0 3
  %2648 = vperm.xlu0 %2647, %v893
  %v2649 = vpop.permute.xlu0 %2648
  %2651 = vset.pattern.permute.xlu0 3
  %2652 = vperm.xlu0 %2651, %v894
  %v2653 = vpop.permute.xlu0 %2652
  %2655 = vset.pattern.permute.xlu0 3
  %2656 = vperm.xlu0 %2655, %v895
  %v2657 = vpop.permute.xlu0 %2656
  %v2659 = vmul.f32 %v2402, %v2405
  %v2660 = vmul.f32 %v2401, %v2409
  %v2661 = vmul.f32 %v2400, %v2413
  %v2662 = vmul.f32 %v2399, %v2417
  %v2663 = vmul.f32 %v2398, %v2421
  %v2664 = vmul.f32 %v2397, %v2425
  %v2665 = vmul.f32 %v2396, %v2429
  %v2666 = vmul.f32 %v2395, %v2433
  %v2667 = vmul.f32 %v2394, %v2437
  %v2668 = vmul.f32 %v2393, %v2441
  %v2669 = vmul.f32 %v2392, %v2445
  %v2670 = vmul.f32 %v2391, %v2449
  %v2671 = vmul.f32 %v2390, %v2453
  %v2672 = vmul.f32 %v2389, %v2457
  %v2673 = vmul.f32 %v2388, %v2461
  %v2674 = vmul.f32 %v2387, %v2465
  %v2675 = vmul.f32 %v2386, %v2469
  %v2676 = vmul.f32 %v2385, %v2473
  %v2677 = vmul.f32 %v2384, %v2477
  %v2678 = vmul.f32 %v2383, %v2481
  %v2679 = vmul.f32 %v2382, %v2485
  %v2680 = vmul.f32 %v2381, %v2489
  %v2681 = vmul.f32 %v2380, %v2493
  %v2682 = vmul.f32 %v2379, %v2497
  %v2683 = vmul.f32 %v2378, %v2501
  %v2684 = vmul.f32 %v2377, %v2505
  %v2685 = vmul.f32 %v2376, %v2509
  %v2686 = vmul.f32 %v2375, %v2513
  %v2687 = vmul.f32 %v2374, %v2517
  %v2688 = vmul.f32 %v2373, %v2521
  %v2689 = vmul.f32 %v2372, %v2525
  %v2690 = vmul.f32 %v2371, %v2529
  %v2691 = vmul.f32 %v2370, %v2533
  %v2692 = vmul.f32 %v2369, %v2537
  %v2693 = vmul.f32 %v2368, %v2541
  %v2694 = vmul.f32 %v2367, %v2545
  %v2695 = vmul.f32 %v2366, %v2549
  %v2696 = vmul.f32 %v2365, %v2553
  %v2697 = vmul.f32 %v2364, %v2557
  %v2698 = vmul.f32 %v2363, %v2561
  %v2699 = vmul.f32 %v2362, %v2565
  %v2700 = vmul.f32 %v2361, %v2569
  %v2701 = vmul.f32 %v2360, %v2573
  %v2702 = vmul.f32 %v2359, %v2577
  %v2703 = vmul.f32 %v2358, %v2581
  %v2704 = vmul.f32 %v2357, %v2585
  %v2705 = vmul.f32 %v2356, %v2589
  %v2706 = vmul.f32 %v2355, %v2593
  %v2707 = vmul.f32 %v2354, %v2597
  %v2708 = vmul.f32 %v2353, %v2601
  %v2709 = vmul.f32 %v2352, %v2605
  %v2710 = vmul.f32 %v2351, %v2609
  %v2711 = vmul.f32 %v2350, %v2613
  %v2712 = vmul.f32 %v2349, %v2617
  %v2713 = vmul.f32 %v2348, %v2621
  %v2714 = vmul.f32 %v2347, %v2625
  %v2715 = vmul.f32 %v2346, %v2629
  %v2716 = vmul.f32 %v2345, %v2633
  %v2717 = vmul.f32 %v2344, %v2637
  %v2718 = vmul.f32 %v2343, %v2641
  %v2719 = vmul.f32 %v2342, %v2645
  %v2720 = vmul.f32 %v2341, %v2649
  %v2721 = vmul.f32 %v2340, %v2653
  %v2722 = vmul.f32 %v2339, %v2657
  %v2723 = vpack.c.bf16 %v2660, %v2659
  %v2724 = vpack.c.bf16 %v2662, %v2661
  %v2725 = vpack.c.bf16 %v2664, %v2663
  %v2726 = vpack.c.bf16 %v2666, %v2665
  %v2727 = vpack.c.bf16 %v2668, %v2667
  %v2728 = vpack.c.bf16 %v2670, %v2669
  %v2729 = vpack.c.bf16 %v2672, %v2671
  %v2730 = vpack.c.bf16 %v2674, %v2673
  %v2731 = vpack.c.bf16 %v2676, %v2675
  %v2732 = vpack.c.bf16 %v2678, %v2677
  %v2733 = vpack.c.bf16 %v2680, %v2679
  %v2734 = vpack.c.bf16 %v2682, %v2681
  %v2735 = vpack.c.bf16 %v2684, %v2683
  %v2736 = vpack.c.bf16 %v2686, %v2685
  %v2737 = vpack.c.bf16 %v2688, %v2687
  %v2738 = vpack.c.bf16 %v2690, %v2689
  %v2739 = vpack.c.bf16 %v2692, %v2691
  %v2740 = vpack.c.bf16 %v2694, %v2693
  %v2741 = vpack.c.bf16 %v2696, %v2695
  %v2742 = vpack.c.bf16 %v2698, %v2697
  %v2743 = vpack.c.bf16 %v2700, %v2699
  %v2744 = vpack.c.bf16 %v2702, %v2701
  %v2745 = vpack.c.bf16 %v2704, %v2703
  %v2746 = vpack.c.bf16 %v2706, %v2705
  %v2747 = vpack.c.bf16 %v2708, %v2707
  %v2748 = vpack.c.bf16 %v2710, %v2709
  %v2749 = vpack.c.bf16 %v2712, %v2711
  %v2750 = vpack.c.bf16 %v2714, %v2713
  %v2751 = vpack.c.bf16 %v2716, %v2715
  %v2752 = vpack.c.bf16 %v2718, %v2717
  %v2753 = vpack.c.bf16 %v2720, %v2719
  %v2754 = vpack.c.bf16 %v2722, %v2721
  %2755 = vset.pattern.permute.xlu0 4
  %2756 = vperm.xlu0 %2755, %v832
  %v2757 = vpop.permute.xlu0 %2756
  %2759 = vset.pattern.permute.xlu0 4
  %2760 = vperm.xlu0 %2759, %v833
  %v2761 = vpop.permute.xlu0 %2760
  %2763 = vset.pattern.permute.xlu0 4
  %2764 = vperm.xlu0 %2763, %v834
  %v2765 = vpop.permute.xlu0 %2764
  %2767 = vset.pattern.permute.xlu0 4
  %2768 = vperm.xlu0 %2767, %v835
  %v2769 = vpop.permute.xlu0 %2768
  %2771 = vset.pattern.permute.xlu0 4
  %2772 = vperm.xlu0 %2771, %v836
  %v2773 = vpop.permute.xlu0 %2772
  %2775 = vset.pattern.permute.xlu0 4
  %2776 = vperm.xlu0 %2775, %v837
  %v2777 = vpop.permute.xlu0 %2776
  %2779 = vset.pattern.permute.xlu0 4
  %2780 = vperm.xlu0 %2779, %v838
  %v2781 = vpop.permute.xlu0 %2780
  %2783 = vset.pattern.permute.xlu0 4
  %2784 = vperm.xlu0 %2783, %v839
  %v2785 = vpop.permute.xlu0 %2784
  %2787 = vset.pattern.permute.xlu0 4
  %2788 = vperm.xlu0 %2787, %v840
  %v2789 = vpop.permute.xlu0 %2788
  %2791 = vset.pattern.permute.xlu0 4
  %2792 = vperm.xlu0 %2791, %v841
  %v2793 = vpop.permute.xlu0 %2792
  %2795 = vset.pattern.permute.xlu0 4
  %2796 = vperm.xlu0 %2795, %v842
  %v2797 = vpop.permute.xlu0 %2796
  %2799 = vset.pattern.permute.xlu0 4
  %2800 = vperm.xlu0 %2799, %v843
  %v2801 = vpop.permute.xlu0 %2800
  %2803 = vset.pattern.permute.xlu0 4
  %2804 = vperm.xlu0 %2803, %v844
  %v2805 = vpop.permute.xlu0 %2804
  %2807 = vset.pattern.permute.xlu0 4
  %2808 = vperm.xlu0 %2807, %v845
  %v2809 = vpop.permute.xlu0 %2808
  %2811 = vset.pattern.permute.xlu0 4
  %2812 = vperm.xlu0 %2811, %v846
  %v2813 = vpop.permute.xlu0 %2812
  %2815 = vset.pattern.permute.xlu0 4
  %2816 = vperm.xlu0 %2815, %v847
  %v2817 = vpop.permute.xlu0 %2816
  %2819 = vset.pattern.permute.xlu0 4
  %2820 = vperm.xlu0 %2819, %v848
  %v2821 = vpop.permute.xlu0 %2820
  %2823 = vset.pattern.permute.xlu0 4
  %2824 = vperm.xlu0 %2823, %v849
  %v2825 = vpop.permute.xlu0 %2824
  %2827 = vset.pattern.permute.xlu0 4
  %2828 = vperm.xlu0 %2827, %v850
  %v2829 = vpop.permute.xlu0 %2828
  %2831 = vset.pattern.permute.xlu0 4
  %2832 = vperm.xlu0 %2831, %v851
  %v2833 = vpop.permute.xlu0 %2832
  %2835 = vset.pattern.permute.xlu0 4
  %2836 = vperm.xlu0 %2835, %v852
  %v2837 = vpop.permute.xlu0 %2836
  %2839 = vset.pattern.permute.xlu0 4
  %2840 = vperm.xlu0 %2839, %v853
  %v2841 = vpop.permute.xlu0 %2840
  %2843 = vset.pattern.permute.xlu0 4
  %2844 = vperm.xlu0 %2843, %v854
  %v2845 = vpop.permute.xlu0 %2844
  %2847 = vset.pattern.permute.xlu0 4
  %2848 = vperm.xlu0 %2847, %v855
  %v2849 = vpop.permute.xlu0 %2848
  %2851 = vset.pattern.permute.xlu0 4
  %2852 = vperm.xlu0 %2851, %v856
  %v2853 = vpop.permute.xlu0 %2852
  %2855 = vset.pattern.permute.xlu0 4
  %2856 = vperm.xlu0 %2855, %v857
  %v2857 = vpop.permute.xlu0 %2856
  %2859 = vset.pattern.permute.xlu0 4
  %2860 = vperm.xlu0 %2859, %v858
  %v2861 = vpop.permute.xlu0 %2860
  %2863 = vset.pattern.permute.xlu0 4
  %2864 = vperm.xlu0 %2863, %v859
  %v2865 = vpop.permute.xlu0 %2864
  %2867 = vset.pattern.permute.xlu0 4
  %2868 = vperm.xlu0 %2867, %v860
  %v2869 = vpop.permute.xlu0 %2868
  %2871 = vset.pattern.permute.xlu0 4
  %2872 = vperm.xlu0 %2871, %v861
  %v2873 = vpop.permute.xlu0 %2872
  %2875 = vset.pattern.permute.xlu0 4
  %2876 = vperm.xlu0 %2875, %v862
  %v2877 = vpop.permute.xlu0 %2876
  %2879 = vset.pattern.permute.xlu0 4
  %2880 = vperm.xlu0 %2879, %v863
  %v2881 = vpop.permute.xlu0 %2880
  %2883 = vset.pattern.permute.xlu0 4
  %2884 = vperm.xlu0 %2883, %v864
  %v2885 = vpop.permute.xlu0 %2884
  %2887 = vset.pattern.permute.xlu0 4
  %2888 = vperm.xlu0 %2887, %v865
  %v2889 = vpop.permute.xlu0 %2888
  %2891 = vset.pattern.permute.xlu0 4
  %2892 = vperm.xlu0 %2891, %v866
  %v2893 = vpop.permute.xlu0 %2892
  %2895 = vset.pattern.permute.xlu0 4
  %2896 = vperm.xlu0 %2895, %v867
  %v2897 = vpop.permute.xlu0 %2896
  %2899 = vset.pattern.permute.xlu0 4
  %2900 = vperm.xlu0 %2899, %v868
  %v2901 = vpop.permute.xlu0 %2900
  %2903 = vset.pattern.permute.xlu0 4
  %2904 = vperm.xlu0 %2903, %v869
  %v2905 = vpop.permute.xlu0 %2904
  %2907 = vset.pattern.permute.xlu0 4
  %2908 = vperm.xlu0 %2907, %v870
  %v2909 = vpop.permute.xlu0 %2908
  %2911 = vset.pattern.permute.xlu0 4
  %2912 = vperm.xlu0 %2911, %v871
  %v2913 = vpop.permute.xlu0 %2912
  %2915 = vset.pattern.permute.xlu0 4
  %2916 = vperm.xlu0 %2915, %v872
  %v2917 = vpop.permute.xlu0 %2916
  %2919 = vset.pattern.permute.xlu0 4
  %2920 = vperm.xlu0 %2919, %v873
  %v2921 = vpop.permute.xlu0 %2920
  %2923 = vset.pattern.permute.xlu0 4
  %2924 = vperm.xlu0 %2923, %v874
  %v2925 = vpop.permute.xlu0 %2924
  %2927 = vset.pattern.permute.xlu0 4
  %2928 = vperm.xlu0 %2927, %v875
  %v2929 = vpop.permute.xlu0 %2928
  %2931 = vset.pattern.permute.xlu0 4
  %2932 = vperm.xlu0 %2931, %v876
  %v2933 = vpop.permute.xlu0 %2932
  %2935 = vset.pattern.permute.xlu0 4
  %2936 = vperm.xlu0 %2935, %v877
  %v2937 = vpop.permute.xlu0 %2936
  %2939 = vset.pattern.permute.xlu0 4
  %2940 = vperm.xlu0 %2939, %v878
  %v2941 = vpop.permute.xlu0 %2940
  %2943 = vset.pattern.permute.xlu0 4
  %2944 = vperm.xlu0 %2943, %v879
  %v2945 = vpop.permute.xlu0 %2944
  %2947 = vset.pattern.permute.xlu0 4
  %2948 = vperm.xlu0 %2947, %v880
  %v2949 = vpop.permute.xlu0 %2948
  %2951 = vset.pattern.permute.xlu0 4
  %2952 = vperm.xlu0 %2951, %v881
  %v2953 = vpop.permute.xlu0 %2952
  %2955 = vset.pattern.permute.xlu0 4
  %2956 = vperm.xlu0 %2955, %v882
  %v2957 = vpop.permute.xlu0 %2956
  %2959 = vset.pattern.permute.xlu0 4
  %2960 = vperm.xlu0 %2959, %v883
  %v2961 = vpop.permute.xlu0 %2960
  %2963 = vset.pattern.permute.xlu0 4
  %2964 = vperm.xlu0 %2963, %v884
  %v2965 = vpop.permute.xlu0 %2964
  %2967 = vset.pattern.permute.xlu0 4
  %2968 = vperm.xlu0 %2967, %v885
  %v2969 = vpop.permute.xlu0 %2968
  %2971 = vset.pattern.permute.xlu0 4
  %2972 = vperm.xlu0 %2971, %v886
  %v2973 = vpop.permute.xlu0 %2972
  %2975 = vset.pattern.permute.xlu0 4
  %2976 = vperm.xlu0 %2975, %v887
  %v2977 = vpop.permute.xlu0 %2976
  %2979 = vset.pattern.permute.xlu0 4
  %2980 = vperm.xlu0 %2979, %v888
  %v2981 = vpop.permute.xlu0 %2980
  %2983 = vset.pattern.permute.xlu0 4
  %2984 = vperm.xlu0 %2983, %v889
  %v2985 = vpop.permute.xlu0 %2984
  %2987 = vset.pattern.permute.xlu0 4
  %2988 = vperm.xlu0 %2987, %v890
  %v2989 = vpop.permute.xlu0 %2988
  %2991 = vset.pattern.permute.xlu0 4
  %2992 = vperm.xlu0 %2991, %v891
  %v2993 = vpop.permute.xlu0 %2992
  %2995 = vset.pattern.permute.xlu0 4
  %2996 = vperm.xlu0 %2995, %v892
  %v2997 = vpop.permute.xlu0 %2996
  %2999 = vset.pattern.permute.xlu0 4
  %3000 = vperm.xlu0 %2999, %v893
  %v3001 = vpop.permute.xlu0 %3000
  %3003 = vset.pattern.permute.xlu0 4
  %3004 = vperm.xlu0 %3003, %v894
  %v3005 = vpop.permute.xlu0 %3004
  %3007 = vset.pattern.permute.xlu0 4
  %3008 = vperm.xlu0 %3007, %v895
  %v3009 = vpop.permute.xlu0 %3008
  %v3011 = vmul.f32 %v637, %v2757
  %v3012 = vmul.f32 %v638, %v2761
  %v3013 = vmul.f32 %v639, %v2765
  %v3014 = vmul.f32 %v640, %v2769
  %v3015 = vmul.f32 %v641, %v2773
  %v3016 = vmul.f32 %v642, %v2777
  %v3017 = vmul.f32 %v643, %v2781
  %v3018 = vmul.f32 %v644, %v2785
  %v3019 = vmul.f32 %v645, %v2789
  %v3020 = vmul.f32 %v646, %v2793
  %v3021 = vmul.f32 %v647, %v2797
  %v3022 = vmul.f32 %v648, %v2801
  %v3023 = vmul.f32 %v649, %v2805
  %v3024 = vmul.f32 %v650, %v2809
  %v3025 = vmul.f32 %v651, %v2813
  %v3026 = vmul.f32 %v652, %v2817
  %v3027 = vmul.f32 %v653, %v2821
  %v3028 = vmul.f32 %v654, %v2825
  %v3029 = vmul.f32 %v655, %v2829
  %v3030 = vmul.f32 %v656, %v2833
  %v3031 = vmul.f32 %v657, %v2837
  %v3032 = vmul.f32 %v658, %v2841
  %v3033 = vmul.f32 %v659, %v2845
  %v3034 = vmul.f32 %v660, %v2849
  %v3035 = vmul.f32 %v661, %v2853
  %v3036 = vmul.f32 %v662, %v2857
  %v3037 = vmul.f32 %v663, %v2861
  %v3038 = vmul.f32 %v664, %v2865
  %v3039 = vmul.f32 %v665, %v2869
  %v3040 = vmul.f32 %v666, %v2873
  %v3041 = vmul.f32 %v667, %v2877
  %v3042 = vmul.f32 %v668, %v2881
  %v3043 = vmul.f32 %v669, %v2885
  %v3044 = vmul.f32 %v670, %v2889
  %v3045 = vmul.f32 %v671, %v2893
  %v3046 = vmul.f32 %v672, %v2897
  %v3047 = vmul.f32 %v673, %v2901
  %v3048 = vmul.f32 %v674, %v2905
  %v3049 = vmul.f32 %v675, %v2909
  %v3050 = vmul.f32 %v676, %v2913
  %v3051 = vmul.f32 %v677, %v2917
  %v3052 = vmul.f32 %v678, %v2921
  %v3053 = vmul.f32 %v679, %v2925
  %v3054 = vmul.f32 %v680, %v2929
  %v3055 = vmul.f32 %v681, %v2933
  %v3056 = vmul.f32 %v682, %v2937
  %v3057 = vmul.f32 %v683, %v2941
  %v3058 = vmul.f32 %v684, %v2945
  %v3059 = vmul.f32 %v685, %v2949
  %v3060 = vmul.f32 %v686, %v2953
  %v3061 = vmul.f32 %v687, %v2957
  %v3062 = vmul.f32 %v688, %v2961
  %v3063 = vmul.f32 %v689, %v2965
  %v3064 = vmul.f32 %v690, %v2969
  %v3065 = vmul.f32 %v691, %v2973
  %v3066 = vmul.f32 %v692, %v2977
  %v3067 = vmul.f32 %v693, %v2981
  %v3068 = vmul.f32 %v694, %v2985
  %v3069 = vmul.f32 %v695, %v2989
  %v3070 = vmul.f32 %v696, %v2993
  %v3071 = vmul.f32 %v697, %v2997
  %v3072 = vmul.f32 %v698, %v3001
  %v3073 = vmul.f32 %v699, %v3005
  %v3074 = vmul.f32 %v700, %v3009
  %v3075 = vpack.c.bf16 %v3012, %v3011
  %v3076 = vpack.c.bf16 %v3014, %v3013
  %v3077 = vpack.c.bf16 %v3016, %v3015
  %v3078 = vpack.c.bf16 %v3018, %v3017
  %v3079 = vpack.c.bf16 %v3020, %v3019
  %v3080 = vpack.c.bf16 %v3022, %v3021
  %v3081 = vpack.c.bf16 %v3024, %v3023
  %v3082 = vpack.c.bf16 %v3026, %v3025
  %v3083 = vpack.c.bf16 %v3028, %v3027
  %v3084 = vpack.c.bf16 %v3030, %v3029
  %v3085 = vpack.c.bf16 %v3032, %v3031
  %v3086 = vpack.c.bf16 %v3034, %v3033
  %v3087 = vpack.c.bf16 %v3036, %v3035
  %v3088 = vpack.c.bf16 %v3038, %v3037
  %v3089 = vpack.c.bf16 %v3040, %v3039
  %v3090 = vpack.c.bf16 %v3042, %v3041
  %v3091 = vpack.c.bf16 %v3044, %v3043
  %v3092 = vpack.c.bf16 %v3046, %v3045
  %v3093 = vpack.c.bf16 %v3048, %v3047
  %v3094 = vpack.c.bf16 %v3050, %v3049
  %v3095 = vpack.c.bf16 %v3052, %v3051
  %v3096 = vpack.c.bf16 %v3054, %v3053
  %v3097 = vpack.c.bf16 %v3056, %v3055
  %v3098 = vpack.c.bf16 %v3058, %v3057
  %v3099 = vpack.c.bf16 %v3060, %v3059
  %v3100 = vpack.c.bf16 %v3062, %v3061
  %v3101 = vpack.c.bf16 %v3064, %v3063
  %v3102 = vpack.c.bf16 %v3066, %v3065
  %v3103 = vpack.c.bf16 %v3068, %v3067
  %v3104 = vpack.c.bf16 %v3070, %v3069
  %v3105 = vpack.c.bf16 %v3072, %v3071
  %v3106 = vpack.c.bf16 %v3074, %v3073
  %3107 = vset.pattern.permute.xlu0 5
  %3108 = vperm.xlu0 %3107, %v832
  %v3109 = vpop.permute.xlu0 %3108
  %3111 = vset.pattern.permute.xlu0 5
  %3112 = vperm.xlu0 %3111, %v833
  %v3113 = vpop.permute.xlu0 %3112
  %3115 = vset.pattern.permute.xlu0 5
  %3116 = vperm.xlu0 %3115, %v834
  %v3117 = vpop.permute.xlu0 %3116
  %3119 = vset.pattern.permute.xlu0 5
  %3120 = vperm.xlu0 %3119, %v835
  %v3121 = vpop.permute.xlu0 %3120
  %3123 = vset.pattern.permute.xlu0 5
  %3124 = vperm.xlu0 %3123, %v836
  %v3125 = vpop.permute.xlu0 %3124
  %3127 = vset.pattern.permute.xlu0 5
  %3128 = vperm.xlu0 %3127, %v837
  %v3129 = vpop.permute.xlu0 %3128
  %3131 = vset.pattern.permute.xlu0 5
  %3132 = vperm.xlu0 %3131, %v838
  %v3133 = vpop.permute.xlu0 %3132
  %3135 = vset.pattern.permute.xlu0 5
  %3136 = vperm.xlu0 %3135, %v839
  %v3137 = vpop.permute.xlu0 %3136
  %3139 = vset.pattern.permute.xlu0 5
  %3140 = vperm.xlu0 %3139, %v840
  %v3141 = vpop.permute.xlu0 %3140
  %3143 = vset.pattern.permute.xlu0 5
  %3144 = vperm.xlu0 %3143, %v841
  %v3145 = vpop.permute.xlu0 %3144
  %3147 = vset.pattern.permute.xlu0 5
  %3148 = vperm.xlu0 %3147, %v842
  %v3149 = vpop.permute.xlu0 %3148
  %3151 = vset.pattern.permute.xlu0 5
  %3152 = vperm.xlu0 %3151, %v843
  %v3153 = vpop.permute.xlu0 %3152
  %3155 = vset.pattern.permute.xlu0 5
  %3156 = vperm.xlu0 %3155, %v844
  %v3157 = vpop.permute.xlu0 %3156
  %3159 = vset.pattern.permute.xlu0 5
  %3160 = vperm.xlu0 %3159, %v845
  %v3161 = vpop.permute.xlu0 %3160
  %3163 = vset.pattern.permute.xlu0 5
  %3164 = vperm.xlu0 %3163, %v846
  %v3165 = vpop.permute.xlu0 %3164
  %3167 = vset.pattern.permute.xlu0 5
  %3168 = vperm.xlu0 %3167, %v847
  %v3169 = vpop.permute.xlu0 %3168
  %3171 = vset.pattern.permute.xlu0 5
  %3172 = vperm.xlu0 %3171, %v848
  %v3173 = vpop.permute.xlu0 %3172
  %3175 = vset.pattern.permute.xlu0 5
  %3176 = vperm.xlu0 %3175, %v849
  %v3177 = vpop.permute.xlu0 %3176
  %3179 = vset.pattern.permute.xlu0 5
  %3180 = vperm.xlu0 %3179, %v850
  %v3181 = vpop.permute.xlu0 %3180
  %3183 = vset.pattern.permute.xlu0 5
  %3184 = vperm.xlu0 %3183, %v851
  %v3185 = vpop.permute.xlu0 %3184
  %3187 = vset.pattern.permute.xlu0 5
  %3188 = vperm.xlu0 %3187, %v852
  %v3189 = vpop.permute.xlu0 %3188
  %3191 = vset.pattern.permute.xlu0 5
  %3192 = vperm.xlu0 %3191, %v853
  %v3193 = vpop.permute.xlu0 %3192
  %3195 = vset.pattern.permute.xlu0 5
  %3196 = vperm.xlu0 %3195, %v854
  %v3197 = vpop.permute.xlu0 %3196
  %3199 = vset.pattern.permute.xlu0 5
  %3200 = vperm.xlu0 %3199, %v855
  %v3201 = vpop.permute.xlu0 %3200
  %3203 = vset.pattern.permute.xlu0 5
  %3204 = vperm.xlu0 %3203, %v856
  %v3205 = vpop.permute.xlu0 %3204
  %3207 = vset.pattern.permute.xlu0 5
  %3208 = vperm.xlu0 %3207, %v857
  %v3209 = vpop.permute.xlu0 %3208
  %3211 = vset.pattern.permute.xlu0 5
  %3212 = vperm.xlu0 %3211, %v858
  %v3213 = vpop.permute.xlu0 %3212
  %3215 = vset.pattern.permute.xlu0 5
  %3216 = vperm.xlu0 %3215, %v859
  %v3217 = vpop.permute.xlu0 %3216
  %3219 = vset.pattern.permute.xlu0 5
  %3220 = vperm.xlu0 %3219, %v860
  %v3221 = vpop.permute.xlu0 %3220
  %3223 = vset.pattern.permute.xlu0 5
  %3224 = vperm.xlu0 %3223, %v861
  %v3225 = vpop.permute.xlu0 %3224
  %3227 = vset.pattern.permute.xlu0 5
  %3228 = vperm.xlu0 %3227, %v862
  %v3229 = vpop.permute.xlu0 %3228
  %3231 = vset.pattern.permute.xlu0 5
  %3232 = vperm.xlu0 %3231, %v863
  %v3233 = vpop.permute.xlu0 %3232
  %3235 = vset.pattern.permute.xlu0 5
  %3236 = vperm.xlu0 %3235, %v864
  %v3237 = vpop.permute.xlu0 %3236
  %3239 = vset.pattern.permute.xlu0 5
  %3240 = vperm.xlu0 %3239, %v865
  %v3241 = vpop.permute.xlu0 %3240
  %3243 = vset.pattern.permute.xlu0 5
  %3244 = vperm.xlu0 %3243, %v866
  %v3245 = vpop.permute.xlu0 %3244
  %3247 = vset.pattern.permute.xlu0 5
  %3248 = vperm.xlu0 %3247, %v867
  %v3249 = vpop.permute.xlu0 %3248
  %3251 = vset.pattern.permute.xlu0 5
  %3252 = vperm.xlu0 %3251, %v868
  %v3253 = vpop.permute.xlu0 %3252
  %3255 = vset.pattern.permute.xlu0 5
  %3256 = vperm.xlu0 %3255, %v869
  %v3257 = vpop.permute.xlu0 %3256
  %3259 = vset.pattern.permute.xlu0 5
  %3260 = vperm.xlu0 %3259, %v870
  %v3261 = vpop.permute.xlu0 %3260
  %3263 = vset.pattern.permute.xlu0 5
  %3264 = vperm.xlu0 %3263, %v871
  %v3265 = vpop.permute.xlu0 %3264
  %3267 = vset.pattern.permute.xlu0 5
  %3268 = vperm.xlu0 %3267, %v872
  %v3269 = vpop.permute.xlu0 %3268
  %3271 = vset.pattern.permute.xlu0 5
  %3272 = vperm.xlu0 %3271, %v873
  %v3273 = vpop.permute.xlu0 %3272
  %3275 = vset.pattern.permute.xlu0 5
  %3276 = vperm.xlu0 %3275, %v874
  %v3277 = vpop.permute.xlu0 %3276
  %3279 = vset.pattern.permute.xlu0 5
  %3280 = vperm.xlu0 %3279, %v875
  %v3281 = vpop.permute.xlu0 %3280
  %3283 = vset.pattern.permute.xlu0 5
  %3284 = vperm.xlu0 %3283, %v876
  %v3285 = vpop.permute.xlu0 %3284
  %3287 = vset.pattern.permute.xlu0 5
  %3288 = vperm.xlu0 %3287, %v877
  %v3289 = vpop.permute.xlu0 %3288
  %3291 = vset.pattern.permute.xlu0 5
  %3292 = vperm.xlu0 %3291, %v878
  %v3293 = vpop.permute.xlu0 %3292
  %3295 = vset.pattern.permute.xlu0 5
  %3296 = vperm.xlu0 %3295, %v879
  %v3297 = vpop.permute.xlu0 %3296
  %3299 = vset.pattern.permute.xlu0 5
  %3300 = vperm.xlu0 %3299, %v880
  %v3301 = vpop.permute.xlu0 %3300
  %3303 = vset.pattern.permute.xlu0 5
  %3304 = vperm.xlu0 %3303, %v881
  %v3305 = vpop.permute.xlu0 %3304
  %3307 = vset.pattern.permute.xlu0 5
  %3308 = vperm.xlu0 %3307, %v882
  %v3309 = vpop.permute.xlu0 %3308
  %3311 = vset.pattern.permute.xlu0 5
  %3312 = vperm.xlu0 %3311, %v883
  %v3313 = vpop.permute.xlu0 %3312
  %3315 = vset.pattern.permute.xlu0 5
  %3316 = vperm.xlu0 %3315, %v884
  %v3317 = vpop.permute.xlu0 %3316
  %3319 = vset.pattern.permute.xlu0 5
  %3320 = vperm.xlu0 %3319, %v885
  %v3321 = vpop.permute.xlu0 %3320
  %3323 = vset.pattern.permute.xlu0 5
  %3324 = vperm.xlu0 %3323, %v886
  %v3325 = vpop.permute.xlu0 %3324
  %3327 = vset.pattern.permute.xlu0 5
  %3328 = vperm.xlu0 %3327, %v887
  %v3329 = vpop.permute.xlu0 %3328
  %3331 = vset.pattern.permute.xlu0 5
  %3332 = vperm.xlu0 %3331, %v888
  %v3333 = vpop.permute.xlu0 %3332
  %3335 = vset.pattern.permute.xlu0 5
  %3336 = vperm.xlu0 %3335, %v889
  %v3337 = vpop.permute.xlu0 %3336
  %3339 = vset.pattern.permute.xlu0 5
  %3340 = vperm.xlu0 %3339, %v890
  %v3341 = vpop.permute.xlu0 %3340
  %3343 = vset.pattern.permute.xlu0 5
  %3344 = vperm.xlu0 %3343, %v891
  %v3345 = vpop.permute.xlu0 %3344
  %3347 = vset.pattern.permute.xlu0 5
  %3348 = vperm.xlu0 %3347, %v892
  %v3349 = vpop.permute.xlu0 %3348
  %3351 = vset.pattern.permute.xlu0 5
  %3352 = vperm.xlu0 %3351, %v893
  %v3353 = vpop.permute.xlu0 %3352
  %3355 = vset.pattern.permute.xlu0 5
  %3356 = vperm.xlu0 %3355, %v894
  %v3357 = vpop.permute.xlu0 %3356
  %3359 = vset.pattern.permute.xlu0 5
  %3360 = vperm.xlu0 %3359, %v895
  %v3361 = vpop.permute.xlu0 %3360
  %v3363 = vmul.f32 %v830, %v3109
  %v3364 = vmul.f32 %v829, %v3113
  %v3365 = vmul.f32 %v828, %v3117
  %v3366 = vmul.f32 %v827, %v3121
  %v3367 = vmul.f32 %v826, %v3125
  %v3368 = vmul.f32 %v825, %v3129
  %v3369 = vmul.f32 %v824, %v3133
  %v3370 = vmul.f32 %v823, %v3137
  %v3371 = vmul.f32 %v822, %v3141
  %v3372 = vmul.f32 %v821, %v3145
  %v3373 = vmul.f32 %v820, %v3149
  %v3374 = vmul.f32 %v819, %v3153
  %v3375 = vmul.f32 %v818, %v3157
  %v3376 = vmul.f32 %v817, %v3161
  %v3377 = vmul.f32 %v816, %v3165
  %v3378 = vmul.f32 %v815, %v3169
  %v3379 = vmul.f32 %v814, %v3173
  %v3380 = vmul.f32 %v813, %v3177
  %v3381 = vmul.f32 %v812, %v3181
  %v3382 = vmul.f32 %v811, %v3185
  %v3383 = vmul.f32 %v810, %v3189
  %v3384 = vmul.f32 %v809, %v3193
  %v3385 = vmul.f32 %v808, %v3197
  %v3386 = vmul.f32 %v807, %v3201
  %v3387 = vmul.f32 %v806, %v3205
  %v3388 = vmul.f32 %v805, %v3209
  %v3389 = vmul.f32 %v804, %v3213
  %v3390 = vmul.f32 %v803, %v3217
  %v3391 = vmul.f32 %v802, %v3221
  %v3392 = vmul.f32 %v801, %v3225
  %v3393 = vmul.f32 %v800, %v3229
  %v3394 = vmul.f32 %v799, %v3233
  %v3395 = vmul.f32 %v798, %v3237
  %v3396 = vmul.f32 %v797, %v3241
  %v3397 = vmul.f32 %v796, %v3245
  %v3398 = vmul.f32 %v795, %v3249
  %v3399 = vmul.f32 %v794, %v3253
  %v3400 = vmul.f32 %v793, %v3257
  %v3401 = vmul.f32 %v792, %v3261
  %v3402 = vmul.f32 %v791, %v3265
  %v3403 = vmul.f32 %v790, %v3269
  %v3404 = vmul.f32 %v789, %v3273
  %v3405 = vmul.f32 %v788, %v3277
  %v3406 = vmul.f32 %v787, %v3281
  %v3407 = vmul.f32 %v786, %v3285
  %v3408 = vmul.f32 %v785, %v3289
  %v3409 = vmul.f32 %v784, %v3293
  %v3410 = vmul.f32 %v783, %v3297
  %v3411 = vmul.f32 %v782, %v3301
  %v3412 = vmul.f32 %v781, %v3305
  %v3413 = vmul.f32 %v780, %v3309
  %v3414 = vmul.f32 %v779, %v3313
  %v3415 = vmul.f32 %v778, %v3317
  %v3416 = vmul.f32 %v777, %v3321
  %v3417 = vmul.f32 %v776, %v3325
  %v3418 = vmul.f32 %v775, %v3329
  %v3419 = vmul.f32 %v774, %v3333
  %v3420 = vmul.f32 %v773, %v3337
  %v3421 = vmul.f32 %v772, %v3341
  %v3422 = vmul.f32 %v771, %v3345
  %v3423 = vmul.f32 %v770, %v3349
  %v3424 = vmul.f32 %v769, %v3353
  %v3425 = vmul.f32 %v768, %v3357
  %v3426 = vmul.f32 %v831, %v3361
  %v3427 = vpack.c.bf16 %v3364, %v3363
  %v3428 = vpack.c.bf16 %v3366, %v3365
  %v3429 = vpack.c.bf16 %v3368, %v3367
  %v3430 = vpack.c.bf16 %v3370, %v3369
  %v3431 = vpack.c.bf16 %v3372, %v3371
  %v3432 = vpack.c.bf16 %v3374, %v3373
  %v3433 = vpack.c.bf16 %v3376, %v3375
  %v3434 = vpack.c.bf16 %v3378, %v3377
  %v3435 = vpack.c.bf16 %v3380, %v3379
  %v3436 = vpack.c.bf16 %v3382, %v3381
  %v3437 = vpack.c.bf16 %v3384, %v3383
  %v3438 = vpack.c.bf16 %v3386, %v3385
  %v3439 = vpack.c.bf16 %v3388, %v3387
  %v3440 = vpack.c.bf16 %v3390, %v3389
  %v3441 = vpack.c.bf16 %v3392, %v3391
  %v3442 = vpack.c.bf16 %v3394, %v3393
  %v3443 = vpack.c.bf16 %v3396, %v3395
  %v3444 = vpack.c.bf16 %v3398, %v3397
  %v3445 = vpack.c.bf16 %v3400, %v3399
  %v3446 = vpack.c.bf16 %v3402, %v3401
  %v3447 = vpack.c.bf16 %v3404, %v3403
  %v3448 = vpack.c.bf16 %v3406, %v3405
  %v3449 = vpack.c.bf16 %v3408, %v3407
  %v3450 = vpack.c.bf16 %v3410, %v3409
  %v3451 = vpack.c.bf16 %v3412, %v3411
  %v3452 = vpack.c.bf16 %v3414, %v3413
  %v3453 = vpack.c.bf16 %v3416, %v3415
  %v3454 = vpack.c.bf16 %v3418, %v3417
  %v3455 = vpack.c.bf16 %v3420, %v3419
  %v3456 = vpack.c.bf16 %v3422, %v3421
  %v3457 = vpack.c.bf16 %v3424, %v3423
  %v3458 = vpack.c.bf16 %v3426, %v3425
  %v3459 = vrot.slane %v637, 5
  %v3460 = vrot.slane %v638, 5
  %v3461 = vrot.slane %v639, 5
  %v3462 = vrot.slane %v640, 5
  %v3463 = vrot.slane %v641, 5
  %v3464 = vrot.slane %v642, 5
  %v3465 = vrot.slane %v643, 5
  %v3466 = vrot.slane %v644, 5
  %v3467 = vrot.slane %v645, 5
  %v3468 = vrot.slane %v646, 5
  %v3469 = vrot.slane %v647, 5
  %v3470 = vrot.slane %v648, 5
  %v3471 = vrot.slane %v649, 5
  %v3472 = vrot.slane %v650, 5
  %v3473 = vrot.slane %v651, 5
  %v3474 = vrot.slane %v652, 5
  %v3475 = vrot.slane %v653, 5
  %v3476 = vrot.slane %v654, 5
  %v3477 = vrot.slane %v655, 5
  %v3478 = vrot.slane %v656, 5
  %v3479 = vrot.slane %v657, 5
  %v3480 = vrot.slane %v658, 5
  %v3481 = vrot.slane %v659, 5
  %v3482 = vrot.slane %v660, 5
  %v3483 = vrot.slane %v661, 5
  %v3484 = vrot.slane %v662, 5
  %v3485 = vrot.slane %v663, 5
  %v3486 = vrot.slane %v664, 5
  %v3487 = vrot.slane %v665, 5
  %v3488 = vrot.slane %v666, 5
  %v3489 = vrot.slane %v667, 5
  %v3490 = vrot.slane %v668, 5
  %v3491 = vrot.slane %v669, 5
  %v3492 = vrot.slane %v670, 5
  %v3493 = vrot.slane %v671, 5
  %v3494 = vrot.slane %v672, 5
  %v3495 = vrot.slane %v673, 5
  %v3496 = vrot.slane %v674, 5
  %v3497 = vrot.slane %v675, 5
  %v3498 = vrot.slane %v676, 5
  %v3499 = vrot.slane %v677, 5
  %v3500 = vrot.slane %v678, 5
  %v3501 = vrot.slane %v679, 5
  %v3502 = vrot.slane %v680, 5
  %v3503 = vrot.slane %v681, 5
  %v3504 = vrot.slane %v682, 5
  %v3505 = vrot.slane %v683, 5
  %v3506 = vrot.slane %v684, 5
  %v3507 = vrot.slane %v685, 5
  %v3508 = vrot.slane %v686, 5
  %v3509 = vrot.slane %v687, 5
  %v3510 = vrot.slane %v688, 5
  %v3511 = vrot.slane %v689, 5
  %v3512 = vrot.slane %v690, 5
  %v3513 = vrot.slane %v691, 5
  %v3514 = vrot.slane %v692, 5
  %v3515 = vrot.slane %v693, 5
  %v3516 = vrot.slane %v694, 5
  %v3517 = vrot.slane %v695, 5
  %v3518 = vrot.slane %v696, 5
  %v3519 = vrot.slane %v697, 5
  %v3520 = vrot.slane %v698, 5
  %v3521 = vrot.slane %v699, 5
  %v3522 = vrot.slane %v700, 5
  %vm3523 = vcmp.lt.s32.totalorder %v766, 3
  %v3524 = vsel %vm3523, %v3521, %v3522
  %v3525 = vsel %vm3523, %v3520, %v3521
  %v3526 = vsel %vm3523, %v3519, %v3520
  %v3527 = vsel %vm3523, %v3518, %v3519
  %v3528 = vsel %vm3523, %v3517, %v3518
  %v3529 = vsel %vm3523, %v3516, %v3517
  %v3530 = vsel %vm3523, %v3515, %v3516
  %v3531 = vsel %vm3523, %v3514, %v3515
  %v3532 = vsel %vm3523, %v3513, %v3514
  %v3533 = vsel %vm3523, %v3512, %v3513
  %v3534 = vsel %vm3523, %v3511, %v3512
  %v3535 = vsel %vm3523, %v3510, %v3511
  %v3536 = vsel %vm3523, %v3509, %v3510
  %v3537 = vsel %vm3523, %v3508, %v3509
  %v3538 = vsel %vm3523, %v3507, %v3508
  %v3539 = vsel %vm3523, %v3506, %v3507
  %v3540 = vsel %vm3523, %v3505, %v3506
  %v3541 = vsel %vm3523, %v3504, %v3505
  %v3542 = vsel %vm3523, %v3503, %v3504
  %v3543 = vsel %vm3523, %v3502, %v3503
  %v3544 = vsel %vm3523, %v3501, %v3502
  %v3545 = vsel %vm3523, %v3500, %v3501
  %v3546 = vsel %vm3523, %v3499, %v3500
  %v3547 = vsel %vm3523, %v3498, %v3499
  %v3548 = vsel %vm3523, %v3497, %v3498
  %v3549 = vsel %vm3523, %v3496, %v3497
  %v3550 = vsel %vm3523, %v3495, %v3496
  %v3551 = vsel %vm3523, %v3494, %v3495
  %v3552 = vsel %vm3523, %v3493, %v3494
  %v3553 = vsel %vm3523, %v3492, %v3493
  %v3554 = vsel %vm3523, %v3491, %v3492
  %v3555 = vsel %vm3523, %v3490, %v3491
  %v3556 = vsel %vm3523, %v3489, %v3490
  %v3557 = vsel %vm3523, %v3488, %v3489
  %v3558 = vsel %vm3523, %v3487, %v3488
  %v3559 = vsel %vm3523, %v3486, %v3487
  %v3560 = vsel %vm3523, %v3485, %v3486
  %v3561 = vsel %vm3523, %v3484, %v3485
  %v3562 = vsel %vm3523, %v3483, %v3484
  %v3563 = vsel %vm3523, %v3482, %v3483
  %v3564 = vsel %vm3523, %v3481, %v3482
  %v3565 = vsel %vm3523, %v3480, %v3481
  %v3566 = vsel %vm3523, %v3479, %v3480
  %v3567 = vsel %vm3523, %v3478, %v3479
  %v3568 = vsel %vm3523, %v3477, %v3478
  %v3569 = vsel %vm3523, %v3476, %v3477
  %v3570 = vsel %vm3523, %v3475, %v3476
  %v3571 = vsel %vm3523, %v3474, %v3475
  %v3572 = vsel %vm3523, %v3473, %v3474
  %v3573 = vsel %vm3523, %v3472, %v3473
  %v3574 = vsel %vm3523, %v3471, %v3472
  %v3575 = vsel %vm3523, %v3470, %v3471
  %v3576 = vsel %vm3523, %v3469, %v3470
  %v3577 = vsel %vm3523, %v3468, %v3469
  %v3578 = vsel %vm3523, %v3467, %v3468
  %v3579 = vsel %vm3523, %v3466, %v3467
  %v3580 = vsel %vm3523, %v3465, %v3466
  %v3581 = vsel %vm3523, %v3464, %v3465
  %v3582 = vsel %vm3523, %v3463, %v3464
  %v3583 = vsel %vm3523, %v3462, %v3463
  %v3584 = vsel %vm3523, %v3461, %v3462
  %v3585 = vsel %vm3523, %v3460, %v3461
  %v3586 = vsel %vm3523, %v3459, %v3460
  %v3587 = vsel %vm3523, %v3522, %v3459
  %3588 = vset.pattern.permute.xlu0 6
  %3589 = vperm.xlu0 %3588, %v832
  %v3590 = vpop.permute.xlu0 %3589
  %3592 = vset.pattern.permute.xlu0 6
  %3593 = vperm.xlu0 %3592, %v833
  %v3594 = vpop.permute.xlu0 %3593
  %3596 = vset.pattern.permute.xlu0 6
  %3597 = vperm.xlu0 %3596, %v834
  %v3598 = vpop.permute.xlu0 %3597
  %3600 = vset.pattern.permute.xlu0 6
  %3601 = vperm.xlu0 %3600, %v835
  %v3602 = vpop.permute.xlu0 %3601
  %3604 = vset.pattern.permute.xlu0 6
  %3605 = vperm.xlu0 %3604, %v836
  %v3606 = vpop.permute.xlu0 %3605
  %3608 = vset.pattern.permute.xlu0 6
  %3609 = vperm.xlu0 %3608, %v837
  %v3610 = vpop.permute.xlu0 %3609
  %3612 = vset.pattern.permute.xlu0 6
  %3613 = vperm.xlu0 %3612, %v838
  %v3614 = vpop.permute.xlu0 %3613
  %3616 = vset.pattern.permute.xlu0 6
  %3617 = vperm.xlu0 %3616, %v839
  %v3618 = vpop.permute.xlu0 %3617
  %3620 = vset.pattern.permute.xlu0 6
  %3621 = vperm.xlu0 %3620, %v840
  %v3622 = vpop.permute.xlu0 %3621
  %3624 = vset.pattern.permute.xlu0 6
  %3625 = vperm.xlu0 %3624, %v841
  %v3626 = vpop.permute.xlu0 %3625
  %3628 = vset.pattern.permute.xlu0 6
  %3629 = vperm.xlu0 %3628, %v842
  %v3630 = vpop.permute.xlu0 %3629
  %3632 = vset.pattern.permute.xlu0 6
  %3633 = vperm.xlu0 %3632, %v843
  %v3634 = vpop.permute.xlu0 %3633
  %3636 = vset.pattern.permute.xlu0 6
  %3637 = vperm.xlu0 %3636, %v844
  %v3638 = vpop.permute.xlu0 %3637
  %3640 = vset.pattern.permute.xlu0 6
  %3641 = vperm.xlu0 %3640, %v845
  %v3642 = vpop.permute.xlu0 %3641
  %3644 = vset.pattern.permute.xlu0 6
  %3645 = vperm.xlu0 %3644, %v846
  %v3646 = vpop.permute.xlu0 %3645
  %3648 = vset.pattern.permute.xlu0 6
  %3649 = vperm.xlu0 %3648, %v847
  %v3650 = vpop.permute.xlu0 %3649
  %3652 = vset.pattern.permute.xlu0 6
  %3653 = vperm.xlu0 %3652, %v848
  %v3654 = vpop.permute.xlu0 %3653
  %3656 = vset.pattern.permute.xlu0 6
  %3657 = vperm.xlu0 %3656, %v849
  %v3658 = vpop.permute.xlu0 %3657
  %3660 = vset.pattern.permute.xlu0 6
  %3661 = vperm.xlu0 %3660, %v850
  %v3662 = vpop.permute.xlu0 %3661
  %3664 = vset.pattern.permute.xlu0 6
  %3665 = vperm.xlu0 %3664, %v851
  %v3666 = vpop.permute.xlu0 %3665
  %3668 = vset.pattern.permute.xlu0 6
  %3669 = vperm.xlu0 %3668, %v852
  %v3670 = vpop.permute.xlu0 %3669
  %3672 = vset.pattern.permute.xlu0 6
  %3673 = vperm.xlu0 %3672, %v853
  %v3674 = vpop.permute.xlu0 %3673
  %3676 = vset.pattern.permute.xlu0 6
  %3677 = vperm.xlu0 %3676, %v854
  %v3678 = vpop.permute.xlu0 %3677
  %3680 = vset.pattern.permute.xlu0 6
  %3681 = vperm.xlu0 %3680, %v855
  %v3682 = vpop.permute.xlu0 %3681
  %3684 = vset.pattern.permute.xlu0 6
  %3685 = vperm.xlu0 %3684, %v856
  %v3686 = vpop.permute.xlu0 %3685
  %3688 = vset.pattern.permute.xlu0 6
  %3689 = vperm.xlu0 %3688, %v857
  %v3690 = vpop.permute.xlu0 %3689
  %3692 = vset.pattern.permute.xlu0 6
  %3693 = vperm.xlu0 %3692, %v858
  %v3694 = vpop.permute.xlu0 %3693
  %3696 = vset.pattern.permute.xlu0 6
  %3697 = vperm.xlu0 %3696, %v859
  %v3698 = vpop.permute.xlu0 %3697
  %3700 = vset.pattern.permute.xlu0 6
  %3701 = vperm.xlu0 %3700, %v860
  %v3702 = vpop.permute.xlu0 %3701
  %3704 = vset.pattern.permute.xlu0 6
  %3705 = vperm.xlu0 %3704, %v861
  %v3706 = vpop.permute.xlu0 %3705
  %3708 = vset.pattern.permute.xlu0 6
  %3709 = vperm.xlu0 %3708, %v862
  %v3710 = vpop.permute.xlu0 %3709
  %3712 = vset.pattern.permute.xlu0 6
  %3713 = vperm.xlu0 %3712, %v863
  %v3714 = vpop.permute.xlu0 %3713
  %3716 = vset.pattern.permute.xlu0 6
  %3717 = vperm.xlu0 %3716, %v864
  %v3718 = vpop.permute.xlu0 %3717
  %3720 = vset.pattern.permute.xlu0 6
  %3721 = vperm.xlu0 %3720, %v865
  %v3722 = vpop.permute.xlu0 %3721
  %3724 = vset.pattern.permute.xlu0 6
  %3725 = vperm.xlu0 %3724, %v866
  %v3726 = vpop.permute.xlu0 %3725
  %3728 = vset.pattern.permute.xlu0 6
  %3729 = vperm.xlu0 %3728, %v867
  %v3730 = vpop.permute.xlu0 %3729
  %3732 = vset.pattern.permute.xlu0 6
  %3733 = vperm.xlu0 %3732, %v868
  %v3734 = vpop.permute.xlu0 %3733
  %3736 = vset.pattern.permute.xlu0 6
  %3737 = vperm.xlu0 %3736, %v869
  %v3738 = vpop.permute.xlu0 %3737
  %3740 = vset.pattern.permute.xlu0 6
  %3741 = vperm.xlu0 %3740, %v870
  %v3742 = vpop.permute.xlu0 %3741
  %3744 = vset.pattern.permute.xlu0 6
  %3745 = vperm.xlu0 %3744, %v871
  %v3746 = vpop.permute.xlu0 %3745
  %3748 = vset.pattern.permute.xlu0 6
  %3749 = vperm.xlu0 %3748, %v872
  %v3750 = vpop.permute.xlu0 %3749
  %3752 = vset.pattern.permute.xlu0 6
  %3753 = vperm.xlu0 %3752, %v873
  %v3754 = vpop.permute.xlu0 %3753
  %3756 = vset.pattern.permute.xlu0 6
  %3757 = vperm.xlu0 %3756, %v874
  %v3758 = vpop.permute.xlu0 %3757
  %3760 = vset.pattern.permute.xlu0 6
  %3761 = vperm.xlu0 %3760, %v875
  %v3762 = vpop.permute.xlu0 %3761
  %3764 = vset.pattern.permute.xlu0 6
  %3765 = vperm.xlu0 %3764, %v876
  %v3766 = vpop.permute.xlu0 %3765
  %3768 = vset.pattern.permute.xlu0 6
  %3769 = vperm.xlu0 %3768, %v877
  %v3770 = vpop.permute.xlu0 %3769
  %3772 = vset.pattern.permute.xlu0 6
  %3773 = vperm.xlu0 %3772, %v878
  %v3774 = vpop.permute.xlu0 %3773
  %3776 = vset.pattern.permute.xlu0 6
  %3777 = vperm.xlu0 %3776, %v879
  %v3778 = vpop.permute.xlu0 %3777
  %3780 = vset.pattern.permute.xlu0 6
  %3781 = vperm.xlu0 %3780, %v880
  %v3782 = vpop.permute.xlu0 %3781
  %3784 = vset.pattern.permute.xlu0 6
  %3785 = vperm.xlu0 %3784, %v881
  %v3786 = vpop.permute.xlu0 %3785
  %3788 = vset.pattern.permute.xlu0 6
  %3789 = vperm.xlu0 %3788, %v882
  %v3790 = vpop.permute.xlu0 %3789
  %3792 = vset.pattern.permute.xlu0 6
  %3793 = vperm.xlu0 %3792, %v883
  %v3794 = vpop.permute.xlu0 %3793
  %3796 = vset.pattern.permute.xlu0 6
  %3797 = vperm.xlu0 %3796, %v884
  %v3798 = vpop.permute.xlu0 %3797
  %3800 = vset.pattern.permute.xlu0 6
  %3801 = vperm.xlu0 %3800, %v885
  %v3802 = vpop.permute.xlu0 %3801
  %3804 = vset.pattern.permute.xlu0 6
  %3805 = vperm.xlu0 %3804, %v886
  %v3806 = vpop.permute.xlu0 %3805
  %3808 = vset.pattern.permute.xlu0 6
  %3809 = vperm.xlu0 %3808, %v887
  %v3810 = vpop.permute.xlu0 %3809
  %3812 = vset.pattern.permute.xlu0 6
  %3813 = vperm.xlu0 %3812, %v888
  %v3814 = vpop.permute.xlu0 %3813
  %3816 = vset.pattern.permute.xlu0 6
  %3817 = vperm.xlu0 %3816, %v889
  %v3818 = vpop.permute.xlu0 %3817
  %3820 = vset.pattern.permute.xlu0 6
  %3821 = vperm.xlu0 %3820, %v890
  %v3822 = vpop.permute.xlu0 %3821
  %3824 = vset.pattern.permute.xlu0 6
  %3825 = vperm.xlu0 %3824, %v891
  %v3826 = vpop.permute.xlu0 %3825
  %3828 = vset.pattern.permute.xlu0 6
  %3829 = vperm.xlu0 %3828, %v892
  %v3830 = vpop.permute.xlu0 %3829
  %3832 = vset.pattern.permute.xlu0 6
  %3833 = vperm.xlu0 %3832, %v893
  %v3834 = vpop.permute.xlu0 %3833
  %3836 = vset.pattern.permute.xlu0 6
  %3837 = vperm.xlu0 %3836, %v894
  %v3838 = vpop.permute.xlu0 %3837
  %3840 = vset.pattern.permute.xlu0 6
  %3841 = vperm.xlu0 %3840, %v895
  %v3842 = vpop.permute.xlu0 %3841
  %v3844 = vmul.f32 %v3585, %v3590
  %v3845 = vmul.f32 %v3584, %v3594
  %v3846 = vmul.f32 %v3583, %v3598
  %v3847 = vmul.f32 %v3582, %v3602
  %v3848 = vmul.f32 %v3581, %v3606
  %v3849 = vmul.f32 %v3580, %v3610
  %v3850 = vmul.f32 %v3579, %v3614
  %v3851 = vmul.f32 %v3578, %v3618
  %v3852 = vmul.f32 %v3577, %v3622
  %v3853 = vmul.f32 %v3576, %v3626
  %v3854 = vmul.f32 %v3575, %v3630
  %v3855 = vmul.f32 %v3574, %v3634
  %v3856 = vmul.f32 %v3573, %v3638
  %v3857 = vmul.f32 %v3572, %v3642
  %v3858 = vmul.f32 %v3571, %v3646
  %v3859 = vmul.f32 %v3570, %v3650
  %v3860 = vmul.f32 %v3569, %v3654
  %v3861 = vmul.f32 %v3568, %v3658
  %v3862 = vmul.f32 %v3567, %v3662
  %v3863 = vmul.f32 %v3566, %v3666
  %v3864 = vmul.f32 %v3565, %v3670
  %v3865 = vmul.f32 %v3564, %v3674
  %v3866 = vmul.f32 %v3563, %v3678
  %v3867 = vmul.f32 %v3562, %v3682
  %v3868 = vmul.f32 %v3561, %v3686
  %v3869 = vmul.f32 %v3560, %v3690
  %v3870 = vmul.f32 %v3559, %v3694
  %v3871 = vmul.f32 %v3558, %v3698
  %v3872 = vmul.f32 %v3557, %v3702
  %v3873 = vmul.f32 %v3556, %v3706
  %v3874 = vmul.f32 %v3555, %v3710
  %v3875 = vmul.f32 %v3554, %v3714
  %v3876 = vmul.f32 %v3553, %v3718
  %v3877 = vmul.f32 %v3552, %v3722
  %v3878 = vmul.f32 %v3551, %v3726
  %v3879 = vmul.f32 %v3550, %v3730
  %v3880 = vmul.f32 %v3549, %v3734
  %v3881 = vmul.f32 %v3548, %v3738
  %v3882 = vmul.f32 %v3547, %v3742
  %v3883 = vmul.f32 %v3546, %v3746
  %v3884 = vmul.f32 %v3545, %v3750
  %v3885 = vmul.f32 %v3544, %v3754
  %v3886 = vmul.f32 %v3543, %v3758
  %v3887 = vmul.f32 %v3542, %v3762
  %v3888 = vmul.f32 %v3541, %v3766
  %v3889 = vmul.f32 %v3540, %v3770
  %v3890 = vmul.f32 %v3539, %v3774
  %v3891 = vmul.f32 %v3538, %v3778
  %v3892 = vmul.f32 %v3537, %v3782
  %v3893 = vmul.f32 %v3536, %v3786
  %v3894 = vmul.f32 %v3535, %v3790
  %v3895 = vmul.f32 %v3534, %v3794
  %v3896 = vmul.f32 %v3533, %v3798
  %v3897 = vmul.f32 %v3532, %v3802
  %v3898 = vmul.f32 %v3531, %v3806
  %v3899 = vmul.f32 %v3530, %v3810
  %v3900 = vmul.f32 %v3529, %v3814
  %v3901 = vmul.f32 %v3528, %v3818
  %v3902 = vmul.f32 %v3527, %v3822
  %v3903 = vmul.f32 %v3526, %v3826
  %v3904 = vmul.f32 %v3525, %v3830
  %v3905 = vmul.f32 %v3524, %v3834
  %v3906 = vmul.f32 %v3587, %v3838
  %v3907 = vmul.f32 %v3586, %v3842
  %v3908 = vpack.c.bf16 %v3845, %v3844
  %v3909 = vpack.c.bf16 %v3847, %v3846
  %v3910 = vpack.c.bf16 %v3849, %v3848
  %v3911 = vpack.c.bf16 %v3851, %v3850
  %v3912 = vpack.c.bf16 %v3853, %v3852
  %v3913 = vpack.c.bf16 %v3855, %v3854
  %v3914 = vpack.c.bf16 %v3857, %v3856
  %v3915 = vpack.c.bf16 %v3859, %v3858
  %v3916 = vpack.c.bf16 %v3861, %v3860
  %v3917 = vpack.c.bf16 %v3863, %v3862
  %v3918 = vpack.c.bf16 %v3865, %v3864
  %v3919 = vpack.c.bf16 %v3867, %v3866
  %v3920 = vpack.c.bf16 %v3869, %v3868
  %v3921 = vpack.c.bf16 %v3871, %v3870
  %v3922 = vpack.c.bf16 %v3873, %v3872
  %v3923 = vpack.c.bf16 %v3875, %v3874
  %v3924 = vpack.c.bf16 %v3877, %v3876
  %v3925 = vpack.c.bf16 %v3879, %v3878
  %v3926 = vpack.c.bf16 %v3881, %v3880
  %v3927 = vpack.c.bf16 %v3883, %v3882
  %v3928 = vpack.c.bf16 %v3885, %v3884
  %v3929 = vpack.c.bf16 %v3887, %v3886
  %v3930 = vpack.c.bf16 %v3889, %v3888
  %v3931 = vpack.c.bf16 %v3891, %v3890
  %v3932 = vpack.c.bf16 %v3893, %v3892
  %v3933 = vpack.c.bf16 %v3895, %v3894
  %v3934 = vpack.c.bf16 %v3897, %v3896
  %v3935 = vpack.c.bf16 %v3899, %v3898
  %v3936 = vpack.c.bf16 %v3901, %v3900
  %v3937 = vpack.c.bf16 %v3903, %v3902
  %v3938 = vpack.c.bf16 %v3905, %v3904
  %v3939 = vpack.c.bf16 %v3907, %v3906
  %v3940 = vrot.slane %v637, 6
  %v3941 = vrot.slane %v638, 6
  %v3942 = vrot.slane %v639, 6
  %v3943 = vrot.slane %v640, 6
  %v3944 = vrot.slane %v641, 6
  %v3945 = vrot.slane %v642, 6
  %v3946 = vrot.slane %v643, 6
  %v3947 = vrot.slane %v644, 6
  %v3948 = vrot.slane %v645, 6
  %v3949 = vrot.slane %v646, 6
  %v3950 = vrot.slane %v647, 6
  %v3951 = vrot.slane %v648, 6
  %v3952 = vrot.slane %v649, 6
  %v3953 = vrot.slane %v650, 6
  %v3954 = vrot.slane %v651, 6
  %v3955 = vrot.slane %v652, 6
  %v3956 = vrot.slane %v653, 6
  %v3957 = vrot.slane %v654, 6
  %v3958 = vrot.slane %v655, 6
  %v3959 = vrot.slane %v656, 6
  %v3960 = vrot.slane %v657, 6
  %v3961 = vrot.slane %v658, 6
  %v3962 = vrot.slane %v659, 6
  %v3963 = vrot.slane %v660, 6
  %v3964 = vrot.slane %v661, 6
  %v3965 = vrot.slane %v662, 6
  %v3966 = vrot.slane %v663, 6
  %v3967 = vrot.slane %v664, 6
  %v3968 = vrot.slane %v665, 6
  %v3969 = vrot.slane %v666, 6
  %v3970 = vrot.slane %v667, 6
  %v3971 = vrot.slane %v668, 6
  %v3972 = vrot.slane %v669, 6
  %v3973 = vrot.slane %v670, 6
  %v3974 = vrot.slane %v671, 6
  %v3975 = vrot.slane %v672, 6
  %v3976 = vrot.slane %v673, 6
  %v3977 = vrot.slane %v674, 6
  %v3978 = vrot.slane %v675, 6
  %v3979 = vrot.slane %v676, 6
  %v3980 = vrot.slane %v677, 6
  %v3981 = vrot.slane %v678, 6
  %v3982 = vrot.slane %v679, 6
  %v3983 = vrot.slane %v680, 6
  %v3984 = vrot.slane %v681, 6
  %v3985 = vrot.slane %v682, 6
  %v3986 = vrot.slane %v683, 6
  %v3987 = vrot.slane %v684, 6
  %v3988 = vrot.slane %v685, 6
  %v3989 = vrot.slane %v686, 6
  %v3990 = vrot.slane %v687, 6
  %v3991 = vrot.slane %v688, 6
  %v3992 = vrot.slane %v689, 6
  %v3993 = vrot.slane %v690, 6
  %v3994 = vrot.slane %v691, 6
  %v3995 = vrot.slane %v692, 6
  %v3996 = vrot.slane %v693, 6
  %v3997 = vrot.slane %v694, 6
  %v3998 = vrot.slane %v695, 6
  %v3999 = vrot.slane %v696, 6
  %v4000 = vrot.slane %v697, 6
  %v4001 = vrot.slane %v698, 6
  %v4002 = vrot.slane %v699, 6
  %v4003 = vrot.slane %v700, 6
  %vm4004 = vcmp.lt.s32.totalorder %v766, 2
  %v4005 = vsel %vm4004, %v4002, %v4003
  %v4006 = vsel %vm4004, %v4001, %v4002
  %v4007 = vsel %vm4004, %v4000, %v4001
  %v4008 = vsel %vm4004, %v3999, %v4000
  %v4009 = vsel %vm4004, %v3998, %v3999
  %v4010 = vsel %vm4004, %v3997, %v3998
  %v4011 = vsel %vm4004, %v3996, %v3997
  %v4012 = vsel %vm4004, %v3995, %v3996
  %v4013 = vsel %vm4004, %v3994, %v3995
  %v4014 = vsel %vm4004, %v3993, %v3994
  %v4015 = vsel %vm4004, %v3992, %v3993
  %v4016 = vsel %vm4004, %v3991, %v3992
  %v4017 = vsel %vm4004, %v3990, %v3991
  %v4018 = vsel %vm4004, %v3989, %v3990
  %v4019 = vsel %vm4004, %v3988, %v3989
  %v4020 = vsel %vm4004, %v3987, %v3988
  %v4021 = vsel %vm4004, %v3986, %v3987
  %v4022 = vsel %vm4004, %v3985, %v3986
  %v4023 = vsel %vm4004, %v3984, %v3985
  %v4024 = vsel %vm4004, %v3983, %v3984
  %v4025 = vsel %vm4004, %v3982, %v3983
  %v4026 = vsel %vm4004, %v3981, %v3982
  %v4027 = vsel %vm4004, %v3980, %v3981
  %v4028 = vsel %vm4004, %v3979, %v3980
  %v4029 = vsel %vm4004, %v3978, %v3979
  %v4030 = vsel %vm4004, %v3977, %v3978
  %v4031 = vsel %vm4004, %v3976, %v3977
  %v4032 = vsel %vm4004, %v3975, %v3976
  %v4033 = vsel %vm4004, %v3974, %v3975
  %v4034 = vsel %vm4004, %v3973, %v3974
  %v4035 = vsel %vm4004, %v3972, %v3973
  %v4036 = vsel %vm4004, %v3971, %v3972
  %v4037 = vsel %vm4004, %v3970, %v3971
  %v4038 = vsel %vm4004, %v3969, %v3970
  %v4039 = vsel %vm4004, %v3968, %v3969
  %v4040 = vsel %vm4004, %v3967, %v3968
  %v4041 = vsel %vm4004, %v3966, %v3967
  %v4042 = vsel %vm4004, %v3965, %v3966
  %v4043 = vsel %vm4004, %v3964, %v3965
  %v4044 = vsel %vm4004, %v3963, %v3964
  %v4045 = vsel %vm4004, %v3962, %v3963
  %v4046 = vsel %vm4004, %v3961, %v3962
  %v4047 = vsel %vm4004, %v3960, %v3961
  %v4048 = vsel %vm4004, %v3959, %v3960
  %v4049 = vsel %vm4004, %v3958, %v3959
  %v4050 = vsel %vm4004, %v3957, %v3958
  %v4051 = vsel %vm4004, %v3956, %v3957
  %v4052 = vsel %vm4004, %v3955, %v3956
  %v4053 = vsel %vm4004, %v3954, %v3955
  %v4054 = vsel %vm4004, %v3953, %v3954
  %v4055 = vsel %vm4004, %v3952, %v3953
  %v4056 = vsel %vm4004, %v3951, %v3952
  %v4057 = vsel %vm4004, %v3950, %v3951
  %v4058 = vsel %vm4004, %v3949, %v3950
  %v4059 = vsel %vm4004, %v3948, %v3949
  %v4060 = vsel %vm4004, %v3947, %v3948
  %v4061 = vsel %vm4004, %v3946, %v3947
  %v4062 = vsel %vm4004, %v3945, %v3946
  %v4063 = vsel %vm4004, %v3944, %v3945
  %v4064 = vsel %vm4004, %v3943, %v3944
  %v4065 = vsel %vm4004, %v3942, %v3943
  %v4066 = vsel %vm4004, %v3941, %v3942
  %v4067 = vsel %vm4004, %v3940, %v3941
  %v4068 = vsel %vm4004, %v4003, %v3940
  %4069 = vset.pattern.permute.xlu0 7
  %4070 = vperm.xlu0 %4069, %v832
  %v4071 = vpop.permute.xlu0 %4070
  %4073 = vset.pattern.permute.xlu0 7
  %4074 = vperm.xlu0 %4073, %v833
  %v4075 = vpop.permute.xlu0 %4074
  %4077 = vset.pattern.permute.xlu0 7
  %4078 = vperm.xlu0 %4077, %v834
  %v4079 = vpop.permute.xlu0 %4078
  %4081 = vset.pattern.permute.xlu0 7
  %4082 = vperm.xlu0 %4081, %v835
  %v4083 = vpop.permute.xlu0 %4082
  %4085 = vset.pattern.permute.xlu0 7
  %4086 = vperm.xlu0 %4085, %v836
  %v4087 = vpop.permute.xlu0 %4086
  %4089 = vset.pattern.permute.xlu0 7
  %4090 = vperm.xlu0 %4089, %v837
  %v4091 = vpop.permute.xlu0 %4090
  %4093 = vset.pattern.permute.xlu0 7
  %4094 = vperm.xlu0 %4093, %v838
  %v4095 = vpop.permute.xlu0 %4094
  %4097 = vset.pattern.permute.xlu0 7
  %4098 = vperm.xlu0 %4097, %v839
  %v4099 = vpop.permute.xlu0 %4098
  %4101 = vset.pattern.permute.xlu0 7
  %4102 = vperm.xlu0 %4101, %v840
  %v4103 = vpop.permute.xlu0 %4102
  %4105 = vset.pattern.permute.xlu0 7
  %4106 = vperm.xlu0 %4105, %v841
  %v4107 = vpop.permute.xlu0 %4106
  %4109 = vset.pattern.permute.xlu0 7
  %4110 = vperm.xlu0 %4109, %v842
  %v4111 = vpop.permute.xlu0 %4110
  %4113 = vset.pattern.permute.xlu0 7
  %4114 = vperm.xlu0 %4113, %v843
  %v4115 = vpop.permute.xlu0 %4114
  %4117 = vset.pattern.permute.xlu0 7
  %4118 = vperm.xlu0 %4117, %v844
  %v4119 = vpop.permute.xlu0 %4118
  %4121 = vset.pattern.permute.xlu0 7
  %4122 = vperm.xlu0 %4121, %v845
  %v4123 = vpop.permute.xlu0 %4122
  %4125 = vset.pattern.permute.xlu0 7
  %4126 = vperm.xlu0 %4125, %v846
  %v4127 = vpop.permute.xlu0 %4126
  %4129 = vset.pattern.permute.xlu0 7
  %4130 = vperm.xlu0 %4129, %v847
  %v4131 = vpop.permute.xlu0 %4130
  %4133 = vset.pattern.permute.xlu0 7
  %4134 = vperm.xlu0 %4133, %v848
  %v4135 = vpop.permute.xlu0 %4134
  %4137 = vset.pattern.permute.xlu0 7
  %4138 = vperm.xlu0 %4137, %v849
  %v4139 = vpop.permute.xlu0 %4138
  %4141 = vset.pattern.permute.xlu0 7
  %4142 = vperm.xlu0 %4141, %v850
  %v4143 = vpop.permute.xlu0 %4142
  %4145 = vset.pattern.permute.xlu0 7
  %4146 = vperm.xlu0 %4145, %v851
  %v4147 = vpop.permute.xlu0 %4146
  %4149 = vset.pattern.permute.xlu0 7
  %4150 = vperm.xlu0 %4149, %v852
  %v4151 = vpop.permute.xlu0 %4150
  %4153 = vset.pattern.permute.xlu0 7
  %4154 = vperm.xlu0 %4153, %v853
  %v4155 = vpop.permute.xlu0 %4154
  %4157 = vset.pattern.permute.xlu0 7
  %4158 = vperm.xlu0 %4157, %v854
  %v4159 = vpop.permute.xlu0 %4158
  %4161 = vset.pattern.permute.xlu0 7
  %4162 = vperm.xlu0 %4161, %v855
  %v4163 = vpop.permute.xlu0 %4162
  %4165 = vset.pattern.permute.xlu0 7
  %4166 = vperm.xlu0 %4165, %v856
  %v4167 = vpop.permute.xlu0 %4166
  %4169 = vset.pattern.permute.xlu0 7
  %4170 = vperm.xlu0 %4169, %v857
  %v4171 = vpop.permute.xlu0 %4170
  %4173 = vset.pattern.permute.xlu0 7
  %4174 = vperm.xlu0 %4173, %v858
  %v4175 = vpop.permute.xlu0 %4174
  %4177 = vset.pattern.permute.xlu0 7
  %4178 = vperm.xlu0 %4177, %v859
  %v4179 = vpop.permute.xlu0 %4178
  %4181 = vset.pattern.permute.xlu0 7
  %4182 = vperm.xlu0 %4181, %v860
  %v4183 = vpop.permute.xlu0 %4182
  %4185 = vset.pattern.permute.xlu0 7
  %4186 = vperm.xlu0 %4185, %v861
  %v4187 = vpop.permute.xlu0 %4186
  %4189 = vset.pattern.permute.xlu0 7
  %4190 = vperm.xlu0 %4189, %v862
  %v4191 = vpop.permute.xlu0 %4190
  %4193 = vset.pattern.permute.xlu0 7
  %4194 = vperm.xlu0 %4193, %v863
  %v4195 = vpop.permute.xlu0 %4194
  %4197 = vset.pattern.permute.xlu0 7
  %4198 = vperm.xlu0 %4197, %v864
  %v4199 = vpop.permute.xlu0 %4198
  %4201 = vset.pattern.permute.xlu0 7
  %4202 = vperm.xlu0 %4201, %v865
  %v4203 = vpop.permute.xlu0 %4202
  %4205 = vset.pattern.permute.xlu0 7
  %4206 = vperm.xlu0 %4205, %v866
  %v4207 = vpop.permute.xlu0 %4206
  %4209 = vset.pattern.permute.xlu0 7
  %4210 = vperm.xlu0 %4209, %v867
  %v4211 = vpop.permute.xlu0 %4210
  %4213 = vset.pattern.permute.xlu0 7
  %4214 = vperm.xlu0 %4213, %v868
  %v4215 = vpop.permute.xlu0 %4214
  %4217 = vset.pattern.permute.xlu0 7
  %4218 = vperm.xlu0 %4217, %v869
  %v4219 = vpop.permute.xlu0 %4218
  %4221 = vset.pattern.permute.xlu0 7
  %4222 = vperm.xlu0 %4221, %v870
  %v4223 = vpop.permute.xlu0 %4222
  %4225 = vset.pattern.permute.xlu0 7
  %4226 = vperm.xlu0 %4225, %v871
  %v4227 = vpop.permute.xlu0 %4226
  %4229 = vset.pattern.permute.xlu0 7
  %4230 = vperm.xlu0 %4229, %v872
  %v4231 = vpop.permute.xlu0 %4230
  %4233 = vset.pattern.permute.xlu0 7
  %4234 = vperm.xlu0 %4233, %v873
  %v4235 = vpop.permute.xlu0 %4234
  %4237 = vset.pattern.permute.xlu0 7
  %4238 = vperm.xlu0 %4237, %v874
  %v4239 = vpop.permute.xlu0 %4238
  %4241 = vset.pattern.permute.xlu0 7
  %4242 = vperm.xlu0 %4241, %v875
  %v4243 = vpop.permute.xlu0 %4242
  %4245 = vset.pattern.permute.xlu0 7
  %4246 = vperm.xlu0 %4245, %v876
  %v4247 = vpop.permute.xlu0 %4246
  %4249 = vset.pattern.permute.xlu0 7
  %4250 = vperm.xlu0 %4249, %v877
  %v4251 = vpop.permute.xlu0 %4250
  %4253 = vset.pattern.permute.xlu0 7
  %4254 = vperm.xlu0 %4253, %v878
  %v4255 = vpop.permute.xlu0 %4254
  %4257 = vset.pattern.permute.xlu0 7
  %4258 = vperm.xlu0 %4257, %v879
  %v4259 = vpop.permute.xlu0 %4258
  %4261 = vset.pattern.permute.xlu0 7
  %4262 = vperm.xlu0 %4261, %v880
  %v4263 = vpop.permute.xlu0 %4262
  %4265 = vset.pattern.permute.xlu0 7
  %4266 = vperm.xlu0 %4265, %v881
  %v4267 = vpop.permute.xlu0 %4266
  %4269 = vset.pattern.permute.xlu0 7
  %4270 = vperm.xlu0 %4269, %v882
  %v4271 = vpop.permute.xlu0 %4270
  %4273 = vset.pattern.permute.xlu0 7
  %4274 = vperm.xlu0 %4273, %v883
  %v4275 = vpop.permute.xlu0 %4274
  %4277 = vset.pattern.permute.xlu0 7
  %4278 = vperm.xlu0 %4277, %v884
  %v4279 = vpop.permute.xlu0 %4278
  %4281 = vset.pattern.permute.xlu0 7
  %4282 = vperm.xlu0 %4281, %v885
  %v4283 = vpop.permute.xlu0 %4282
  %4285 = vset.pattern.permute.xlu0 7
  %4286 = vperm.xlu0 %4285, %v886
  %v4287 = vpop.permute.xlu0 %4286
  %4289 = vset.pattern.permute.xlu0 7
  %4290 = vperm.xlu0 %4289, %v887
  %v4291 = vpop.permute.xlu0 %4290
  %4293 = vset.pattern.permute.xlu0 7
  %4294 = vperm.xlu0 %4293, %v888
  %v4295 = vpop.permute.xlu0 %4294
  %4297 = vset.pattern.permute.xlu0 7
  %4298 = vperm.xlu0 %4297, %v889
  %v4299 = vpop.permute.xlu0 %4298
  %4301 = vset.pattern.permute.xlu0 7
  %4302 = vperm.xlu0 %4301, %v890
  %v4303 = vpop.permute.xlu0 %4302
  %4305 = vset.pattern.permute.xlu0 7
  %4306 = vperm.xlu0 %4305, %v891
  %v4307 = vpop.permute.xlu0 %4306
  %4309 = vset.pattern.permute.xlu0 7
  %4310 = vperm.xlu0 %4309, %v892
  %v4311 = vpop.permute.xlu0 %4310
  %4313 = vset.pattern.permute.xlu0 7
  %4314 = vperm.xlu0 %4313, %v893
  %v4315 = vpop.permute.xlu0 %4314
  %4317 = vset.pattern.permute.xlu0 7
  %4318 = vperm.xlu0 %4317, %v894
  %v4319 = vpop.permute.xlu0 %4318
  %4321 = vset.pattern.permute.xlu0 7
  %4322 = vperm.xlu0 %4321, %v895
  %v4323 = vpop.permute.xlu0 %4322
  %v4325 = vmul.f32 %v4066, %v4071
  %v4326 = vmul.f32 %v4065, %v4075
  %v4327 = vmul.f32 %v4064, %v4079
  %v4328 = vmul.f32 %v4063, %v4083
  %v4329 = vmul.f32 %v4062, %v4087
  %v4330 = vmul.f32 %v4061, %v4091
  %v4331 = vmul.f32 %v4060, %v4095
  %v4332 = vmul.f32 %v4059, %v4099
  %v4333 = vmul.f32 %v4058, %v4103
  %v4334 = vmul.f32 %v4057, %v4107
  %v4335 = vmul.f32 %v4056, %v4111
  %v4336 = vmul.f32 %v4055, %v4115
  %v4337 = vmul.f32 %v4054, %v4119
  %v4338 = vmul.f32 %v4053, %v4123
  %v4339 = vmul.f32 %v4052, %v4127
  %v4340 = vmul.f32 %v4051, %v4131
  %v4341 = vmul.f32 %v4050, %v4135
  %v4342 = vmul.f32 %v4049, %v4139
  %v4343 = vmul.f32 %v4048, %v4143
  %v4344 = vmul.f32 %v4047, %v4147
  %v4345 = vmul.f32 %v4046, %v4151
  %v4346 = vmul.f32 %v4045, %v4155
  %v4347 = vmul.f32 %v4044, %v4159
  %v4348 = vmul.f32 %v4043, %v4163
  %v4349 = vmul.f32 %v4042, %v4167
  %v4350 = vmul.f32 %v4041, %v4171
  %v4351 = vmul.f32 %v4040, %v4175
  %v4352 = vmul.f32 %v4039, %v4179
  %v4353 = vmul.f32 %v4038, %v4183
  %v4354 = vmul.f32 %v4037, %v4187
  %v4355 = vmul.f32 %v4036, %v4191
  %v4356 = vmul.f32 %v4035, %v4195
  %v4357 = vmul.f32 %v4034, %v4199
  %v4358 = vmul.f32 %v4033, %v4203
  %v4359 = vmul.f32 %v4032, %v4207
  %v4360 = vmul.f32 %v4031, %v4211
  %v4361 = vmul.f32 %v4030, %v4215
  %v4362 = vmul.f32 %v4029, %v4219
  %v4363 = vmul.f32 %v4028, %v4223
  %v4364 = vmul.f32 %v4027, %v4227
  %v4365 = vmul.f32 %v4026, %v4231
  %v4366 = vmul.f32 %v4025, %v4235
  %v4367 = vmul.f32 %v4024, %v4239
  %v4368 = vmul.f32 %v4023, %v4243
  %v4369 = vmul.f32 %v4022, %v4247
  %v4370 = vmul.f32 %v4021, %v4251
  %v4371 = vmul.f32 %v4020, %v4255
  %v4372 = vmul.f32 %v4019, %v4259
  %v4373 = vmul.f32 %v4018, %v4263
  %v4374 = vmul.f32 %v4017, %v4267
  %v4375 = vmul.f32 %v4016, %v4271
  %v4376 = vmul.f32 %v4015, %v4275
  %v4377 = vmul.f32 %v4014, %v4279
  %v4378 = vmul.f32 %v4013, %v4283
  %v4379 = vmul.f32 %v4012, %v4287
  %v4380 = vmul.f32 %v4011, %v4291
  %v4381 = vmul.f32 %v4010, %v4295
  %v4382 = vmul.f32 %v4009, %v4299
  %v4383 = vmul.f32 %v4008, %v4303
  %v4384 = vmul.f32 %v4007, %v4307
  %v4385 = vmul.f32 %v4006, %v4311
  %v4386 = vmul.f32 %v4005, %v4315
  %v4387 = vmul.f32 %v4068, %v4319
  %v4388 = vmul.f32 %v4067, %v4323
  %v4389 = vpack.c.bf16 %v4326, %v4325
  %v4390 = vpack.c.bf16 %v4328, %v4327
  %v4391 = vpack.c.bf16 %v4330, %v4329
  %v4392 = vpack.c.bf16 %v4332, %v4331
  %v4393 = vpack.c.bf16 %v4334, %v4333
  %v4394 = vpack.c.bf16 %v4336, %v4335
  %v4395 = vpack.c.bf16 %v4338, %v4337
  %v4396 = vpack.c.bf16 %v4340, %v4339
  %v4397 = vpack.c.bf16 %v4342, %v4341
  %v4398 = vpack.c.bf16 %v4344, %v4343
  %v4399 = vpack.c.bf16 %v4346, %v4345
  %v4400 = vpack.c.bf16 %v4348, %v4347
  %v4401 = vpack.c.bf16 %v4350, %v4349
  %v4402 = vpack.c.bf16 %v4352, %v4351
  %v4403 = vpack.c.bf16 %v4354, %v4353
  %v4404 = vpack.c.bf16 %v4356, %v4355
  %v4405 = vpack.c.bf16 %v4358, %v4357
  %v4406 = vpack.c.bf16 %v4360, %v4359
  %v4407 = vpack.c.bf16 %v4362, %v4361
  %v4408 = vpack.c.bf16 %v4364, %v4363
  %v4409 = vpack.c.bf16 %v4366, %v4365
  %v4410 = vpack.c.bf16 %v4368, %v4367
  %v4411 = vpack.c.bf16 %v4370, %v4369
  %v4412 = vpack.c.bf16 %v4372, %v4371
  %v4413 = vpack.c.bf16 %v4374, %v4373
  %v4414 = vpack.c.bf16 %v4376, %v4375
  %v4415 = vpack.c.bf16 %v4378, %v4377
  %v4416 = vpack.c.bf16 %v4380, %v4379
  %v4417 = vpack.c.bf16 %v4382, %v4381
  %v4418 = vpack.c.bf16 %v4384, %v4383
  %v4419 = vpack.c.bf16 %v4386, %v4385
  %v4420 = vpack.c.bf16 %v4388, %v4387
  %4421 = vset.pattern.permute.xlu0 8
  %4422 = vperm.xlu0 %4421, %v832
  %v4423 = vpop.permute.xlu0 %4422
  %4425 = vset.pattern.permute.xlu0 8
  %4426 = vperm.xlu0 %4425, %v833
  %v4427 = vpop.permute.xlu0 %4426
  %4429 = vset.pattern.permute.xlu0 8
  %4430 = vperm.xlu0 %4429, %v834
  %v4431 = vpop.permute.xlu0 %4430
  %4433 = vset.pattern.permute.xlu0 8
  %4434 = vperm.xlu0 %4433, %v835
  %v4435 = vpop.permute.xlu0 %4434
  %4437 = vset.pattern.permute.xlu0 8
  %4438 = vperm.xlu0 %4437, %v836
  %v4439 = vpop.permute.xlu0 %4438
  %4441 = vset.pattern.permute.xlu0 8
  %4442 = vperm.xlu0 %4441, %v837
  %v4443 = vpop.permute.xlu0 %4442
  %4445 = vset.pattern.permute.xlu0 8
  %4446 = vperm.xlu0 %4445, %v838
  %v4447 = vpop.permute.xlu0 %4446
  %4449 = vset.pattern.permute.xlu0 8
  %4450 = vperm.xlu0 %4449, %v839
  %v4451 = vpop.permute.xlu0 %4450
  %4453 = vset.pattern.permute.xlu0 8
  %4454 = vperm.xlu0 %4453, %v840
  %v4455 = vpop.permute.xlu0 %4454
  %4457 = vset.pattern.permute.xlu0 8
  %4458 = vperm.xlu0 %4457, %v841
  %v4459 = vpop.permute.xlu0 %4458
  %4461 = vset.pattern.permute.xlu0 8
  %4462 = vperm.xlu0 %4461, %v842
  %v4463 = vpop.permute.xlu0 %4462
  %4465 = vset.pattern.permute.xlu0 8
  %4466 = vperm.xlu0 %4465, %v843
  %v4467 = vpop.permute.xlu0 %4466
  %4469 = vset.pattern.permute.xlu0 8
  %4470 = vperm.xlu0 %4469, %v844
  %v4471 = vpop.permute.xlu0 %4470
  %4473 = vset.pattern.permute.xlu0 8
  %4474 = vperm.xlu0 %4473, %v845
  %v4475 = vpop.permute.xlu0 %4474
  %4477 = vset.pattern.permute.xlu0 8
  %4478 = vperm.xlu0 %4477, %v846
  %v4479 = vpop.permute.xlu0 %4478
  %4481 = vset.pattern.permute.xlu0 8
  %4482 = vperm.xlu0 %4481, %v847
  %v4483 = vpop.permute.xlu0 %4482
  %4485 = vset.pattern.permute.xlu0 8
  %4486 = vperm.xlu0 %4485, %v848
  %v4487 = vpop.permute.xlu0 %4486
  %4489 = vset.pattern.permute.xlu0 8
  %4490 = vperm.xlu0 %4489, %v849
  %v4491 = vpop.permute.xlu0 %4490
  %4493 = vset.pattern.permute.xlu0 8
  %4494 = vperm.xlu0 %4493, %v850
  %v4495 = vpop.permute.xlu0 %4494
  %4497 = vset.pattern.permute.xlu0 8
  %4498 = vperm.xlu0 %4497, %v851
  %v4499 = vpop.permute.xlu0 %4498
  %4501 = vset.pattern.permute.xlu0 8
  %4502 = vperm.xlu0 %4501, %v852
  %v4503 = vpop.permute.xlu0 %4502
  %4505 = vset.pattern.permute.xlu0 8
  %4506 = vperm.xlu0 %4505, %v853
  %v4507 = vpop.permute.xlu0 %4506
  %4509 = vset.pattern.permute.xlu0 8
  %4510 = vperm.xlu0 %4509, %v854
  %v4511 = vpop.permute.xlu0 %4510
  %4513 = vset.pattern.permute.xlu0 8
  %4514 = vperm.xlu0 %4513, %v855
  %v4515 = vpop.permute.xlu0 %4514
  %4517 = vset.pattern.permute.xlu0 8
  %4518 = vperm.xlu0 %4517, %v856
  %v4519 = vpop.permute.xlu0 %4518
  %4521 = vset.pattern.permute.xlu0 8
  %4522 = vperm.xlu0 %4521, %v857
  %v4523 = vpop.permute.xlu0 %4522
  %4525 = vset.pattern.permute.xlu0 8
  %4526 = vperm.xlu0 %4525, %v858
  %v4527 = vpop.permute.xlu0 %4526
  %4529 = vset.pattern.permute.xlu0 8
  %4530 = vperm.xlu0 %4529, %v859
  %v4531 = vpop.permute.xlu0 %4530
  %4533 = vset.pattern.permute.xlu0 8
  %4534 = vperm.xlu0 %4533, %v860
  %v4535 = vpop.permute.xlu0 %4534
  %4537 = vset.pattern.permute.xlu0 8
  %4538 = vperm.xlu0 %4537, %v861
  %v4539 = vpop.permute.xlu0 %4538
  %4541 = vset.pattern.permute.xlu0 8
  %4542 = vperm.xlu0 %4541, %v862
  %v4543 = vpop.permute.xlu0 %4542
  %4545 = vset.pattern.permute.xlu0 8
  %4546 = vperm.xlu0 %4545, %v863
  %v4547 = vpop.permute.xlu0 %4546
  %4549 = vset.pattern.permute.xlu0 8
  %4550 = vperm.xlu0 %4549, %v864
  %v4551 = vpop.permute.xlu0 %4550
  %4553 = vset.pattern.permute.xlu0 8
  %4554 = vperm.xlu0 %4553, %v865
  %v4555 = vpop.permute.xlu0 %4554
  %4557 = vset.pattern.permute.xlu0 8
  %4558 = vperm.xlu0 %4557, %v866
  %v4559 = vpop.permute.xlu0 %4558
  %4561 = vset.pattern.permute.xlu0 8
  %4562 = vperm.xlu0 %4561, %v867
  %v4563 = vpop.permute.xlu0 %4562
  %4565 = vset.pattern.permute.xlu0 8
  %4566 = vperm.xlu0 %4565, %v868
  %v4567 = vpop.permute.xlu0 %4566
  %4569 = vset.pattern.permute.xlu0 8
  %4570 = vperm.xlu0 %4569, %v869
  %v4571 = vpop.permute.xlu0 %4570
  %4573 = vset.pattern.permute.xlu0 8
  %4574 = vperm.xlu0 %4573, %v870
  %v4575 = vpop.permute.xlu0 %4574
  %4577 = vset.pattern.permute.xlu0 8
  %4578 = vperm.xlu0 %4577, %v871
  %v4579 = vpop.permute.xlu0 %4578
  %4581 = vset.pattern.permute.xlu0 8
  %4582 = vperm.xlu0 %4581, %v872
  %v4583 = vpop.permute.xlu0 %4582
  %4585 = vset.pattern.permute.xlu0 8
  %4586 = vperm.xlu0 %4585, %v873
  %v4587 = vpop.permute.xlu0 %4586
  %4589 = vset.pattern.permute.xlu0 8
  %4590 = vperm.xlu0 %4589, %v874
  %v4591 = vpop.permute.xlu0 %4590
  %4593 = vset.pattern.permute.xlu0 8
  %4594 = vperm.xlu0 %4593, %v875
  %v4595 = vpop.permute.xlu0 %4594
  %4597 = vset.pattern.permute.xlu0 8
  %4598 = vperm.xlu0 %4597, %v876
  %v4599 = vpop.permute.xlu0 %4598
  %4601 = vset.pattern.permute.xlu0 8
  %4602 = vperm.xlu0 %4601, %v877
  %v4603 = vpop.permute.xlu0 %4602
  %4605 = vset.pattern.permute.xlu0 8
  %4606 = vperm.xlu0 %4605, %v878
  %v4607 = vpop.permute.xlu0 %4606
  %4609 = vset.pattern.permute.xlu0 8
  %4610 = vperm.xlu0 %4609, %v879
  %v4611 = vpop.permute.xlu0 %4610
  %4613 = vset.pattern.permute.xlu0 8
  %4614 = vperm.xlu0 %4613, %v880
  %v4615 = vpop.permute.xlu0 %4614
  %4617 = vset.pattern.permute.xlu0 8
  %4618 = vperm.xlu0 %4617, %v881
  %v4619 = vpop.permute.xlu0 %4618
  %4621 = vset.pattern.permute.xlu0 8
  %4622 = vperm.xlu0 %4621, %v882
  %v4623 = vpop.permute.xlu0 %4622
  %4625 = vset.pattern.permute.xlu0 8
  %4626 = vperm.xlu0 %4625, %v883
  %v4627 = vpop.permute.xlu0 %4626
  %4629 = vset.pattern.permute.xlu0 8
  %4630 = vperm.xlu0 %4629, %v884
  %v4631 = vpop.permute.xlu0 %4630
  %4633 = vset.pattern.permute.xlu0 8
  %4634 = vperm.xlu0 %4633, %v885
  %v4635 = vpop.permute.xlu0 %4634
  %4637 = vset.pattern.permute.xlu0 8
  %4638 = vperm.xlu0 %4637, %v886
  %v4639 = vpop.permute.xlu0 %4638
  %4641 = vset.pattern.permute.xlu0 8
  %4642 = vperm.xlu0 %4641, %v887
  %v4643 = vpop.permute.xlu0 %4642
  %4645 = vset.pattern.permute.xlu0 8
  %4646 = vperm.xlu0 %4645, %v888
  %v4647 = vpop.permute.xlu0 %4646
  %4649 = vset.pattern.permute.xlu0 8
  %4650 = vperm.xlu0 %4649, %v889
  %v4651 = vpop.permute.xlu0 %4650
  %4653 = vset.pattern.permute.xlu0 8
  %4654 = vperm.xlu0 %4653, %v890
  %v4655 = vpop.permute.xlu0 %4654
  %4657 = vset.pattern.permute.xlu0 8
  %4658 = vperm.xlu0 %4657, %v891
  %v4659 = vpop.permute.xlu0 %4658
  %4661 = vset.pattern.permute.xlu0 8
  %4662 = vperm.xlu0 %4661, %v892
  %v4663 = vpop.permute.xlu0 %4662
  %4665 = vset.pattern.permute.xlu0 8
  %4666 = vperm.xlu0 %4665, %v893
  %v4667 = vpop.permute.xlu0 %4666
  %4669 = vset.pattern.permute.xlu0 8
  %4670 = vperm.xlu0 %4669, %v894
  %v4671 = vpop.permute.xlu0 %4670
  %4673 = vset.pattern.permute.xlu0 8
  %4674 = vperm.xlu0 %4673, %v895
  %v4675 = vpop.permute.xlu0 %4674
  %v4677 = vmul.f32 %v2400, %v4423
  %v4678 = vmul.f32 %v2399, %v4427
  %v4679 = vmul.f32 %v2398, %v4431
  %v4680 = vmul.f32 %v2397, %v4435
  %v4681 = vmul.f32 %v2396, %v4439
  %v4682 = vmul.f32 %v2395, %v4443
  %v4683 = vmul.f32 %v2394, %v4447
  %v4684 = vmul.f32 %v2393, %v4451
  %v4685 = vmul.f32 %v2392, %v4455
  %v4686 = vmul.f32 %v2391, %v4459
  %v4687 = vmul.f32 %v2390, %v4463
  %v4688 = vmul.f32 %v2389, %v4467
  %v4689 = vmul.f32 %v2388, %v4471
  %v4690 = vmul.f32 %v2387, %v4475
  %v4691 = vmul.f32 %v2386, %v4479
  %v4692 = vmul.f32 %v2385, %v4483
  %v4693 = vmul.f32 %v2384, %v4487
  %v4694 = vmul.f32 %v2383, %v4491
  %v4695 = vmul.f32 %v2382, %v4495
  %v4696 = vmul.f32 %v2381, %v4499
  %v4697 = vmul.f32 %v2380, %v4503
  %v4698 = vmul.f32 %v2379, %v4507
  %v4699 = vmul.f32 %v2378, %v4511
  %v4700 = vmul.f32 %v2377, %v4515
  %v4701 = vmul.f32 %v2376, %v4519
  %v4702 = vmul.f32 %v2375, %v4523
  %v4703 = vmul.f32 %v2374, %v4527
  %v4704 = vmul.f32 %v2373, %v4531
  %v4705 = vmul.f32 %v2372, %v4535
  %v4706 = vmul.f32 %v2371, %v4539
  %v4707 = vmul.f32 %v2370, %v4543
  %v4708 = vmul.f32 %v2369, %v4547
  %v4709 = vmul.f32 %v2368, %v4551
  %v4710 = vmul.f32 %v2367, %v4555
  %v4711 = vmul.f32 %v2366, %v4559
  %v4712 = vmul.f32 %v2365, %v4563
  %v4713 = vmul.f32 %v2364, %v4567
  %v4714 = vmul.f32 %v2363, %v4571
  %v4715 = vmul.f32 %v2362, %v4575
  %v4716 = vmul.f32 %v2361, %v4579
  %v4717 = vmul.f32 %v2360, %v4583
  %v4718 = vmul.f32 %v2359, %v4587
  %v4719 = vmul.f32 %v2358, %v4591
  %v4720 = vmul.f32 %v2357, %v4595
  %v4721 = vmul.f32 %v2356, %v4599
  %v4722 = vmul.f32 %v2355, %v4603
  %v4723 = vmul.f32 %v2354, %v4607
  %v4724 = vmul.f32 %v2353, %v4611
  %v4725 = vmul.f32 %v2352, %v4615
  %v4726 = vmul.f32 %v2351, %v4619
  %v4727 = vmul.f32 %v2350, %v4623
  %v4728 = vmul.f32 %v2349, %v4627
  %v4729 = vmul.f32 %v2348, %v4631
  %v4730 = vmul.f32 %v2347, %v4635
  %v4731 = vmul.f32 %v2346, %v4639
  %v4732 = vmul.f32 %v2345, %v4643
  %v4733 = vmul.f32 %v2344, %v4647
  %v4734 = vmul.f32 %v2343, %v4651
  %v4735 = vmul.f32 %v2342, %v4655
  %v4736 = vmul.f32 %v2341, %v4659
  %v4737 = vmul.f32 %v2340, %v4663
  %v4738 = vmul.f32 %v2339, %v4667
  %v4739 = vmul.f32 %v2402, %v4671
  %v4740 = vmul.f32 %v2401, %v4675
  %v4741 = vpack.c.bf16 %v4678, %v4677
  %v4742 = vpack.c.bf16 %v4680, %v4679
  %v4743 = vpack.c.bf16 %v4682, %v4681
  %v4744 = vpack.c.bf16 %v4684, %v4683
  %v4745 = vpack.c.bf16 %v4686, %v4685
  %v4746 = vpack.c.bf16 %v4688, %v4687
  %v4747 = vpack.c.bf16 %v4690, %v4689
  %v4748 = vpack.c.bf16 %v4692, %v4691
  %v4749 = vpack.c.bf16 %v4694, %v4693
  %v4750 = vpack.c.bf16 %v4696, %v4695
  %v4751 = vpack.c.bf16 %v4698, %v4697
  %v4752 = vpack.c.bf16 %v4700, %v4699
  %v4753 = vpack.c.bf16 %v4702, %v4701
  %v4754 = vpack.c.bf16 %v4704, %v4703
  %v4755 = vpack.c.bf16 %v4706, %v4705
  %v4756 = vpack.c.bf16 %v4708, %v4707
  %v4757 = vpack.c.bf16 %v4710, %v4709
  %v4758 = vpack.c.bf16 %v4712, %v4711
  %v4759 = vpack.c.bf16 %v4714, %v4713
  %v4760 = vpack.c.bf16 %v4716, %v4715
  %v4761 = vpack.c.bf16 %v4718, %v4717
  %v4762 = vpack.c.bf16 %v4720, %v4719
  %v4763 = vpack.c.bf16 %v4722, %v4721
  %v4764 = vpack.c.bf16 %v4724, %v4723
  %v4765 = vpack.c.bf16 %v4726, %v4725
  %v4766 = vpack.c.bf16 %v4728, %v4727
  %v4767 = vpack.c.bf16 %v4730, %v4729
  %v4768 = vpack.c.bf16 %v4732, %v4731
  %v4769 = vpack.c.bf16 %v4734, %v4733
  %v4770 = vpack.c.bf16 %v4736, %v4735
  %v4771 = vpack.c.bf16 %v4738, %v4737
  %v4772 = vpack.c.bf16 %v4740, %v4739
  %4805 = vrot.lane.b32.xlu0 %v1761, 32
  %v4806 = vpop.permute.xlu0 %4805
  %4807 = vrot.lane.b32.xlu0 %v1762, 32
  %v4808 = vpop.permute.xlu0 %4807
  %4809 = vrot.lane.b32.xlu0 %v1763, 32
  %v4810 = vpop.permute.xlu0 %4809
  %4811 = vrot.lane.b32.xlu0 %v1764, 32
  %v4812 = vpop.permute.xlu0 %4811
  %4813 = vrot.lane.b32.xlu0 %v1765, 32
  %v4814 = vpop.permute.xlu0 %4813
  %4815 = vrot.lane.b32.xlu0 %v1766, 32
  %v4816 = vpop.permute.xlu0 %4815
  %4817 = vrot.lane.b32.xlu0 %v1767, 32
  %v4818 = vpop.permute.xlu0 %4817
  %4819 = vrot.lane.b32.xlu0 %v1768, 32
  %v4820 = vpop.permute.xlu0 %4819
  %4821 = vrot.lane.b32.xlu0 %v1769, 32
  %v4822 = vpop.permute.xlu0 %4821
  %4823 = vrot.lane.b32.xlu0 %v1770, 32
  %v4824 = vpop.permute.xlu0 %4823
  %4825 = vrot.lane.b32.xlu0 %v1771, 32
  %v4826 = vpop.permute.xlu0 %4825
  %4827 = vrot.lane.b32.xlu0 %v1772, 32
  %v4828 = vpop.permute.xlu0 %4827
  %4829 = vrot.lane.b32.xlu0 %v1773, 32
  %v4830 = vpop.permute.xlu0 %4829
  %4831 = vrot.lane.b32.xlu0 %v1774, 32
  %v4832 = vpop.permute.xlu0 %4831
  %4833 = vrot.lane.b32.xlu0 %v1775, 32
  %v4834 = vpop.permute.xlu0 %4833
  %4835 = vrot.lane.b32.xlu0 %v1776, 32
  %v4836 = vpop.permute.xlu0 %4835
  %4837 = vrot.lane.b32.xlu0 %v1777, 32
  %v4838 = vpop.permute.xlu0 %4837
  %4839 = vrot.lane.b32.xlu0 %v1778, 32
  %v4840 = vpop.permute.xlu0 %4839
  %4841 = vrot.lane.b32.xlu0 %v1779, 32
  %v4842 = vpop.permute.xlu0 %4841
  %4843 = vrot.lane.b32.xlu0 %v1780, 32
  %v4844 = vpop.permute.xlu0 %4843
  %4845 = vrot.lane.b32.xlu0 %v1781, 32
  %v4846 = vpop.permute.xlu0 %4845
  %4847 = vrot.lane.b32.xlu0 %v1782, 32
  %v4848 = vpop.permute.xlu0 %4847
  %4849 = vrot.lane.b32.xlu0 %v1783, 32
  %v4850 = vpop.permute.xlu0 %4849
  %4851 = vrot.lane.b32.xlu0 %v1784, 32
  %v4852 = vpop.permute.xlu0 %4851
  %4853 = vrot.lane.b32.xlu0 %v1785, 32
  %v4854 = vpop.permute.xlu0 %4853
  %4855 = vrot.lane.b32.xlu0 %v1786, 32
  %v4856 = vpop.permute.xlu0 %4855
  %4857 = vrot.lane.b32.xlu0 %v1787, 32
  %v4858 = vpop.permute.xlu0 %4857
  %4859 = vrot.lane.b32.xlu0 %v1788, 32
  %v4860 = vpop.permute.xlu0 %4859
  %4861 = vrot.lane.b32.xlu0 %v1789, 32
  %v4862 = vpop.permute.xlu0 %4861
  %4863 = vrot.lane.b32.xlu0 %v1790, 32
  %v4864 = vpop.permute.xlu0 %4863
  %4865 = vrot.lane.b32.xlu0 %v1791, 32
  %v4866 = vpop.permute.xlu0 %4865
  %4867 = vrot.lane.b32.xlu0 %v1792, 32
  %v4868 = vpop.permute.xlu0 %4867
  %4901 = vrot.lane.b32.xlu0 %v2242, 64
  %v4902 = vpop.permute.xlu0 %4901
  %4903 = vrot.lane.b32.xlu0 %v2243, 64
  %v4904 = vpop.permute.xlu0 %4903
  %4905 = vrot.lane.b32.xlu0 %v2244, 64
  %v4906 = vpop.permute.xlu0 %4905
  %4907 = vrot.lane.b32.xlu0 %v2245, 64
  %v4908 = vpop.permute.xlu0 %4907
  %4909 = vrot.lane.b32.xlu0 %v2246, 64
  %v4910 = vpop.permute.xlu0 %4909
  %4911 = vrot.lane.b32.xlu0 %v2247, 64
  %v4912 = vpop.permute.xlu0 %4911
  %4913 = vrot.lane.b32.xlu0 %v2248, 64
  %v4914 = vpop.permute.xlu0 %4913
  %4915 = vrot.lane.b32.xlu0 %v2249, 64
  %v4916 = vpop.permute.xlu0 %4915
  %4917 = vrot.lane.b32.xlu0 %v2250, 64
  %v4918 = vpop.permute.xlu0 %4917
  %4919 = vrot.lane.b32.xlu0 %v2251, 64
  %v4920 = vpop.permute.xlu0 %4919
  %4921 = vrot.lane.b32.xlu0 %v2252, 64
  %v4922 = vpop.permute.xlu0 %4921
  %4923 = vrot.lane.b32.xlu0 %v2253, 64
  %v4924 = vpop.permute.xlu0 %4923
  %4925 = vrot.lane.b32.xlu0 %v2254, 64
  %v4926 = vpop.permute.xlu0 %4925
  %4927 = vrot.lane.b32.xlu0 %v2255, 64
  %v4928 = vpop.permute.xlu0 %4927
  %4929 = vrot.lane.b32.xlu0 %v2256, 64
  %v4930 = vpop.permute.xlu0 %4929
  %4931 = vrot.lane.b32.xlu0 %v2257, 64
  %v4932 = vpop.permute.xlu0 %4931
  %4933 = vrot.lane.b32.xlu0 %v2258, 64
  %v4934 = vpop.permute.xlu0 %4933
  %4935 = vrot.lane.b32.xlu0 %v2259, 64
  %v4936 = vpop.permute.xlu0 %4935
  %4937 = vrot.lane.b32.xlu0 %v2260, 64
  %v4938 = vpop.permute.xlu0 %4937
  %4939 = vrot.lane.b32.xlu0 %v2261, 64
  %v4940 = vpop.permute.xlu0 %4939
  %4941 = vrot.lane.b32.xlu0 %v2262, 64
  %v4942 = vpop.permute.xlu0 %4941
  %4943 = vrot.lane.b32.xlu0 %v2263, 64
  %v4944 = vpop.permute.xlu0 %4943
  %4945 = vrot.lane.b32.xlu0 %v2264, 64
  %v4946 = vpop.permute.xlu0 %4945
  %4947 = vrot.lane.b32.xlu0 %v2265, 64
  %v4948 = vpop.permute.xlu0 %4947
  %4949 = vrot.lane.b32.xlu0 %v2266, 64
  %v4950 = vpop.permute.xlu0 %4949
  %4951 = vrot.lane.b32.xlu0 %v2267, 64
  %v4952 = vpop.permute.xlu0 %4951
  %4953 = vrot.lane.b32.xlu0 %v2268, 64
  %v4954 = vpop.permute.xlu0 %4953
  %4955 = vrot.lane.b32.xlu0 %v2269, 64
  %v4956 = vpop.permute.xlu0 %4955
  %4957 = vrot.lane.b32.xlu0 %v2270, 64
  %v4958 = vpop.permute.xlu0 %4957
  %4959 = vrot.lane.b32.xlu0 %v2271, 64
  %v4960 = vpop.permute.xlu0 %4959
  %4961 = vrot.lane.b32.xlu0 %v2272, 64
  %v4962 = vpop.permute.xlu0 %4961
  %4963 = vrot.lane.b32.xlu0 %v2273, 64
  %v4964 = vpop.permute.xlu0 %4963
  %4997 = vrot.lane.b32.xlu0 %v2723, 96
  %v4998 = vpop.permute.xlu0 %4997
  %4999 = vrot.lane.b32.xlu0 %v2724, 96
  %v5000 = vpop.permute.xlu0 %4999
  %5001 = vrot.lane.b32.xlu0 %v2725, 96
  %v5002 = vpop.permute.xlu0 %5001
  %5003 = vrot.lane.b32.xlu0 %v2726, 96
  %v5004 = vpop.permute.xlu0 %5003
  %5005 = vrot.lane.b32.xlu0 %v2727, 96
  %v5006 = vpop.permute.xlu0 %5005
  %5007 = vrot.lane.b32.xlu0 %v2728, 96
  %v5008 = vpop.permute.xlu0 %5007
  %5009 = vrot.lane.b32.xlu0 %v2729, 96
  %v5010 = vpop.permute.xlu0 %5009
  %5011 = vrot.lane.b32.xlu0 %v2730, 96
  %v5012 = vpop.permute.xlu0 %5011
  %5013 = vrot.lane.b32.xlu0 %v2731, 96
  %v5014 = vpop.permute.xlu0 %5013
  %5015 = vrot.lane.b32.xlu0 %v2732, 96
  %v5016 = vpop.permute.xlu0 %5015
  %5017 = vrot.lane.b32.xlu0 %v2733, 96
  %v5018 = vpop.permute.xlu0 %5017
  %5019 = vrot.lane.b32.xlu0 %v2734, 96
  %v5020 = vpop.permute.xlu0 %5019
  %5021 = vrot.lane.b32.xlu0 %v2735, 96
  %v5022 = vpop.permute.xlu0 %5021
  %5023 = vrot.lane.b32.xlu0 %v2736, 96
  %v5024 = vpop.permute.xlu0 %5023
  %5025 = vrot.lane.b32.xlu0 %v2737, 96
  %v5026 = vpop.permute.xlu0 %5025
  %5027 = vrot.lane.b32.xlu0 %v2738, 96
  %v5028 = vpop.permute.xlu0 %5027
  %5029 = vrot.lane.b32.xlu0 %v2739, 96
  %v5030 = vpop.permute.xlu0 %5029
  %5031 = vrot.lane.b32.xlu0 %v2740, 96
  %v5032 = vpop.permute.xlu0 %5031
  %5033 = vrot.lane.b32.xlu0 %v2741, 96
  %v5034 = vpop.permute.xlu0 %5033
  %5035 = vrot.lane.b32.xlu0 %v2742, 96
  %v5036 = vpop.permute.xlu0 %5035
  %5037 = vrot.lane.b32.xlu0 %v2743, 96
  %v5038 = vpop.permute.xlu0 %5037
  %5039 = vrot.lane.b32.xlu0 %v2744, 96
  %v5040 = vpop.permute.xlu0 %5039
  %5041 = vrot.lane.b32.xlu0 %v2745, 96
  %v5042 = vpop.permute.xlu0 %5041
  %5043 = vrot.lane.b32.xlu0 %v2746, 96
  %v5044 = vpop.permute.xlu0 %5043
  %5045 = vrot.lane.b32.xlu0 %v2747, 96
  %v5046 = vpop.permute.xlu0 %5045
  %5047 = vrot.lane.b32.xlu0 %v2748, 96
  %v5048 = vpop.permute.xlu0 %5047
  %5049 = vrot.lane.b32.xlu0 %v2749, 96
  %v5050 = vpop.permute.xlu0 %5049
  %5051 = vrot.lane.b32.xlu0 %v2750, 96
  %v5052 = vpop.permute.xlu0 %5051
  %5053 = vrot.lane.b32.xlu0 %v2751, 96
  %v5054 = vpop.permute.xlu0 %5053
  %5055 = vrot.lane.b32.xlu0 %v2752, 96
  %v5056 = vpop.permute.xlu0 %5055
  %5057 = vrot.lane.b32.xlu0 %v2753, 96
  %v5058 = vpop.permute.xlu0 %5057
  %5059 = vrot.lane.b32.xlu0 %v2754, 96
  %v5060 = vpop.permute.xlu0 %5059
  %5093 = vrot.lane.b32.xlu0 %v3427, 32
  %v5094 = vpop.permute.xlu0 %5093
  %5095 = vrot.lane.b32.xlu0 %v3428, 32
  %v5096 = vpop.permute.xlu0 %5095
  %5097 = vrot.lane.b32.xlu0 %v3429, 32
  %v5098 = vpop.permute.xlu0 %5097
  %5099 = vrot.lane.b32.xlu0 %v3430, 32
  %v5100 = vpop.permute.xlu0 %5099
  %5101 = vrot.lane.b32.xlu0 %v3431, 32
  %v5102 = vpop.permute.xlu0 %5101
  %5103 = vrot.lane.b32.xlu0 %v3432, 32
  %v5104 = vpop.permute.xlu0 %5103
  %5105 = vrot.lane.b32.xlu0 %v3433, 32
  %v5106 = vpop.permute.xlu0 %5105
  %5107 = vrot.lane.b32.xlu0 %v3434, 32
  %v5108 = vpop.permute.xlu0 %5107
  %5109 = vrot.lane.b32.xlu0 %v3435, 32
  %v5110 = vpop.permute.xlu0 %5109
  %5111 = vrot.lane.b32.xlu0 %v3436, 32
  %v5112 = vpop.permute.xlu0 %5111
  %5113 = vrot.lane.b32.xlu0 %v3437, 32
  %v5114 = vpop.permute.xlu0 %5113
  %5115 = vrot.lane.b32.xlu0 %v3438, 32
  %v5116 = vpop.permute.xlu0 %5115
  %5117 = vrot.lane.b32.xlu0 %v3439, 32
  %v5118 = vpop.permute.xlu0 %5117
  %5119 = vrot.lane.b32.xlu0 %v3440, 32
  %v5120 = vpop.permute.xlu0 %5119
  %5121 = vrot.lane.b32.xlu0 %v3441, 32
  %v5122 = vpop.permute.xlu0 %5121
  %5123 = vrot.lane.b32.xlu0 %v3442, 32
  %v5124 = vpop.permute.xlu0 %5123
  %5125 = vrot.lane.b32.xlu0 %v3443, 32
  %v5126 = vpop.permute.xlu0 %5125
  %5127 = vrot.lane.b32.xlu0 %v3444, 32
  %v5128 = vpop.permute.xlu0 %5127
  %5129 = vrot.lane.b32.xlu0 %v3445, 32
  %v5130 = vpop.permute.xlu0 %5129
  %5131 = vrot.lane.b32.xlu0 %v3446, 32
  %v5132 = vpop.permute.xlu0 %5131
  %5133 = vrot.lane.b32.xlu0 %v3447, 32
  %v5134 = vpop.permute.xlu0 %5133
  %5135 = vrot.lane.b32.xlu0 %v3448, 32
  %v5136 = vpop.permute.xlu0 %5135
  %5137 = vrot.lane.b32.xlu0 %v3449, 32
  %v5138 = vpop.permute.xlu0 %5137
  %5139 = vrot.lane.b32.xlu0 %v3450, 32
  %v5140 = vpop.permute.xlu0 %5139
  %5141 = vrot.lane.b32.xlu0 %v3451, 32
  %v5142 = vpop.permute.xlu0 %5141
  %5143 = vrot.lane.b32.xlu0 %v3452, 32
  %v5144 = vpop.permute.xlu0 %5143
  %5145 = vrot.lane.b32.xlu0 %v3453, 32
  %v5146 = vpop.permute.xlu0 %5145
  %5147 = vrot.lane.b32.xlu0 %v3454, 32
  %v5148 = vpop.permute.xlu0 %5147
  %5149 = vrot.lane.b32.xlu0 %v3455, 32
  %v5150 = vpop.permute.xlu0 %5149
  %5151 = vrot.lane.b32.xlu0 %v3456, 32
  %v5152 = vpop.permute.xlu0 %5151
  %5153 = vrot.lane.b32.xlu0 %v3457, 32
  %v5154 = vpop.permute.xlu0 %5153
  %5155 = vrot.lane.b32.xlu0 %v3458, 32
  %v5156 = vpop.permute.xlu0 %5155
  %5189 = vrot.lane.b32.xlu0 %v3908, 64
  %v5190 = vpop.permute.xlu0 %5189
  %5191 = vrot.lane.b32.xlu0 %v3909, 64
  %v5192 = vpop.permute.xlu0 %5191
  %5193 = vrot.lane.b32.xlu0 %v3910, 64
  %v5194 = vpop.permute.xlu0 %5193
  %5195 = vrot.lane.b32.xlu0 %v3911, 64
  %v5196 = vpop.permute.xlu0 %5195
  %5197 = vrot.lane.b32.xlu0 %v3912, 64
  %v5198 = vpop.permute.xlu0 %5197
  %5199 = vrot.lane.b32.xlu0 %v3913, 64
  %v5200 = vpop.permute.xlu0 %5199
  %5201 = vrot.lane.b32.xlu0 %v3914, 64
  %v5202 = vpop.permute.xlu0 %5201
  %5203 = vrot.lane.b32.xlu0 %v3915, 64
  %v5204 = vpop.permute.xlu0 %5203
  %5205 = vrot.lane.b32.xlu0 %v3916, 64
  %v5206 = vpop.permute.xlu0 %5205
  %5207 = vrot.lane.b32.xlu0 %v3917, 64
  %v5208 = vpop.permute.xlu0 %5207
  %5209 = vrot.lane.b32.xlu0 %v3918, 64
  %v5210 = vpop.permute.xlu0 %5209
  %5211 = vrot.lane.b32.xlu0 %v3919, 64
  %v5212 = vpop.permute.xlu0 %5211
  %5213 = vrot.lane.b32.xlu0 %v3920, 64
  %v5214 = vpop.permute.xlu0 %5213
  %5215 = vrot.lane.b32.xlu0 %v3921, 64
  %v5216 = vpop.permute.xlu0 %5215
  %5217 = vrot.lane.b32.xlu0 %v3922, 64
  %v5218 = vpop.permute.xlu0 %5217
  %5219 = vrot.lane.b32.xlu0 %v3923, 64
  %v5220 = vpop.permute.xlu0 %5219
  %5221 = vrot.lane.b32.xlu0 %v3924, 64
  %v5222 = vpop.permute.xlu0 %5221
  %5223 = vrot.lane.b32.xlu0 %v3925, 64
  %v5224 = vpop.permute.xlu0 %5223
  %5225 = vrot.lane.b32.xlu0 %v3926, 64
  %v5226 = vpop.permute.xlu0 %5225
  %5227 = vrot.lane.b32.xlu0 %v3927, 64
  %v5228 = vpop.permute.xlu0 %5227
  %5229 = vrot.lane.b32.xlu0 %v3928, 64
  %v5230 = vpop.permute.xlu0 %5229
  %5231 = vrot.lane.b32.xlu0 %v3929, 64
  %v5232 = vpop.permute.xlu0 %5231
  %5233 = vrot.lane.b32.xlu0 %v3930, 64
  %v5234 = vpop.permute.xlu0 %5233
  %5235 = vrot.lane.b32.xlu0 %v3931, 64
  %v5236 = vpop.permute.xlu0 %5235
  %5237 = vrot.lane.b32.xlu0 %v3932, 64
  %v5238 = vpop.permute.xlu0 %5237
  %5239 = vrot.lane.b32.xlu0 %v3933, 64
  %v5240 = vpop.permute.xlu0 %5239
  %5241 = vrot.lane.b32.xlu0 %v3934, 64
  %v5242 = vpop.permute.xlu0 %5241
  %5243 = vrot.lane.b32.xlu0 %v3935, 64
  %v5244 = vpop.permute.xlu0 %5243
  %5245 = vrot.lane.b32.xlu0 %v3936, 64
  %v5246 = vpop.permute.xlu0 %5245
  %5247 = vrot.lane.b32.xlu0 %v3937, 64
  %v5248 = vpop.permute.xlu0 %5247
  %5249 = vrot.lane.b32.xlu0 %v3938, 64
  %v5250 = vpop.permute.xlu0 %5249
  %5251 = vrot.lane.b32.xlu0 %v3939, 64
  %v5252 = vpop.permute.xlu0 %5251
  %5285 = vrot.lane.b32.xlu0 %v4389, 96
  %v5286 = vpop.permute.xlu0 %5285
  %5287 = vrot.lane.b32.xlu0 %v4390, 96
  %v5288 = vpop.permute.xlu0 %5287
  %5289 = vrot.lane.b32.xlu0 %v4391, 96
  %v5290 = vpop.permute.xlu0 %5289
  %5291 = vrot.lane.b32.xlu0 %v4392, 96
  %v5292 = vpop.permute.xlu0 %5291
  %5293 = vrot.lane.b32.xlu0 %v4393, 96
  %v5294 = vpop.permute.xlu0 %5293
  %5295 = vrot.lane.b32.xlu0 %v4394, 96
  %v5296 = vpop.permute.xlu0 %5295
  %5297 = vrot.lane.b32.xlu0 %v4395, 96
  %v5298 = vpop.permute.xlu0 %5297
  %5299 = vrot.lane.b32.xlu0 %v4396, 96
  %v5300 = vpop.permute.xlu0 %5299
  %5301 = vrot.lane.b32.xlu0 %v4397, 96
  %v5302 = vpop.permute.xlu0 %5301
  %5303 = vrot.lane.b32.xlu0 %v4398, 96
  %v5304 = vpop.permute.xlu0 %5303
  %5305 = vrot.lane.b32.xlu0 %v4399, 96
  %v5306 = vpop.permute.xlu0 %5305
  %5307 = vrot.lane.b32.xlu0 %v4400, 96
  %v5308 = vpop.permute.xlu0 %5307
  %5309 = vrot.lane.b32.xlu0 %v4401, 96
  %v5310 = vpop.permute.xlu0 %5309
  %5311 = vrot.lane.b32.xlu0 %v4402, 96
  %v5312 = vpop.permute.xlu0 %5311
  %5313 = vrot.lane.b32.xlu0 %v4403, 96
  %v5314 = vpop.permute.xlu0 %5313
  %5315 = vrot.lane.b32.xlu0 %v4404, 96
  %v5316 = vpop.permute.xlu0 %5315
  %5317 = vrot.lane.b32.xlu0 %v4405, 96
  %v5318 = vpop.permute.xlu0 %5317
  %5319 = vrot.lane.b32.xlu0 %v4406, 96
  %v5320 = vpop.permute.xlu0 %5319
  %5321 = vrot.lane.b32.xlu0 %v4407, 96
  %v5322 = vpop.permute.xlu0 %5321
  %5323 = vrot.lane.b32.xlu0 %v4408, 96
  %v5324 = vpop.permute.xlu0 %5323
  %5325 = vrot.lane.b32.xlu0 %v4409, 96
  %v5326 = vpop.permute.xlu0 %5325
  %5327 = vrot.lane.b32.xlu0 %v4410, 96
  %v5328 = vpop.permute.xlu0 %5327
  %5329 = vrot.lane.b32.xlu0 %v4411, 96
  %v5330 = vpop.permute.xlu0 %5329
  %5331 = vrot.lane.b32.xlu0 %v4412, 96
  %v5332 = vpop.permute.xlu0 %5331
  %5333 = vrot.lane.b32.xlu0 %v4413, 96
  %v5334 = vpop.permute.xlu0 %5333
  %5335 = vrot.lane.b32.xlu0 %v4414, 96
  %v5336 = vpop.permute.xlu0 %5335
  %5337 = vrot.lane.b32.xlu0 %v4415, 96
  %v5338 = vpop.permute.xlu0 %5337
  %5339 = vrot.lane.b32.xlu0 %v4416, 96
  %v5340 = vpop.permute.xlu0 %5339
  %5341 = vrot.lane.b32.xlu0 %v4417, 96
  %v5342 = vpop.permute.xlu0 %5341
  %5343 = vrot.lane.b32.xlu0 %v4418, 96
  %v5344 = vpop.permute.xlu0 %5343
  %5345 = vrot.lane.b32.xlu0 %v4419, 96
  %v5346 = vpop.permute.xlu0 %5345
  %5347 = vrot.lane.b32.xlu0 %v4420, 96
  %v5348 = vpop.permute.xlu0 %5347
  %v5351 = vsel %vm155, %v1280, %v4806
  %v5354 = vsel %vm155, %v1281, %v4808
  %v5357 = vsel %vm155, %v1282, %v4810
  %v5360 = vsel %vm155, %v1283, %v4812
  %v5363 = vsel %vm155, %v1284, %v4814
  %v5366 = vsel %vm155, %v1285, %v4816
  %v5369 = vsel %vm155, %v1286, %v4818
  %v5372 = vsel %vm155, %v1287, %v4820
  %v5375 = vsel %vm155, %v1288, %v4822
  %v5378 = vsel %vm155, %v1289, %v4824
  %v5381 = vsel %vm155, %v1290, %v4826
  %v5384 = vsel %vm155, %v1291, %v4828
  %v5387 = vsel %vm155, %v1292, %v4830
  %v5390 = vsel %vm155, %v1293, %v4832
  %v5393 = vsel %vm155, %v1294, %v4834
  %v5396 = vsel %vm155, %v1295, %v4836
  %v5399 = vsel %vm155, %v1296, %v4838
  %v5402 = vsel %vm155, %v1297, %v4840
  %v5405 = vsel %vm155, %v1298, %v4842
  %v5408 = vsel %vm155, %v1299, %v4844
  %v5411 = vsel %vm155, %v1300, %v4846
  %v5414 = vsel %vm155, %v1301, %v4848
  %v5417 = vsel %vm155, %v1302, %v4850
  %v5420 = vsel %vm155, %v1303, %v4852
  %v5423 = vsel %vm155, %v1304, %v4854
  %v5426 = vsel %vm155, %v1305, %v4856
  %v5429 = vsel %vm155, %v1306, %v4858
  %v5432 = vsel %vm155, %v1307, %v4860
  %v5435 = vsel %vm155, %v1308, %v4862
  %v5438 = vsel %vm155, %v1309, %v4864
  %v5441 = vsel %vm155, %v1310, %v4866
  %v5444 = vsel %vm155, %v1311, %v4868
  %vm5445 = vcmask 523264
  %v5447 = vsel %vm5445, %v5351, %v4902
  %v5449 = vsel %vm5445, %v5354, %v4904
  %v5451 = vsel %vm5445, %v5357, %v4906
  %v5453 = vsel %vm5445, %v5360, %v4908
  %v5455 = vsel %vm5445, %v5363, %v4910
  %v5457 = vsel %vm5445, %v5366, %v4912
  %v5459 = vsel %vm5445, %v5369, %v4914
  %v5461 = vsel %vm5445, %v5372, %v4916
  %v5463 = vsel %vm5445, %v5375, %v4918
  %v5465 = vsel %vm5445, %v5378, %v4920
  %v5467 = vsel %vm5445, %v5381, %v4922
  %v5469 = vsel %vm5445, %v5384, %v4924
  %v5471 = vsel %vm5445, %v5387, %v4926
  %v5473 = vsel %vm5445, %v5390, %v4928
  %v5475 = vsel %vm5445, %v5393, %v4930
  %v5477 = vsel %vm5445, %v5396, %v4932
  %v5479 = vsel %vm5445, %v5399, %v4934
  %v5481 = vsel %vm5445, %v5402, %v4936
  %v5483 = vsel %vm5445, %v5405, %v4938
  %v5485 = vsel %vm5445, %v5408, %v4940
  %v5487 = vsel %vm5445, %v5411, %v4942
  %v5489 = vsel %vm5445, %v5414, %v4944
  %v5491 = vsel %vm5445, %v5417, %v4946
  %v5493 = vsel %vm5445, %v5420, %v4948
  %v5495 = vsel %vm5445, %v5423, %v4950
  %v5497 = vsel %vm5445, %v5426, %v4952
  %v5499 = vsel %vm5445, %v5429, %v4954
  %v5501 = vsel %vm5445, %v5432, %v4956
  %v5503 = vsel %vm5445, %v5435, %v4958
  %v5505 = vsel %vm5445, %v5438, %v4960
  %v5507 = vsel %vm5445, %v5441, %v4962
  %v5509 = vsel %vm5445, %v5444, %v4964
  %vm5510 = vcmask 785408
  %v5512 = vsel %vm5510, %v5447, %v4998
  %v5515 = vsel %vm5510, %v5449, %v5000
  %v5518 = vsel %vm5510, %v5451, %v5002
  %v5521 = vsel %vm5510, %v5453, %v5004
  %v5524 = vsel %vm5510, %v5455, %v5006
  %v5527 = vsel %vm5510, %v5457, %v5008
  %v5530 = vsel %vm5510, %v5459, %v5010
  %v5533 = vsel %vm5510, %v5461, %v5012
  %v5536 = vsel %vm5510, %v5463, %v5014
  %v5539 = vsel %vm5510, %v5465, %v5016
  %v5542 = vsel %vm5510, %v5467, %v5018
  %v5545 = vsel %vm5510, %v5469, %v5020
  %v5548 = vsel %vm5510, %v5471, %v5022
  %v5551 = vsel %vm5510, %v5473, %v5024
  %v5554 = vsel %vm5510, %v5475, %v5026
  %v5557 = vsel %vm5510, %v5477, %v5028
  %v5560 = vsel %vm5510, %v5479, %v5030
  %v5563 = vsel %vm5510, %v5481, %v5032
  %v5566 = vsel %vm5510, %v5483, %v5034
  %v5569 = vsel %vm5510, %v5485, %v5036
  %v5572 = vsel %vm5510, %v5487, %v5038
  %v5575 = vsel %vm5510, %v5489, %v5040
  %v5578 = vsel %vm5510, %v5491, %v5042
  %v5581 = vsel %vm5510, %v5493, %v5044
  %v5584 = vsel %vm5510, %v5495, %v5046
  %v5587 = vsel %vm5510, %v5497, %v5048
  %v5590 = vsel %vm5510, %v5499, %v5050
  %v5593 = vsel %vm5510, %v5501, %v5052
  %v5596 = vsel %vm5510, %v5503, %v5054
  %v5599 = vsel %vm5510, %v5505, %v5056
  %v5602 = vsel %vm5510, %v5507, %v5058
  %v5605 = vsel %vm5510, %v5509, %v5060
  %v5609 = vsel %vm155, %v3075, %v5094
  %v5612 = vsel %vm155, %v3076, %v5096
  %v5615 = vsel %vm155, %v3077, %v5098
  %v5618 = vsel %vm155, %v3078, %v5100
  %v5621 = vsel %vm155, %v3079, %v5102
  %v5624 = vsel %vm155, %v3080, %v5104
  %v5627 = vsel %vm155, %v3081, %v5106
  %v5630 = vsel %vm155, %v3082, %v5108
  %v5633 = vsel %vm155, %v3083, %v5110
  %v5636 = vsel %vm155, %v3084, %v5112
  %v5639 = vsel %vm155, %v3085, %v5114
  %v5642 = vsel %vm155, %v3086, %v5116
  %v5645 = vsel %vm155, %v3087, %v5118
  %v5648 = vsel %vm155, %v3088, %v5120
  %v5651 = vsel %vm155, %v3089, %v5122
  %v5654 = vsel %vm155, %v3090, %v5124
  %v5657 = vsel %vm155, %v3091, %v5126
  %v5660 = vsel %vm155, %v3092, %v5128
  %v5663 = vsel %vm155, %v3093, %v5130
  %v5666 = vsel %vm155, %v3094, %v5132
  %v5669 = vsel %vm155, %v3095, %v5134
  %v5672 = vsel %vm155, %v3096, %v5136
  %v5675 = vsel %vm155, %v3097, %v5138
  %v5678 = vsel %vm155, %v3098, %v5140
  %v5681 = vsel %vm155, %v3099, %v5142
  %v5684 = vsel %vm155, %v3100, %v5144
  %v5687 = vsel %vm155, %v3101, %v5146
  %v5690 = vsel %vm155, %v3102, %v5148
  %v5693 = vsel %vm155, %v3103, %v5150
  %v5696 = vsel %vm155, %v3104, %v5152
  %v5699 = vsel %vm155, %v3105, %v5154
  %v5702 = vsel %vm155, %v3106, %v5156
  %v5704 = vsel %vm5445, %v5609, %v5190
  %v5706 = vsel %vm5445, %v5612, %v5192
  %v5708 = vsel %vm5445, %v5615, %v5194
  %v5710 = vsel %vm5445, %v5618, %v5196
  %v5712 = vsel %vm5445, %v5621, %v5198
  %v5714 = vsel %vm5445, %v5624, %v5200
  %v5716 = vsel %vm5445, %v5627, %v5202
  %v5718 = vsel %vm5445, %v5630, %v5204
  %v5720 = vsel %vm5445, %v5633, %v5206
  %v5722 = vsel %vm5445, %v5636, %v5208
  %v5724 = vsel %vm5445, %v5639, %v5210
  %v5726 = vsel %vm5445, %v5642, %v5212
  %v5728 = vsel %vm5445, %v5645, %v5214
  %v5730 = vsel %vm5445, %v5648, %v5216
  %v5732 = vsel %vm5445, %v5651, %v5218
  %v5734 = vsel %vm5445, %v5654, %v5220
  %v5736 = vsel %vm5445, %v5657, %v5222
  %v5738 = vsel %vm5445, %v5660, %v5224
  %v5740 = vsel %vm5445, %v5663, %v5226
  %v5742 = vsel %vm5445, %v5666, %v5228
  %v5744 = vsel %vm5445, %v5669, %v5230
  %v5746 = vsel %vm5445, %v5672, %v5232
  %v5748 = vsel %vm5445, %v5675, %v5234
  %v5750 = vsel %vm5445, %v5678, %v5236
  %v5752 = vsel %vm5445, %v5681, %v5238
  %v5754 = vsel %vm5445, %v5684, %v5240
  %v5756 = vsel %vm5445, %v5687, %v5242
  %v5758 = vsel %vm5445, %v5690, %v5244
  %v5760 = vsel %vm5445, %v5693, %v5246
  %v5762 = vsel %vm5445, %v5696, %v5248
  %v5764 = vsel %vm5445, %v5699, %v5250
  %v5766 = vsel %vm5445, %v5702, %v5252
  %v5768 = vsel %vm5510, %v5704, %v5286
  %v5771 = vsel %vm5510, %v5706, %v5288
  %v5774 = vsel %vm5510, %v5708, %v5290
  %v5777 = vsel %vm5510, %v5710, %v5292
  %v5780 = vsel %vm5510, %v5712, %v5294
  %v5783 = vsel %vm5510, %v5714, %v5296
  %v5786 = vsel %vm5510, %v5716, %v5298
  %v5789 = vsel %vm5510, %v5718, %v5300
  %v5792 = vsel %vm5510, %v5720, %v5302
  %v5795 = vsel %vm5510, %v5722, %v5304
  %v5798 = vsel %vm5510, %v5724, %v5306
  %v5801 = vsel %vm5510, %v5726, %v5308
  %v5804 = vsel %vm5510, %v5728, %v5310
  %v5807 = vsel %vm5510, %v5730, %v5312
  %v5810 = vsel %vm5510, %v5732, %v5314
  %v5813 = vsel %vm5510, %v5734, %v5316
  %v5816 = vsel %vm5510, %v5736, %v5318
  %v5819 = vsel %vm5510, %v5738, %v5320
  %v5822 = vsel %vm5510, %v5740, %v5322
  %v5825 = vsel %vm5510, %v5742, %v5324
  %v5828 = vsel %vm5510, %v5744, %v5326
  %v5831 = vsel %vm5510, %v5746, %v5328
  %v5834 = vsel %vm5510, %v5748, %v5330
  %v5837 = vsel %vm5510, %v5750, %v5332
  %v5840 = vsel %vm5510, %v5752, %v5334
  %v5843 = vsel %vm5510, %v5754, %v5336
  %v5846 = vsel %vm5510, %v5756, %v5338
  %v5849 = vsel %vm5510, %v5758, %v5340
  %v5852 = vsel %vm5510, %v5760, %v5342
  %v5855 = vsel %vm5510, %v5762, %v5344
  %v5858 = vsel %vm5510, %v5764, %v5346
  %v5861 = vsel %vm5510, %v5766, %v5348
  %v5863 = vld [vmem:[%s2] sm:$0xf]
  %v5864 = vld [vmem:[%s2 + $0x4] sm:$0xf]
  %v5865 = vld [vmem:[%s2 + $0x8] sm:$0xf]
  %v5866 = vld [vmem:[%s2 + $0xc] sm:$0xf]
  %v5867 = vld [vmem:[%s2 + $0x10] sm:$0xf]
  %v5868 = vld [vmem:[%s2 + $0x14] sm:$0xf]
  %v5869 = vld [vmem:[%s2 + $0x18] sm:$0xf]
  %v5870 = vld [vmem:[%s2 + $0x1c] sm:$0xf]
  %v5871 = vld [vmem:[%s2 + $0x20] sm:$0xf]
  %v5872 = vld [vmem:[%s2 + $0x24] sm:$0xf]
  %v5873 = vld [vmem:[%s2 + $0x28] sm:$0xf]
  %v5874 = vld [vmem:[%s2 + $0x2c] sm:$0xf]
  %v5875 = vld [vmem:[%s2 + $0x30] sm:$0xf]
  %v5876 = vld [vmem:[%s2 + $0x34] sm:$0xf]
  %v5877 = vld [vmem:[%s2 + $0x38] sm:$0xf]
  %v5878 = vld [vmem:[%s2 + $0x3c] sm:$0xf]
  %v5879 = vld [vmem:[%s2 + $0x40] sm:$0xf]
  %v5880 = vld [vmem:[%s2 + $0x44] sm:$0xf]
  %v5881 = vld [vmem:[%s2 + $0x48] sm:$0xf]
  %v5882 = vld [vmem:[%s2 + $0x4c] sm:$0xf]
  %v5883 = vld [vmem:[%s2 + $0x50] sm:$0xf]
  %v5884 = vld [vmem:[%s2 + $0x54] sm:$0xf]
  %v5885 = vld [vmem:[%s2 + $0x58] sm:$0xf]
  %v5886 = vld [vmem:[%s2 + $0x5c] sm:$0xf]
  %v5887 = vld [vmem:[%s2 + $0x60] sm:$0xf]
  %v5888 = vld [vmem:[%s2 + $0x64] sm:$0xf]
  %v5889 = vld [vmem:[%s2 + $0x68] sm:$0xf]
  %v5890 = vld [vmem:[%s2 + $0x6c] sm:$0xf]
  %v5891 = vld [vmem:[%s2 + $0x70] sm:$0xf]
  %v5892 = vld [vmem:[%s2 + $0x74] sm:$0xf]
  %v5893 = vld [vmem:[%s2 + $0x78] sm:$0xf]
  %v5894 = vld [vmem:[%s2 + $0x7c] sm:$0xf]
  %v5895 = vld [vmem:[%s2 + $0x80] sm:$0xf]
  %v5896 = vld [vmem:[%s2 + $0x84] sm:$0xf]
  %v5897 = vld [vmem:[%s2 + $0x88] sm:$0xf]
  %v5898 = vld [vmem:[%s2 + $0x8c] sm:$0xf]
  %v5935 = vunpack.c.l.b16 %v5863
  %v5936 = vunpack.c.l.b16 %v5864
  %v5937 = vunpack.c.l.b16 %v5865
  %v5938 = vunpack.c.l.b16 %v5866
  %v5939 = vunpack.c.l.b16 %v5867
  %v5940 = vunpack.c.l.b16 %v5868
  %v5941 = vunpack.c.l.b16 %v5869
  %v5942 = vunpack.c.l.b16 %v5870
  %v5943 = vunpack.c.l.b16 %v5871
  %v5944 = vunpack.c.l.b16 %v5872
  %v5945 = vunpack.c.l.b16 %v5873
  %v5946 = vunpack.c.l.b16 %v5874
  %v5947 = vunpack.c.l.b16 %v5875
  %v5948 = vunpack.c.l.b16 %v5876
  %v5949 = vunpack.c.l.b16 %v5877
  %v5950 = vunpack.c.l.b16 %v5878
  %v5951 = vunpack.c.l.b16 %v5879
  %v5952 = vunpack.c.l.b16 %v5880
  %v5953 = vunpack.c.l.b16 %v5881
  %v5954 = vunpack.c.l.b16 %v5882
  %v5955 = vunpack.c.l.b16 %v5883
  %v5956 = vunpack.c.l.b16 %v5884
  %v5957 = vunpack.c.l.b16 %v5885
  %v5958 = vunpack.c.l.b16 %v5886
  %v5959 = vunpack.c.l.b16 %v5887
  %v5960 = vunpack.c.l.b16 %v5888
  %v5961 = vunpack.c.l.b16 %v5889
  %v5962 = vunpack.c.l.b16 %v5890
  %v5963 = vunpack.c.l.b16 %v5891
  %v5964 = vunpack.c.l.b16 %v5892
  %v5965 = vunpack.c.l.b16 %v5893
  %v5966 = vunpack.c.l.b16 %v5894
  %v5967 = vunpack.c.l.b16 %v5895
  %v5968 = vunpack.c.l.b16 %v5896
  %v5969 = vunpack.c.l.b16 %v5897
  %v5970 = vunpack.c.l.b16 %v5898
  %v5971 = vpack.c.b16 %v5936, %v5935
  %v5972 = vpack.c.b16 %v5938, %v5937
  %v5973 = vpack.c.b16 %v5940, %v5939
  %v5974 = vpack.c.b16 %v5942, %v5941
  %v5975 = vpack.c.b16 %v5944, %v5943
  %v5976 = vpack.c.b16 %v5946, %v5945
  %v5977 = vpack.c.b16 %v5948, %v5947
  %v5978 = vpack.c.b16 %v5950, %v5949
  %v5979 = vpack.c.b16 %v5952, %v5951
  %v5980 = vpack.c.b16 %v5954, %v5953
  %v5981 = vpack.c.b16 %v5956, %v5955
  %v5982 = vpack.c.b16 %v5958, %v5957
  %v5983 = vpack.c.b16 %v5960, %v5959
  %v5984 = vpack.c.b16 %v5962, %v5961
  %v5985 = vpack.c.b16 %v5964, %v5963
  %v5986 = vpack.c.b16 %v5966, %v5965
  %v5987 = vpack.c.b16 %v5968, %v5967
  %v5988 = vpack.c.b16 %v5970, %v5969
  %v6008 = vsel %vm155, %v4741, 0
  %v6011 = vsel %vm155, %v4742, 0
  %v6014 = vsel %vm155, %v4743, 0
  %v6017 = vsel %vm155, %v4744, 0
  %v6020 = vsel %vm155, %v4745, 0
  %v6023 = vsel %vm155, %v4746, 0
  %v6026 = vsel %vm155, %v4747, 0
  %v6029 = vsel %vm155, %v4748, 0
  %v6032 = vsel %vm155, %v4749, 0
  %v6035 = vsel %vm155, %v4750, 0
  %v6038 = vsel %vm155, %v4751, 0
  %v6041 = vsel %vm155, %v4752, 0
  %v6044 = vsel %vm155, %v4753, 0
  %v6047 = vsel %vm155, %v4754, 0
  %v6050 = vsel %vm155, %v4755, 0
  %v6053 = vsel %vm155, %v4756, 0
  %v6056 = vsel %vm155, %v4757, 0
  %v6059 = vsel %vm155, %v4758, 0
  %v6062 = vsel %vm155, %v4759, 0
  %v6065 = vsel %vm155, %v4760, 0
  %v6068 = vsel %vm155, %v4761, 0
  %v6071 = vsel %vm155, %v4762, 0
  %v6074 = vsel %vm155, %v4763, 0
  %v6077 = vsel %vm155, %v4764, 0
  %v6080 = vsel %vm155, %v4765, 0
  %v6083 = vsel %vm155, %v4766, 0
  %v6086 = vsel %vm155, %v4767, 0
  %v6089 = vsel %vm155, %v4768, 0
  %v6092 = vsel %vm155, %v4769, 0
  %v6095 = vsel %vm155, %v4770, 0
  %v6098 = vsel %vm155, %v4771, 0
  %v6101 = vsel %vm155, %v4772, 0
  %6103 = vmatprep.subr.bf16.mxu0 0
  %6104 = vmatpush1.bf16.msra.mxu0 %v5978
  %6105 = vmatprep.subr.bf16.mxu0 0
  %6106 = vmatpush1.bf16.msra.mxu0 %v5977
  %6107 = vmatprep.subr.bf16.mxu0 0
  %6108 = vmatpush1.bf16.msra.mxu0 %v5976
  %6109 = vmatprep.subr.bf16.mxu0 0
  %6110 = vmatpush1.bf16.msra.mxu0 %v5975
  %6111 = vmatprep.subr.bf16.mxu0 0
  %6112 = vmatpush1.bf16.msra.mxu0 %v5974
  %6113 = vmatprep.subr.bf16.mxu0 0
  %6114 = vmatpush1.bf16.msra.mxu0 %v5973
  %6115 = vmatprep.subr.bf16.mxu0 0
  %6116 = vmatpush1.bf16.msra.mxu0 %v5972
  %6117 = vmatprep.subr.bf16.mxu0 0
  %6118 = vmatpush1.bf16.msra.mxu0 %v5971
  %6119 = vmatprep.subr.bf16.mxu0 0
  %6120 = vmatpush2.bf16.msra.mxu0 %v5986
  %6121 = vmatprep.subr.bf16.mxu0 0
  %6122 = vmatpush2.bf16.msra.mxu0 %v5985
  %6123 = vmatprep.subr.bf16.mxu0 0
  %6124 = vmatpush2.bf16.msra.mxu0 %v5984
  %6125 = vmatprep.subr.bf16.mxu0 0
  %6126 = vmatpush2.bf16.msra.mxu0 %v5983
  %6127 = vmatprep.subr.bf16.mxu0 0
  %6128 = vmatpush2.bf16.msra.mxu0 %v5982
  %6129 = vmatprep.subr.bf16.mxu0 0
  %6130 = vmatpush2.bf16.msra.mxu0 %v5981
  %6131 = vmatprep.subr.bf16.mxu0 0
  %6132 = vmatpush2.bf16.msra.mxu0 %v5980
  %6133 = vmatprep.subr.bf16.mxu0 0
  %6134 = vmatpush2.bf16.msra.mxu0 %v5979
  %6135 = vmatprep.mubr.bf16.mxu0 %v5768
  %6136 = vmatmul.mubr.bf16.gmra.mxu0 %v5512
  %v6137 = vpop.f32.mrf.mxu0
  %v6138 = vadd.f32 0.0, %v6137
  %v6139 = vpop.f32.mrf.mxu0
  %v6140 = vpop.f32.mrf.mxu0
  %v6141 = vadd.f32 0.0, %v6140
  %v6142 = vpop.f32.mrf.mxu0
  %6143 = vmatprep.mubr.bf16.mxu0 %v5771
  %6144 = vmatmul.mubr.bf16.gmra.mxu0 %v5515
  %v6145 = vpop.f32.mrf.mxu0
  %v6146 = vadd.f32 0.0, %v6145
  %v6147 = vpop.f32.mrf.mxu0
  %v6148 = vpop.f32.mrf.mxu0
  %v6149 = vadd.f32 0.0, %v6148
  %v6150 = vpop.f32.mrf.mxu0
  %6151 = vmatprep.mubr.bf16.mxu0 %v5774
  %6152 = vmatmul.mubr.bf16.gmra.mxu0 %v5518
  %v6153 = vpop.f32.mrf.mxu0
  %v6154 = vadd.f32 0.0, %v6153
  %v6155 = vpop.f32.mrf.mxu0
  %v6156 = vpop.f32.mrf.mxu0
  %v6157 = vadd.f32 0.0, %v6156
  %v6158 = vpop.f32.mrf.mxu0
  %6159 = vmatprep.mubr.bf16.mxu0 %v5777
  %6160 = vmatmul.mubr.bf16.gmra.mxu0 %v5521
  %v6161 = vpop.f32.mrf.mxu0
  %v6162 = vadd.f32 0.0, %v6161
  %v6163 = vpop.f32.mrf.mxu0
  %v6164 = vpop.f32.mrf.mxu0
  %v6165 = vadd.f32 0.0, %v6164
  %v6166 = vpop.f32.mrf.mxu0
  %6167 = vmatprep.mubr.bf16.mxu0 %v5780
  %6168 = vmatmul.mubr.bf16.gmra.mxu0 %v5524
  %v6169 = vpop.f32.mrf.mxu0
  %v6170 = vadd.f32 0.0, %v6169
  %v6171 = vpop.f32.mrf.mxu0
  %v6172 = vpop.f32.mrf.mxu0
  %v6173 = vadd.f32 0.0, %v6172
  %v6174 = vpop.f32.mrf.mxu0
  %6175 = vmatprep.mubr.bf16.mxu0 %v5783
  %6176 = vmatmul.mubr.bf16.gmra.mxu0 %v5527
  %v6177 = vpop.f32.mrf.mxu0
  %v6178 = vadd.f32 0.0, %v6177
  %v6179 = vpop.f32.mrf.mxu0
  %v6180 = vpop.f32.mrf.mxu0
  %v6181 = vadd.f32 0.0, %v6180
  %v6182 = vpop.f32.mrf.mxu0
  %6183 = vmatprep.mubr.bf16.mxu0 %v5786
  %6184 = vmatmul.mubr.bf16.gmra.mxu0 %v5530
  %v6185 = vpop.f32.mrf.mxu0
  %v6186 = vadd.f32 0.0, %v6185
  %v6187 = vpop.f32.mrf.mxu0
  %v6188 = vpop.f32.mrf.mxu0
  %v6189 = vadd.f32 0.0, %v6188
  %v6190 = vpop.f32.mrf.mxu0
  %6191 = vmatprep.mubr.bf16.mxu0 %v5789
  %6192 = vmatmul.mubr.bf16.gmra.mxu0 %v5533
  %v6193 = vpop.f32.mrf.mxu0
  %v6194 = vadd.f32 0.0, %v6193
  %v6195 = vpop.f32.mrf.mxu0
  %v6196 = vpop.f32.mrf.mxu0
  %v6197 = vadd.f32 0.0, %v6196
  %v6198 = vpop.f32.mrf.mxu0
  %6199 = vmatprep.mubr.bf16.mxu0 %v5792
  %6200 = vmatmul.mubr.bf16.gmra.mxu0 %v5536
  %v6201 = vpop.f32.mrf.mxu0
  %v6202 = vadd.f32 0.0, %v6201
  %v6203 = vpop.f32.mrf.mxu0
  %v6204 = vpop.f32.mrf.mxu0
  %v6205 = vadd.f32 0.0, %v6204
  %v6206 = vpop.f32.mrf.mxu0
  %6207 = vmatprep.mubr.bf16.mxu0 %v5795
  %6208 = vmatmul.mubr.bf16.gmra.mxu0 %v5539
  %v6209 = vpop.f32.mrf.mxu0
  %v6210 = vadd.f32 0.0, %v6209
  %v6211 = vpop.f32.mrf.mxu0
  %v6212 = vpop.f32.mrf.mxu0
  %v6213 = vadd.f32 0.0, %v6212
  %v6214 = vpop.f32.mrf.mxu0
  %6215 = vmatprep.mubr.bf16.mxu0 %v5798
  %6216 = vmatmul.mubr.bf16.gmra.mxu0 %v5542
  %v6217 = vpop.f32.mrf.mxu0
  %v6218 = vadd.f32 0.0, %v6217
  %v6219 = vpop.f32.mrf.mxu0
  %v6220 = vpop.f32.mrf.mxu0
  %v6221 = vadd.f32 0.0, %v6220
  %v6222 = vpop.f32.mrf.mxu0
  %6223 = vmatprep.mubr.bf16.mxu0 %v5801
  %6224 = vmatmul.mubr.bf16.gmra.mxu0 %v5545
  %v6225 = vpop.f32.mrf.mxu0
  %v6226 = vadd.f32 0.0, %v6225
  %v6227 = vpop.f32.mrf.mxu0
  %v6228 = vpop.f32.mrf.mxu0
  %v6229 = vadd.f32 0.0, %v6228
  %v6230 = vpop.f32.mrf.mxu0
  %6231 = vmatprep.mubr.bf16.mxu0 %v5804
  %6232 = vmatmul.mubr.bf16.gmra.mxu0 %v5548
  %v6233 = vpop.f32.mrf.mxu0
  %v6234 = vadd.f32 0.0, %v6233
  %v6235 = vpop.f32.mrf.mxu0
  %v6236 = vpop.f32.mrf.mxu0
  %v6237 = vadd.f32 0.0, %v6236
  %v6238 = vpop.f32.mrf.mxu0
  %6239 = vmatprep.mubr.bf16.mxu0 %v5807
  %6240 = vmatmul.mubr.bf16.gmra.mxu0 %v5551
  %v6241 = vpop.f32.mrf.mxu0
  %v6242 = vadd.f32 0.0, %v6241
  %v6243 = vpop.f32.mrf.mxu0
  %v6244 = vpop.f32.mrf.mxu0
  %v6245 = vadd.f32 0.0, %v6244
  %v6246 = vpop.f32.mrf.mxu0
  %6247 = vmatprep.mubr.bf16.mxu0 %v5810
  %6248 = vmatmul.mubr.bf16.gmra.mxu0 %v5554
  %v6249 = vpop.f32.mrf.mxu0
  %v6250 = vadd.f32 0.0, %v6249
  %v6251 = vpop.f32.mrf.mxu0
  %v6252 = vpop.f32.mrf.mxu0
  %v6253 = vadd.f32 0.0, %v6252
  %v6254 = vpop.f32.mrf.mxu0
  %6255 = vmatprep.mubr.bf16.mxu0 %v5813
  %6256 = vmatmul.mubr.bf16.gmra.mxu0 %v5557
  %v6257 = vpop.f32.mrf.mxu0
  %v6258 = vadd.f32 0.0, %v6257
  %v6259 = vpop.f32.mrf.mxu0
  %v6260 = vpop.f32.mrf.mxu0
  %v6261 = vadd.f32 0.0, %v6260
  %v6262 = vpop.f32.mrf.mxu0
  %6263 = vmatprep.mubr.bf16.mxu0 %v5816
  %6264 = vmatmul.mubr.bf16.gmra.mxu0 %v5560
  %v6265 = vpop.f32.mrf.mxu0
  %v6266 = vadd.f32 0.0, %v6265
  %v6267 = vpop.f32.mrf.mxu0
  %v6268 = vpop.f32.mrf.mxu0
  %v6269 = vadd.f32 0.0, %v6268
  %v6270 = vpop.f32.mrf.mxu0
  %6271 = vmatprep.mubr.bf16.mxu0 %v5819
  %6272 = vmatmul.mubr.bf16.gmra.mxu0 %v5563
  %v6273 = vpop.f32.mrf.mxu0
  %v6274 = vadd.f32 0.0, %v6273
  %v6275 = vpop.f32.mrf.mxu0
  %v6276 = vpop.f32.mrf.mxu0
  %v6277 = vadd.f32 0.0, %v6276
  %v6278 = vpop.f32.mrf.mxu0
  %6279 = vmatprep.mubr.bf16.mxu0 %v5822
  %6280 = vmatmul.mubr.bf16.gmra.mxu0 %v5566
  %v6281 = vpop.f32.mrf.mxu0
  %v6282 = vadd.f32 0.0, %v6281
  %v6283 = vpop.f32.mrf.mxu0
  %v6284 = vpop.f32.mrf.mxu0
  %v6285 = vadd.f32 0.0, %v6284
  %v6286 = vpop.f32.mrf.mxu0
  %6287 = vmatprep.mubr.bf16.mxu0 %v5825
  %6288 = vmatmul.mubr.bf16.gmra.mxu0 %v5569
  %v6289 = vpop.f32.mrf.mxu0
  %v6290 = vadd.f32 0.0, %v6289
  %v6291 = vpop.f32.mrf.mxu0
  %v6292 = vpop.f32.mrf.mxu0
  %v6293 = vadd.f32 0.0, %v6292
  %v6294 = vpop.f32.mrf.mxu0
  %6295 = vmatprep.mubr.bf16.mxu0 %v5828
  %6296 = vmatmul.mubr.bf16.gmra.mxu0 %v5572
  %v6297 = vpop.f32.mrf.mxu0
  %v6298 = vadd.f32 0.0, %v6297
  %v6299 = vpop.f32.mrf.mxu0
  %v6300 = vpop.f32.mrf.mxu0
  %v6301 = vadd.f32 0.0, %v6300
  %v6302 = vpop.f32.mrf.mxu0
  %6303 = vmatprep.mubr.bf16.mxu0 %v5831
  %6304 = vmatmul.mubr.bf16.gmra.mxu0 %v5575
  %v6305 = vpop.f32.mrf.mxu0
  %v6306 = vadd.f32 0.0, %v6305
  %v6307 = vpop.f32.mrf.mxu0
  %v6308 = vpop.f32.mrf.mxu0
  %v6309 = vadd.f32 0.0, %v6308
  %v6310 = vpop.f32.mrf.mxu0
  %6311 = vmatprep.mubr.bf16.mxu0 %v5834
  %6312 = vmatmul.mubr.bf16.gmra.mxu0 %v5578
  %v6313 = vpop.f32.mrf.mxu0
  %v6314 = vadd.f32 0.0, %v6313
  %v6315 = vpop.f32.mrf.mxu0
  %v6316 = vpop.f32.mrf.mxu0
  %v6317 = vadd.f32 0.0, %v6316
  %v6318 = vpop.f32.mrf.mxu0
  %6319 = vmatprep.mubr.bf16.mxu0 %v5837
  %6320 = vmatmul.mubr.bf16.gmra.mxu0 %v5581
  %v6321 = vpop.f32.mrf.mxu0
  %v6322 = vadd.f32 0.0, %v6321
  %v6323 = vpop.f32.mrf.mxu0
  %v6324 = vpop.f32.mrf.mxu0
  %v6325 = vadd.f32 0.0, %v6324
  %v6326 = vpop.f32.mrf.mxu0
  %6327 = vmatprep.mubr.bf16.mxu0 %v5840
  %6328 = vmatmul.mubr.bf16.gmra.mxu0 %v5584
  %v6329 = vpop.f32.mrf.mxu0
  %v6330 = vadd.f32 0.0, %v6329
  %v6331 = vpop.f32.mrf.mxu0
  %v6332 = vpop.f32.mrf.mxu0
  %v6333 = vadd.f32 0.0, %v6332
  %v6334 = vpop.f32.mrf.mxu0
  %6335 = vmatprep.mubr.bf16.mxu0 %v5843
  %6336 = vmatmul.mubr.bf16.gmra.mxu0 %v5587
  %v6337 = vpop.f32.mrf.mxu0
  %v6338 = vadd.f32 0.0, %v6337
  %v6339 = vpop.f32.mrf.mxu0
  %v6340 = vpop.f32.mrf.mxu0
  %v6341 = vadd.f32 0.0, %v6340
  %v6342 = vpop.f32.mrf.mxu0
  %6343 = vmatprep.mubr.bf16.mxu0 %v5846
  %6344 = vmatmul.mubr.bf16.gmra.mxu0 %v5590
  %v6345 = vpop.f32.mrf.mxu0
  %v6346 = vadd.f32 0.0, %v6345
  %v6347 = vpop.f32.mrf.mxu0
  %v6348 = vpop.f32.mrf.mxu0
  %v6349 = vadd.f32 0.0, %v6348
  %v6350 = vpop.f32.mrf.mxu0
  %6351 = vmatprep.mubr.bf16.mxu0 %v5849
  %6352 = vmatmul.mubr.bf16.gmra.mxu0 %v5593
  %v6353 = vpop.f32.mrf.mxu0
  %v6354 = vadd.f32 0.0, %v6353
  %v6355 = vpop.f32.mrf.mxu0
  %v6356 = vpop.f32.mrf.mxu0
  %v6357 = vadd.f32 0.0, %v6356
  %v6358 = vpop.f32.mrf.mxu0
  %6359 = vmatprep.mubr.bf16.mxu0 %v5852
  %6360 = vmatmul.mubr.bf16.gmra.mxu0 %v5596
  %v6361 = vpop.f32.mrf.mxu0
  %v6362 = vadd.f32 0.0, %v6361
  %v6363 = vpop.f32.mrf.mxu0
  %v6364 = vpop.f32.mrf.mxu0
  %v6365 = vadd.f32 0.0, %v6364
  %v6366 = vpop.f32.mrf.mxu0
  %6367 = vmatprep.mubr.bf16.mxu0 %v5855
  %6368 = vmatmul.mubr.bf16.gmra.mxu0 %v5599
  %v6369 = vpop.f32.mrf.mxu0
  %v6370 = vadd.f32 0.0, %v6369
  %v6371 = vpop.f32.mrf.mxu0
  %v6372 = vpop.f32.mrf.mxu0
  %v6373 = vadd.f32 0.0, %v6372
  %v6374 = vpop.f32.mrf.mxu0
  %6375 = vmatprep.mubr.bf16.mxu0 %v5858
  %6376 = vmatmul.mubr.bf16.gmra.mxu0 %v5602
  %v6377 = vpop.f32.mrf.mxu0
  %v6378 = vadd.f32 0.0, %v6377
  %v6379 = vpop.f32.mrf.mxu0
  %v6380 = vpop.f32.mrf.mxu0
  %v6381 = vadd.f32 0.0, %v6380
  %v6382 = vpop.f32.mrf.mxu0
  %6383 = vmatprep.mubr.bf16.mxu0 %v5861
  %6384 = vmatmul.mubr.bf16.gmra.mxu0 %v5605
  %v6385 = vpop.f32.mrf.mxu0
  %v6386 = vadd.f32 0.0, %v6385
  %v6387 = vpop.f32.mrf.mxu0
  %v6388 = vpop.f32.mrf.mxu0
  %v6389 = vadd.f32 0.0, %v6388
  %v6390 = vpop.f32.mrf.mxu0
  %6391 = vdwg.mxu0
  %6392 = vmatprep.subr.bf16.mxu0 0
  %6393 = vmatpush1.bf16.msra.mxu0 0
  %6394 = vmatprep.subr.bf16.mxu0 0
  %6395 = vmatpush1.bf16.msra.mxu0 0
  %6396 = vmatprep.subr.bf16.mxu0 0
  %6397 = vmatpush1.bf16.msra.mxu0 0
  %6398 = vmatprep.subr.bf16.mxu0 0
  %6399 = vmatpush1.bf16.msra.mxu0 0
  %6400 = vmatprep.subr.bf16.mxu0 0
  %6401 = vmatpush1.bf16.msra.mxu0 0
  %6402 = vmatprep.subr.bf16.mxu0 0
  %6403 = vmatpush1.bf16.msra.mxu0 0
  %6404 = vmatprep.subr.bf16.mxu0 0
  %6405 = vmatpush1.bf16.msra.mxu0 %v5988
  %6406 = vmatprep.subr.bf16.mxu0 0
  %6407 = vmatpush1.bf16.msra.mxu0 %v5987
  %6408 = vmatprep.subr.bf16.mxu0 0
  %6409 = vmatpush2.bf16.msra.mxu0 0
  %6410 = vmatprep.subr.bf16.mxu0 0
  %6411 = vmatpush2.bf16.msra.mxu0 0
  %6412 = vmatprep.subr.bf16.mxu0 0
  %6413 = vmatpush2.bf16.msra.mxu0 0
  %6414 = vmatprep.subr.bf16.mxu0 0
  %6415 = vmatpush2.bf16.msra.mxu0 0
  %6416 = vmatprep.subr.bf16.mxu0 0
  %6417 = vmatpush2.bf16.msra.mxu0 0
  %6418 = vmatprep.subr.bf16.mxu0 0
  %6419 = vmatpush2.bf16.msra.mxu0 0
  %6420 = vmatprep.subr.bf16.mxu0 0
  %6421 = vmatpush2.bf16.msra.mxu0 0
  %6422 = vmatprep.subr.bf16.mxu0 0
  %6423 = vmatpush2.bf16.msra.mxu0 0
  %6424 = vmatprep.mubr.bf16.mxu0 0
  %6425 = vmatmul.mubr.bf16.gmra.mxu0 %v6008
  %v6426 = vpop.f32.mrf.mxu0
  %v6427 = vadd.f32 %v6138, %v6426
  %v6428 = vpop.f32.mrf.mxu0
  %v6429 = vpop.f32.mrf.mxu0
  %v6430 = vadd.f32 %v6141, %v6429
  %v6431 = vpop.f32.mrf.mxu0
  %6432 = vmatprep.mubr.bf16.mxu0 0
  %6433 = vmatmul.mubr.bf16.gmra.mxu0 %v6011
  %v6434 = vpop.f32.mrf.mxu0
  %v6435 = vadd.f32 %v6146, %v6434
  %v6436 = vpop.f32.mrf.mxu0
  %v6437 = vpop.f32.mrf.mxu0
  %v6438 = vadd.f32 %v6149, %v6437
  %v6439 = vpop.f32.mrf.mxu0
  %6440 = vmatprep.mubr.bf16.mxu0 0
  %6441 = vmatmul.mubr.bf16.gmra.mxu0 %v6014
  %v6442 = vpop.f32.mrf.mxu0
  %v6443 = vadd.f32 %v6154, %v6442
  %v6444 = vpop.f32.mrf.mxu0
  %v6445 = vpop.f32.mrf.mxu0
  %v6446 = vadd.f32 %v6157, %v6445
  %v6447 = vpop.f32.mrf.mxu0
  %6448 = vmatprep.mubr.bf16.mxu0 0
  %6449 = vmatmul.mubr.bf16.gmra.mxu0 %v6017
  %v6450 = vpop.f32.mrf.mxu0
  %v6451 = vadd.f32 %v6162, %v6450
  %v6452 = vpop.f32.mrf.mxu0
  %v6453 = vpop.f32.mrf.mxu0
  %v6454 = vadd.f32 %v6165, %v6453
  %v6455 = vpop.f32.mrf.mxu0
  %6456 = vmatprep.mubr.bf16.mxu0 0
  %6457 = vmatmul.mubr.bf16.gmra.mxu0 %v6020
  %v6458 = vpop.f32.mrf.mxu0
  %v6459 = vadd.f32 %v6170, %v6458
  %v6460 = vpop.f32.mrf.mxu0
  %v6461 = vpop.f32.mrf.mxu0
  %v6462 = vadd.f32 %v6173, %v6461
  %v6463 = vpop.f32.mrf.mxu0
  %6464 = vmatprep.mubr.bf16.mxu0 0
  %6465 = vmatmul.mubr.bf16.gmra.mxu0 %v6023
  %v6466 = vpop.f32.mrf.mxu0
  %v6467 = vadd.f32 %v6178, %v6466
  %v6468 = vpop.f32.mrf.mxu0
  %v6469 = vpop.f32.mrf.mxu0
  %v6470 = vadd.f32 %v6181, %v6469
  %v6471 = vpop.f32.mrf.mxu0
  %6472 = vmatprep.mubr.bf16.mxu0 0
  %6473 = vmatmul.mubr.bf16.gmra.mxu0 %v6026
  %v6474 = vpop.f32.mrf.mxu0
  %v6475 = vadd.f32 %v6186, %v6474
  %v6476 = vpop.f32.mrf.mxu0
  %v6477 = vpop.f32.mrf.mxu0
  %v6478 = vadd.f32 %v6189, %v6477
  %v6479 = vpop.f32.mrf.mxu0
  %6480 = vmatprep.mubr.bf16.mxu0 0
  %6481 = vmatmul.mubr.bf16.gmra.mxu0 %v6029
  %v6482 = vpop.f32.mrf.mxu0
  %v6483 = vadd.f32 %v6194, %v6482
  %v6484 = vpop.f32.mrf.mxu0
  %v6485 = vpop.f32.mrf.mxu0
  %v6486 = vadd.f32 %v6197, %v6485
  %v6487 = vpop.f32.mrf.mxu0
  %6488 = vmatprep.mubr.bf16.mxu0 0
  %6489 = vmatmul.mubr.bf16.gmra.mxu0 %v6032
  %v6490 = vpop.f32.mrf.mxu0
  %v6491 = vadd.f32 %v6202, %v6490
  %v6492 = vpop.f32.mrf.mxu0
  %v6493 = vpop.f32.mrf.mxu0
  %v6494 = vadd.f32 %v6205, %v6493
  %v6495 = vpop.f32.mrf.mxu0
  %6496 = vmatprep.mubr.bf16.mxu0 0
  %6497 = vmatmul.mubr.bf16.gmra.mxu0 %v6035
  %v6498 = vpop.f32.mrf.mxu0
  %v6499 = vadd.f32 %v6210, %v6498
  %v6500 = vpop.f32.mrf.mxu0
  %v6501 = vpop.f32.mrf.mxu0
  %v6502 = vadd.f32 %v6213, %v6501
  %v6503 = vpop.f32.mrf.mxu0
  %6504 = vmatprep.mubr.bf16.mxu0 0
  %6505 = vmatmul.mubr.bf16.gmra.mxu0 %v6038
  %v6506 = vpop.f32.mrf.mxu0
  %v6507 = vadd.f32 %v6218, %v6506
  %v6508 = vpop.f32.mrf.mxu0
  %v6509 = vpop.f32.mrf.mxu0
  %v6510 = vadd.f32 %v6221, %v6509
  %v6511 = vpop.f32.mrf.mxu0
  %6512 = vmatprep.mubr.bf16.mxu0 0
  %6513 = vmatmul.mubr.bf16.gmra.mxu0 %v6041
  %v6514 = vpop.f32.mrf.mxu0
  %v6515 = vadd.f32 %v6226, %v6514
  %v6516 = vpop.f32.mrf.mxu0
  %v6517 = vpop.f32.mrf.mxu0
  %v6518 = vadd.f32 %v6229, %v6517
  %v6519 = vpop.f32.mrf.mxu0
  %6520 = vmatprep.mubr.bf16.mxu0 0
  %6521 = vmatmul.mubr.bf16.gmra.mxu0 %v6044
  %v6522 = vpop.f32.mrf.mxu0
  %v6523 = vadd.f32 %v6234, %v6522
  %v6524 = vpop.f32.mrf.mxu0
  %v6525 = vpop.f32.mrf.mxu0
  %v6526 = vadd.f32 %v6237, %v6525
  %v6527 = vpop.f32.mrf.mxu0
  %6528 = vmatprep.mubr.bf16.mxu0 0
  %6529 = vmatmul.mubr.bf16.gmra.mxu0 %v6047
  %v6530 = vpop.f32.mrf.mxu0
  %v6531 = vadd.f32 %v6242, %v6530
  %v6532 = vpop.f32.mrf.mxu0
  %v6533 = vpop.f32.mrf.mxu0
  %v6534 = vadd.f32 %v6245, %v6533
  %v6535 = vpop.f32.mrf.mxu0
  %6536 = vmatprep.mubr.bf16.mxu0 0
  %6537 = vmatmul.mubr.bf16.gmra.mxu0 %v6050
  %v6538 = vpop.f32.mrf.mxu0
  %v6539 = vadd.f32 %v6250, %v6538
  %v6540 = vpop.f32.mrf.mxu0
  %v6541 = vpop.f32.mrf.mxu0
  %v6542 = vadd.f32 %v6253, %v6541
  %v6543 = vpop.f32.mrf.mxu0
  %6544 = vmatprep.mubr.bf16.mxu0 0
  %6545 = vmatmul.mubr.bf16.gmra.mxu0 %v6053
  %v6546 = vpop.f32.mrf.mxu0
  %v6547 = vadd.f32 %v6258, %v6546
  %v6548 = vpop.f32.mrf.mxu0
  %v6549 = vpop.f32.mrf.mxu0
  %v6550 = vadd.f32 %v6261, %v6549
  %v6551 = vpop.f32.mrf.mxu0
  %6552 = vmatprep.mubr.bf16.mxu0 0
  %6553 = vmatmul.mubr.bf16.gmra.mxu0 %v6056
  %v6554 = vpop.f32.mrf.mxu0
  %v6555 = vadd.f32 %v6266, %v6554
  %v6556 = vpop.f32.mrf.mxu0
  %v6557 = vpop.f32.mrf.mxu0
  %v6558 = vadd.f32 %v6269, %v6557
  %v6559 = vpop.f32.mrf.mxu0
  %6560 = vmatprep.mubr.bf16.mxu0 0
  %6561 = vmatmul.mubr.bf16.gmra.mxu0 %v6059
  %v6562 = vpop.f32.mrf.mxu0
  %v6563 = vadd.f32 %v6274, %v6562
  %v6564 = vpop.f32.mrf.mxu0
  %v6565 = vpop.f32.mrf.mxu0
  %v6566 = vadd.f32 %v6277, %v6565
  %v6567 = vpop.f32.mrf.mxu0
  %6568 = vmatprep.mubr.bf16.mxu0 0
  %6569 = vmatmul.mubr.bf16.gmra.mxu0 %v6062
  %v6570 = vpop.f32.mrf.mxu0
  %v6571 = vadd.f32 %v6282, %v6570
  %v6572 = vpop.f32.mrf.mxu0
  %v6573 = vpop.f32.mrf.mxu0
  %v6574 = vadd.f32 %v6285, %v6573
  %v6575 = vpop.f32.mrf.mxu0
  %6576 = vmatprep.mubr.bf16.mxu0 0
  %6577 = vmatmul.mubr.bf16.gmra.mxu0 %v6065
  %v6578 = vpop.f32.mrf.mxu0
  %v6579 = vadd.f32 %v6290, %v6578
  %v6580 = vpop.f32.mrf.mxu0
  %v6581 = vpop.f32.mrf.mxu0
  %v6582 = vadd.f32 %v6293, %v6581
  %v6583 = vpop.f32.mrf.mxu0
  %6584 = vmatprep.mubr.bf16.mxu0 0
  %6585 = vmatmul.mubr.bf16.gmra.mxu0 %v6068
  %v6586 = vpop.f32.mrf.mxu0
  %v6587 = vadd.f32 %v6298, %v6586
  %v6588 = vpop.f32.mrf.mxu0
  %v6589 = vpop.f32.mrf.mxu0
  %v6590 = vadd.f32 %v6301, %v6589
  %v6591 = vpop.f32.mrf.mxu0
  %6592 = vmatprep.mubr.bf16.mxu0 0
  %6593 = vmatmul.mubr.bf16.gmra.mxu0 %v6071
  %v6594 = vpop.f32.mrf.mxu0
  %v6595 = vadd.f32 %v6306, %v6594
  %v6596 = vpop.f32.mrf.mxu0
  %v6597 = vpop.f32.mrf.mxu0
  %v6598 = vadd.f32 %v6309, %v6597
  %v6599 = vpop.f32.mrf.mxu0
  %6600 = vmatprep.mubr.bf16.mxu0 0
  %6601 = vmatmul.mubr.bf16.gmra.mxu0 %v6074
  %v6602 = vpop.f32.mrf.mxu0
  %v6603 = vadd.f32 %v6314, %v6602
  %v6604 = vpop.f32.mrf.mxu0
  %v6605 = vpop.f32.mrf.mxu0
  %v6606 = vadd.f32 %v6317, %v6605
  %v6607 = vpop.f32.mrf.mxu0
  %6608 = vmatprep.mubr.bf16.mxu0 0
  %6609 = vmatmul.mubr.bf16.gmra.mxu0 %v6077
  %v6610 = vpop.f32.mrf.mxu0
  %v6611 = vadd.f32 %v6322, %v6610
  %v6612 = vpop.f32.mrf.mxu0
  %v6613 = vpop.f32.mrf.mxu0
  %v6614 = vadd.f32 %v6325, %v6613
  %v6615 = vpop.f32.mrf.mxu0
  %6616 = vmatprep.mubr.bf16.mxu0 0
  %6617 = vmatmul.mubr.bf16.gmra.mxu0 %v6080
  %v6618 = vpop.f32.mrf.mxu0
  %v6619 = vadd.f32 %v6330, %v6618
  %v6620 = vpop.f32.mrf.mxu0
  %v6621 = vpop.f32.mrf.mxu0
  %v6622 = vadd.f32 %v6333, %v6621
  %v6623 = vpop.f32.mrf.mxu0
  %6624 = vmatprep.mubr.bf16.mxu0 0
  %6625 = vmatmul.mubr.bf16.gmra.mxu0 %v6083
  %v6626 = vpop.f32.mrf.mxu0
  %v6627 = vadd.f32 %v6338, %v6626
  %v6628 = vpop.f32.mrf.mxu0
  %v6629 = vpop.f32.mrf.mxu0
  %v6630 = vadd.f32 %v6341, %v6629
  %v6631 = vpop.f32.mrf.mxu0
  %6632 = vmatprep.mubr.bf16.mxu0 0
  %6633 = vmatmul.mubr.bf16.gmra.mxu0 %v6086
  %v6634 = vpop.f32.mrf.mxu0
  %v6635 = vadd.f32 %v6346, %v6634
  %v6636 = vpop.f32.mrf.mxu0
  %v6637 = vpop.f32.mrf.mxu0
  %v6638 = vadd.f32 %v6349, %v6637
  %v6639 = vpop.f32.mrf.mxu0
  %6640 = vmatprep.mubr.bf16.mxu0 0
  %6641 = vmatmul.mubr.bf16.gmra.mxu0 %v6089
  %v6642 = vpop.f32.mrf.mxu0
  %v6643 = vadd.f32 %v6354, %v6642
  %v6644 = vpop.f32.mrf.mxu0
  %v6645 = vpop.f32.mrf.mxu0
  %v6646 = vadd.f32 %v6357, %v6645
  %v6647 = vpop.f32.mrf.mxu0
  %6648 = vmatprep.mubr.bf16.mxu0 0
  %6649 = vmatmul.mubr.bf16.gmra.mxu0 %v6092
  %v6650 = vpop.f32.mrf.mxu0
  %v6651 = vadd.f32 %v6362, %v6650
  %v6652 = vpop.f32.mrf.mxu0
  %v6653 = vpop.f32.mrf.mxu0
  %v6654 = vadd.f32 %v6365, %v6653
  %v6655 = vpop.f32.mrf.mxu0
  %6656 = vmatprep.mubr.bf16.mxu0 0
  %6657 = vmatmul.mubr.bf16.gmra.mxu0 %v6095
  %v6658 = vpop.f32.mrf.mxu0
  %v6659 = vadd.f32 %v6370, %v6658
  %v6660 = vpop.f32.mrf.mxu0
  %v6661 = vpop.f32.mrf.mxu0
  %v6662 = vadd.f32 %v6373, %v6661
  %v6663 = vpop.f32.mrf.mxu0
  %6664 = vmatprep.mubr.bf16.mxu0 0
  %6665 = vmatmul.mubr.bf16.gmra.mxu0 %v6098
  %v6666 = vpop.f32.mrf.mxu0
  %v6667 = vadd.f32 %v6378, %v6666
  %v6668 = vpop.f32.mrf.mxu0
  %v6669 = vpop.f32.mrf.mxu0
  %v6670 = vadd.f32 %v6381, %v6669
  %v6671 = vpop.f32.mrf.mxu0
  %6672 = vmatprep.mubr.bf16.mxu0 0
  %6673 = vmatmul.mubr.bf16.gmra.mxu0 %v6101
  %v6674 = vpop.f32.mrf.mxu0
  %v6675 = vadd.f32 %v6386, %v6674
  %v6676 = vpop.f32.mrf.mxu0
  %v6677 = vpop.f32.mrf.mxu0
  %v6678 = vadd.f32 %v6389, %v6677
  %v6679 = vpop.f32.mrf.mxu0
  %6680 = vdwg.mxu0
  %v6681 = vadd.f32 %v6427, %v6430
  %v6682 = vadd.f32 %v6681, %v6435
  %v6683 = vadd.f32 %v6682, %v6438
  %v6684 = vadd.f32 %v6683, %v6443
  %v6685 = vadd.f32 %v6684, %v6446
  %v6686 = vadd.f32 %v6685, %v6451
  %v6687 = vadd.f32 %v6686, %v6454
  %v6688 = vadd.f32 %v6687, %v6459
  %v6689 = vadd.f32 %v6688, %v6462
  %v6690 = vadd.f32 %v6689, %v6467
  %v6691 = vadd.f32 %v6690, %v6470
  %v6692 = vadd.f32 %v6691, %v6475
  %v6693 = vadd.f32 %v6692, %v6478
  %v6694 = vadd.f32 %v6693, %v6483
  %v6695 = vadd.f32 %v6694, %v6486
  %v6696 = vadd.f32 %v6695, %v6491
  %v6697 = vadd.f32 %v6696, %v6494
  %v6698 = vadd.f32 %v6697, %v6499
  %v6699 = vadd.f32 %v6698, %v6502
  %v6700 = vadd.f32 %v6699, %v6507
  %v6701 = vadd.f32 %v6700, %v6510
  %v6702 = vadd.f32 %v6701, %v6515
  %v6703 = vadd.f32 %v6702, %v6518
  %v6704 = vadd.f32 %v6703, %v6523
  %v6705 = vadd.f32 %v6704, %v6526
  %v6706 = vadd.f32 %v6705, %v6531
  %v6707 = vadd.f32 %v6706, %v6534
  %v6708 = vadd.f32 %v6707, %v6539
  %v6709 = vadd.f32 %v6708, %v6542
  %v6710 = vadd.f32 %v6709, %v6547
  %v6711 = vadd.f32 %v6710, %v6550
  %v6712 = vadd.f32 %v6711, %v6555
  %v6713 = vadd.f32 %v6712, %v6558
  %v6714 = vadd.f32 %v6713, %v6563
  %v6715 = vadd.f32 %v6714, %v6566
  %v6716 = vadd.f32 %v6715, %v6571
  %v6717 = vadd.f32 %v6716, %v6574
  %v6718 = vadd.f32 %v6717, %v6579
  %v6719 = vadd.f32 %v6718, %v6582
  %v6720 = vadd.f32 %v6719, %v6587
  %v6721 = vadd.f32 %v6720, %v6590
  %v6722 = vadd.f32 %v6721, %v6595
  %v6723 = vadd.f32 %v6722, %v6598
  %v6724 = vadd.f32 %v6723, %v6603
  %v6725 = vadd.f32 %v6724, %v6606
  %v6726 = vadd.f32 %v6725, %v6611
  %v6727 = vadd.f32 %v6726, %v6614
  %v6728 = vadd.f32 %v6727, %v6619
  %v6729 = vadd.f32 %v6728, %v6622
  %v6730 = vadd.f32 %v6729, %v6627
  %v6731 = vadd.f32 %v6730, %v6630
  %v6732 = vadd.f32 %v6731, %v6635
  %v6733 = vadd.f32 %v6732, %v6638
  %v6734 = vadd.f32 %v6733, %v6643
  %v6735 = vadd.f32 %v6734, %v6646
  %v6736 = vadd.f32 %v6735, %v6651
  %v6737 = vadd.f32 %v6736, %v6654
  %v6738 = vadd.f32 %v6737, %v6659
  %v6739 = vadd.f32 %v6738, %v6662
  %v6740 = vadd.f32 %v6739, %v6667
  %v6741 = vadd.f32 %v6740, %v6670
  %v6742 = vadd.f32 %v6741, %v6675
  %v6743 = vadd.f32 %v6742, %v6678
  %v6744 = vrot.slane %v6743, 4
  %v6745 = vadd.f32 %v6743, %v6744
  %v6746 = vrot.slane %v6745, 2
  %v6747 = vadd.f32 %v6745, %v6746
  %v6748 = vrot.slane %v6747, 1
  %v6749 = vadd.f32 %v6747, %v6748
  %v6750 = vmul.f32 %v6749, 0.0025510204
  %v6751 = vmul.f32 %v6427, %v6427
  %v6752 = vmul.f32 %v6430, %v6430
  %v6753 = vmul.f32 %v6435, %v6435
  %v6754 = vmul.f32 %v6438, %v6438
  %v6755 = vmul.f32 %v6443, %v6443
  %v6756 = vmul.f32 %v6446, %v6446
  %v6757 = vmul.f32 %v6451, %v6451
  %v6758 = vmul.f32 %v6454, %v6454
  %v6759 = vmul.f32 %v6459, %v6459
  %v6760 = vmul.f32 %v6462, %v6462
  %v6761 = vmul.f32 %v6467, %v6467
  %v6762 = vmul.f32 %v6470, %v6470
  %v6763 = vmul.f32 %v6475, %v6475
  %v6764 = vmul.f32 %v6478, %v6478
  %v6765 = vmul.f32 %v6483, %v6483
  %v6766 = vmul.f32 %v6486, %v6486
  %v6767 = vmul.f32 %v6491, %v6491
  %v6768 = vmul.f32 %v6494, %v6494
  %v6769 = vmul.f32 %v6499, %v6499
  %v6770 = vmul.f32 %v6502, %v6502
  %v6771 = vmul.f32 %v6507, %v6507
  %v6772 = vmul.f32 %v6510, %v6510
  %v6773 = vmul.f32 %v6515, %v6515
  %v6774 = vmul.f32 %v6518, %v6518
  %v6775 = vmul.f32 %v6523, %v6523
  %v6776 = vmul.f32 %v6526, %v6526
  %v6777 = vmul.f32 %v6531, %v6531
  %v6778 = vmul.f32 %v6534, %v6534
  %v6779 = vmul.f32 %v6539, %v6539
  %v6780 = vmul.f32 %v6542, %v6542
  %v6781 = vmul.f32 %v6547, %v6547
  %v6782 = vmul.f32 %v6550, %v6550
  %v6783 = vmul.f32 %v6555, %v6555
  %v6784 = vmul.f32 %v6558, %v6558
  %v6785 = vmul.f32 %v6563, %v6563
  %v6786 = vmul.f32 %v6566, %v6566
  %v6787 = vmul.f32 %v6571, %v6571
  %v6788 = vmul.f32 %v6574, %v6574
  %v6789 = vmul.f32 %v6579, %v6579
  %v6790 = vmul.f32 %v6582, %v6582
  %v6791 = vmul.f32 %v6587, %v6587
  %v6792 = vmul.f32 %v6590, %v6590
  %v6793 = vmul.f32 %v6595, %v6595
  %v6794 = vmul.f32 %v6598, %v6598
  %v6795 = vmul.f32 %v6603, %v6603
  %v6796 = vmul.f32 %v6606, %v6606
  %v6797 = vmul.f32 %v6611, %v6611
  %v6798 = vmul.f32 %v6614, %v6614
  %v6799 = vmul.f32 %v6619, %v6619
  %v6800 = vmul.f32 %v6622, %v6622
  %v6801 = vmul.f32 %v6627, %v6627
  %v6802 = vmul.f32 %v6630, %v6630
  %v6803 = vmul.f32 %v6635, %v6635
  %v6804 = vmul.f32 %v6638, %v6638
  %v6805 = vmul.f32 %v6643, %v6643
  %v6806 = vmul.f32 %v6646, %v6646
  %v6807 = vmul.f32 %v6651, %v6651
  %v6808 = vmul.f32 %v6654, %v6654
  %v6809 = vmul.f32 %v6659, %v6659
  %v6810 = vmul.f32 %v6662, %v6662
  %v6811 = vmul.f32 %v6667, %v6667
  %v6812 = vmul.f32 %v6670, %v6670
  %v6813 = vmul.f32 %v6675, %v6675
  %v6814 = vmul.f32 %v6678, %v6678
  %v6815 = vadd.f32 %v6751, %v6752
  %v6816 = vadd.f32 %v6815, %v6753
  %v6817 = vadd.f32 %v6816, %v6754
  %v6818 = vadd.f32 %v6817, %v6755
  %v6819 = vadd.f32 %v6818, %v6756
  %v6820 = vadd.f32 %v6819, %v6757
  %v6821 = vadd.f32 %v6820, %v6758
  %v6822 = vadd.f32 %v6821, %v6759
  %v6823 = vadd.f32 %v6822, %v6760
  %v6824 = vadd.f32 %v6823, %v6761
  %v6825 = vadd.f32 %v6824, %v6762
  %v6826 = vadd.f32 %v6825, %v6763
  %v6827 = vadd.f32 %v6826, %v6764
  %v6828 = vadd.f32 %v6827, %v6765
  %v6829 = vadd.f32 %v6828, %v6766
  %v6830 = vadd.f32 %v6829, %v6767
  %v6831 = vadd.f32 %v6830, %v6768
  %v6832 = vadd.f32 %v6831, %v6769
  %v6833 = vadd.f32 %v6832, %v6770
  %v6834 = vadd.f32 %v6833, %v6771
  %v6835 = vadd.f32 %v6834, %v6772
  %v6836 = vadd.f32 %v6835, %v6773
  %v6837 = vadd.f32 %v6836, %v6774
  %v6838 = vadd.f32 %v6837, %v6775
  %v6839 = vadd.f32 %v6838, %v6776
  %v6840 = vadd.f32 %v6839, %v6777
  %v6841 = vadd.f32 %v6840, %v6778
  %v6842 = vadd.f32 %v6841, %v6779
  %v6843 = vadd.f32 %v6842, %v6780
  %v6844 = vadd.f32 %v6843, %v6781
  %v6845 = vadd.f32 %v6844, %v6782
  %v6846 = vadd.f32 %v6845, %v6783
  %v6847 = vadd.f32 %v6846, %v6784
  %v6848 = vadd.f32 %v6847, %v6785
  %v6849 = vadd.f32 %v6848, %v6786
  %v6850 = vadd.f32 %v6849, %v6787
  %v6851 = vadd.f32 %v6850, %v6788
  %v6852 = vadd.f32 %v6851, %v6789
  %v6853 = vadd.f32 %v6852, %v6790
  %v6854 = vadd.f32 %v6853, %v6791
  %v6855 = vadd.f32 %v6854, %v6792
  %v6856 = vadd.f32 %v6855, %v6793
  %v6857 = vadd.f32 %v6856, %v6794
  %v6858 = vadd.f32 %v6857, %v6795
  %v6859 = vadd.f32 %v6858, %v6796
  %v6860 = vadd.f32 %v6859, %v6797
  %v6861 = vadd.f32 %v6860, %v6798
  %v6862 = vadd.f32 %v6861, %v6799
  %v6863 = vadd.f32 %v6862, %v6800
  %v6864 = vadd.f32 %v6863, %v6801
  %v6865 = vadd.f32 %v6864, %v6802
  %v6866 = vadd.f32 %v6865, %v6803
  %v6867 = vadd.f32 %v6866, %v6804
  %v6868 = vadd.f32 %v6867, %v6805
  %v6869 = vadd.f32 %v6868, %v6806
  %v6870 = vadd.f32 %v6869, %v6807
  %v6871 = vadd.f32 %v6870, %v6808
  %v6872 = vadd.f32 %v6871, %v6809
  %v6873 = vadd.f32 %v6872, %v6810
  %v6874 = vadd.f32 %v6873, %v6811
  %v6875 = vadd.f32 %v6874, %v6812
  %v6876 = vadd.f32 %v6875, %v6813
  %v6877 = vadd.f32 %v6876, %v6814
  %v6878 = vrot.slane %v6877, 4
  %v6879 = vadd.f32 %v6877, %v6878
  %v6880 = vrot.slane %v6879, 2
  %v6881 = vadd.f32 %v6879, %v6880
  %v6882 = vrot.slane %v6881, 1
  %v6883 = vadd.f32 %v6881, %v6882
  %v6884 = vmul.f32 %v6883, 0.0025510204
  %v6885 = vld [vmem:[%s5] sm:$0x1]
  %v6886 = vmul.f32 %v6750, %v6750
  %v6887 = vsub.f32 %v6884, %v6886
  %v6888 = vadd.f32 %v6887, 0.001
  %v6889 = vrsqrt.pop %v6888
  %v6890 = vmul.f32 %v6885, %v6889
  %v6891 = vld [vmem:[%s6] sm:$0x1]
  %v6892 = vmul.f32 %v6750, %v6890
  %v6893 = vsub.f32 %v6891, %v6892
  %v6895 = vlaneseq
  %v6896 = vshrl.u32 %v6895, 7
  %v6897 = vsub.s32 0, %v6896
  %v6898 = vrot.slane %v6890, %v6897
  %v6900 = vmul.f32 %v6427, %v6898
  %v6901 = vmul.f32 %v6430, %v6898
  %v6902 = vmul.f32 %v6435, %v6898
  %v6903 = vmul.f32 %v6438, %v6898
  %v6904 = vmul.f32 %v6443, %v6898
  %v6905 = vmul.f32 %v6446, %v6898
  %v6906 = vmul.f32 %v6451, %v6898
  %v6907 = vmul.f32 %v6454, %v6898
  %v6908 = vmul.f32 %v6459, %v6898
  %v6909 = vmul.f32 %v6462, %v6898
  %v6910 = vmul.f32 %v6467, %v6898
  %v6911 = vmul.f32 %v6470, %v6898
  %v6912 = vmul.f32 %v6475, %v6898
  %v6913 = vmul.f32 %v6478, %v6898
  %v6914 = vmul.f32 %v6483, %v6898
  %v6915 = vmul.f32 %v6486, %v6898
  %v6916 = vmul.f32 %v6491, %v6898
  %v6917 = vmul.f32 %v6494, %v6898
  %v6918 = vmul.f32 %v6499, %v6898
  %v6919 = vmul.f32 %v6502, %v6898
  %v6920 = vmul.f32 %v6507, %v6898
  %v6921 = vmul.f32 %v6510, %v6898
  %v6922 = vmul.f32 %v6515, %v6898
  %v6923 = vmul.f32 %v6518, %v6898
  %v6924 = vmul.f32 %v6523, %v6898
  %v6925 = vmul.f32 %v6526, %v6898
  %v6926 = vmul.f32 %v6531, %v6898
  %v6927 = vmul.f32 %v6534, %v6898
  %v6928 = vmul.f32 %v6539, %v6898
  %v6929 = vmul.f32 %v6542, %v6898
  %v6930 = vmul.f32 %v6547, %v6898
  %v6931 = vmul.f32 %v6550, %v6898
  %v6932 = vmul.f32 %v6555, %v6898
  %v6933 = vmul.f32 %v6558, %v6898
  %v6934 = vmul.f32 %v6563, %v6898
  %v6935 = vmul.f32 %v6566, %v6898
  %v6936 = vmul.f32 %v6571, %v6898
  %v6937 = vmul.f32 %v6574, %v6898
  %v6938 = vmul.f32 %v6579, %v6898
  %v6939 = vmul.f32 %v6582, %v6898
  %v6940 = vmul.f32 %v6587, %v6898
  %v6941 = vmul.f32 %v6590, %v6898
  %v6942 = vmul.f32 %v6595, %v6898
  %v6943 = vmul.f32 %v6598, %v6898
  %v6944 = vmul.f32 %v6603, %v6898
  %v6945 = vmul.f32 %v6606, %v6898
  %v6946 = vmul.f32 %v6611, %v6898
  %v6947 = vmul.f32 %v6614, %v6898
  %v6948 = vmul.f32 %v6619, %v6898
  %v6949 = vmul.f32 %v6622, %v6898
  %v6950 = vmul.f32 %v6627, %v6898
  %v6951 = vmul.f32 %v6630, %v6898
  %v6952 = vmul.f32 %v6635, %v6898
  %v6953 = vmul.f32 %v6638, %v6898
  %v6954 = vmul.f32 %v6643, %v6898
  %v6955 = vmul.f32 %v6646, %v6898
  %v6956 = vmul.f32 %v6651, %v6898
  %v6957 = vmul.f32 %v6654, %v6898
  %v6958 = vmul.f32 %v6659, %v6898
  %v6959 = vmul.f32 %v6662, %v6898
  %v6960 = vmul.f32 %v6667, %v6898
  %v6961 = vmul.f32 %v6670, %v6898
  %v6962 = vmul.f32 %v6675, %v6898
  %v6963 = vmul.f32 %v6678, %v6898
  %v6965 = vlaneseq
  %v6966 = vshrl.u32 %v6965, 7
  %v6967 = vsub.s32 0, %v6966
  %v6968 = vrot.slane %v6893, %v6967
  %v6970 = vadd.f32 %v6900, %v6968
  %v6971 = vadd.f32 %v6901, %v6968
  %v6972 = vadd.f32 %v6902, %v6968
  %v6973 = vadd.f32 %v6903, %v6968
  %v6974 = vadd.f32 %v6904, %v6968
  %v6975 = vadd.f32 %v6905, %v6968
  %v6976 = vadd.f32 %v6906, %v6968
  %v6977 = vadd.f32 %v6907, %v6968
  %v6978 = vadd.f32 %v6908, %v6968
  %v6979 = vadd.f32 %v6909, %v6968
  %v6980 = vadd.f32 %v6910, %v6968
  %v6981 = vadd.f32 %v6911, %v6968
  %v6982 = vadd.f32 %v6912, %v6968
  %v6983 = vadd.f32 %v6913, %v6968
  %v6984 = vadd.f32 %v6914, %v6968
  %v6985 = vadd.f32 %v6915, %v6968
  %v6986 = vadd.f32 %v6916, %v6968
  %v6987 = vadd.f32 %v6917, %v6968
  %v6988 = vadd.f32 %v6918, %v6968
  %v6989 = vadd.f32 %v6919, %v6968
  %v6990 = vadd.f32 %v6920, %v6968
  %v6991 = vadd.f32 %v6921, %v6968
  %v6992 = vadd.f32 %v6922, %v6968
  %v6993 = vadd.f32 %v6923, %v6968
  %v6994 = vadd.f32 %v6924, %v6968
  %v6995 = vadd.f32 %v6925, %v6968
  %v6996 = vadd.f32 %v6926, %v6968
  %v6997 = vadd.f32 %v6927, %v6968
  %v6998 = vadd.f32 %v6928, %v6968
  %v6999 = vadd.f32 %v6929, %v6968
  %v7000 = vadd.f32 %v6930, %v6968
  %v7001 = vadd.f32 %v6931, %v6968
  %v7002 = vadd.f32 %v6932, %v6968
  %v7003 = vadd.f32 %v6933, %v6968
  %v7004 = vadd.f32 %v6934, %v6968
  %v7005 = vadd.f32 %v6935, %v6968
  %v7006 = vadd.f32 %v6936, %v6968
  %v7007 = vadd.f32 %v6937, %v6968
  %v7008 = vadd.f32 %v6938, %v6968
  %v7009 = vadd.f32 %v6939, %v6968
  %v7010 = vadd.f32 %v6940, %v6968
  %v7011 = vadd.f32 %v6941, %v6968
  %v7012 = vadd.f32 %v6942, %v6968
  %v7013 = vadd.f32 %v6943, %v6968
  %v7014 = vadd.f32 %v6944, %v6968
  %v7015 = vadd.f32 %v6945, %v6968
  %v7016 = vadd.f32 %v6946, %v6968
  %v7017 = vadd.f32 %v6947, %v6968
  %v7018 = vadd.f32 %v6948, %v6968
  %v7019 = vadd.f32 %v6949, %v6968
  %v7020 = vadd.f32 %v6950, %v6968
  %v7021 = vadd.f32 %v6951, %v6968
  %v7022 = vadd.f32 %v6952, %v6968
  %v7023 = vadd.f32 %v6953, %v6968
  %v7024 = vadd.f32 %v6954, %v6968
  %v7025 = vadd.f32 %v6955, %v6968
  %v7026 = vadd.f32 %v6956, %v6968
  %v7027 = vadd.f32 %v6957, %v6968
  %v7028 = vadd.f32 %v6958, %v6968
  %v7029 = vadd.f32 %v6959, %v6968
  %v7030 = vadd.f32 %v6960, %v6968
  %v7031 = vadd.f32 %v6961, %v6968
  %v7032 = vadd.f32 %v6962, %v6968
  %v7033 = vadd.f32 %v6963, %v6968
  %7034 = vst [vmem:[%s7] sm:$0xff] %v6970
  %7035 = vst [vmem:[%s7 + $0x8] sm:$0xff] %v6971
  %7036 = vst [vmem:[%s7 + $0x10] sm:$0xff] %v6972
  %7037 = vst [vmem:[%s7 + $0x18] sm:$0xff] %v6973
  %7038 = vst [vmem:[%s7 + $0x20] sm:$0xff] %v6974
  %7039 = vst [vmem:[%s7 + $0x28] sm:$0xff] %v6975
  %7040 = vst [vmem:[%s7 + $0x30] sm:$0xff] %v6976
  %7041 = vst [vmem:[%s7 + $0x38] sm:$0xff] %v6977
  %7042 = vst [vmem:[%s7 + $0x40] sm:$0xff] %v6978
  %7043 = vst [vmem:[%s7 + $0x48] sm:$0xff] %v6979
  %7044 = vst [vmem:[%s7 + $0x50] sm:$0xff] %v6980
  %7045 = vst [vmem:[%s7 + $0x58] sm:$0xff] %v6981
  %7046 = vst [vmem:[%s7 + $0x60] sm:$0xff] %v6982
  %7047 = vst [vmem:[%s7 + $0x68] sm:$0xff] %v6983
  %7048 = vst [vmem:[%s7 + $0x70] sm:$0xff] %v6984
  %7049 = vst [vmem:[%s7 + $0x78] sm:$0xff] %v6985
  %7050 = vst [vmem:[%s7 + $0x80] sm:$0xff] %v6986
  %7051 = vst [vmem:[%s7 + $0x88] sm:$0xff] %v6987
  %7052 = vst [vmem:[%s7 + $0x90] sm:$0xff] %v6988
  %7053 = vst [vmem:[%s7 + $0x98] sm:$0xff] %v6989
  %7054 = vst [vmem:[%s7 + $0xa0] sm:$0xff] %v6990
  %7055 = vst [vmem:[%s7 + $0xa8] sm:$0xff] %v6991
  %7056 = vst [vmem:[%s7 + $0xb0] sm:$0xff] %v6992
  %7057 = vst [vmem:[%s7 + $0xb8] sm:$0xff] %v6993
  %7058 = vst [vmem:[%s7 + $0xc0] sm:$0xff] %v6994
  %7059 = vst [vmem:[%s7 + $0xc8] sm:$0xff] %v6995
  %7060 = vst [vmem:[%s7 + $0xd0] sm:$0xff] %v6996
  %7061 = vst [vmem:[%s7 + $0xd8] sm:$0xff] %v6997
  %7062 = vst [vmem:[%s7 + $0xe0] sm:$0xff] %v6998
  %7063 = vst [vmem:[%s7 + $0xe8] sm:$0xff] %v6999
  %7064 = vst [vmem:[%s7 + $0xf0] sm:$0xff] %v7000
  %7065 = vst [vmem:[%s7 + $0xf8] sm:$0xff] %v7001
  %7066 = vst [vmem:[%s7 + $0x100] sm:$0xff] %v7002
  %7067 = vst [vmem:[%s7 + $0x108] sm:$0xff] %v7003
  %7068 = vst [vmem:[%s7 + $0x110] sm:$0xff] %v7004
  %7069 = vst [vmem:[%s7 + $0x118] sm:$0xff] %v7005
  %7070 = vst [vmem:[%s7 + $0x120] sm:$0xff] %v7006
  %7071 = vst [vmem:[%s7 + $0x128] sm:$0xff] %v7007
  %7072 = vst [vmem:[%s7 + $0x130] sm:$0xff] %v7008
  %7073 = vst [vmem:[%s7 + $0x138] sm:$0xff] %v7009
  %7074 = vst [vmem:[%s7 + $0x140] sm:$0xff] %v7010
  %7075 = vst [vmem:[%s7 + $0x148] sm:$0xff] %v7011
  %7076 = vst [vmem:[%s7 + $0x150] sm:$0xff] %v7012
  %7077 = vst [vmem:[%s7 + $0x158] sm:$0xff] %v7013
  %7078 = vst [vmem:[%s7 + $0x160] sm:$0xff] %v7014
  %7079 = vst [vmem:[%s7 + $0x168] sm:$0xff] %v7015
  %7080 = vst [vmem:[%s7 + $0x170] sm:$0xff] %v7016
  %7081 = vst [vmem:[%s7 + $0x178] sm:$0xff] %v7017
  %7082 = vst [vmem:[%s7 + $0x180] sm:$0xff] %v7018
  %7083 = vst [vmem:[%s7 + $0x188] sm:$0xff] %v7019
  %7084 = vst [vmem:[%s7 + $0x190] sm:$0xff] %v7020
  %7085 = vst [vmem:[%s7 + $0x198] sm:$0xff] %v7021
  %7086 = vst [vmem:[%s7 + $0x1a0] sm:$0xff] %v7022
  %7087 = vst [vmem:[%s7 + $0x1a8] sm:$0xff] %v7023
  %7088 = vst [vmem:[%s7 + $0x1b0] sm:$0xff] %v7024
  %7089 = vst [vmem:[%s7 + $0x1b8] sm:$0xff] %v7025
  %7090 = vst [vmem:[%s7 + $0x1c0] sm:$0xff] %v7026
  %7091 = vst [vmem:[%s7 + $0x1c8] sm:$0xff] %v7027
  %7092 = vst [vmem:[%s7 + $0x1d0] sm:$0xff] %v7028
  %7093 = vst [vmem:[%s7 + $0x1d8] sm:$0xff] %v7029
  %7094 = vst [vmem:[%s7 + $0x1e0] sm:$0xff] %v7030
  %7095 = vst [vmem:[%s7 + $0x1e8] sm:$0xff] %v7031
  %7096 = vst [vmem:[%s7 + $0x1f0] sm:$0xff] %v7032
  %7097 = vst [vmem:[%s7 + $0x1f8] sm:$0xff] %v7033
  // Predicated region
  $region30: #{gnet_block_forward.3} parent=0 // pred_check
    _
  $region31: #{gnet_block_forward.3} parent=0 // pred_check_branch
    %7099 = sbr.rel (0) target = $region33
  $region32: #{gnet_block_forward.3} parent=0 // pred_region
    _
  $region33: #{gnet_block_forward.3} parent=0 // pred_fallthru
    _
  // Predicated region
  $region34: #{gnet_block_forward.3} parent=0 // pred_check
    _
  $region35: #{gnet_block_forward.3} parent=0 // pred_check_branch
    %7101 = sbr.rel (0) target = $region37
  $region36: #{gnet_block_forward.3} parent=0 // pred_region
    _
  $region37: #{gnet_block_forward.3} parent=0 // pred_fallthru
    _

</llo_original>
